<compile_context>
chip_gen: v6e
topology: v6e:2x2x1
jax: 0.10.0
libtpu: 0.0.40
codegen_flags: <defaults>
</compile_context>

<pallas_src>
import math
import functools

import numpy as np
import jax
import jax.numpy as jnp
from jax import lax
from jax.experimental import pallas as pl
from jax.experimental.pallas import tpu as pltpu


# ---------------------------------------------------------------------------
# Parameter packing: every weight / bias goes into ONE row-stacked f32 slab.
# ---------------------------------------------------------------------------
class _ParamPacker:
    """Row-stacks 1-D/2-D parameters into one [rows, cols] f32 slab.

    Each entry starts at an 8-row-aligned offset (sublane aligned) and lane 0,
    so in-kernel static slices need no relayout."""

    def __init__(self, row_align=8):
        self._row_align = row_align
        self._arrays = []      # (row_offset, np.ndarray)
        self._index = {}       # name -> (row_offset, nrows, ncols)
        self._rows = 0
        self._cols = 0

    def add(self, name, arr):
        a = np.asarray(arr, np.float32)
        if a.ndim == 1:
            a = a[None, :]
        assert a.ndim == 2, name
        self._index[name] = (self._rows, a.shape[0], a.shape[1])
        self._arrays.append((self._rows, a))
        self._rows += -(-a.shape[0] // self._row_align) * self._row_align
        self._cols = max(self._cols, a.shape[1])

    def finalize(self):
        rows = max(self._rows, self._row_align)
        slab = np.zeros((rows, self._cols), np.float32)
        for off, a in self._arrays:
            slab[off:off + a.shape[0], :a.shape[1]] = a
        return jnp.asarray(slab), dict(self._index)


# ---------------------------------------------------------------------------
# Fused whole-forward kernel (one grid step == one batch element).
# ---------------------------------------------------------------------------
def _build_kernel(index, *, n_heads, d_model, activation, e_layers, d_layers):
    H = n_heads
    E = d_model // n_heads
    scale = 1.0 / math.sqrt(E)

    def kernel(x_ref, tau_ref, w_ref, o_ref):
        def P(name):
            off, nr, nc = index[name]
            return w_ref[off:off + nr, :nc]

        def layer_norm(z, g, b, eps=1e-5):
            mu = jnp.mean(z, axis=-1, keepdims=True)
            var = jnp.mean((z - mu) ** 2, axis=-1, keepdims=True)
            return (z - mu) * lax.rsqrt(var + eps) * g + b

        def batch_norm(z, pfx, eps=1e-5):
            # BatchNorm1d(d_model), eval mode: running statistics.
            return ((z - P(pfx + "rm")) * lax.rsqrt(P(pfx + "rv") + eps)
                    * P(pfx + "g") + P(pfx + "b"))

        def split_heads(x2):                     # [L, D] -> [H, L, E]
            xt = x2.T                            # [D, L]
            return jnp.transpose(xt.reshape(H, E, xt.shape[-1]), (0, 2, 1))

        def attend(q2, k2, v2, wo, bo, causal):
            lq, lk = q2.shape[0], k2.shape[0]
            q3, k3, v3 = split_heads(q2), split_heads(k2), split_heads(v2)
            s = jnp.einsum("hqe,hke->hqk", q3, k3,
                           preferred_element_type=jnp.float32) * scale
            if causal:
                row = lax.broadcasted_iota(jnp.int32, (lq, lk), 0)
                col = lax.broadcasted_iota(jnp.int32, (lq, lk), 1)
                s = jnp.where((col > row)[None, :, :], jnp.float32(-1e30), s)
            m = jnp.max(s, axis=-1, keepdims=True)
            p = jnp.exp(s - m)
            a = p * pl.reciprocal(jnp.sum(p, axis=-1, keepdims=True), approx=True)
            o3 = jnp.einsum("hqk,hke->hqe", a, v3,
                            preferred_element_type=jnp.float32)       # [H, L, E]
            # Single output-projection matmul (no per-head accumulate chain).
            o2 = jnp.concatenate([o3[h] for h in range(H)], axis=-1)  # [L, D]
            return jnp.dot(o2, wo, preferred_element_type=jnp.float32) + bo

        def self_attn(h, pfx, causal):
            qkv = jnp.dot(h, P(pfx + "wqkv"),
                          preferred_element_type=jnp.float32) + P(pfx + "bqkv")
            return attend(qkv[:, :d_model], qkv[:, d_model:2 * d_model],
                          qkv[:, 2 * d_model:], P(pfx + "wo"), P(pfx + "bo"),
                          causal)

        def cross_attn(h, mem, pfx):
            q = jnp.dot(h, P(pfx + "wq"),
                        preferred_element_type=jnp.float32) + P(pfx + "bq")
            kv = jnp.dot(mem, P(pfx + "wkv"),
                         preferred_element_type=jnp.float32) + P(pfx + "bkv")
            return attend(q, kv[:, :d_model], kv[:, d_model:],
                          P(pfx + "wo"), P(pfx + "bo"), False)

        def ffn(z, pfx):
            hh = jnp.dot(z, P(pfx + "w1"),
                         preferred_element_type=jnp.float32) + P(pfx + "b1")
            if activation == "relu":
                hh = jnp.maximum(hh, 0.0)
            else:
                # TODO(synk): PyTorch F.gelu defaults to exact erf; tanh approx used.
                hh = jax.nn.gelu(hh)
            return jnp.dot(hh, P(pfx + "w2"),
                           preferred_element_type=jnp.float32) + P(pfx + "b2")

        x = x_ref[0]        # [L, d_feature]
        tau = tau_ref[0]    # [L, d_mark]

        # --- T2V position embedding: col 0 = trend, cols 1.. = sin (cat[v2,v1])
        z = jnp.dot(tau, P("t2v_w"),
                    preferred_element_type=jnp.float32) + P("t2v_b")
        colz = lax.broadcasted_iota(jnp.int32, z.shape, 1)
        t2v = jnp.where(colz == 0, z, jnp.sin(z))
        # mean over T2V features; identical for every d_feature channel.
        pos = jnp.mean(t2v, axis=-1, keepdims=True)
        stream = jnp.dot(pos + x, P("proj_w"),
                         preferred_element_type=jnp.float32) + P("proj_b")

        # --- Encoder: post-LN EncoderLayers + final BatchNorm1d (eval) -------
        h = stream
        for li in range(e_layers):
            pfx = f"enc{li}_"
            a = self_attn(h, pfx, causal=False)
            h1 = layer_norm(h + a, P(pfx + "ln1_g"), P(pfx + "ln1_b"))
            y = ffn(h1, pfx)
            h = layer_norm(h1 + y, P(pfx + "ln2_g"), P(pfx + "ln2_b"))
        enc_out = batch_norm(h, "enc_bn_")

        # --- Decoder: causal self-attn + cross-attn + FFN, BN + projection ---
        h = stream
        for li in range(d_layers):
            pfx = f"dec{li}_"
            sa = self_attn(h, pfx + "s_", causal=True)
            h1 = layer_norm(h + sa, P(pfx + "ln1_g"), P(pfx + "ln1_b"))
            ca = cross_attn(h1, enc_out, pfx + "c_")
            h2 = layer_norm(h1 + ca, P(pfx + "ln2_g"), P(pfx + "ln2_b"))
            y = ffn(h2, pfx)
            h = layer_norm(h2 + y, P(pfx + "ln3_g"), P(pfx + "ln3_b"))
        dec = batch_norm(h, "dec_bn_")
        dec = jnp.dot(dec, P("dec_proj_w"),
                      preferred_element_type=jnp.float32) + P("dec_proj_b")

        # --- output_proj over the time axis: [pred, L] @ [L, c_out] + b ------
        out = jnp.dot(P("out_proj_w"), dec,
                      preferred_element_type=jnp.float32) + P("out_proj_b")
        o_ref[0] = out

    return kernel


# ---------------------------------------------------------------------------
# Cost estimate (latency-bound kernel; helps XLA schedule around the call).
# ---------------------------------------------------------------------------
def _cost_estimate(cfg, bsz, n_in_bytes, n_out_bytes):
    L, D = cfg["seq_len"], cfg["d_model"]
    F, H = cfg["d_ff"], cfg["n_heads"]
    per_attn = 8 * L * D * D + 4 * L * L * D
    per_ffn = 4 * L * D * F
    head = (2 * L * cfg["d_mark"] * cfg["T2V_outmodel"]
            + 2 * L * cfg["d_feature"] * D)
    enc = cfg["e_layers"] * (per_attn + per_ffn)
    dec = cfg["d_layers"] * (2 * per_attn + per_ffn)
    tail = 2 * L * D * cfg["c_out"] + 2 * cfg["pred_len"] * L * cfg["c_out"]
    n_attn = cfg["e_layers"] + 2 * cfg["d_layers"]
    return pl.CostEstimate(
        flops=int(bsz * (head + enc + dec + tail)),
        transcendentals=int(bsz * (L * cfg["T2V_outmodel"] + n_attn * H * L * L)),
        bytes_accessed=int(n_in_bytes + n_out_bytes),
    )


# ---------------------------------------------------------------------------
# Forward wrapper: one pallas_call, grid over batch, single parameter slab.
# ---------------------------------------------------------------------------
def t2v_transformer_forward(slab, x_enc, x_mark_enc, y_batch, x_mark_dec, *,
                            index, cfg):
    # y_batch / x_mark_dec never influence the reference output (see header).
    del y_batch, x_mark_dec
    B, L, d_feature = x_enc.shape
    d_mark = x_mark_enc.shape[-1]
    pred_len, c_out = cfg["pred_len"], cfg["c_out"]

    kernel = _build_kernel(index, n_heads=cfg["n_heads"], d_model=cfg["d_model"],
                           activation=cfg["activation"],
                           e_layers=cfg["e_layers"], d_layers=cfg["d_layers"])

    x = x_enc.astype(jnp.float32)
    tau = x_mark_enc.astype(jnp.float32)
    bytes_in = 4 * (x.size + tau.size + slab.size)
    bytes_out = 4 * B * pred_len * c_out

    return pl.pallas_call(
        kernel,
        out_shape=jax.ShapeDtypeStruct((B, pred_len, c_out), jnp.float32),
        grid=(B,),
        in_specs=[
            pl.BlockSpec((1, L, d_feature), lambda b: (b, 0, 0)),
            pl.BlockSpec((1, L, d_mark), lambda b: (b, 0, 0)),
            pl.BlockSpec(tuple(slab.shape), lambda b: (0, 0)),  # same block -> DMA'd once
        ],
        out_specs=pl.BlockSpec((1, pred_len, c_out), lambda b: (b, 0, 0)),
        compiler_params=pltpu.CompilerParams(
            # v7x: the 2 TensorCores each take one (independent) batch element.
            dimension_semantics=("parallel",)),
        cost_estimate=_cost_estimate(cfg, B, bytes_in, bytes_out),
    )(x, tau, slab)


# ---------------------------------------------------------------------------
# Parameter construction (deterministic, synthetic; PyTorch-style init),
# packed directly into the single slab.
# ---------------------------------------------------------------------------
def make_packed_params(key, cfg):
    d_model, d_ff = cfg["d_model"], cfg["d_ff"]
    d_mark, d_feature = cfg["d_mark"], cfg["d_feature"]
    out_f = cfg["T2V_outmodel"]
    keys = iter(jax.random.split(key, 256))
    pk = _ParamPacker()

    def u(shape, bound):
        return jax.random.uniform(next(keys), shape, jnp.float32, -bound, bound)

    def lin_wb(fan_in, fan_out):
        bound = 1.0 / math.sqrt(fan_in)
        return u((fan_in, fan_out), bound), u((1, fan_out), bound)

    def add_self_attn(pfx):
        wq, bq = lin_wb(d_model, d_model)
        wk, bk = lin_wb(d_model, d_model)
        wv, bv = lin_wb(d_model, d_model)
        wo, bo = lin_wb(d_model, d_model)
        pk.add(pfx + "wqkv", jnp.concatenate([wq, wk, wv], axis=1))
        pk.add(pfx + "bqkv", jnp.concatenate([bq, bk, bv], axis=1))
        pk.add(pfx + "wo", wo)
        pk.add(pfx + "bo", bo)

    def add_cross_attn(pfx):
        wq, bq = lin_wb(d_model, d_model)
        wk, bk = lin_wb(d_model, d_model)
        wv, bv = lin_wb(d_model, d_model)
        wo, bo = lin_wb(d_model, d_model)
        pk.add(pfx + "wq", wq)
        pk.add(pfx + "bq", bq)
        pk.add(pfx + "wkv", jnp.concatenate([wk, wv], axis=1))
        pk.add(pfx + "bkv", jnp.concatenate([bk, bv], axis=1))
        pk.add(pfx + "wo", wo)
        pk.add(pfx + "bo", bo)

    def add_ln(pfx):
        pk.add(pfx + "g", np.ones((1, d_model), np.float32))
        pk.add(pfx + "b", np.zeros((1, d_model), np.float32))

    def add_bn(pfx):
        pk.add(pfx + "g", np.ones((1, d_model), np.float32))
        pk.add(pfx + "b", np.zeros((1, d_model), np.float32))
        pk.add(pfx + "rm", np.zeros((1, d_model), np.float32))   # running mean
        pk.add(pfx + "rv", np.ones((1, d_model), np.float32))    # running var

    # SineActivation: uniform(-1, 1); trend column first (torch.cat([v2, v1])).
    w0 = u((d_mark, 1), 1.0)
    b0 = u((1, 1), 1.0)
    w = u((d_mark, out_f - 1), 1.0)
    b = u((1, out_f - 1), 1.0)
    pk.add("t2v_w", jnp.concatenate([w0, w], axis=1))
    pk.add("t2v_b", jnp.concatenate([b0, b], axis=1))

    pw, pb = lin_wb(d_feature, d_model)
    pk.add("proj_w", pw)
    pk.add("proj_b", pb)

    for li in range(cfg["e_layers"]):
        pfx = f"enc{li}_"
        add_self_attn(pfx)
        w1, b1 = lin_wb(d_model, d_ff)
        w2, b2 = lin_wb(d_ff, d_model)
        pk.add(pfx + "w1", w1)
        pk.add(pfx + "b1", b1)
        pk.add(pfx + "w2", w2)
        pk.add(pfx + "b2", b2)
        add_ln(pfx + "ln1_")
        add_ln(pfx + "ln2_")
    add_bn("enc_bn_")

    for li in range(cfg["d_layers"]):
        pfx = f"dec{li}_"
        add_self_attn(pfx + "s_")
        add_cross_attn(pfx + "c_")
        w1, b1 = lin_wb(d_model, d_ff)
        w2, b2 = lin_wb(d_ff, d_model)
        pk.add(pfx + "w1", w1)
        pk.add(pfx + "b1", b1)
        pk.add(pfx + "w2", w2)
        pk.add(pfx + "b2", b2)
        add_ln(pfx + "ln1_")
        add_ln(pfx + "ln2_")
        add_ln(pfx + "ln3_")
    add_bn("dec_bn_")

    dpw, dpb = lin_wb(d_model, cfg["c_out"])
    pk.add("dec_proj_w", dpw)
    pk.add("dec_proj_b", dpb)

    # output_proj kept in PyTorch [out, in] layout so the kernel computes
    # W @ dec_b with no extra transposes; bias stored as a [pred, 1] column.
    bound = 1.0 / math.sqrt(cfg["seq_len"])
    pk.add("out_proj_w", u((cfg["pred_len"], cfg["seq_len"]), bound))
    pk.add("out_proj_b", u((cfg["pred_len"], 1), bound))

    return pk.finalize()


# ---------------------------------------------------------------------------
if __name__ == "__main__":
    cfg = dict(
        seq_len=8, label_len=4, pred_len=4,
        d_mark=5, d_feature=4, d_model=32,
        T2V_outmodel=8, n_heads=4, d_ff=64,
        e_layers=2, d_layers=1, c_out=4,
        activation="relu", dropout=0.0, factor=5,
    )

    key = jax.random.PRNGKey(0)
    k_x, k_me, k_md, k_y, k_p = jax.random.split(key, 5)

    B = 2
    x_enc = jax.random.normal(k_x, (B, cfg["seq_len"], cfg["d_feature"]), jnp.float32)
    x_mark_enc = jax.random.normal(k_me, (B, cfg["seq_len"], cfg["d_mark"]), jnp.float32)
    x_mark_dec = jax.random.normal(
        k_md, (B, cfg["label_len"] + cfg["pred_len"], cfg["d_mark"]), jnp.float32)
    y_batch = jax.random.normal(
        k_y, (B, cfg["label_len"] + cfg["pred_len"], cfg["d_feature"]), jnp.float32)

    slab, index = make_packed_params(k_p, cfg)

    fwd = jax.jit(functools.partial(t2v_transformer_forward, index=index, cfg=cfg))
    out = jax.block_until_ready(fwd(slab, x_enc, x_mark_enc, y_batch, x_mark_dec))

    assert out.shape == (B, cfg["pred_len"], cfg["c_out"]), out.shape
    assert bool(jnp.all(jnp.isfinite(out)))
    print("KERNEL_OK")
</pallas_src>

<mosaic_0001>
module attributes {stable_mosaic.version = 11 : i64} {
  func.func @kernel(%arg0: i32, %arg1: memref<1x8x4xf32, #tpu.memory_space<vmem>>, %arg2: memref<1x8x5xf32, #tpu.memory_space<vmem>>, %arg3: memref<960x96xf32, #tpu.memory_space<vmem>>, %arg4: memref<1x4x4xf32, #tpu.memory_space<vmem>>) attributes {dimension_semantics = [#tpu.dimension_semantics<parallel>], iteration_bounds = array<i64: 2>, scalar_prefetch = 0 : i64, scratch_operands = 0 : i64, tpu.core_type = #tpu.core_type<tc>, window_params = [{transform_indices = @transform_0, window_bounds = array<i64: 1, 8, 4>}, {transform_indices = @transform_1, window_bounds = array<i64: 1, 8, 5>}, {pipeline_mode = #tpu.pipeline_mode<synchronous>, transform_indices = @transform_2, window_bounds = array<i64: 960, 96>}, {transform_indices = @transform_3, window_bounds = array<i64: 1, 4, 4>}]} {
    %c0 = arith.constant 0 : index
    %c0_0 = arith.constant 0 : index
    %c0_1 = arith.constant 0 : index
    %0 = vector.load %arg1[%c0, %c0_0, %c0_1] : memref<1x8x4xf32, #tpu.memory_space<vmem>>, vector<1x8x4xf32>
    %1 = vector.shape_cast %0 : vector<1x8x4xf32> to vector<8x4xf32>
    %c0_2 = arith.constant 0 : index
    %c0_3 = arith.constant 0 : index
    %c0_4 = arith.constant 0 : index
    %2 = vector.load %arg2[%c0_2, %c0_3, %c0_4] : memref<1x8x5xf32, #tpu.memory_space<vmem>>, vector<1x8x5xf32>
    %3 = vector.shape_cast %2 : vector<1x8x5xf32> to vector<8x5xf32>
    %c0_5 = arith.constant 0 : index
    %c0_6 = arith.constant 0 : index
    %4 = vector.load %arg3[%c0_5, %c0_6] : memref<960x96xf32, #tpu.memory_space<vmem>>, vector<5x8xf32>
    %cst = arith.constant dense<0.000000e+00> : vector<8x8xf32>
    %5 = tpu.matmul %3, %4, %cst {dimension_numbers = #tpu.dot_dimension_numbers<[1], [0], [0], [1], [0, 0, 1, 1], [], []>} : vector<8x5xf32>, vector<5x8xf32>, vector<8x8xf32> -> vector<8x8xf32>
    %c8 = arith.constant 8 : index
    %c0_7 = arith.constant 0 : index
    %6 = vector.load %arg3[%c8, %c0_7] : memref<960x96xf32, #tpu.memory_space<vmem>>, vector<1x8xf32>
    %7 = vector.broadcast %6 : vector<1x8xf32> to vector<8x8xf32>
    %8 = arith.addf %5, %7 : vector<8x8xf32>
    %9 = tpu.iota {dimensions = array<i32: 1>} : vector<8x8xi32>
    %c0_i32 = arith.constant 0 : i32
    %10 = vector.broadcast %c0_i32 : i32 to vector<8x8xi32>
    %11 = arith.cmpi eq, %9, %10 : vector<8x8xi32>
    %12 = math.sin %8 : vector<8x8xf32>
    %13 = arith.select %11, %8, %12 : vector<8x8xi1>, vector<8x8xf32>
    %cst_8 = arith.constant dense<0.000000e+00> : vector<8xf32>
    %14 = vector.multi_reduction <add>, %13, %cst_8 [1] : vector<8x8xf32> to vector<8xf32>
    %15 = vector.shape_cast %14 : vector<8xf32> to vector<8x1xf32>
    %cst_9 = arith.constant 8.000000e+00 : f32
    %16 = vector.broadcast %cst_9 : f32 to vector<8x1xf32>
    %17 = arith.divf %15, %16 : vector<8x1xf32>
    %18 = vector.broadcast %17 : vector<8x1xf32> to vector<8x4xf32>
    %19 = arith.addf %18, %1 : vector<8x4xf32>
    %c16 = arith.constant 16 : index
    %c0_10 = arith.constant 0 : index
    %20 = vector.load %arg3[%c16, %c0_10] : memref<960x96xf32, #tpu.memory_space<vmem>>, vector<4x32xf32>
    %cst_11 = arith.constant dense<0.000000e+00> : vector<8x32xf32>
    %21 = tpu.matmul %19, %20, %cst_11 {dimension_numbers = #tpu.dot_dimension_numbers<[1], [0], [0], [1], [0, 0, 1, 1], [], []>} : vector<8x4xf32>, vector<4x32xf32>, vector<8x32xf32> -> vector<8x32xf32>
    %c24 = arith.constant 24 : index
    %c0_12 = arith.constant 0 : index
    %22 = vector.load %arg3[%c24, %c0_12] : memref<960x96xf32, #tpu.memory_space<vmem>>, vector<1x32xf32>
    %23 = vector.broadcast %22 : vector<1x32xf32> to vector<8x32xf32>
    %24 = arith.addf %21, %23 : vector<8x32xf32>
    %c32 = arith.constant 32 : index
    %c0_13 = arith.constant 0 : index
    %25 = vector.load %arg3[%c32, %c0_13] : memref<960x96xf32, #tpu.memory_space<vmem>>, vector<32x96xf32>
    %cst_14 = arith.constant dense<0.000000e+00> : vector<8x96xf32>
    %26 = tpu.matmul %24, %25, %cst_14 {dimension_numbers = #tpu.dot_dimension_numbers<[1], [0], [0], [1], [0, 0, 1, 1], [], []>} : vector<8x32xf32>, vector<32x96xf32>, vector<8x96xf32> -> vector<8x96xf32>
    %c64 = arith.constant 64 : index
    %c0_15 = arith.constant 0 : index
    %27 = vector.load %arg3[%c64, %c0_15] : memref<960x96xf32, #tpu.memory_space<vmem>>, vector<1x96xf32>
    %28 = vector.broadcast %27 : vector<1x96xf32> to vector<8x96xf32>
    %29 = arith.addf %26, %28 : vector<8x96xf32>
    %30 = vector.extract_strided_slice %29 {offsets = [0, 0], sizes = [8, 32], strides = [1, 1]} : vector<8x96xf32> to vector<8x32xf32>
    %31 = vector.extract_strided_slice %29 {offsets = [0, 32], sizes = [8, 32], strides = [1, 1]} : vector<8x96xf32> to vector<8x32xf32>
    %32 = vector.extract_strided_slice %29 {offsets = [0, 64], sizes = [8, 32], strides = [1, 1]} : vector<8x96xf32> to vector<8x32xf32>
    %c72 = arith.constant 72 : index
    %c0_16 = arith.constant 0 : index
    %33 = vector.load %arg3[%c72, %c0_16] : memref<960x96xf32, #tpu.memory_space<vmem>>, vector<32x32xf32>
    %c104 = arith.constant 104 : index
    %c0_17 = arith.constant 0 : index
    %34 = vector.load %arg3[%c104, %c0_17] : memref<960x96xf32, #tpu.memory_space<vmem>>, vector<1x32xf32>
    %35 = tpu.transpose %30, [1, 0] : vector<8x32xf32> -> vector<32x8xf32>
    %36 = vector.shape_cast %35 : vector<32x8xf32> to vector<4x8x8xf32>
    %37 = tpu.transpose %36, [0, 2, 1] : vector<4x8x8xf32> -> vector<4x8x8xf32>
    %38 = tpu.transpose %31, [1, 0] : vector<8x32xf32> -> vector<32x8xf32>
    %39 = vector.shape_cast %38 : vector<32x8xf32> to vector<4x8x8xf32>
    %40 = tpu.transpose %39, [0, 2, 1] : vector<4x8x8xf32> -> vector<4x8x8xf32>
    %41 = tpu.transpose %32, [1, 0] : vector<8x32xf32> -> vector<32x8xf32>
    %42 = vector.shape_cast %41 : vector<32x8xf32> to vector<4x8x8xf32>
    %43 = tpu.transpose %42, [0, 2, 1] : vector<4x8x8xf32> -> vector<4x8x8xf32>
    "tpu.trace_start"() <{level = 10 : i32, message = "hqe,hke->hqk"}> : () -> ()
    %cst_18 = arith.constant dense<0.000000e+00> : vector<4x8x8xf32>
    %44 = tpu.matmul %37, %40, %cst_18 {dimension_numbers = #tpu.dot_dimension_numbers<[2], [2], [1], [1], [0, 0, 0, 1, 1, 1], [0], [0]>} : vector<4x8x8xf32>, vector<4x8x8xf32>, vector<4x8x8xf32> -> vector<4x8x8xf32>
    "tpu.trace_stop"() : () -> ()
    %cst_19 = arith.constant 0.353553385 : f32
    %45 = vector.broadcast %cst_19 : f32 to vector<4x8x8xf32>
    %46 = arith.mulf %44, %45 : vector<4x8x8xf32>
    %cst_20 = arith.constant dense<0xFF800000> : vector<4x8xf32>
    %47 = vector.multi_reduction <maximumf>, %46, %cst_20 [2] : vector<4x8x8xf32> to vector<4x8xf32>
    %48 = vector.shape_cast %47 : vector<4x8xf32> to vector<4x8x1xf32>
    %49 = vector.broadcast %48 : vector<4x8x1xf32> to vector<4x8x8xf32>
    %50 = arith.subf %46, %49 : vector<4x8x8xf32>
    %51 = math.exp %50 : vector<4x8x8xf32>
    %cst_21 = arith.constant dense<0.000000e+00> : vector<4x8xf32>
    %52 = vector.multi_reduction <add>, %51, %cst_21 [2] : vector<4x8x8xf32> to vector<4x8xf32>
    %53 = vector.shape_cast %52 : vector<4x8xf32> to vector<4x8x1xf32>
    %54 = tpu.reciprocal %53 {approx = true} : vector<4x8x1xf32> -> vector<4x8x1xf32>
    %55 = vector.broadcast %54 : vector<4x8x1xf32> to vector<4x8x8xf32>
    %56 = arith.mulf %51, %55 : vector<4x8x8xf32>
    "tpu.trace_start"() <{level = 10 : i32, message = "hqk,hke->hqe"}> : () -> ()
    %cst_22 = arith.constant dense<0.000000e+00> : vector<4x8x8xf32>
    %57 = tpu.matmul %56, %43, %cst_22 {dimension_numbers = #tpu.dot_dimension_numbers<[2], [1], [1], [2], [0, 0, 0, 1, 1, 2], [0], [0]>} : vector<4x8x8xf32>, vector<4x8x8xf32>, vector<4x8x8xf32> -> vector<4x8x8xf32>
    "tpu.trace_stop"() : () -> ()
    %58 = vector.extract_strided_slice %57 {offsets = [0, 0, 0], sizes = [1, 8, 8], strides = [1, 1, 1]} : vector<4x8x8xf32> to vector<1x8x8xf32>
    %59 = vector.shape_cast %58 : vector<1x8x8xf32> to vector<8x8xf32>
    %60 = vector.extract_strided_slice %57 {offsets = [1, 0, 0], sizes = [1, 8, 8], strides = [1, 1, 1]} : vector<4x8x8xf32> to vector<1x8x8xf32>
    %61 = vector.shape_cast %60 : vector<1x8x8xf32> to vector<8x8xf32>
    %62 = vector.extract_strided_slice %57 {offsets = [2, 0, 0], sizes = [1, 8, 8], strides = [1, 1, 1]} : vector<4x8x8xf32> to vector<1x8x8xf32>
    %63 = vector.shape_cast %62 : vector<1x8x8xf32> to vector<8x8xf32>
    %64 = vector.extract_strided_slice %57 {offsets = [3, 0, 0], sizes = [1, 8, 8], strides = [1, 1, 1]} : vector<4x8x8xf32> to vector<1x8x8xf32>
    %65 = vector.shape_cast %64 : vector<1x8x8xf32> to vector<8x8xf32>
    %66 = tpu.concatenate %59, %61, %63, %65 in 1 : vector<8x8xf32>, vector<8x8xf32>, vector<8x8xf32>, vector<8x8xf32> -> vector<8x32xf32>
    %cst_23 = arith.constant dense<0.000000e+00> : vector<8x32xf32>
    %67 = tpu.matmul %66, %33, %cst_23 {dimension_numbers = #tpu.dot_dimension_numbers<[1], [0], [0], [1], [0, 0, 1, 1], [], []>} : vector<8x32xf32>, vector<32x32xf32>, vector<8x32xf32> -> vector<8x32xf32>
    %68 = vector.broadcast %34 : vector<1x32xf32> to vector<8x32xf32>
    %69 = arith.addf %67, %68 : vector<8x32xf32>
    %70 = arith.addf %24, %69 : vector<8x32xf32>
    %c224 = arith.constant 224 : index
    %c0_24 = arith.constant 0 : index
    %71 = vector.load %arg3[%c224, %c0_24] : memref<960x96xf32, #tpu.memory_space<vmem>>, vector<1x32xf32>
    %c232 = arith.constant 232 : index
    %c0_25 = arith.constant 0 : index
    %72 = vector.load %arg3[%c232, %c0_25] : memref<960x96xf32, #tpu.memory_space<vmem>>, vector<1x32xf32>
    %cst_26 = arith.constant dense<0.000000e+00> : vector<8xf32>
    %73 = vector.multi_reduction <add>, %70, %cst_26 [1] : vector<8x32xf32> to vector<8xf32>
    %74 = vector.shape_cast %73 : vector<8xf32> to vector<8x1xf32>
    %cst_27 = arith.constant 3.200000e+01 : f32
    %75 = vector.broadcast %cst_27 : f32 to vector<8x1xf32>
    %76 = arith.divf %74, %75 : vector<8x1xf32>
    %77 = vector.broadcast %76 : vector<8x1xf32> to vector<8x32xf32>
    %78 = arith.subf %70, %77 : vector<8x32xf32>
    %79 = arith.mulf %78, %78 : vector<8x32xf32>
    %cst_28 = arith.constant dense<0.000000e+00> : vector<8xf32>
    %80 = vector.multi_reduction <add>, %79, %cst_28 [1] : vector<8x32xf32> to vector<8xf32>
    %81 = vector.shape_cast %80 : vector<8xf32> to vector<8x1xf32>
    %cst_29 = arith.constant 3.200000e+01 : f32
    %82 = vector.broadcast %cst_29 : f32 to vector<8x1xf32>
    %83 = arith.divf %81, %82 : vector<8x1xf32>
    %84 = vector.broadcast %76 : vector<8x1xf32> to vector<8x32xf32>
    %85 = arith.subf %70, %84 : vector<8x32xf32>
    %cst_30 = arith.constant 9.99999974E-6 : f32
    %86 = vector.broadcast %cst_30 : f32 to vector<8x1xf32>
    %87 = arith.addf %83, %86 : vector<8x1xf32>
    %88 = math.rsqrt %87 : vector<8x1xf32>
    %89 = vector.broadcast %88 : vector<8x1xf32> to vector<8x32xf32>
    %90 = arith.mulf %85, %89 : vector<8x32xf32>
    %91 = vector.broadcast %71 : vector<1x32xf32> to vector<8x32xf32>
    %92 = arith.mulf %90, %91 : vector<8x32xf32>
    %93 = vector.broadcast %72 : vector<1x32xf32> to vector<8x32xf32>
    %94 = arith.addf %92, %93 : vector<8x32xf32>
    %c112 = arith.constant 112 : index
    %c0_31 = arith.constant 0 : index
    %95 = vector.load %arg3[%c112, %c0_31] : memref<960x96xf32, #tpu.memory_space<vmem>>, vector<32x64xf32>
    %cst_32 = arith.constant dense<0.000000e+00> : vector<8x64xf32>
    %96 = tpu.matmul %94, %95, %cst_32 {dimension_numbers = #tpu.dot_dimension_numbers<[1], [0], [0], [1], [0, 0, 1, 1], [], []>} : vector<8x32xf32>, vector<32x64xf32>, vector<8x64xf32> -> vector<8x64xf32>
    %c144 = arith.constant 144 : index
    %c0_33 = arith.constant 0 : index
    %97 = vector.load %arg3[%c144, %c0_33] : memref<960x96xf32, #tpu.memory_space<vmem>>, vector<1x64xf32>
    %98 = vector.broadcast %97 : vector<1x64xf32> to vector<8x64xf32>
    %99 = arith.addf %96, %98 : vector<8x64xf32>
    %cst_34 = arith.constant 0.000000e+00 : f32
    %100 = vector.broadcast %cst_34 : f32 to vector<8x64xf32>
    %101 = arith.maximumf %99, %100 : vector<8x64xf32>
    %c152 = arith.constant 152 : index
    %c0_35 = arith.constant 0 : index
    %102 = vector.load %arg3[%c152, %c0_35] : memref<960x96xf32, #tpu.memory_space<vmem>>, vector<64x32xf32>
    %cst_36 = arith.constant dense<0.000000e+00> : vector<8x32xf32>
    %103 = tpu.matmul %101, %102, %cst_36 {dimension_numbers = #tpu.dot_dimension_numbers<[1], [0], [0], [1], [0, 0, 1, 1], [], []>} : vector<8x64xf32>, vector<64x32xf32>, vector<8x32xf32> -> vector<8x32xf32>
    %c216 = arith.constant 216 : index
    %c0_37 = arith.constant 0 : index
    %104 = vector.load %arg3[%c216, %c0_37] : memref<960x96xf32, #tpu.memory_space<vmem>>, vector<1x32xf32>
    %105 = vector.broadcast %104 : vector<1x32xf32> to vector<8x32xf32>
    %106 = arith.addf %103, %105 : vector<8x32xf32>
    %107 = arith.addf %94, %106 : vector<8x32xf32>
    %c240 = arith.constant 240 : index
    %c0_38 = arith.constant 0 : index
    %108 = vector.load %arg3[%c240, %c0_38] : memref<960x96xf32, #tpu.memory_space<vmem>>, vector<1x32xf32>
    %c248 = arith.constant 248 : index
    %c0_39 = arith.constant 0 : index
    %109 = vector.load %arg3[%c248, %c0_39] : memref<960x96xf32, #tpu.memory_space<vmem>>, vector<1x32xf32>
    %cst_40 = arith.constant dense<0.000000e+00> : vector<8xf32>
    %110 = vector.multi_reduction <add>, %107, %cst_40 [1] : vector<8x32xf32> to vector<8xf32>
    %111 = vector.shape_cast %110 : vector<8xf32> to vector<8x1xf32>
    %cst_41 = arith.constant 3.200000e+01 : f32
    %112 = vector.broadcast %cst_41 : f32 to vector<8x1xf32>
    %113 = arith.divf %111, %112 : vector<8x1xf32>
    %114 = vector.broadcast %113 : vector<8x1xf32> to vector<8x32xf32>
    %115 = arith.subf %107, %114 : vector<8x32xf32>
    %116 = arith.mulf %115, %115 : vector<8x32xf32>
    %cst_42 = arith.constant dense<0.000000e+00> : vector<8xf32>
    %117 = vector.multi_reduction <add>, %116, %cst_42 [1] : vector<8x32xf32> to vector<8xf32>
    %118 = vector.shape_cast %117 : vector<8xf32> to vector<8x1xf32>
    %cst_43 = arith.constant 3.200000e+01 : f32
    %119 = vector.broadcast %cst_43 : f32 to vector<8x1xf32>
    %120 = arith.divf %118, %119 : vector<8x1xf32>
    %121 = vector.broadcast %113 : vector<8x1xf32> to vector<8x32xf32>
    %122 = arith.subf %107, %121 : vector<8x32xf32>
    %cst_44 = arith.constant 9.99999974E-6 : f32
    %123 = vector.broadcast %cst_44 : f32 to vector<8x1xf32>
    %124 = arith.addf %120, %123 : vector<8x1xf32>
    %125 = math.rsqrt %124 : vector<8x1xf32>
    %126 = vector.broadcast %125 : vector<8x1xf32> to vector<8x32xf32>
    %127 = arith.mulf %122, %126 : vector<8x32xf32>
    %128 = vector.broadcast %108 : vector<1x32xf32> to vector<8x32xf32>
    %129 = arith.mulf %127, %128 : vector<8x32xf32>
    %130 = vector.broadcast %109 : vector<1x32xf32> to vector<8x32xf32>
    %131 = arith.addf %129, %130 : vector<8x32xf32>
    %c256 = arith.constant 256 : index
    %c0_45 = arith.constant 0 : index
    %132 = vector.load %arg3[%c256, %c0_45] : memref<960x96xf32, #tpu.memory_space<vmem>>, vector<32x96xf32>
    %cst_46 = arith.constant dense<0.000000e+00> : vector<8x96xf32>
    %133 = tpu.matmul %131, %132, %cst_46 {dimension_numbers = #tpu.dot_dimension_numbers<[1], [0], [0], [1], [0, 0, 1, 1], [], []>} : vector<8x32xf32>, vector<32x96xf32>, vector<8x96xf32> -> vector<8x96xf32>
    %c288 = arith.constant 288 : index
    %c0_47 = arith.constant 0 : index
    %134 = vector.load %arg3[%c288, %c0_47] : memref<960x96xf32, #tpu.memory_space<vmem>>, vector<1x96xf32>
    %135 = vector.broadcast %134 : vector<1x96xf32> to vector<8x96xf32>
    %136 = arith.addf %133, %135 : vector<8x96xf32>
    %137 = vector.extract_strided_slice %136 {offsets = [0, 0], sizes = [8, 32], strides = [1, 1]} : vector<8x96xf32> to vector<8x32xf32>
    %138 = vector.extract_strided_slice %136 {offsets = [0, 32], sizes = [8, 32], strides = [1, 1]} : vector<8x96xf32> to vector<8x32xf32>
    %139 = vector.extract_strided_slice %136 {offsets = [0, 64], sizes = [8, 32], strides = [1, 1]} : vector<8x96xf32> to vector<8x32xf32>
    %c296 = arith.constant 296 : index
    %c0_48 = arith.constant 0 : index
    %140 = vector.load %arg3[%c296, %c0_48] : memref<960x96xf32, #tpu.memory_space<vmem>>, vector<32x32xf32>
    %c328 = arith.constant 328 : index
    %c0_49 = arith.constant 0 : index
    %141 = vector.load %arg3[%c328, %c0_49] : memref<960x96xf32, #tpu.memory_space<vmem>>, vector<1x32xf32>
    %142 = tpu.transpose %137, [1, 0] : vector<8x32xf32> -> vector<32x8xf32>
    %143 = vector.shape_cast %142 : vector<32x8xf32> to vector<4x8x8xf32>
    %144 = tpu.transpose %143, [0, 2, 1] : vector<4x8x8xf32> -> vector<4x8x8xf32>
    %145 = tpu.transpose %138, [1, 0] : vector<8x32xf32> -> vector<32x8xf32>
    %146 = vector.shape_cast %145 : vector<32x8xf32> to vector<4x8x8xf32>
    %147 = tpu.transpose %146, [0, 2, 1] : vector<4x8x8xf32> -> vector<4x8x8xf32>
    %148 = tpu.transpose %139, [1, 0] : vector<8x32xf32> -> vector<32x8xf32>
    %149 = vector.shape_cast %148 : vector<32x8xf32> to vector<4x8x8xf32>
    %150 = tpu.transpose %149, [0, 2, 1] : vector<4x8x8xf32> -> vector<4x8x8xf32>
    "tpu.trace_start"() <{level = 10 : i32, message = "hqe,hke->hqk"}> : () -> ()
    %cst_50 = arith.constant dense<0.000000e+00> : vector<4x8x8xf32>
    %151 = tpu.matmul %144, %147, %cst_50 {dimension_numbers = #tpu.dot_dimension_numbers<[2], [2], [1], [1], [0, 0, 0, 1, 1, 1], [0], [0]>} : vector<4x8x8xf32>, vector<4x8x8xf32>, vector<4x8x8xf32> -> vector<4x8x8xf32>
    "tpu.trace_stop"() : () -> ()
    %cst_51 = arith.constant 0.353553385 : f32
    %152 = vector.broadcast %cst_51 : f32 to vector<4x8x8xf32>
    %153 = arith.mulf %151, %152 : vector<4x8x8xf32>
    %cst_52 = arith.constant dense<0xFF800000> : vector<4x8xf32>
    %154 = vector.multi_reduction <maximumf>, %153, %cst_52 [2] : vector<4x8x8xf32> to vector<4x8xf32>
    %155 = vector.shape_cast %154 : vector<4x8xf32> to vector<4x8x1xf32>
    %156 = vector.broadcast %155 : vector<4x8x1xf32> to vector<4x8x8xf32>
    %157 = arith.subf %153, %156 : vector<4x8x8xf32>
    %158 = math.exp %157 : vector<4x8x8xf32>
    %cst_53 = arith.constant dense<0.000000e+00> : vector<4x8xf32>
    %159 = vector.multi_reduction <add>, %158, %cst_53 [2] : vector<4x8x8xf32> to vector<4x8xf32>
    %160 = vector.shape_cast %159 : vector<4x8xf32> to vector<4x8x1xf32>
    %161 = tpu.reciprocal %160 {approx = true} : vector<4x8x1xf32> -> vector<4x8x1xf32>
    %162 = vector.broadcast %161 : vector<4x8x1xf32> to vector<4x8x8xf32>
    %163 = arith.mulf %158, %162 : vector<4x8x8xf32>
    "tpu.trace_start"() <{level = 10 : i32, message = "hqk,hke->hqe"}> : () -> ()
    %cst_54 = arith.constant dense<0.000000e+00> : vector<4x8x8xf32>
    %164 = tpu.matmul %163, %150, %cst_54 {dimension_numbers = #tpu.dot_dimension_numbers<[2], [1], [1], [2], [0, 0, 0, 1, 1, 2], [0], [0]>} : vector<4x8x8xf32>, vector<4x8x8xf32>, vector<4x8x8xf32> -> vector<4x8x8xf32>
    "tpu.trace_stop"() : () -> ()
    %165 = vector.extract_strided_slice %164 {offsets = [0, 0, 0], sizes = [1, 8, 8], strides = [1, 1, 1]} : vector<4x8x8xf32> to vector<1x8x8xf32>
    %166 = vector.shape_cast %165 : vector<1x8x8xf32> to vector<8x8xf32>
    %167 = vector.extract_strided_slice %164 {offsets = [1, 0, 0], sizes = [1, 8, 8], strides = [1, 1, 1]} : vector<4x8x8xf32> to vector<1x8x8xf32>
    %168 = vector.shape_cast %167 : vector<1x8x8xf32> to vector<8x8xf32>
    %169 = vector.extract_strided_slice %164 {offsets = [2, 0, 0], sizes = [1, 8, 8], strides = [1, 1, 1]} : vector<4x8x8xf32> to vector<1x8x8xf32>
    %170 = vector.shape_cast %169 : vector<1x8x8xf32> to vector<8x8xf32>
    %171 = vector.extract_strided_slice %164 {offsets = [3, 0, 0], sizes = [1, 8, 8], strides = [1, 1, 1]} : vector<4x8x8xf32> to vector<1x8x8xf32>
    %172 = vector.shape_cast %171 : vector<1x8x8xf32> to vector<8x8xf32>
    %173 = tpu.concatenate %166, %168, %170, %172 in 1 : vector<8x8xf32>, vector<8x8xf32>, vector<8x8xf32>, vector<8x8xf32> -> vector<8x32xf32>
    %cst_55 = arith.constant dense<0.000000e+00> : vector<8x32xf32>
    %174 = tpu.matmul %173, %140, %cst_55 {dimension_numbers = #tpu.dot_dimension_numbers<[1], [0], [0], [1], [0, 0, 1, 1], [], []>} : vector<8x32xf32>, vector<32x32xf32>, vector<8x32xf32> -> vector<8x32xf32>
    %175 = vector.broadcast %141 : vector<1x32xf32> to vector<8x32xf32>
    %176 = arith.addf %174, %175 : vector<8x32xf32>
    %177 = arith.addf %131, %176 : vector<8x32xf32>
    %c448 = arith.constant 448 : index
    %c0_56 = arith.constant 0 : index
    %178 = vector.load %arg3[%c448, %c0_56] : memref<960x96xf32, #tpu.memory_space<vmem>>, vector<1x32xf32>
    %c456 = arith.constant 456 : index
    %c0_57 = arith.constant 0 : index
    %179 = vector.load %arg3[%c456, %c0_57] : memref<960x96xf32, #tpu.memory_space<vmem>>, vector<1x32xf32>
    %cst_58 = arith.constant dense<0.000000e+00> : vector<8xf32>
    %180 = vector.multi_reduction <add>, %177, %cst_58 [1] : vector<8x32xf32> to vector<8xf32>
    %181 = vector.shape_cast %180 : vector<8xf32> to vector<8x1xf32>
    %cst_59 = arith.constant 3.200000e+01 : f32
    %182 = vector.broadcast %cst_59 : f32 to vector<8x1xf32>
    %183 = arith.divf %181, %182 : vector<8x1xf32>
    %184 = vector.broadcast %183 : vector<8x1xf32> to vector<8x32xf32>
    %185 = arith.subf %177, %184 : vector<8x32xf32>
    %186 = arith.mulf %185, %185 : vector<8x32xf32>
    %cst_60 = arith.constant dense<0.000000e+00> : vector<8xf32>
    %187 = vector.multi_reduction <add>, %186, %cst_60 [1] : vector<8x32xf32> to vector<8xf32>
    %188 = vector.shape_cast %187 : vector<8xf32> to vector<8x1xf32>
    %cst_61 = arith.constant 3.200000e+01 : f32
    %189 = vector.broadcast %cst_61 : f32 to vector<8x1xf32>
    %190 = arith.divf %188, %189 : vector<8x1xf32>
    %191 = vector.broadcast %183 : vector<8x1xf32> to vector<8x32xf32>
    %192 = arith.subf %177, %191 : vector<8x32xf32>
    %cst_62 = arith.constant 9.99999974E-6 : f32
    %193 = vector.broadcast %cst_62 : f32 to vector<8x1xf32>
    %194 = arith.addf %190, %193 : vector<8x1xf32>
    %195 = math.rsqrt %194 : vector<8x1xf32>
    %196 = vector.broadcast %195 : vector<8x1xf32> to vector<8x32xf32>
    %197 = arith.mulf %192, %196 : vector<8x32xf32>
    %198 = vector.broadcast %178 : vector<1x32xf32> to vector<8x32xf32>
    %199 = arith.mulf %197, %198 : vector<8x32xf32>
    %200 = vector.broadcast %179 : vector<1x32xf32> to vector<8x32xf32>
    %201 = arith.addf %199, %200 : vector<8x32xf32>
    %c336 = arith.constant 336 : index
    %c0_63 = arith.constant 0 : index
    %202 = vector.load %arg3[%c336, %c0_63] : memref<960x96xf32, #tpu.memory_space<vmem>>, vector<32x64xf32>
    %cst_64 = arith.constant dense<0.000000e+00> : vector<8x64xf32>
    %203 = tpu.matmul %201, %202, %cst_64 {dimension_numbers = #tpu.dot_dimension_numbers<[1], [0], [0], [1], [0, 0, 1, 1], [], []>} : vector<8x32xf32>, vector<32x64xf32>, vector<8x64xf32> -> vector<8x64xf32>
    %c368 = arith.constant 368 : index
    %c0_65 = arith.constant 0 : index
    %204 = vector.load %arg3[%c368, %c0_65] : memref<960x96xf32, #tpu.memory_space<vmem>>, vector<1x64xf32>
    %205 = vector.broadcast %204 : vector<1x64xf32> to vector<8x64xf32>
    %206 = arith.addf %203, %205 : vector<8x64xf32>
    %cst_66 = arith.constant 0.000000e+00 : f32
    %207 = vector.broadcast %cst_66 : f32 to vector<8x64xf32>
    %208 = arith.maximumf %206, %207 : vector<8x64xf32>
    %c376 = arith.constant 376 : index
    %c0_67 = arith.constant 0 : index
    %209 = vector.load %arg3[%c376, %c0_67] : memref<960x96xf32, #tpu.memory_space<vmem>>, vector<64x32xf32>
    %cst_68 = arith.constant dense<0.000000e+00> : vector<8x32xf32>
    %210 = tpu.matmul %208, %209, %cst_68 {dimension_numbers = #tpu.dot_dimension_numbers<[1], [0], [0], [1], [0, 0, 1, 1], [], []>} : vector<8x64xf32>, vector<64x32xf32>, vector<8x32xf32> -> vector<8x32xf32>
    %c440 = arith.constant 440 : index
    %c0_69 = arith.constant 0 : index
    %211 = vector.load %arg3[%c440, %c0_69] : memref<960x96xf32, #tpu.memory_space<vmem>>, vector<1x32xf32>
    %212 = vector.broadcast %211 : vector<1x32xf32> to vector<8x32xf32>
    %213 = arith.addf %210, %212 : vector<8x32xf32>
    %214 = arith.addf %201, %213 : vector<8x32xf32>
    %c464 = arith.constant 464 : index
    %c0_70 = arith.constant 0 : index
    %215 = vector.load %arg3[%c464, %c0_70] : memref<960x96xf32, #tpu.memory_space<vmem>>, vector<1x32xf32>
    %c472 = arith.constant 472 : index
    %c0_71 = arith.constant 0 : index
    %216 = vector.load %arg3[%c472, %c0_71] : memref<960x96xf32, #tpu.memory_space<vmem>>, vector<1x32xf32>
    %cst_72 = arith.constant dense<0.000000e+00> : vector<8xf32>
    %217 = vector.multi_reduction <add>, %214, %cst_72 [1] : vector<8x32xf32> to vector<8xf32>
    %218 = vector.shape_cast %217 : vector<8xf32> to vector<8x1xf32>
    %cst_73 = arith.constant 3.200000e+01 : f32
    %219 = vector.broadcast %cst_73 : f32 to vector<8x1xf32>
    %220 = arith.divf %218, %219 : vector<8x1xf32>
    %221 = vector.broadcast %220 : vector<8x1xf32> to vector<8x32xf32>
    %222 = arith.subf %214, %221 : vector<8x32xf32>
    %223 = arith.mulf %222, %222 : vector<8x32xf32>
    %cst_74 = arith.constant dense<0.000000e+00> : vector<8xf32>
    %224 = vector.multi_reduction <add>, %223, %cst_74 [1] : vector<8x32xf32> to vector<8xf32>
    %225 = vector.shape_cast %224 : vector<8xf32> to vector<8x1xf32>
    %cst_75 = arith.constant 3.200000e+01 : f32
    %226 = vector.broadcast %cst_75 : f32 to vector<8x1xf32>
    %227 = arith.divf %225, %226 : vector<8x1xf32>
    %228 = vector.broadcast %220 : vector<8x1xf32> to vector<8x32xf32>
    %229 = arith.subf %214, %228 : vector<8x32xf32>
    %cst_76 = arith.constant 9.99999974E-6 : f32
    %230 = vector.broadcast %cst_76 : f32 to vector<8x1xf32>
    %231 = arith.addf %227, %230 : vector<8x1xf32>
    %232 = math.rsqrt %231 : vector<8x1xf32>
    %233 = vector.broadcast %232 : vector<8x1xf32> to vector<8x32xf32>
    %234 = arith.mulf %229, %233 : vector<8x32xf32>
    %235 = vector.broadcast %215 : vector<1x32xf32> to vector<8x32xf32>
    %236 = arith.mulf %234, %235 : vector<8x32xf32>
    %237 = vector.broadcast %216 : vector<1x32xf32> to vector<8x32xf32>
    %238 = arith.addf %236, %237 : vector<8x32xf32>
    %c496 = arith.constant 496 : index
    %c0_77 = arith.constant 0 : index
    %239 = vector.load %arg3[%c496, %c0_77] : memref<960x96xf32, #tpu.memory_space<vmem>>, vector<1x32xf32>
    %240 = vector.broadcast %239 : vector<1x32xf32> to vector<8x32xf32>
    %241 = arith.subf %238, %240 : vector<8x32xf32>
    %c504 = arith.constant 504 : index
    %c0_78 = arith.constant 0 : index
    %242 = vector.load %arg3[%c504, %c0_78] : memref<960x96xf32, #tpu.memory_space<vmem>>, vector<1x32xf32>
    %cst_79 = arith.constant 9.99999974E-6 : f32
    %243 = vector.broadcast %cst_79 : f32 to vector<1x32xf32>
    %244 = arith.addf %242, %243 : vector<1x32xf32>
    %245 = math.rsqrt %244 : vector<1x32xf32>
    %246 = vector.broadcast %245 : vector<1x32xf32> to vector<8x32xf32>
    %247 = arith.mulf %241, %246 : vector<8x32xf32>
    %c480 = arith.constant 480 : index
    %c0_80 = arith.constant 0 : index
    %248 = vector.load %arg3[%c480, %c0_80] : memref<960x96xf32, #tpu.memory_space<vmem>>, vector<1x32xf32>
    %249 = vector.broadcast %248 : vector<1x32xf32> to vector<8x32xf32>
    %250 = arith.mulf %247, %249 : vector<8x32xf32>
    %c488 = arith.constant 488 : index
    %c0_81 = arith.constant 0 : index
    %251 = vector.load %arg3[%c488, %c0_81] : memref<960x96xf32, #tpu.memory_space<vmem>>, vector<1x32xf32>
    %252 = vector.broadcast %251 : vector<1x32xf32> to vector<8x32xf32>
    %253 = arith.addf %250, %252 : vector<8x32xf32>
    %c512 = arith.constant 512 : index
    %c0_82 = arith.constant 0 : index
    %254 = vector.load %arg3[%c512, %c0_82] : memref<960x96xf32, #tpu.memory_space<vmem>>, vector<32x96xf32>
    %cst_83 = arith.constant dense<0.000000e+00> : vector<8x96xf32>
    %255 = tpu.matmul %24, %254, %cst_83 {dimension_numbers = #tpu.dot_dimension_numbers<[1], [0], [0], [1], [0, 0, 1, 1], [], []>} : vector<8x32xf32>, vector<32x96xf32>, vector<8x96xf32> -> vector<8x96xf32>
    %c544 = arith.constant 544 : index
    %c0_84 = arith.constant 0 : index
    %256 = vector.load %arg3[%c544, %c0_84] : memref<960x96xf32, #tpu.memory_space<vmem>>, vector<1x96xf32>
    %257 = vector.broadcast %256 : vector<1x96xf32> to vector<8x96xf32>
    %258 = arith.addf %255, %257 : vector<8x96xf32>
    %259 = vector.extract_strided_slice %258 {offsets = [0, 0], sizes = [8, 32], strides = [1, 1]} : vector<8x96xf32> to vector<8x32xf32>
    %260 = vector.extract_strided_slice %258 {offsets = [0, 32], sizes = [8, 32], strides = [1, 1]} : vector<8x96xf32> to vector<8x32xf32>
    %261 = vector.extract_strided_slice %258 {offsets = [0, 64], sizes = [8, 32], strides = [1, 1]} : vector<8x96xf32> to vector<8x32xf32>
    %c552 = arith.constant 552 : index
    %c0_85 = arith.constant 0 : index
    %262 = vector.load %arg3[%c552, %c0_85] : memref<960x96xf32, #tpu.memory_space<vmem>>, vector<32x32xf32>
    %c584 = arith.constant 584 : index
    %c0_86 = arith.constant 0 : index
    %263 = vector.load %arg3[%c584, %c0_86] : memref<960x96xf32, #tpu.memory_space<vmem>>, vector<1x32xf32>
    %264 = tpu.transpose %259, [1, 0] : vector<8x32xf32> -> vector<32x8xf32>
    %265 = vector.shape_cast %264 : vector<32x8xf32> to vector<4x8x8xf32>
    %266 = tpu.transpose %265, [0, 2, 1] : vector<4x8x8xf32> -> vector<4x8x8xf32>
    %267 = tpu.transpose %260, [1, 0] : vector<8x32xf32> -> vector<32x8xf32>
    %268 = vector.shape_cast %267 : vector<32x8xf32> to vector<4x8x8xf32>
    %269 = tpu.transpose %268, [0, 2, 1] : vector<4x8x8xf32> -> vector<4x8x8xf32>
    %270 = tpu.transpose %261, [1, 0] : vector<8x32xf32> -> vector<32x8xf32>
    %271 = vector.shape_cast %270 : vector<32x8xf32> to vector<4x8x8xf32>
    %272 = tpu.transpose %271, [0, 2, 1] : vector<4x8x8xf32> -> vector<4x8x8xf32>
    "tpu.trace_start"() <{level = 10 : i32, message = "hqe,hke->hqk"}> : () -> ()
    %cst_87 = arith.constant dense<0.000000e+00> : vector<4x8x8xf32>
    %273 = tpu.matmul %266, %269, %cst_87 {dimension_numbers = #tpu.dot_dimension_numbers<[2], [2], [1], [1], [0, 0, 0, 1, 1, 1], [0], [0]>} : vector<4x8x8xf32>, vector<4x8x8xf32>, vector<4x8x8xf32> -> vector<4x8x8xf32>
    "tpu.trace_stop"() : () -> ()
    %cst_88 = arith.constant 0.353553385 : f32
    %274 = vector.broadcast %cst_88 : f32 to vector<4x8x8xf32>
    %275 = arith.mulf %273, %274 : vector<4x8x8xf32>
    %276 = tpu.iota {dimensions = array<i32: 0>} : vector<8x8xi32>
    %277 = tpu.iota {dimensions = array<i32: 1>} : vector<8x8xi32>
    %278 = arith.cmpi sgt, %277, %276 : vector<8x8xi32>
    %279 = vector.shape_cast %278 : vector<8x8xi1> to vector<1x8x8xi1>
    %cst_89 = arith.constant -1.000000e+30 : f32
    %280 = vector.shape_cast %279 : vector<1x8x8xi1> to vector<1x8x8xi1>
    %281 = vector.broadcast %280 : vector<1x8x8xi1> to vector<4x8x8xi1>
    %282 = vector.broadcast %cst_89 : f32 to vector<4x8x8xf32>
    %283 = arith.select %281, %282, %275 : vector<4x8x8xi1>, vector<4x8x8xf32>
    %cst_90 = arith.constant dense<0xFF800000> : vector<4x8xf32>
    %284 = vector.multi_reduction <maximumf>, %283, %cst_90 [2] : vector<4x8x8xf32> to vector<4x8xf32>
    %285 = vector.shape_cast %284 : vector<4x8xf32> to vector<4x8x1xf32>
    %286 = vector.broadcast %285 : vector<4x8x1xf32> to vector<4x8x8xf32>
    %287 = arith.subf %283, %286 : vector<4x8x8xf32>
    %288 = math.exp %287 : vector<4x8x8xf32>
    %cst_91 = arith.constant dense<0.000000e+00> : vector<4x8xf32>
    %289 = vector.multi_reduction <add>, %288, %cst_91 [2] : vector<4x8x8xf32> to vector<4x8xf32>
    %290 = vector.shape_cast %289 : vector<4x8xf32> to vector<4x8x1xf32>
    %291 = tpu.reciprocal %290 {approx = true} : vector<4x8x1xf32> -> vector<4x8x1xf32>
    %292 = vector.broadcast %291 : vector<4x8x1xf32> to vector<4x8x8xf32>
    %293 = arith.mulf %288, %292 : vector<4x8x8xf32>
    "tpu.trace_start"() <{level = 10 : i32, message = "hqk,hke->hqe"}> : () -> ()
    %cst_92 = arith.constant dense<0.000000e+00> : vector<4x8x8xf32>
    %294 = tpu.matmul %293, %272, %cst_92 {dimension_numbers = #tpu.dot_dimension_numbers<[2], [1], [1], [2], [0, 0, 0, 1, 1, 2], [0], [0]>} : vector<4x8x8xf32>, vector<4x8x8xf32>, vector<4x8x8xf32> -> vector<4x8x8xf32>
    "tpu.trace_stop"() : () -> ()
    %295 = vector.extract_strided_slice %294 {offsets = [0, 0, 0], sizes = [1, 8, 8], strides = [1, 1, 1]} : vector<4x8x8xf32> to vector<1x8x8xf32>
    %296 = vector.shape_cast %295 : vector<1x8x8xf32> to vector<8x8xf32>
    %297 = vector.extract_strided_slice %294 {offsets = [1, 0, 0], sizes = [1, 8, 8], strides = [1, 1, 1]} : vector<4x8x8xf32> to vector<1x8x8xf32>
    %298 = vector.shape_cast %297 : vector<1x8x8xf32> to vector<8x8xf32>
    %299 = vector.extract_strided_slice %294 {offsets = [2, 0, 0], sizes = [1, 8, 8], strides = [1, 1, 1]} : vector<4x8x8xf32> to vector<1x8x8xf32>
    %300 = vector.shape_cast %299 : vector<1x8x8xf32> to vector<8x8xf32>
    %301 = vector.extract_strided_slice %294 {offsets = [3, 0, 0], sizes = [1, 8, 8], strides = [1, 1, 1]} : vector<4x8x8xf32> to vector<1x8x8xf32>
    %302 = vector.shape_cast %301 : vector<1x8x8xf32> to vector<8x8xf32>
    %303 = tpu.concatenate %296, %298, %300, %302 in 1 : vector<8x8xf32>, vector<8x8xf32>, vector<8x8xf32>, vector<8x8xf32> -> vector<8x32xf32>
    %cst_93 = arith.constant dense<0.000000e+00> : vector<8x32xf32>
    %304 = tpu.matmul %303, %262, %cst_93 {dimension_numbers = #tpu.dot_dimension_numbers<[1], [0], [0], [1], [0, 0, 1, 1], [], []>} : vector<8x32xf32>, vector<32x32xf32>, vector<8x32xf32> -> vector<8x32xf32>
    %305 = vector.broadcast %263 : vector<1x32xf32> to vector<8x32xf32>
    %306 = arith.addf %304, %305 : vector<8x32xf32>
    %307 = arith.addf %24, %306 : vector<8x32xf32>
    %c824 = arith.constant 824 : index
    %c0_94 = arith.constant 0 : index
    %308 = vector.load %arg3[%c824, %c0_94] : memref<960x96xf32, #tpu.memory_space<vmem>>, vector<1x32xf32>
    %c832 = arith.constant 832 : index
    %c0_95 = arith.constant 0 : index
    %309 = vector.load %arg3[%c832, %c0_95] : memref<960x96xf32, #tpu.memory_space<vmem>>, vector<1x32xf32>
    %cst_96 = arith.constant dense<0.000000e+00> : vector<8xf32>
    %310 = vector.multi_reduction <add>, %307, %cst_96 [1] : vector<8x32xf32> to vector<8xf32>
    %311 = vector.shape_cast %310 : vector<8xf32> to vector<8x1xf32>
    %cst_97 = arith.constant 3.200000e+01 : f32
    %312 = vector.broadcast %cst_97 : f32 to vector<8x1xf32>
    %313 = arith.divf %311, %312 : vector<8x1xf32>
    %314 = vector.broadcast %313 : vector<8x1xf32> to vector<8x32xf32>
    %315 = arith.subf %307, %314 : vector<8x32xf32>
    %316 = arith.mulf %315, %315 : vector<8x32xf32>
    %cst_98 = arith.constant dense<0.000000e+00> : vector<8xf32>
    %317 = vector.multi_reduction <add>, %316, %cst_98 [1] : vector<8x32xf32> to vector<8xf32>
    %318 = vector.shape_cast %317 : vector<8xf32> to vector<8x1xf32>
    %cst_99 = arith.constant 3.200000e+01 : f32
    %319 = vector.broadcast %cst_99 : f32 to vector<8x1xf32>
    %320 = arith.divf %318, %319 : vector<8x1xf32>
    %321 = vector.broadcast %313 : vector<8x1xf32> to vector<8x32xf32>
    %322 = arith.subf %307, %321 : vector<8x32xf32>
    %cst_100 = arith.constant 9.99999974E-6 : f32
    %323 = vector.broadcast %cst_100 : f32 to vector<8x1xf32>
    %324 = arith.addf %320, %323 : vector<8x1xf32>
    %325 = math.rsqrt %324 : vector<8x1xf32>
    %326 = vector.broadcast %325 : vector<8x1xf32> to vector<8x32xf32>
    %327 = arith.mulf %322, %326 : vector<8x32xf32>
    %328 = vector.broadcast %308 : vector<1x32xf32> to vector<8x32xf32>
    %329 = arith.mulf %327, %328 : vector<8x32xf32>
    %330 = vector.broadcast %309 : vector<1x32xf32> to vector<8x32xf32>
    %331 = arith.addf %329, %330 : vector<8x32xf32>
    %c592 = arith.constant 592 : index
    %c0_101 = arith.constant 0 : index
    %332 = vector.load %arg3[%c592, %c0_101] : memref<960x96xf32, #tpu.memory_space<vmem>>, vector<32x32xf32>
    %cst_102 = arith.constant dense<0.000000e+00> : vector<8x32xf32>
    %333 = tpu.matmul %331, %332, %cst_102 {dimension_numbers = #tpu.dot_dimension_numbers<[1], [0], [0], [1], [0, 0, 1, 1], [], []>} : vector<8x32xf32>, vector<32x32xf32>, vector<8x32xf32> -> vector<8x32xf32>
    %c624 = arith.constant 624 : index
    %c0_103 = arith.constant 0 : index
    %334 = vector.load %arg3[%c624, %c0_103] : memref<960x96xf32, #tpu.memory_space<vmem>>, vector<1x32xf32>
    %335 = vector.broadcast %334 : vector<1x32xf32> to vector<8x32xf32>
    %336 = arith.addf %333, %335 : vector<8x32xf32>
    %c632 = arith.constant 632 : index
    %c0_104 = arith.constant 0 : index
    %337 = vector.load %arg3[%c632, %c0_104] : memref<960x96xf32, #tpu.memory_space<vmem>>, vector<32x64xf32>
    %cst_105 = arith.constant dense<0.000000e+00> : vector<8x64xf32>
    %338 = tpu.matmul %253, %337, %cst_105 {dimension_numbers = #tpu.dot_dimension_numbers<[1], [0], [0], [1], [0, 0, 1, 1], [], []>} : vector<8x32xf32>, vector<32x64xf32>, vector<8x64xf32> -> vector<8x64xf32>
    %c664 = arith.constant 664 : index
    %c0_106 = arith.constant 0 : index
    %339 = vector.load %arg3[%c664, %c0_106] : memref<960x96xf32, #tpu.memory_space<vmem>>, vector<1x64xf32>
    %340 = vector.broadcast %339 : vector<1x64xf32> to vector<8x64xf32>
    %341 = arith.addf %338, %340 : vector<8x64xf32>
    %342 = vector.extract_strided_slice %341 {offsets = [0, 0], sizes = [8, 32], strides = [1, 1]} : vector<8x64xf32> to vector<8x32xf32>
    %343 = vector.extract_strided_slice %341 {offsets = [0, 32], sizes = [8, 32], strides = [1, 1]} : vector<8x64xf32> to vector<8x32xf32>
    %c672 = arith.constant 672 : index
    %c0_107 = arith.constant 0 : index
    %344 = vector.load %arg3[%c672, %c0_107] : memref<960x96xf32, #tpu.memory_space<vmem>>, vector<32x32xf32>
    %c704 = arith.constant 704 : index
    %c0_108 = arith.constant 0 : index
    %345 = vector.load %arg3[%c704, %c0_108] : memref<960x96xf32, #tpu.memory_space<vmem>>, vector<1x32xf32>
    %346 = tpu.transpose %336, [1, 0] : vector<8x32xf32> -> vector<32x8xf32>
    %347 = vector.shape_cast %346 : vector<32x8xf32> to vector<4x8x8xf32>
    %348 = tpu.transpose %347, [0, 2, 1] : vector<4x8x8xf32> -> vector<4x8x8xf32>
    %349 = tpu.transpose %342, [1, 0] : vector<8x32xf32> -> vector<32x8xf32>
    %350 = vector.shape_cast %349 : vector<32x8xf32> to vector<4x8x8xf32>
    %351 = tpu.transpose %350, [0, 2, 1] : vector<4x8x8xf32> -> vector<4x8x8xf32>
    %352 = tpu.transpose %343, [1, 0] : vector<8x32xf32> -> vector<32x8xf32>
    %353 = vector.shape_cast %352 : vector<32x8xf32> to vector<4x8x8xf32>
    %354 = tpu.transpose %353, [0, 2, 1] : vector<4x8x8xf32> -> vector<4x8x8xf32>
    "tpu.trace_start"() <{level = 10 : i32, message = "hqe,hke->hqk"}> : () -> ()
    %cst_109 = arith.constant dense<0.000000e+00> : vector<4x8x8xf32>
    %355 = tpu.matmul %348, %351, %cst_109 {dimension_numbers = #tpu.dot_dimension_numbers<[2], [2], [1], [1], [0, 0, 0, 1, 1, 1], [0], [0]>} : vector<4x8x8xf32>, vector<4x8x8xf32>, vector<4x8x8xf32> -> vector<4x8x8xf32>
    "tpu.trace_stop"() : () -> ()
    %cst_110 = arith.constant 0.353553385 : f32
    %356 = vector.broadcast %cst_110 : f32 to vector<4x8x8xf32>
    %357 = arith.mulf %355, %356 : vector<4x8x8xf32>
    %cst_111 = arith.constant dense<0xFF800000> : vector<4x8xf32>
    %358 = vector.multi_reduction <maximumf>, %357, %cst_111 [2] : vector<4x8x8xf32> to vector<4x8xf32>
    %359 = vector.shape_cast %358 : vector<4x8xf32> to vector<4x8x1xf32>
    %360 = vector.broadcast %359 : vector<4x8x1xf32> to vector<4x8x8xf32>
    %361 = arith.subf %357, %360 : vector<4x8x8xf32>
    %362 = math.exp %361 : vector<4x8x8xf32>
    %cst_112 = arith.constant dense<0.000000e+00> : vector<4x8xf32>
    %363 = vector.multi_reduction <add>, %362, %cst_112 [2] : vector<4x8x8xf32> to vector<4x8xf32>
    %364 = vector.shape_cast %363 : vector<4x8xf32> to vector<4x8x1xf32>
    %365 = tpu.reciprocal %364 {approx = true} : vector<4x8x1xf32> -> vector<4x8x1xf32>
    %366 = vector.broadcast %365 : vector<4x8x1xf32> to vector<4x8x8xf32>
    %367 = arith.mulf %362, %366 : vector<4x8x8xf32>
    "tpu.trace_start"() <{level = 10 : i32, message = "hqk,hke->hqe"}> : () -> ()
    %cst_113 = arith.constant dense<0.000000e+00> : vector<4x8x8xf32>
    %368 = tpu.matmul %367, %354, %cst_113 {dimension_numbers = #tpu.dot_dimension_numbers<[2], [1], [1], [2], [0, 0, 0, 1, 1, 2], [0], [0]>} : vector<4x8x8xf32>, vector<4x8x8xf32>, vector<4x8x8xf32> -> vector<4x8x8xf32>
    "tpu.trace_stop"() : () -> ()
    %369 = vector.extract_strided_slice %368 {offsets = [0, 0, 0], sizes = [1, 8, 8], strides = [1, 1, 1]} : vector<4x8x8xf32> to vector<1x8x8xf32>
    %370 = vector.shape_cast %369 : vector<1x8x8xf32> to vector<8x8xf32>
    %371 = vector.extract_strided_slice %368 {offsets = [1, 0, 0], sizes = [1, 8, 8], strides = [1, 1, 1]} : vector<4x8x8xf32> to vector<1x8x8xf32>
    %372 = vector.shape_cast %371 : vector<1x8x8xf32> to vector<8x8xf32>
    %373 = vector.extract_strided_slice %368 {offsets = [2, 0, 0], sizes = [1, 8, 8], strides = [1, 1, 1]} : vector<4x8x8xf32> to vector<1x8x8xf32>
    %374 = vector.shape_cast %373 : vector<1x8x8xf32> to vector<8x8xf32>
    %375 = vector.extract_strided_slice %368 {offsets = [3, 0, 0], sizes = [1, 8, 8], strides = [1, 1, 1]} : vector<4x8x8xf32> to vector<1x8x8xf32>
    %376 = vector.shape_cast %375 : vector<1x8x8xf32> to vector<8x8xf32>
    %377 = tpu.concatenate %370, %372, %374, %376 in 1 : vector<8x8xf32>, vector<8x8xf32>, vector<8x8xf32>, vector<8x8xf32> -> vector<8x32xf32>
    %cst_114 = arith.constant dense<0.000000e+00> : vector<8x32xf32>
    %378 = tpu.matmul %377, %344, %cst_114 {dimension_numbers = #tpu.dot_dimension_numbers<[1], [0], [0], [1], [0, 0, 1, 1], [], []>} : vector<8x32xf32>, vector<32x32xf32>, vector<8x32xf32> -> vector<8x32xf32>
    %379 = vector.broadcast %345 : vector<1x32xf32> to vector<8x32xf32>
    %380 = arith.addf %378, %379 : vector<8x32xf32>
    %381 = arith.addf %331, %380 : vector<8x32xf32>
    %c840 = arith.constant 840 : index
    %c0_115 = arith.constant 0 : index
    %382 = vector.load %arg3[%c840, %c0_115] : memref<960x96xf32, #tpu.memory_space<vmem>>, vector<1x32xf32>
    %c848 = arith.constant 848 : index
    %c0_116 = arith.constant 0 : index
    %383 = vector.load %arg3[%c848, %c0_116] : memref<960x96xf32, #tpu.memory_space<vmem>>, vector<1x32xf32>
    %cst_117 = arith.constant dense<0.000000e+00> : vector<8xf32>
    %384 = vector.multi_reduction <add>, %381, %cst_117 [1] : vector<8x32xf32> to vector<8xf32>
    %385 = vector.shape_cast %384 : vector<8xf32> to vector<8x1xf32>
    %cst_118 = arith.constant 3.200000e+01 : f32
    %386 = vector.broadcast %cst_118 : f32 to vector<8x1xf32>
    %387 = arith.divf %385, %386 : vector<8x1xf32>
    %388 = vector.broadcast %387 : vector<8x1xf32> to vector<8x32xf32>
    %389 = arith.subf %381, %388 : vector<8x32xf32>
    %390 = arith.mulf %389, %389 : vector<8x32xf32>
    %cst_119 = arith.constant dense<0.000000e+00> : vector<8xf32>
    %391 = vector.multi_reduction <add>, %390, %cst_119 [1] : vector<8x32xf32> to vector<8xf32>
    %392 = vector.shape_cast %391 : vector<8xf32> to vector<8x1xf32>
    %cst_120 = arith.constant 3.200000e+01 : f32
    %393 = vector.broadcast %cst_120 : f32 to vector<8x1xf32>
    %394 = arith.divf %392, %393 : vector<8x1xf32>
    %395 = vector.broadcast %387 : vector<8x1xf32> to vector<8x32xf32>
    %396 = arith.subf %381, %395 : vector<8x32xf32>
    %cst_121 = arith.constant 9.99999974E-6 : f32
    %397 = vector.broadcast %cst_121 : f32 to vector<8x1xf32>
    %398 = arith.addf %394, %397 : vector<8x1xf32>
    %399 = math.rsqrt %398 : vector<8x1xf32>
    %400 = vector.broadcast %399 : vector<8x1xf32> to vector<8x32xf32>
    %401 = arith.mulf %396, %400 : vector<8x32xf32>
    %402 = vector.broadcast %382 : vector<1x32xf32> to vector<8x32xf32>
    %403 = arith.mulf %401, %402 : vector<8x32xf32>
    %404 = vector.broadcast %383 : vector<1x32xf32> to vector<8x32xf32>
    %405 = arith.addf %403, %404 : vector<8x32xf32>
    %c712 = arith.constant 712 : index
    %c0_122 = arith.constant 0 : index
    %406 = vector.load %arg3[%c712, %c0_122] : memref<960x96xf32, #tpu.memory_space<vmem>>, vector<32x64xf32>
    %cst_123 = arith.constant dense<0.000000e+00> : vector<8x64xf32>
    %407 = tpu.matmul %405, %406, %cst_123 {dimension_numbers = #tpu.dot_dimension_numbers<[1], [0], [0], [1], [0, 0, 1, 1], [], []>} : vector<8x32xf32>, vector<32x64xf32>, vector<8x64xf32> -> vector<8x64xf32>
    %c744 = arith.constant 744 : index
    %c0_124 = arith.constant 0 : index
    %408 = vector.load %arg3[%c744, %c0_124] : memref<960x96xf32, #tpu.memory_space<vmem>>, vector<1x64xf32>
    %409 = vector.broadcast %408 : vector<1x64xf32> to vector<8x64xf32>
    %410 = arith.addf %407, %409 : vector<8x64xf32>
    %cst_125 = arith.constant 0.000000e+00 : f32
    %411 = vector.broadcast %cst_125 : f32 to vector<8x64xf32>
    %412 = arith.maximumf %410, %411 : vector<8x64xf32>
    %c752 = arith.constant 752 : index
    %c0_126 = arith.constant 0 : index
    %413 = vector.load %arg3[%c752, %c0_126] : memref<960x96xf32, #tpu.memory_space<vmem>>, vector<64x32xf32>
    %cst_127 = arith.constant dense<0.000000e+00> : vector<8x32xf32>
    %414 = tpu.matmul %412, %413, %cst_127 {dimension_numbers = #tpu.dot_dimension_numbers<[1], [0], [0], [1], [0, 0, 1, 1], [], []>} : vector<8x64xf32>, vector<64x32xf32>, vector<8x32xf32> -> vector<8x32xf32>
    %c816 = arith.constant 816 : index
    %c0_128 = arith.constant 0 : index
    %415 = vector.load %arg3[%c816, %c0_128] : memref<960x96xf32, #tpu.memory_space<vmem>>, vector<1x32xf32>
    %416 = vector.broadcast %415 : vector<1x32xf32> to vector<8x32xf32>
    %417 = arith.addf %414, %416 : vector<8x32xf32>
    %418 = arith.addf %405, %417 : vector<8x32xf32>
    %c856 = arith.constant 856 : index
    %c0_129 = arith.constant 0 : index
    %419 = vector.load %arg3[%c856, %c0_129] : memref<960x96xf32, #tpu.memory_space<vmem>>, vector<1x32xf32>
    %c864 = arith.constant 864 : index
    %c0_130 = arith.constant 0 : index
    %420 = vector.load %arg3[%c864, %c0_130] : memref<960x96xf32, #tpu.memory_space<vmem>>, vector<1x32xf32>
    %cst_131 = arith.constant dense<0.000000e+00> : vector<8xf32>
    %421 = vector.multi_reduction <add>, %418, %cst_131 [1] : vector<8x32xf32> to vector<8xf32>
    %422 = vector.shape_cast %421 : vector<8xf32> to vector<8x1xf32>
    %cst_132 = arith.constant 3.200000e+01 : f32
    %423 = vector.broadcast %cst_132 : f32 to vector<8x1xf32>
    %424 = arith.divf %422, %423 : vector<8x1xf32>
    %425 = vector.broadcast %424 : vector<8x1xf32> to vector<8x32xf32>
    %426 = arith.subf %418, %425 : vector<8x32xf32>
    %427 = arith.mulf %426, %426 : vector<8x32xf32>
    %cst_133 = arith.constant dense<0.000000e+00> : vector<8xf32>
    %428 = vector.multi_reduction <add>, %427, %cst_133 [1] : vector<8x32xf32> to vector<8xf32>
    %429 = vector.shape_cast %428 : vector<8xf32> to vector<8x1xf32>
    %cst_134 = arith.constant 3.200000e+01 : f32
    %430 = vector.broadcast %cst_134 : f32 to vector<8x1xf32>
    %431 = arith.divf %429, %430 : vector<8x1xf32>
    %432 = vector.broadcast %424 : vector<8x1xf32> to vector<8x32xf32>
    %433 = arith.subf %418, %432 : vector<8x32xf32>
    %cst_135 = arith.constant 9.99999974E-6 : f32
    %434 = vector.broadcast %cst_135 : f32 to vector<8x1xf32>
    %435 = arith.addf %431, %434 : vector<8x1xf32>
    %436 = math.rsqrt %435 : vector<8x1xf32>
    %437 = vector.broadcast %436 : vector<8x1xf32> to vector<8x32xf32>
    %438 = arith.mulf %433, %437 : vector<8x32xf32>
    %439 = vector.broadcast %419 : vector<1x32xf32> to vector<8x32xf32>
    %440 = arith.mulf %438, %439 : vector<8x32xf32>
    %441 = vector.broadcast %420 : vector<1x32xf32> to vector<8x32xf32>
    %442 = arith.addf %440, %441 : vector<8x32xf32>
    %c888 = arith.constant 888 : index
    %c0_136 = arith.constant 0 : index
    %443 = vector.load %arg3[%c888, %c0_136] : memref<960x96xf32, #tpu.memory_space<vmem>>, vector<1x32xf32>
    %444 = vector.broadcast %443 : vector<1x32xf32> to vector<8x32xf32>
    %445 = arith.subf %442, %444 : vector<8x32xf32>
    %c896 = arith.constant 896 : index
    %c0_137 = arith.constant 0 : index
    %446 = vector.load %arg3[%c896, %c0_137] : memref<960x96xf32, #tpu.memory_space<vmem>>, vector<1x32xf32>
    %cst_138 = arith.constant 9.99999974E-6 : f32
    %447 = vector.broadcast %cst_138 : f32 to vector<1x32xf32>
    %448 = arith.addf %446, %447 : vector<1x32xf32>
    %449 = math.rsqrt %448 : vector<1x32xf32>
    %450 = vector.broadcast %449 : vector<1x32xf32> to vector<8x32xf32>
    %451 = arith.mulf %445, %450 : vector<8x32xf32>
    %c872 = arith.constant 872 : index
    %c0_139 = arith.constant 0 : index
    %452 = vector.load %arg3[%c872, %c0_139] : memref<960x96xf32, #tpu.memory_space<vmem>>, vector<1x32xf32>
    %453 = vector.broadcast %452 : vector<1x32xf32> to vector<8x32xf32>
    %454 = arith.mulf %451, %453 : vector<8x32xf32>
    %c880 = arith.constant 880 : index
    %c0_140 = arith.constant 0 : index
    %455 = vector.load %arg3[%c880, %c0_140] : memref<960x96xf32, #tpu.memory_space<vmem>>, vector<1x32xf32>
    %456 = vector.broadcast %455 : vector<1x32xf32> to vector<8x32xf32>
    %457 = arith.addf %454, %456 : vector<8x32xf32>
    %c904 = arith.constant 904 : index
    %c0_141 = arith.constant 0 : index
    %458 = vector.load %arg3[%c904, %c0_141] : memref<960x96xf32, #tpu.memory_space<vmem>>, vector<32x4xf32>
    %cst_142 = arith.constant dense<0.000000e+00> : vector<8x4xf32>
    %459 = tpu.matmul %457, %458, %cst_142 {dimension_numbers = #tpu.dot_dimension_numbers<[1], [0], [0], [1], [0, 0, 1, 1], [], []>} : vector<8x32xf32>, vector<32x4xf32>, vector<8x4xf32> -> vector<8x4xf32>
    %c936 = arith.constant 936 : index
    %c0_143 = arith.constant 0 : index
    %460 = vector.load %arg3[%c936, %c0_143] : memref<960x96xf32, #tpu.memory_space<vmem>>, vector<1x4xf32>
    %461 = vector.broadcast %460 : vector<1x4xf32> to vector<8x4xf32>
    %462 = arith.addf %459, %461 : vector<8x4xf32>
    %c944 = arith.constant 944 : index
    %c0_144 = arith.constant 0 : index
    %463 = vector.load %arg3[%c944, %c0_144] : memref<960x96xf32, #tpu.memory_space<vmem>>, vector<4x8xf32>
    %cst_145 = arith.constant dense<0.000000e+00> : vector<4x4xf32>
    %464 = tpu.matmul %463, %462, %cst_145 {dimension_numbers = #tpu.dot_dimension_numbers<[1], [0], [0], [1], [0, 0, 1, 1], [], []>} : vector<4x8xf32>, vector<8x4xf32>, vector<4x4xf32> -> vector<4x4xf32>
    %c952 = arith.constant 952 : index
    %c0_146 = arith.constant 0 : index
    %465 = vector.load %arg3[%c952, %c0_146] : memref<960x96xf32, #tpu.memory_space<vmem>>, vector<4x1xf32>
    %466 = vector.broadcast %465 : vector<4x1xf32> to vector<4x4xf32>
    %467 = arith.addf %464, %466 : vector<4x4xf32>
    %c0_147 = arith.constant 0 : index
    %c0_148 = arith.constant 0 : index
    %c0_149 = arith.constant 0 : index
    %468 = vector.load %arg4[%c0_147, %c0_148, %c0_149] : memref<1x4x4xf32, #tpu.memory_space<vmem>>, vector<1x4x4xf32>
    %469 = vector.shape_cast %468 : vector<1x4x4xf32> to vector<4x4xf32>
    %470 = vector.shape_cast %467 : vector<4x4xf32> to vector<1x4x4xf32>
    tpu.vector_store %arg4[%c0_147, %c0_148, %c0_149], %470 {strides = array<i32>} : memref<1x4x4xf32, #tpu.memory_space<vmem>>, vector<1x4x4xf32>,
    return
  }
  func.func @transform_0(%arg0: i32) -> (i32, i32, i32) {
    %c0_i32 = arith.constant 0 : i32
    %c0_i32_0 = arith.constant 0 : i32
    %c0_i32_1 = arith.constant 0 : i32
    return %arg0, %c0_i32, %c0_i32_0 : i32, i32, i32
  }
  func.func @transform_1(%arg0: i32) -> (i32, i32, i32) {
    %c0_i32 = arith.constant 0 : i32
    %c0_i32_0 = arith.constant 0 : i32
    %c0_i32_1 = arith.constant 0 : i32
    return %arg0, %c0_i32, %c0_i32_0 : i32, i32, i32
  }
  func.func @transform_2(%arg0: i32) -> (i32, i32) {
    %c0_i32 = arith.constant 0 : i32
    %c0_i32_0 = arith.constant 0 : i32
    %c0_i32_1 = arith.constant 0 : i32
    return %c0_i32, %c0_i32_0 : i32, i32
  }
  func.func @transform_3(%arg0: i32) -> (i32, i32, i32) {
    %c0_i32 = arith.constant 0 : i32
    %c0_i32_0 = arith.constant 0 : i32
    %c0_i32_1 = arith.constant 0 : i32
    return %arg0, %c0_i32, %c0_i32_0 : i32, i32, i32
  }
}

</mosaic_0001>

<llo_original>
// kernel: t2v_transformer_forward.1
$region0: #{t2v_transformer_forward.1}
  #allocation0 [shape = 'u32[]', space=smem, size = 0x4, offset = 0x4, fixed_abs, tag = 'smem constant byte address 0x4 - core index']
  #allocation1 [shape = 'u32[144,128]{1,0:T(1,128)}', space=vmem, size = 0x12000, scoped, tag = 'internal scratch']
  %s0 = inlined_call_operand.vmem [shape: f32[2,8,4], index: 0, kind: input, shape index: {}]
  %s1 = inlined_call_operand.vmem [shape: f32[2,8,5], index: 1, kind: input, shape index: {}]
  %s2 = inlined_call_operand.vmem [shape: f32[960,96], index: 2, kind: input, shape index: {}]
  %s3 = inlined_call_operand.hbm [shape: f32[2,4,4], index: 3, kind: output, shape index: {}]
  %s4 = sld [smem:[#allocation0]]
  $region45: #{t2v_transformer_forward.1} parent=0
    _
  %s6 = ssub.s32 1, %s4
  %s7 = scalar_select 0, %s6, %s4
  $region1: #{t2v_transformer_forward.1} parent=0
    #allocation2 [shape = 'u8[4096]{0}', space=vmem, size = 0x1000, scoped, tag = 'output window, operand 0']
    #allocation3 [shape = 's32[2]{0}', space=sflag, size = 0x8, scoped, tag = 'scoped memory for t2v_transformer_forward.1']
    %8 = vsyncpa [#allocation3], 0
    %s9 = scalar_lea.sflag [#allocation3], 1
    %10 = vsyncpa %s9, 0
    loop: start=0, step=1, limit=4
    $region2: #{t2v_transformer_forward.1} parent=1 // loop_pre_header
      _
    $region3: #{t2v_transformer_forward.1} parent=1 // loop_header
      %s12 = sphi 0, %s16
      %p13 = scmp.ge.s32.totalorder %s12, 4
      %s22 = sphi 0, %s24
      %s25 = sphi 0, %s22
      %s26 = sphi 0, %s25
      %s42 = sphi 0, %s26
      %s48 = sphi 0, %s50
      %s51 = sphi 0, %s48
      %s52 = sphi 0, %s51
      %s68 = sphi 0, %s52
      %s72 = sphi 0, %s72
      %s74 = sphi 0, %s72
      %s75 = sphi 0, %s74
      %s89 = sphi 0, %s75
      %s95 = sphi 0, %s97
      %s98 = sphi 0, %s95
      %s99 = sphi 0, %s98
      %s115 = sphi 0, %s99
    $region4: #{t2v_transformer_forward.1} parent=1 // loop_header_branch
      %15 = sbr.rel (%p13) target = $region8
    $region5: #{t2v_transformer_forward.1} parent=1 // loop_body
      %s17 = ssub.s32 %s12, 1
      %s18 = ssub.s32 %s12, 2
      %s19 = sadd.s32 %s12, 1
      %s20 = ssub.s32 %s12, %s19
      %p21 = scmp.eq.s32.totalorder %s20, 0
      %s23 = sadd.s32 %s22, 1
      %s24 = scalar_select %p21, %s22, %s23
      %p27 = pneg %p21
      %p28 = scmp.eq.s32.totalorder %s12, 1
      %p29 = por %p27, %p28
      %p30 = scmp.ne.s32.totalorder %s22, %s25
      %p31 = scmp.eq.s32.totalorder %s12, 0
      %p32 = por %p30, %p31
      %p33 = scmp.ne.s32.totalorder %s22, %s25
      %p34 = scmp.eq.s32.totalorder %s17, 1
      %p35 = por %p33, %p34
      %p36 = scmp.ne.s32.totalorder %s25, %s26
      %p37 = scmp.eq.s32.totalorder %s17, 0
      %p38 = por %p36, %p37
      %p39 = scmp.ne.s32.totalorder %s25, %s26
      %p40 = scmp.eq.s32.totalorder %s18, 1
      %p41 = por %p39, %p40
      %p43 = scmp.ne.s32.totalorder %s26, %s42
      %p44 = scmp.eq.s32.totalorder %s18, 0
      %p45 = por %p43, %p44
      %s46 = ssub.s32 %s12, %s19
      %p47 = scmp.eq.s32.totalorder %s46, 0
      %s49 = sadd.s32 %s48, 1
      %s50 = scalar_select %p47, %s48, %s49
      %p53 = pneg %p47
      %p54 = scmp.eq.s32.totalorder %s12, 1
      %p55 = por %p53, %p54
      %p56 = scmp.ne.s32.totalorder %s48, %s51
      %p57 = scmp.eq.s32.totalorder %s12, 0
      %p58 = por %p56, %p57
      %p59 = scmp.ne.s32.totalorder %s48, %s51
      %p60 = scmp.eq.s32.totalorder %s17, 1
      %p61 = por %p59, %p60
      %p62 = scmp.ne.s32.totalorder %s51, %s52
      %p63 = scmp.eq.s32.totalorder %s17, 0
      %p64 = por %p62, %p63
      %p65 = scmp.ne.s32.totalorder %s51, %s52
      %p66 = scmp.eq.s32.totalorder %s18, 1
      %p67 = por %p65, %p66
      %p69 = scmp.ne.s32.totalorder %s52, %s68
      %p70 = scmp.eq.s32.totalorder %s18, 0
      %p71 = por %p69, %p70
      %s73 = sadd.s32 %s72, 1
      %p76 = scmp.eq.s32.totalorder %s12, 1
      %p77 = scmp.ne.s32.totalorder %s72, %s74
      %p78 = scmp.eq.s32.totalorder %s12, 0
      %p79 = por %p77, %p78
      %p80 = scmp.ne.s32.totalorder %s72, %s74
      %p81 = scmp.eq.s32.totalorder %s17, 1
      %p82 = por %p80, %p81
      %p83 = scmp.ne.s32.totalorder %s74, %s75
      %p84 = scmp.eq.s32.totalorder %s17, 0
      %p85 = por %p83, %p84
      %p86 = scmp.ne.s32.totalorder %s74, %s75
      %p87 = scmp.eq.s32.totalorder %s18, 1
      %p88 = por %p86, %p87
      %p90 = scmp.ne.s32.totalorder %s75, %s89
      %p91 = scmp.eq.s32.totalorder %s18, 0
      %p92 = por %p90, %p91
      %s93 = ssub.s32 %s12, %s19
      %p94 = scmp.eq.s32.totalorder %s93, 0
      %s96 = sadd.s32 %s95, 1
      %s97 = scalar_select %p94, %s95, %s96
      %p100 = pneg %p94
      %p101 = scmp.eq.s32.totalorder %s12, 1
      %p102 = por %p100, %p101
      %p103 = scmp.ne.s32.totalorder %s95, %s98
      %p104 = scmp.eq.s32.totalorder %s12, 0
      %p105 = por %p103, %p104
      %p106 = scmp.ne.s32.totalorder %s95, %s98
      %p107 = scmp.eq.s32.totalorder %s17, 1
      %p108 = por %p106, %p107
      %p109 = scmp.ne.s32.totalorder %s98, %s99
      %p110 = scmp.eq.s32.totalorder %s17, 0
      %p111 = por %p109, %p110
      %p112 = scmp.ne.s32.totalorder %s98, %s99
      %p113 = scmp.eq.s32.totalorder %s18, 1
      %p114 = por %p112, %p113
      %p116 = scmp.ne.s32.totalorder %s99, %s115
      %p117 = scmp.eq.s32.totalorder %s18, 0
      %p118 = por %p116, %p117
      %p119 = scmp.le.s32.totalorder 1, %s12
      %p120 = scmp.lt.s32.totalorder %s12, 3
      %p121 = pnand %p119, %p120
      %p122 = pneg %p121
      // Predicated region
      $region9: #{t2v_transformer_forward.1} parent=5 // pred_check
        _
      $region10: #{t2v_transformer_forward.1} parent=5 // pred_check_branch
        %124 = sbr.rel (%p121) target = $region12
      $region11: #{t2v_transformer_forward.1} parent=5 // pred_region
        %s125 = ssub.s32 %s12, 1
        // Predicated region
        $region13: #{t2v_transformer_forward.1} parent=11 // pred_check
          %p126 = pneg %p85
        $region14: #{t2v_transformer_forward.1} parent=11 // pred_check_branch
          %128 = sbr.rel (%p126) target = $region16
        $region15: #{t2v_transformer_forward.1} parent=11 // pred_region
          _
        $region16: #{t2v_transformer_forward.1} parent=11 // pred_fallthru
          _
      $region12: #{t2v_transformer_forward.1} parent=5 // pred_fallthru
        _
      %p129 = scmp.lt.s32.totalorder %s12, 2
      // Predicated region
      $region17: #{t2v_transformer_forward.1} parent=5 // pred_check
        %p130 = pneg %p129
      $region18: #{t2v_transformer_forward.1} parent=5 // pred_check_branch
        %132 = sbr.rel (%p130) target = $region20
      $region19: #{t2v_transformer_forward.1} parent=5 // pred_region
        // Predicated region
        $region21: #{t2v_transformer_forward.1} parent=19 // pred_check
          %p133 = pneg %p32
        $region22: #{t2v_transformer_forward.1} parent=19 // pred_check_branch
          %135 = sbr.rel (%p133) target = $region24
        $region23: #{t2v_transformer_forward.1} parent=19 // pred_region
          %p136 = scmp.lt.s32.totalorder %s12, 1
          %s137 = scalar_select %p136, %s12, 1
          %s138 = smul.addr %s137, 8
          %s139 = scalar_lea.vmem %s0, %s138
        $region24: #{t2v_transformer_forward.1} parent=19 // pred_fallthru
          _
        // Predicated region
        $region25: #{t2v_transformer_forward.1} parent=19 // pred_check
          %p140 = pneg %p58
        $region26: #{t2v_transformer_forward.1} parent=19 // pred_check_branch
          %142 = sbr.rel (%p140) target = $region28
        $region27: #{t2v_transformer_forward.1} parent=19 // pred_region
          %p143 = scmp.lt.s32.totalorder %s12, 1
          %s144 = scalar_select %p143, %s12, 1
          %s145 = smul.addr %s144, 8
          %s146 = scalar_lea.vmem %s1, %s145
        $region28: #{t2v_transformer_forward.1} parent=19 // pred_fallthru
          _
      $region20: #{t2v_transformer_forward.1} parent=5 // pred_fallthru
        _
      %p147 = scmp.le.s32.totalorder 1, %s12
      %p148 = scmp.lt.s32.totalorder %s12, 3
      %p149 = pnand %p147, %p148
      %p150 = pneg %p149
      // Predicated region
      $region29: #{t2v_transformer_forward.1} parent=5 // pred_check
        _
      $region30: #{t2v_transformer_forward.1} parent=5 // pred_check_branch
        %152 = sbr.rel (%p149) target = $region32
      $region31: #{t2v_transformer_forward.1} parent=5 // pred_region
        %s153 = ssub.s32 %s12, 1
        %p154 = scmp.lt.s32.totalorder %s17, 1
        %s155 = scalar_select %p154, %s17, 1
        %s156 = smul.addr %s155, 8
        %s157 = scalar_lea.vmem %s0, %s156
        %p158 = pneg %p38
        %p159 = pneg %p35
        %p160 = scmp.lt.s32.totalorder %s17, 1
        %s161 = scalar_select %p160, %s17, 1
        %s162 = smul.addr %s161, 8
        %s163 = scalar_lea.vmem %s1, %s162
        %p164 = pneg %p64
        %p165 = pneg %p61
        %p166 = pneg %p85
        %p167 = pneg %p82
        %p168 = pneg %p111
        %p169 = pneg %p108
        %s170 = sand.u32 %s98, 1
        %s171 = scalar_lea.sflag [#allocation3], %s170
        %s172 = sand.u32 %s98, 1
        %s173 = smul.addr %s172, 4
        %s174 = scalar_lea.vmem [#allocation2], %s173
        %p175 = scmp.lt.s32.totalorder %s17, 1
        %s176 = scalar_select %p175, %s17, 1
        %s177 = smul.addr %s176, 8
        %s178 = scalar_lea.vmem %s0, %s177
        %p179 = scmp.lt.s32.totalorder %s17, 1
        %s180 = scalar_select %p179, %s17, 1
        %s181 = smul.addr %s180, 8
        %s182 = scalar_lea.vmem %s1, %s181
        %v183 = vld [vmem:[%s178] sm:$0xff]
        %v184 = vld [vmem:[%s182] sm:$0xff]
        %v185 = vld [vmem:[%s2] sm:$0x1f]
        %v186 = vld [vmem:[%s2 + $0x8] sm:$0x1]
        %v187 = vlaneseq
        %v188 = vshrl.u32 %v187, 7
        %v189 = vsub.s32 0, %v188
        %v190 = vrot.slane %v186, %v189
        %vm191 = vcmask 39936
        %v193 = vsel %vm191, %v184, 0
        %vm195 = vcmask 1044480
        %v197 = vsel %vm195, %v185, 0
        %199 = vmatprep.subr.mxu0 0.0
        %200 = vmatpush1.msra.mxu0 0.0
        %201 = vmatprep.subr.mxu0 0.0
        %202 = vmatpush1.msra.mxu0 0.0
        %203 = vmatprep.subr.mxu0 0.0
        %204 = vmatpush1.msra.mxu0 0.0
        %205 = vmatprep.subr.mxu0 0.0
        %206 = vmatpush1.msra.mxu0 0.0
        %207 = vmatprep.subr.mxu0 0.0
        %208 = vmatpush1.msra.mxu0 0.0
        %209 = vmatprep.subr.mxu0 0.0
        %210 = vmatpush1.msra.mxu0 0.0
        %211 = vmatprep.subr.mxu0 0.0
        %212 = vmatpush1.msra.mxu0 0.0
        %213 = vmatprep.subr.mxu0 0.0
        %214 = vmatpush1.msra.mxu0 0.0
        %215 = vmatprep.subr.mxu0 0.0
        %216 = vmatpush1.msra.mxu0 0.0
        %217 = vmatprep.subr.mxu0 0.0
        %218 = vmatpush1.msra.mxu0 0.0
        %219 = vmatprep.subr.mxu0 0.0
        %220 = vmatpush1.msra.mxu0 0.0
        %221 = vmatprep.subr.mxu0 0.0
        %222 = vmatpush1.msra.mxu0 0.0
        %223 = vmatprep.subr.mxu0 0.0
        %224 = vmatpush1.msra.mxu0 0.0
        %225 = vmatprep.subr.mxu0 0.0
        %226 = vmatpush1.msra.mxu0 0.0
        %227 = vmatprep.subr.mxu0 0.0
        %228 = vmatpush1.msra.mxu0 0.0
        %229 = vmatprep.subr.mxu0 0.0
        %230 = vmatpush1.msra.mxu0 %v197
        %231 = vmatprep.subr.mxu0 0.0
        %232 = vmatpush2.msra.mxu0 0.0
        %233 = vmatprep.subr.mxu0 0.0
        %234 = vmatpush2.msra.mxu0 0.0
        %235 = vmatprep.subr.mxu0 0.0
        %236 = vmatpush2.msra.mxu0 0.0
        %237 = vmatprep.subr.mxu0 0.0
        %238 = vmatpush2.msra.mxu0 0.0
        %239 = vmatprep.subr.mxu0 0.0
        %240 = vmatpush2.msra.mxu0 0.0
        %241 = vmatprep.subr.mxu0 0.0
        %242 = vmatpush2.msra.mxu0 0.0
        %243 = vmatprep.subr.mxu0 0.0
        %244 = vmatpush2.msra.mxu0 0.0
        %245 = vmatprep.subr.mxu0 0.0
        %246 = vmatpush2.msra.mxu0 0.0
        %247 = vmatprep.subr.mxu0 0.0
        %248 = vmatpush2.msra.mxu0 0.0
        %249 = vmatprep.subr.mxu0 0.0
        %250 = vmatpush2.msra.mxu0 0.0
        %251 = vmatprep.subr.mxu0 0.0
        %252 = vmatpush2.msra.mxu0 0.0
        %253 = vmatprep.subr.mxu0 0.0
        %254 = vmatpush2.msra.mxu0 0.0
        %255 = vmatprep.subr.mxu0 0.0
        %256 = vmatpush2.msra.mxu0 0.0
        %257 = vmatprep.subr.mxu0 0.0
        %258 = vmatpush2.msra.mxu0 0.0
        %259 = vmatprep.subr.mxu0 0.0
        %260 = vmatpush2.msra.mxu0 0.0
        %261 = vmatprep.subr.mxu0 0.0
        %262 = vmatpush2.msra.mxu0 0.0
        %263 = vmatprep.mubr.f32.mxu0 0.0
        %264 = vmatmul.mubr.f32.gmra.mxu0 %v193
        %v265 = vpop.f32.mrf.mxu0
        %v266 = vadd.f32 %v190, %v265
        %v267 = vpop.f32.mrf.mxu0
        %268 = vdwg.mxu0
        %v269 = vlaneseq
        %v270 = vand.u32 %v269, 127
        %vm271 = vcmp.eq.s32.totalorder %v270, 0
        %v272 = vand.u32 2147483647, %v266
        %vm273 = vcmp.le.f32.partialorder %v272, 0.7853982
        %vm274 = vcmp.lt.s32.totalorder %v266, 0
        %v275 = vand.u32 %v266, 2139095040
        %v276 = vshrl.u32 %v275, 23
        %v277 = vsub.s32 %v276, 127
        %v278 = vand.u32 2147483647, %v266
        %v279 = vand.u32 %v278, 8388607
        %v280 = vor.u32 %v279, 8388608
        %v281 = vsub.s32 0, %v280
        %v282 = vadd.s32 %v277, 1
        %vm283 = vcmp.gt.s32.totalorder %v282, 0
        %v284 = vsel %vm283, %v282, 0
        %v285 = vshrl.u32 %v284, 5
        %v286 = vand.u32 %v284, 31
        %v287 = vsub.s32 32, %v286
        %v288 = vshrl.u32 683565275, %v287
        %v289 = vshll.u32 683565275, %v286
        %v290 = vshrl.u32 2475754826, %v287
        %v291 = vor.u32 %v289, %v290
        %v292 = vshll.u32 2475754826, %v286
        %v293 = vshrl.u32 2131351028, %v287
        %v294 = vor.u32 %v292, %v293
        %v295 = vshll.u32 2131351028, %v286
        %v296 = vshrl.u32 2102212464, %v287
        %v297 = vor.u32 %v295, %v296
        %v298 = vshll.u32 2102212464, %v286
        %v299 = vshrl.u32 920167782, %v287
        %v300 = vor.u32 %v298, %v299
        %v301 = vshll.u32 920167782, %v286
        %v302 = vshrl.u32 1326507024, %v287
        %v303 = vor.u32 %v301, %v302
        %vm304 = vcmp.lt.s32.totalorder %v285, 1
        %vm305 = vcmp.lt.s32.totalorder %v285, 2
        %vm306 = vcmp.lt.s32.totalorder %v285, 3
        %vm307 = vcmp.lt.s32.totalorder %v285, 4
        %v308 = vsel %vm304, %v288, %v291
        %v309 = vsel %vm307, %v297, 2102212464
        %v310 = vsel %vm306, %v294, %v309
        %v311 = vsel %vm305, %v308, %v310
        %v312 = vsel %vm304, %v291, %v294
        %v313 = vsel %vm307, %v300, 920167782
        %v314 = vsel %vm306, %v297, %v313
        %v315 = vsel %vm305, %v312, %v314
        %v316 = vsel %vm304, %v294, %v297
        %v317 = vsel %vm307, %v303, 1326507024
        %v318 = vsel %vm306, %v300, %v317
        %v319 = vsel %vm305, %v316, %v318
        %v320 = vshll.u32 %v280, 8
        %v321 = vmul.u32.u64.compose %v320, %v319
        %v322 = vextract.low.u32 %v321
        %v323 = vextract.high.u32 %v321
        %v324 = vmul.u32.u64.compose %v320, %v315
        %v325 = vextract.low.u32 %v324
        %v326 = vextract.high.u32 %v324
        %v327 = vmul.u32 %v320, %v311
        %v328 = vadd.s32 %v323, %v325
        %vm329 = vc.u32 %v323, %v325
        %v330 = vadd.s32 %v326, 1
        %v331 = vsel %vm329, %v330, %v326
        %v332 = vadd.s32 %v327, %v331
        %v333 = vadd.s32 %v332, 536870912
        %v334 = vshrl.u32 %v333, 30
        %v335 = vshll.u32 %v334, 30
        %v336 = vsub.s32 %v332, %v335
        %vm337 = vcmp.lt.s32.totalorder %v336, 0
        %v338 = vsub.s32 0, %v336
        %v339 = vsel %vm337, %v338, %v336
        %v340 = vclz %v339
        %v341 = vsub.s32 %v340, 2
        %vm342 = vcmp.gt.s32.totalorder 0, %v341
        %v343 = vsel %vm342, 0, %v341
        %v344 = vsub.s32 32, %v343
        %v345 = vshll.u32 %v336, %v343
        %v346 = vshrl.u32 %v328, %v344
        %v347 = vor.u32 %v345, %v346
        %v348 = vsub.s32 4294967266, %v343
        %v349 = vadd.s32 %v348, 127
        %v350 = vshll.u32 %v349, 23
        %v351 = vor.u32 4788187, %v350
        %v352 = vand.u32 2147483647, %v351
        %v354 = vcvt.s32.f32 %v347
        %v355 = vmul.f32 %v354, %v352
        %v356 = vxor.u32 %v355, 2147483648
        %v357 = vsel %vm274, %v356, %v355
        %v358 = vsub.s32 4, %v334
        %v359 = vsel %vm274, %v358, %v334
        %v360 = vsel %vm273, %v266, %v357
        %v361 = vsel %vm273, 0, %v359
        %v362 = vcosq.f32.pop %v360
        %v363 = vsinq.f32.pop %v360
        %vm364 = vweird.f32 %v266
        %v365 = vadd.s32 %v361, 3
        %v366 = vand.u32 %v365, 3
        %vm367 = vcmp.lt.s32.totalorder %v366, 2
        %vm368 = vcmp.eq.s32.totalorder %v366, 0
        %v369 = vxor.u32 %v363, 2147483648
        %v370 = vsel %vm368, %v362, %v369
        %vm371 = vcmp.eq.s32.totalorder %v366, 2
        %v372 = vxor.u32 %v362, 2147483648
        %v373 = vsel %vm371, %v372, %v363
        %v374 = vsel %vm367, %v370, %v373
        %v375 = vsel %vm364, nan, %v374
        %v376 = vsel %vm271, %v266, %v375
        %vm377 = vcmask 64512
        %v378 = vsel %vm377, %v376, 0.0
        %379 = vadd.xlane.f32.xlu0 %v378
        %v380 = vpop.xlane.xlu0 %379
        %v381 = vrcp.pop 8.0
        %v382 = vmul.f32 %v380, %v381
        %v383 = vadd.f32 %v382, %v183
        %v384 = vld [vmem:[%s2 + $0x10] sm:$0xf]
        %v385 = vld [vmem:[%s2 + $0x18] sm:$0x1]
        %v386 = vlaneseq
        %v387 = vshrl.u32 %v386, 7
        %v388 = vsub.s32 0, %v387
        %v389 = vrot.slane %v385, %v388
        %vm390 = vcmask 31744
        %v392 = vsel %vm390, %v383, 0
        %vm394 = vcmask 1043456
        %v396 = vsel %vm394, %v384, 0
        %398 = vmatprep.subr.mxu0 0.0
        %399 = vmatpush1.msra.mxu0 0.0
        %400 = vmatprep.subr.mxu0 0.0
        %401 = vmatpush1.msra.mxu0 0.0
        %402 = vmatprep.subr.mxu0 0.0
        %403 = vmatpush1.msra.mxu0 0.0
        %404 = vmatprep.subr.mxu0 0.0
        %405 = vmatpush1.msra.mxu0 0.0
        %406 = vmatprep.subr.mxu0 0.0
        %407 = vmatpush1.msra.mxu0 0.0
        %408 = vmatprep.subr.mxu0 0.0
        %409 = vmatpush1.msra.mxu0 0.0
        %410 = vmatprep.subr.mxu0 0.0
        %411 = vmatpush1.msra.mxu0 0.0
        %412 = vmatprep.subr.mxu0 0.0
        %413 = vmatpush1.msra.mxu0 0.0
        %414 = vmatprep.subr.mxu0 0.0
        %415 = vmatpush1.msra.mxu0 0.0
        %416 = vmatprep.subr.mxu0 0.0
        %417 = vmatpush1.msra.mxu0 0.0
        %418 = vmatprep.subr.mxu0 0.0
        %419 = vmatpush1.msra.mxu0 0.0
        %420 = vmatprep.subr.mxu0 0.0
        %421 = vmatpush1.msra.mxu0 0.0
        %422 = vmatprep.subr.mxu0 0.0
        %423 = vmatpush1.msra.mxu0 0.0
        %424 = vmatprep.subr.mxu0 0.0
        %425 = vmatpush1.msra.mxu0 0.0
        %426 = vmatprep.subr.mxu0 0.0
        %427 = vmatpush1.msra.mxu0 0.0
        %428 = vmatprep.subr.mxu0 0.0
        %429 = vmatpush1.msra.mxu0 %v396
        %430 = vmatprep.subr.mxu0 0.0
        %431 = vmatpush2.msra.mxu0 0.0
        %432 = vmatprep.subr.mxu0 0.0
        %433 = vmatpush2.msra.mxu0 0.0
        %434 = vmatprep.subr.mxu0 0.0
        %435 = vmatpush2.msra.mxu0 0.0
        %436 = vmatprep.subr.mxu0 0.0
        %437 = vmatpush2.msra.mxu0 0.0
        %438 = vmatprep.subr.mxu0 0.0
        %439 = vmatpush2.msra.mxu0 0.0
        %440 = vmatprep.subr.mxu0 0.0
        %441 = vmatpush2.msra.mxu0 0.0
        %442 = vmatprep.subr.mxu0 0.0
        %443 = vmatpush2.msra.mxu0 0.0
        %444 = vmatprep.subr.mxu0 0.0
        %445 = vmatpush2.msra.mxu0 0.0
        %446 = vmatprep.subr.mxu0 0.0
        %447 = vmatpush2.msra.mxu0 0.0
        %448 = vmatprep.subr.mxu0 0.0
        %449 = vmatpush2.msra.mxu0 0.0
        %450 = vmatprep.subr.mxu0 0.0
        %451 = vmatpush2.msra.mxu0 0.0
        %452 = vmatprep.subr.mxu0 0.0
        %453 = vmatpush2.msra.mxu0 0.0
        %454 = vmatprep.subr.mxu0 0.0
        %455 = vmatpush2.msra.mxu0 0.0
        %456 = vmatprep.subr.mxu0 0.0
        %457 = vmatpush2.msra.mxu0 0.0
        %458 = vmatprep.subr.mxu0 0.0
        %459 = vmatpush2.msra.mxu0 0.0
        %460 = vmatprep.subr.mxu0 0.0
        %461 = vmatpush2.msra.mxu0 0.0
        %462 = vmatprep.mubr.f32.mxu0 0.0
        %463 = vmatmul.mubr.f32.gmra.mxu0 %v392
        %v464 = vpop.f32.mrf.mxu0
        %v465 = vadd.f32 %v389, %v464
        %v466 = vpop.f32.mrf.mxu0
        %467 = vdwg.mxu0
        %v468 = vld [vmem:[%s2 + $0x20] sm:$0xff]
        %v469 = vld [vmem:[%s2 + $0x28] sm:$0xff]
        %v470 = vld [vmem:[%s2 + $0x30] sm:$0xff]
        %v471 = vld [vmem:[%s2 + $0x38] sm:$0xff]
        %v472 = vld [vmem:[%s2 + $0x40] sm:$0x1]
        %v473 = vlaneseq
        %v474 = vshrl.u32 %v473, 7
        %v475 = vsub.s32 0, %v474
        %v476 = vrot.slane %v472, %v475
        %vm477 = vcmask 261120
        %v479 = vsel %vm477, %v465, 0
        %481 = vmatprep.subr.mxu0 0.0
        %482 = vmatpush1.msra.mxu0 0.0
        %483 = vmatprep.subr.mxu0 0.0
        %484 = vmatpush1.msra.mxu0 0.0
        %485 = vmatprep.subr.mxu0 0.0
        %486 = vmatpush1.msra.mxu0 0.0
        %487 = vmatprep.subr.mxu0 0.0
        %488 = vmatpush1.msra.mxu0 0.0
        %489 = vmatprep.subr.mxu0 0.0
        %490 = vmatpush1.msra.mxu0 0.0
        %491 = vmatprep.subr.mxu0 0.0
        %492 = vmatpush1.msra.mxu0 0.0
        %493 = vmatprep.subr.mxu0 0.0
        %494 = vmatpush1.msra.mxu0 0.0
        %495 = vmatprep.subr.mxu0 0.0
        %496 = vmatpush1.msra.mxu0 0.0
        %497 = vmatprep.subr.mxu0 0.0
        %498 = vmatpush1.msra.mxu0 0.0
        %499 = vmatprep.subr.mxu0 0.0
        %500 = vmatpush1.msra.mxu0 0.0
        %501 = vmatprep.subr.mxu0 0.0
        %502 = vmatpush1.msra.mxu0 0.0
        %503 = vmatprep.subr.mxu0 0.0
        %504 = vmatpush1.msra.mxu0 0.0
        %505 = vmatprep.subr.mxu0 0.0
        %506 = vmatpush1.msra.mxu0 %v471
        %507 = vmatprep.subr.mxu0 0.0
        %508 = vmatpush1.msra.mxu0 %v470
        %509 = vmatprep.subr.mxu0 0.0
        %510 = vmatpush1.msra.mxu0 %v469
        %511 = vmatprep.subr.mxu0 0.0
        %512 = vmatpush1.msra.mxu0 %v468
        %513 = vmatprep.subr.mxu0 0.0
        %514 = vmatpush2.msra.mxu0 0.0
        %515 = vmatprep.subr.mxu0 0.0
        %516 = vmatpush2.msra.mxu0 0.0
        %517 = vmatprep.subr.mxu0 0.0
        %518 = vmatpush2.msra.mxu0 0.0
        %519 = vmatprep.subr.mxu0 0.0
        %520 = vmatpush2.msra.mxu0 0.0
        %521 = vmatprep.subr.mxu0 0.0
        %522 = vmatpush2.msra.mxu0 0.0
        %523 = vmatprep.subr.mxu0 0.0
        %524 = vmatpush2.msra.mxu0 0.0
        %525 = vmatprep.subr.mxu0 0.0
        %526 = vmatpush2.msra.mxu0 0.0
        %527 = vmatprep.subr.mxu0 0.0
        %528 = vmatpush2.msra.mxu0 0.0
        %529 = vmatprep.subr.mxu0 0.0
        %530 = vmatpush2.msra.mxu0 0.0
        %531 = vmatprep.subr.mxu0 0.0
        %532 = vmatpush2.msra.mxu0 0.0
        %533 = vmatprep.subr.mxu0 0.0
        %534 = vmatpush2.msra.mxu0 0.0
        %535 = vmatprep.subr.mxu0 0.0
        %536 = vmatpush2.msra.mxu0 0.0
        %537 = vmatprep.subr.mxu0 0.0
        %538 = vmatpush2.msra.mxu0 0.0
        %539 = vmatprep.subr.mxu0 0.0
        %540 = vmatpush2.msra.mxu0 0.0
        %541 = vmatprep.subr.mxu0 0.0
        %542 = vmatpush2.msra.mxu0 0.0
        %543 = vmatprep.subr.mxu0 0.0
        %544 = vmatpush2.msra.mxu0 0.0
        %545 = vmatprep.mubr.f32.mxu0 0.0
        %546 = vmatmul.mubr.f32.gmra.mxu0 %v479
        %v547 = vpop.f32.mrf.mxu0
        %v548 = vadd.f32 %v476, %v547
        %v549 = vpop.f32.mrf.mxu0
        %550 = vdwg.mxu0
        %v551 = vld [vmem:[%s2 + $0x48] sm:$0xff]
        %v552 = vld [vmem:[%s2 + $0x50] sm:$0xff]
        %v553 = vld [vmem:[%s2 + $0x58] sm:$0xff]
        %v554 = vld [vmem:[%s2 + $0x60] sm:$0xff]
        %v555 = vld [vmem:[%s2 + $0x68] sm:$0x1]
        %556 = vxpose.xlu0.b32.start [1/16] %v548, 128
        %557 = vxpose.xlu0.b32.cont [2/16] 0.0, 128
        %558 = vxpose.xlu0.b32.cont [3/16] 0.0, 128
        %559 = vxpose.xlu0.b32.cont [4/16] 0.0, 128
        %560 = vxpose.xlu0.b32.cont [5/16] 0.0, 128
        %561 = vxpose.xlu0.b32.cont [6/16] 0.0, 128
        %562 = vxpose.xlu0.b32.cont [7/16] 0.0, 128
        %563 = vxpose.xlu0.b32.cont [8/16] 0.0, 128
        %564 = vxpose.xlu0.b32.cont [9/16] 0.0, 128
        %565 = vxpose.xlu0.b32.cont [10/16] 0.0, 128
        %566 = vxpose.xlu0.b32.cont [11/16] 0.0, 128
        %567 = vxpose.xlu0.b32.cont [12/16] 0.0, 128
        %568 = vxpose.xlu0.b32.cont [13/16] 0.0, 128
        %569 = vxpose.xlu0.b32.cont [14/16] 0.0, 128
        %570 = vxpose.xlu0.b32.cont [15/16] 0.0, 128
        %571 = vxpose.xlu0.b32.end [16/16] 0.0, 128
        %v572 = vpop.trf.xlu0
        %v573 = vpop.trf.xlu0
        %v574 = vpop.trf.xlu0
        %v575 = vpop.trf.xlu0
        %v576 = vpop.trf.xlu0
        %v577 = vpop.trf.xlu0
        %v578 = vpop.trf.xlu0
        %v579 = vpop.trf.xlu0
        %v580 = vpop.trf.xlu0
        %v581 = vpop.trf.xlu0
        %v582 = vpop.trf.xlu0
        %v583 = vpop.trf.xlu0
        %v584 = vpop.trf.xlu0
        %v585 = vpop.trf.xlu0
        %v586 = vpop.trf.xlu0
        %v587 = vpop.trf.xlu0
        %588 = vxpose.xlu0.b32.start [1/16] %v572, 128
        %589 = vxpose.xlu0.b32.cont [2/16] 0.0, 128
        %590 = vxpose.xlu0.b32.cont [3/16] 0.0, 128
        %591 = vxpose.xlu0.b32.cont [4/16] 0.0, 128
        %592 = vxpose.xlu0.b32.cont [5/16] 0.0, 128
        %593 = vxpose.xlu0.b32.cont [6/16] 0.0, 128
        %594 = vxpose.xlu0.b32.cont [7/16] 0.0, 128
        %595 = vxpose.xlu0.b32.cont [8/16] 0.0, 128
        %596 = vxpose.xlu0.b32.cont [9/16] 0.0, 128
        %597 = vxpose.xlu0.b32.cont [10/16] 0.0, 128
        %598 = vxpose.xlu0.b32.cont [11/16] 0.0, 128
        %599 = vxpose.xlu0.b32.cont [12/16] 0.0, 128
        %600 = vxpose.xlu0.b32.cont [13/16] 0.0, 128
        %601 = vxpose.xlu0.b32.cont [14/16] 0.0, 128
        %602 = vxpose.xlu0.b32.cont [15/16] 0.0, 128
        %603 = vxpose.xlu0.b32.end [16/16] 0.0, 128
        %v604 = vpop.trf.xlu0
        %v605 = vpop.trf.xlu0
        %v606 = vpop.trf.xlu0
        %v607 = vpop.trf.xlu0
        %v608 = vpop.trf.xlu0
        %v609 = vpop.trf.xlu0
        %v610 = vpop.trf.xlu0
        %v611 = vpop.trf.xlu0
        %v612 = vpop.trf.xlu0
        %v613 = vpop.trf.xlu0
        %v614 = vpop.trf.xlu0
        %v615 = vpop.trf.xlu0
        %v616 = vpop.trf.xlu0
        %v617 = vpop.trf.xlu0
        %v618 = vpop.trf.xlu0
        %v619 = vpop.trf.xlu0
        %620 = vxpose.xlu0.b32.start [1/16] %v573, 128
        %621 = vxpose.xlu0.b32.cont [2/16] 0.0, 128
        %622 = vxpose.xlu0.b32.cont [3/16] 0.0, 128
        %623 = vxpose.xlu0.b32.cont [4/16] 0.0, 128
        %624 = vxpose.xlu0.b32.cont [5/16] 0.0, 128
        %625 = vxpose.xlu0.b32.cont [6/16] 0.0, 128
        %626 = vxpose.xlu0.b32.cont [7/16] 0.0, 128
        %627 = vxpose.xlu0.b32.cont [8/16] 0.0, 128
        %628 = vxpose.xlu0.b32.cont [9/16] 0.0, 128
        %629 = vxpose.xlu0.b32.cont [10/16] 0.0, 128
        %630 = vxpose.xlu0.b32.cont [11/16] 0.0, 128
        %631 = vxpose.xlu0.b32.cont [12/16] 0.0, 128
        %632 = vxpose.xlu0.b32.cont [13/16] 0.0, 128
        %633 = vxpose.xlu0.b32.cont [14/16] 0.0, 128
        %634 = vxpose.xlu0.b32.cont [15/16] 0.0, 128
        %635 = vxpose.xlu0.b32.end [16/16] 0.0, 128
        %v636 = vpop.trf.xlu0
        %v637 = vpop.trf.xlu0
        %v638 = vpop.trf.xlu0
        %v639 = vpop.trf.xlu0
        %v640 = vpop.trf.xlu0
        %v641 = vpop.trf.xlu0
        %v642 = vpop.trf.xlu0
        %v643 = vpop.trf.xlu0
        %v644 = vpop.trf.xlu0
        %v645 = vpop.trf.xlu0
        %v646 = vpop.trf.xlu0
        %v647 = vpop.trf.xlu0
        %v648 = vpop.trf.xlu0
        %v649 = vpop.trf.xlu0
        %v650 = vpop.trf.xlu0
        %v651 = vpop.trf.xlu0
        %652 = vxpose.xlu0.b32.start [1/16] %v574, 128
        %653 = vxpose.xlu0.b32.cont [2/16] 0.0, 128
        %654 = vxpose.xlu0.b32.cont [3/16] 0.0, 128
        %655 = vxpose.xlu0.b32.cont [4/16] 0.0, 128
        %656 = vxpose.xlu0.b32.cont [5/16] 0.0, 128
        %657 = vxpose.xlu0.b32.cont [6/16] 0.0, 128
        %658 = vxpose.xlu0.b32.cont [7/16] 0.0, 128
        %659 = vxpose.xlu0.b32.cont [8/16] 0.0, 128
        %660 = vxpose.xlu0.b32.cont [9/16] 0.0, 128
        %661 = vxpose.xlu0.b32.cont [10/16] 0.0, 128
        %662 = vxpose.xlu0.b32.cont [11/16] 0.0, 128
        %663 = vxpose.xlu0.b32.cont [12/16] 0.0, 128
        %664 = vxpose.xlu0.b32.cont [13/16] 0.0, 128
        %665 = vxpose.xlu0.b32.cont [14/16] 0.0, 128
        %666 = vxpose.xlu0.b32.cont [15/16] 0.0, 128
        %667 = vxpose.xlu0.b32.end [16/16] 0.0, 128
        %v668 = vpop.trf.xlu0
        %v669 = vpop.trf.xlu0
        %v670 = vpop.trf.xlu0
        %v671 = vpop.trf.xlu0
        %v672 = vpop.trf.xlu0
        %v673 = vpop.trf.xlu0
        %v674 = vpop.trf.xlu0
        %v675 = vpop.trf.xlu0
        %v676 = vpop.trf.xlu0
        %v677 = vpop.trf.xlu0
        %v678 = vpop.trf.xlu0
        %v679 = vpop.trf.xlu0
        %v680 = vpop.trf.xlu0
        %v681 = vpop.trf.xlu0
        %v682 = vpop.trf.xlu0
        %v683 = vpop.trf.xlu0
        %684 = vxpose.xlu0.b32.start [1/16] %v575, 128
        %685 = vxpose.xlu0.b32.cont [2/16] 0.0, 128
        %686 = vxpose.xlu0.b32.cont [3/16] 0.0, 128
        %687 = vxpose.xlu0.b32.cont [4/16] 0.0, 128
        %688 = vxpose.xlu0.b32.cont [5/16] 0.0, 128
        %689 = vxpose.xlu0.b32.cont [6/16] 0.0, 128
        %690 = vxpose.xlu0.b32.cont [7/16] 0.0, 128
        %691 = vxpose.xlu0.b32.cont [8/16] 0.0, 128
        %692 = vxpose.xlu0.b32.cont [9/16] 0.0, 128
        %693 = vxpose.xlu0.b32.cont [10/16] 0.0, 128
        %694 = vxpose.xlu0.b32.cont [11/16] 0.0, 128
        %695 = vxpose.xlu0.b32.cont [12/16] 0.0, 128
        %696 = vxpose.xlu0.b32.cont [13/16] 0.0, 128
        %697 = vxpose.xlu0.b32.cont [14/16] 0.0, 128
        %698 = vxpose.xlu0.b32.cont [15/16] 0.0, 128
        %699 = vxpose.xlu0.b32.end [16/16] 0.0, 128
        %v700 = vpop.trf.xlu0
        %v701 = vpop.trf.xlu0
        %v702 = vpop.trf.xlu0
        %v703 = vpop.trf.xlu0
        %v704 = vpop.trf.xlu0
        %v705 = vpop.trf.xlu0
        %v706 = vpop.trf.xlu0
        %v707 = vpop.trf.xlu0
        %v708 = vpop.trf.xlu0
        %v709 = vpop.trf.xlu0
        %v710 = vpop.trf.xlu0
        %v711 = vpop.trf.xlu0
        %v712 = vpop.trf.xlu0
        %v713 = vpop.trf.xlu0
        %v714 = vpop.trf.xlu0
        %v715 = vpop.trf.xlu0
        %717 = vrot.lane.b32.xlu0 %v548, 96
        %v718 = vpop.permute.xlu0 %717
        %720 = vxpose.xlu0.b32.start [1/16] %v718, 128
        %721 = vxpose.xlu0.b32.cont [2/16] 0.0, 128
        %722 = vxpose.xlu0.b32.cont [3/16] 0.0, 128
        %723 = vxpose.xlu0.b32.cont [4/16] 0.0, 128
        %724 = vxpose.xlu0.b32.cont [5/16] 0.0, 128
        %725 = vxpose.xlu0.b32.cont [6/16] 0.0, 128
        %726 = vxpose.xlu0.b32.cont [7/16] 0.0, 128
        %727 = vxpose.xlu0.b32.cont [8/16] 0.0, 128
        %728 = vxpose.xlu0.b32.cont [9/16] 0.0, 128
        %729 = vxpose.xlu0.b32.cont [10/16] 0.0, 128
        %730 = vxpose.xlu0.b32.cont [11/16] 0.0, 128
        %731 = vxpose.xlu0.b32.cont [12/16] 0.0, 128
        %732 = vxpose.xlu0.b32.cont [13/16] 0.0, 128
        %733 = vxpose.xlu0.b32.cont [14/16] 0.0, 128
        %734 = vxpose.xlu0.b32.cont [15/16] 0.0, 128
        %735 = vxpose.xlu0.b32.end [16/16] 0.0, 128
        %v736 = vpop.trf.xlu0
        %v737 = vpop.trf.xlu0
        %v738 = vpop.trf.xlu0
        %v739 = vpop.trf.xlu0
        %v740 = vpop.trf.xlu0
        %v741 = vpop.trf.xlu0
        %v742 = vpop.trf.xlu0
        %v743 = vpop.trf.xlu0
        %v744 = vpop.trf.xlu0
        %v745 = vpop.trf.xlu0
        %v746 = vpop.trf.xlu0
        %v747 = vpop.trf.xlu0
        %v748 = vpop.trf.xlu0
        %v749 = vpop.trf.xlu0
        %v750 = vpop.trf.xlu0
        %v751 = vpop.trf.xlu0
        %752 = vrot.lane.b32.xlu0 %v548, 64
        %v753 = vpop.permute.xlu0 %752
        %755 = vxpose.xlu0.b32.start [1/16] %v753, 128
        %756 = vxpose.xlu0.b32.cont [2/16] 0.0, 128
        %757 = vxpose.xlu0.b32.cont [3/16] 0.0, 128
        %758 = vxpose.xlu0.b32.cont [4/16] 0.0, 128
        %759 = vxpose.xlu0.b32.cont [5/16] 0.0, 128
        %760 = vxpose.xlu0.b32.cont [6/16] 0.0, 128
        %761 = vxpose.xlu0.b32.cont [7/16] 0.0, 128
        %762 = vxpose.xlu0.b32.cont [8/16] 0.0, 128
        %763 = vxpose.xlu0.b32.cont [9/16] 0.0, 128
        %764 = vxpose.xlu0.b32.cont [10/16] 0.0, 128
        %765 = vxpose.xlu0.b32.cont [11/16] 0.0, 128
        %766 = vxpose.xlu0.b32.cont [12/16] 0.0, 128
        %767 = vxpose.xlu0.b32.cont [13/16] 0.0, 128
        %768 = vxpose.xlu0.b32.cont [14/16] 0.0, 128
        %769 = vxpose.xlu0.b32.cont [15/16] 0.0, 128
        %770 = vxpose.xlu0.b32.end [16/16] 0.0, 128
        %v771 = vpop.trf.xlu0
        %v772 = vpop.trf.xlu0
        %v773 = vpop.trf.xlu0
        %v774 = vpop.trf.xlu0
        %v775 = vpop.trf.xlu0
        %v776 = vpop.trf.xlu0
        %v777 = vpop.trf.xlu0
        %v778 = vpop.trf.xlu0
        %v779 = vpop.trf.xlu0
        %v780 = vpop.trf.xlu0
        %v781 = vpop.trf.xlu0
        %v782 = vpop.trf.xlu0
        %v783 = vpop.trf.xlu0
        %v784 = vpop.trf.xlu0
        %v785 = vpop.trf.xlu0
        %v786 = vpop.trf.xlu0
        %v788 = vsel %vm377, %v604, 0
        %790 = vmatprep.subr.mxu0 0.0
        %791 = vmatpush1.msra.mxu0 0.0
        %792 = vmatprep.subr.mxu0 0.0
        %793 = vmatpush1.msra.mxu0 0.0
        %794 = vmatprep.subr.mxu0 0.0
        %795 = vmatpush1.msra.mxu0 0.0
        %796 = vmatprep.subr.mxu0 0.0
        %797 = vmatpush1.msra.mxu0 0.0
        %798 = vmatprep.subr.mxu0 0.0
        %799 = vmatpush1.msra.mxu0 0.0
        %800 = vmatprep.subr.mxu0 0.0
        %801 = vmatpush1.msra.mxu0 0.0
        %802 = vmatprep.subr.mxu0 0.0
        %803 = vmatpush1.msra.mxu0 0.0
        %804 = vmatprep.subr.mxu0 0.0
        %805 = vmatpush1.msra.mxu0 0.0
        %806 = vmatprep.subr.mxu0 0.0
        %807 = vmatpush1.msra.mxu0 0.0
        %808 = vmatprep.subr.mxu0 0.0
        %809 = vmatpush1.msra.mxu0 0.0
        %810 = vmatprep.subr.mxu0 0.0
        %811 = vmatpush1.msra.mxu0 0.0
        %812 = vmatprep.subr.mxu0 0.0
        %813 = vmatpush1.msra.mxu0 0.0
        %814 = vmatprep.subr.mxu0 0.0
        %815 = vmatpush1.msra.mxu0 0.0
        %816 = vmatprep.subr.mxu0 0.0
        %817 = vmatpush1.msra.mxu0 0.0
        %818 = vmatprep.subr.mxu0 0.0
        %819 = vmatpush1.msra.mxu0 0.0
        %820 = vmatprep.subr.mxu0 0.0
        %821 = vmatpush1.msra.mxu0 %v736
        %822 = vmatprep.subr.mxu0 0.0
        %823 = vmatpush2.msra.mxu0 0.0
        %824 = vmatprep.subr.mxu0 0.0
        %825 = vmatpush2.msra.mxu0 0.0
        %826 = vmatprep.subr.mxu0 0.0
        %827 = vmatpush2.msra.mxu0 0.0
        %828 = vmatprep.subr.mxu0 0.0
        %829 = vmatpush2.msra.mxu0 0.0
        %830 = vmatprep.subr.mxu0 0.0
        %831 = vmatpush2.msra.mxu0 0.0
        %832 = vmatprep.subr.mxu0 0.0
        %833 = vmatpush2.msra.mxu0 0.0
        %834 = vmatprep.subr.mxu0 0.0
        %835 = vmatpush2.msra.mxu0 0.0
        %836 = vmatprep.subr.mxu0 0.0
        %837 = vmatpush2.msra.mxu0 0.0
        %838 = vmatprep.subr.mxu0 0.0
        %839 = vmatpush2.msra.mxu0 0.0
        %840 = vmatprep.subr.mxu0 0.0
        %841 = vmatpush2.msra.mxu0 0.0
        %842 = vmatprep.subr.mxu0 0.0
        %843 = vmatpush2.msra.mxu0 0.0
        %844 = vmatprep.subr.mxu0 0.0
        %845 = vmatpush2.msra.mxu0 0.0
        %846 = vmatprep.subr.mxu0 0.0
        %847 = vmatpush2.msra.mxu0 0.0
        %848 = vmatprep.subr.mxu0 0.0
        %849 = vmatpush2.msra.mxu0 0.0
        %850 = vmatprep.subr.mxu0 0.0
        %851 = vmatpush2.msra.mxu0 0.0
        %852 = vmatprep.subr.mxu0 0.0
        %853 = vmatpush2.msra.mxu0 0.0
        %854 = vmatprep.mubr.f32.mxu0 0.0
        %855 = vmatmul.mubr.f32.gmra.mxu0 %v788
        %v856 = vpop.f32.mrf.mxu0
        %v857 = vadd.f32 0.0, %v856
        %v858 = vpop.f32.mrf.mxu0
        %859 = vdwg.mxu0
        %v861 = vsel %vm377, %v636, 0
        %863 = vmatprep.subr.mxu0 0.0
        %864 = vmatpush1.msra.mxu0 0.0
        %865 = vmatprep.subr.mxu0 0.0
        %866 = vmatpush1.msra.mxu0 0.0
        %867 = vmatprep.subr.mxu0 0.0
        %868 = vmatpush1.msra.mxu0 0.0
        %869 = vmatprep.subr.mxu0 0.0
        %870 = vmatpush1.msra.mxu0 0.0
        %871 = vmatprep.subr.mxu0 0.0
        %872 = vmatpush1.msra.mxu0 0.0
        %873 = vmatprep.subr.mxu0 0.0
        %874 = vmatpush1.msra.mxu0 0.0
        %875 = vmatprep.subr.mxu0 0.0
        %876 = vmatpush1.msra.mxu0 0.0
        %877 = vmatprep.subr.mxu0 0.0
        %878 = vmatpush1.msra.mxu0 0.0
        %879 = vmatprep.subr.mxu0 0.0
        %880 = vmatpush1.msra.mxu0 0.0
        %881 = vmatprep.subr.mxu0 0.0
        %882 = vmatpush1.msra.mxu0 0.0
        %883 = vmatprep.subr.mxu0 0.0
        %884 = vmatpush1.msra.mxu0 0.0
        %885 = vmatprep.subr.mxu0 0.0
        %886 = vmatpush1.msra.mxu0 0.0
        %887 = vmatprep.subr.mxu0 0.0
        %888 = vmatpush1.msra.mxu0 0.0
        %889 = vmatprep.subr.mxu0 0.0
        %890 = vmatpush1.msra.mxu0 0.0
        %891 = vmatprep.subr.mxu0 0.0
        %892 = vmatpush1.msra.mxu0 0.0
        %893 = vmatprep.subr.mxu0 0.0
        %894 = vmatpush1.msra.mxu0 %v737
        %895 = vmatprep.subr.mxu0 0.0
        %896 = vmatpush2.msra.mxu0 0.0
        %897 = vmatprep.subr.mxu0 0.0
        %898 = vmatpush2.msra.mxu0 0.0
        %899 = vmatprep.subr.mxu0 0.0
        %900 = vmatpush2.msra.mxu0 0.0
        %901 = vmatprep.subr.mxu0 0.0
        %902 = vmatpush2.msra.mxu0 0.0
        %903 = vmatprep.subr.mxu0 0.0
        %904 = vmatpush2.msra.mxu0 0.0
        %905 = vmatprep.subr.mxu0 0.0
        %906 = vmatpush2.msra.mxu0 0.0
        %907 = vmatprep.subr.mxu0 0.0
        %908 = vmatpush2.msra.mxu0 0.0
        %909 = vmatprep.subr.mxu0 0.0
        %910 = vmatpush2.msra.mxu0 0.0
        %911 = vmatprep.subr.mxu0 0.0
        %912 = vmatpush2.msra.mxu0 0.0
        %913 = vmatprep.subr.mxu0 0.0
        %914 = vmatpush2.msra.mxu0 0.0
        %915 = vmatprep.subr.mxu0 0.0
        %916 = vmatpush2.msra.mxu0 0.0
        %917 = vmatprep.subr.mxu0 0.0
        %918 = vmatpush2.msra.mxu0 0.0
        %919 = vmatprep.subr.mxu0 0.0
        %920 = vmatpush2.msra.mxu0 0.0
        %921 = vmatprep.subr.mxu0 0.0
        %922 = vmatpush2.msra.mxu0 0.0
        %923 = vmatprep.subr.mxu0 0.0
        %924 = vmatpush2.msra.mxu0 0.0
        %925 = vmatprep.subr.mxu0 0.0
        %926 = vmatpush2.msra.mxu0 0.0
        %927 = vmatprep.mubr.f32.mxu0 0.0
        %928 = vmatmul.mubr.f32.gmra.mxu0 %v861
        %v929 = vpop.f32.mrf.mxu0
        %v930 = vadd.f32 0.0, %v929
        %v931 = vpop.f32.mrf.mxu0
        %932 = vdwg.mxu0
        %v934 = vsel %vm377, %v668, 0
        %936 = vmatprep.subr.mxu0 0.0
        %937 = vmatpush1.msra.mxu0 0.0
        %938 = vmatprep.subr.mxu0 0.0
        %939 = vmatpush1.msra.mxu0 0.0
        %940 = vmatprep.subr.mxu0 0.0
        %941 = vmatpush1.msra.mxu0 0.0
        %942 = vmatprep.subr.mxu0 0.0
        %943 = vmatpush1.msra.mxu0 0.0
        %944 = vmatprep.subr.mxu0 0.0
        %945 = vmatpush1.msra.mxu0 0.0
        %946 = vmatprep.subr.mxu0 0.0
        %947 = vmatpush1.msra.mxu0 0.0
        %948 = vmatprep.subr.mxu0 0.0
        %949 = vmatpush1.msra.mxu0 0.0
        %950 = vmatprep.subr.mxu0 0.0
        %951 = vmatpush1.msra.mxu0 0.0
        %952 = vmatprep.subr.mxu0 0.0
        %953 = vmatpush1.msra.mxu0 0.0
        %954 = vmatprep.subr.mxu0 0.0
        %955 = vmatpush1.msra.mxu0 0.0
        %956 = vmatprep.subr.mxu0 0.0
        %957 = vmatpush1.msra.mxu0 0.0
        %958 = vmatprep.subr.mxu0 0.0
        %959 = vmatpush1.msra.mxu0 0.0
        %960 = vmatprep.subr.mxu0 0.0
        %961 = vmatpush1.msra.mxu0 0.0
        %962 = vmatprep.subr.mxu0 0.0
        %963 = vmatpush1.msra.mxu0 0.0
        %964 = vmatprep.subr.mxu0 0.0
        %965 = vmatpush1.msra.mxu0 0.0
        %966 = vmatprep.subr.mxu0 0.0
        %967 = vmatpush1.msra.mxu0 %v738
        %968 = vmatprep.subr.mxu0 0.0
        %969 = vmatpush2.msra.mxu0 0.0
        %970 = vmatprep.subr.mxu0 0.0
        %971 = vmatpush2.msra.mxu0 0.0
        %972 = vmatprep.subr.mxu0 0.0
        %973 = vmatpush2.msra.mxu0 0.0
        %974 = vmatprep.subr.mxu0 0.0
        %975 = vmatpush2.msra.mxu0 0.0
        %976 = vmatprep.subr.mxu0 0.0
        %977 = vmatpush2.msra.mxu0 0.0
        %978 = vmatprep.subr.mxu0 0.0
        %979 = vmatpush2.msra.mxu0 0.0
        %980 = vmatprep.subr.mxu0 0.0
        %981 = vmatpush2.msra.mxu0 0.0
        %982 = vmatprep.subr.mxu0 0.0
        %983 = vmatpush2.msra.mxu0 0.0
        %984 = vmatprep.subr.mxu0 0.0
        %985 = vmatpush2.msra.mxu0 0.0
        %986 = vmatprep.subr.mxu0 0.0
        %987 = vmatpush2.msra.mxu0 0.0
        %988 = vmatprep.subr.mxu0 0.0
        %989 = vmatpush2.msra.mxu0 0.0
        %990 = vmatprep.subr.mxu0 0.0
        %991 = vmatpush2.msra.mxu0 0.0
        %992 = vmatprep.subr.mxu0 0.0
        %993 = vmatpush2.msra.mxu0 0.0
        %994 = vmatprep.subr.mxu0 0.0
        %995 = vmatpush2.msra.mxu0 0.0
        %996 = vmatprep.subr.mxu0 0.0
        %997 = vmatpush2.msra.mxu0 0.0
        %998 = vmatprep.subr.mxu0 0.0
        %999 = vmatpush2.msra.mxu0 0.0
        %1000 = vmatprep.mubr.f32.mxu0 0.0
        %1001 = vmatmul.mubr.f32.gmra.mxu0 %v934
        %v1002 = vpop.f32.mrf.mxu0
        %v1003 = vadd.f32 0.0, %v1002
        %v1004 = vpop.f32.mrf.mxu0
        %1005 = vdwg.mxu0
        %v1007 = vsel %vm377, %v700, 0
        %1009 = vmatprep.subr.mxu0 0.0
        %1010 = vmatpush1.msra.mxu0 0.0
        %1011 = vmatprep.subr.mxu0 0.0
        %1012 = vmatpush1.msra.mxu0 0.0
        %1013 = vmatprep.subr.mxu0 0.0
        %1014 = vmatpush1.msra.mxu0 0.0
        %1015 = vmatprep.subr.mxu0 0.0
        %1016 = vmatpush1.msra.mxu0 0.0
        %1017 = vmatprep.subr.mxu0 0.0
        %1018 = vmatpush1.msra.mxu0 0.0
        %1019 = vmatprep.subr.mxu0 0.0
        %1020 = vmatpush1.msra.mxu0 0.0
        %1021 = vmatprep.subr.mxu0 0.0
        %1022 = vmatpush1.msra.mxu0 0.0
        %1023 = vmatprep.subr.mxu0 0.0
        %1024 = vmatpush1.msra.mxu0 0.0
        %1025 = vmatprep.subr.mxu0 0.0
        %1026 = vmatpush1.msra.mxu0 0.0
        %1027 = vmatprep.subr.mxu0 0.0
        %1028 = vmatpush1.msra.mxu0 0.0
        %1029 = vmatprep.subr.mxu0 0.0
        %1030 = vmatpush1.msra.mxu0 0.0
        %1031 = vmatprep.subr.mxu0 0.0
        %1032 = vmatpush1.msra.mxu0 0.0
        %1033 = vmatprep.subr.mxu0 0.0
        %1034 = vmatpush1.msra.mxu0 0.0
        %1035 = vmatprep.subr.mxu0 0.0
        %1036 = vmatpush1.msra.mxu0 0.0
        %1037 = vmatprep.subr.mxu0 0.0
        %1038 = vmatpush1.msra.mxu0 0.0
        %1039 = vmatprep.subr.mxu0 0.0
        %1040 = vmatpush1.msra.mxu0 %v739
        %1041 = vmatprep.subr.mxu0 0.0
        %1042 = vmatpush2.msra.mxu0 0.0
        %1043 = vmatprep.subr.mxu0 0.0
        %1044 = vmatpush2.msra.mxu0 0.0
        %1045 = vmatprep.subr.mxu0 0.0
        %1046 = vmatpush2.msra.mxu0 0.0
        %1047 = vmatprep.subr.mxu0 0.0
        %1048 = vmatpush2.msra.mxu0 0.0
        %1049 = vmatprep.subr.mxu0 0.0
        %1050 = vmatpush2.msra.mxu0 0.0
        %1051 = vmatprep.subr.mxu0 0.0
        %1052 = vmatpush2.msra.mxu0 0.0
        %1053 = vmatprep.subr.mxu0 0.0
        %1054 = vmatpush2.msra.mxu0 0.0
        %1055 = vmatprep.subr.mxu0 0.0
        %1056 = vmatpush2.msra.mxu0 0.0
        %1057 = vmatprep.subr.mxu0 0.0
        %1058 = vmatpush2.msra.mxu0 0.0
        %1059 = vmatprep.subr.mxu0 0.0
        %1060 = vmatpush2.msra.mxu0 0.0
        %1061 = vmatprep.subr.mxu0 0.0
        %1062 = vmatpush2.msra.mxu0 0.0
        %1063 = vmatprep.subr.mxu0 0.0
        %1064 = vmatpush2.msra.mxu0 0.0
        %1065 = vmatprep.subr.mxu0 0.0
        %1066 = vmatpush2.msra.mxu0 0.0
        %1067 = vmatprep.subr.mxu0 0.0
        %1068 = vmatpush2.msra.mxu0 0.0
        %1069 = vmatprep.subr.mxu0 0.0
        %1070 = vmatpush2.msra.mxu0 0.0
        %1071 = vmatprep.subr.mxu0 0.0
        %1072 = vmatpush2.msra.mxu0 0.0
        %1073 = vmatprep.mubr.f32.mxu0 0.0
        %1074 = vmatmul.mubr.f32.gmra.mxu0 %v1007
        %v1075 = vpop.f32.mrf.mxu0
        %v1076 = vadd.f32 0.0, %v1075
        %v1077 = vpop.f32.mrf.mxu0
        %1078 = vdwg.mxu0
        %v1079 = vmul.f32 %v857, 0.35355338
        %v1080 = vmul.f32 %v930, 0.35355338
        %v1081 = vmul.f32 %v1003, 0.35355338
        %v1082 = vmul.f32 %v1076, 0.35355338
        %v1083 = vsel %vm377, %v1079, -inf
        %1084 = vmax.xlane.f32.xlu0 %v1083
        %v1085 = vpop.xlane.xlu0 %1084
        %v1086 = vsel %vm377, %v1080, -inf
        %1087 = vmax.xlane.f32.xlu0 %v1086
        %v1088 = vpop.xlane.xlu0 %1087
        %v1089 = vsel %vm377, %v1081, -inf
        %1090 = vmax.xlane.f32.xlu0 %v1089
        %v1091 = vpop.xlane.xlu0 %1090
        %v1092 = vsel %vm377, %v1082, -inf
        %1093 = vmax.xlane.f32.xlu0 %v1092
        %v1094 = vpop.xlane.xlu0 %1093
        %v1095 = vsub.f32 %v1079, %v1085
        %v1096 = vsub.f32 %v1080, %v1088
        %v1097 = vsub.f32 %v1081, %v1091
        %v1098 = vsub.f32 %v1082, %v1094
        %v1099 = vmul.f32 %v1095, 1.442695
        %v1100 = vpow.pop %v1099
        %v1101 = vmul.f32 %v1096, 1.442695
        %v1102 = vpow.pop %v1101
        %v1103 = vmul.f32 %v1097, 1.442695
        %v1104 = vpow.pop %v1103
        %v1105 = vmul.f32 %v1098, 1.442695
        %v1106 = vpow.pop %v1105
        %v1107 = vsel %vm377, %v1100, 0.0
        %1108 = vadd.xlane.f32.xlu0 %v1107
        %v1109 = vpop.xlane.xlu0 %1108
        %v1110 = vsel %vm377, %v1102, 0.0
        %1111 = vadd.xlane.f32.xlu0 %v1110
        %v1112 = vpop.xlane.xlu0 %1111
        %v1113 = vsel %vm377, %v1104, 0.0
        %1114 = vadd.xlane.f32.xlu0 %v1113
        %v1115 = vpop.xlane.xlu0 %1114
        %v1116 = vsel %vm377, %v1106, 0.0
        %1117 = vadd.xlane.f32.xlu0 %v1116
        %v1118 = vpop.xlane.xlu0 %1117
        %v1119 = vrcp.pop %v1109
        %v1120 = vrcp.pop %v1112
        %v1121 = vrcp.pop %v1115
        %v1122 = vrcp.pop %v1118
        %v1123 = vmul.f32 %v1100, %v1119
        %v1124 = vmul.f32 %v1102, %v1120
        %v1125 = vmul.f32 %v1104, %v1121
        %v1126 = vmul.f32 %v1106, %v1122
        %v1128 = vsel %vm377, %v1123, 0
        %v1131 = vsel %vm377, %v771, 0
        %1133 = vmatprep.subr.mxu0 0.0
        %1134 = vmatpush1.xpose.msra.mxu0 0.0
        %1135 = vmatprep.subr.mxu0 0.0
        %1136 = vmatpush1.xpose.msra.mxu0 0.0
        %1137 = vmatprep.subr.mxu0 0.0
        %1138 = vmatpush1.xpose.msra.mxu0 0.0
        %1139 = vmatprep.subr.mxu0 0.0
        %1140 = vmatpush1.xpose.msra.mxu0 0.0
        %1141 = vmatprep.subr.mxu0 0.0
        %1142 = vmatpush1.xpose.msra.mxu0 0.0
        %1143 = vmatprep.subr.mxu0 0.0
        %1144 = vmatpush1.xpose.msra.mxu0 0.0
        %1145 = vmatprep.subr.mxu0 0.0
        %1146 = vmatpush1.xpose.msra.mxu0 0.0
        %1147 = vmatprep.subr.mxu0 0.0
        %1148 = vmatpush1.xpose.msra.mxu0 0.0
        %1149 = vmatprep.subr.mxu0 0.0
        %1150 = vmatpush1.xpose.msra.mxu0 0.0
        %1151 = vmatprep.subr.mxu0 0.0
        %1152 = vmatpush1.xpose.msra.mxu0 0.0
        %1153 = vmatprep.subr.mxu0 0.0
        %1154 = vmatpush1.xpose.msra.mxu0 0.0
        %1155 = vmatprep.subr.mxu0 0.0
        %1156 = vmatpush1.xpose.msra.mxu0 0.0
        %1157 = vmatprep.subr.mxu0 0.0
        %1158 = vmatpush1.xpose.msra.mxu0 0.0
        %1159 = vmatprep.subr.mxu0 0.0
        %1160 = vmatpush1.xpose.msra.mxu0 0.0
        %1161 = vmatprep.subr.mxu0 0.0
        %1162 = vmatpush1.xpose.msra.mxu0 0.0
        %1163 = vmatprep.subr.mxu0 0.0
        %1164 = vmatpush1.xpose.msra.mxu0 %v1131
        %1165 = vmatprep.subr.mxu0 0.0
        %1166 = vmatpush2.xpose.msra.mxu0 0.0
        %1167 = vmatprep.subr.mxu0 0.0
        %1168 = vmatpush2.xpose.msra.mxu0 0.0
        %1169 = vmatprep.subr.mxu0 0.0
        %1170 = vmatpush2.xpose.msra.mxu0 0.0
        %1171 = vmatprep.subr.mxu0 0.0
        %1172 = vmatpush2.xpose.msra.mxu0 0.0
        %1173 = vmatprep.subr.mxu0 0.0
        %1174 = vmatpush2.xpose.msra.mxu0 0.0
        %1175 = vmatprep.subr.mxu0 0.0
        %1176 = vmatpush2.xpose.msra.mxu0 0.0
        %1177 = vmatprep.subr.mxu0 0.0
        %1178 = vmatpush2.xpose.msra.mxu0 0.0
        %1179 = vmatprep.subr.mxu0 0.0
        %1180 = vmatpush2.xpose.msra.mxu0 0.0
        %1181 = vmatprep.subr.mxu0 0.0
        %1182 = vmatpush2.xpose.msra.mxu0 0.0
        %1183 = vmatprep.subr.mxu0 0.0
        %1184 = vmatpush2.xpose.msra.mxu0 0.0
        %1185 = vmatprep.subr.mxu0 0.0
        %1186 = vmatpush2.xpose.msra.mxu0 0.0
        %1187 = vmatprep.subr.mxu0 0.0
        %1188 = vmatpush2.xpose.msra.mxu0 0.0
        %1189 = vmatprep.subr.mxu0 0.0
        %1190 = vmatpush2.xpose.msra.mxu0 0.0
        %1191 = vmatprep.subr.mxu0 0.0
        %1192 = vmatpush2.xpose.msra.mxu0 0.0
        %1193 = vmatprep.subr.mxu0 0.0
        %1194 = vmatpush2.xpose.msra.mxu0 0.0
        %1195 = vmatprep.subr.mxu0 0.0
        %1196 = vmatpush2.xpose.msra.mxu0 0.0
        %1197 = vmatprep.mubr.f32.mxu0 0.0
        %1198 = vmatmul.mubr.f32.gmra.mxu0 %v1128
        %v1199 = vpop.f32.mrf.mxu0
        %v1200 = vadd.f32 0.0, %v1199
        %v1201 = vpop.f32.mrf.mxu0
        %1202 = vdwg.mxu0
        %v1204 = vsel %vm377, %v1124, 0
        %v1207 = vsel %vm377, %v772, 0
        %1209 = vmatprep.subr.mxu0 0.0
        %1210 = vmatpush1.xpose.msra.mxu0 0.0
        %1211 = vmatprep.subr.mxu0 0.0
        %1212 = vmatpush1.xpose.msra.mxu0 0.0
        %1213 = vmatprep.subr.mxu0 0.0
        %1214 = vmatpush1.xpose.msra.mxu0 0.0
        %1215 = vmatprep.subr.mxu0 0.0
        %1216 = vmatpush1.xpose.msra.mxu0 0.0
        %1217 = vmatprep.subr.mxu0 0.0
        %1218 = vmatpush1.xpose.msra.mxu0 0.0
        %1219 = vmatprep.subr.mxu0 0.0
        %1220 = vmatpush1.xpose.msra.mxu0 0.0
        %1221 = vmatprep.subr.mxu0 0.0
        %1222 = vmatpush1.xpose.msra.mxu0 0.0
        %1223 = vmatprep.subr.mxu0 0.0
        %1224 = vmatpush1.xpose.msra.mxu0 0.0
        %1225 = vmatprep.subr.mxu0 0.0
        %1226 = vmatpush1.xpose.msra.mxu0 0.0
        %1227 = vmatprep.subr.mxu0 0.0
        %1228 = vmatpush1.xpose.msra.mxu0 0.0
        %1229 = vmatprep.subr.mxu0 0.0
        %1230 = vmatpush1.xpose.msra.mxu0 0.0
        %1231 = vmatprep.subr.mxu0 0.0
        %1232 = vmatpush1.xpose.msra.mxu0 0.0
        %1233 = vmatprep.subr.mxu0 0.0
        %1234 = vmatpush1.xpose.msra.mxu0 0.0
        %1235 = vmatprep.subr.mxu0 0.0
        %1236 = vmatpush1.xpose.msra.mxu0 0.0
        %1237 = vmatprep.subr.mxu0 0.0
        %1238 = vmatpush1.xpose.msra.mxu0 0.0
        %1239 = vmatprep.subr.mxu0 0.0
        %1240 = vmatpush1.xpose.msra.mxu0 %v1207
        %1241 = vmatprep.subr.mxu0 0.0
        %1242 = vmatpush2.xpose.msra.mxu0 0.0
        %1243 = vmatprep.subr.mxu0 0.0
        %1244 = vmatpush2.xpose.msra.mxu0 0.0
        %1245 = vmatprep.subr.mxu0 0.0
        %1246 = vmatpush2.xpose.msra.mxu0 0.0
        %1247 = vmatprep.subr.mxu0 0.0
        %1248 = vmatpush2.xpose.msra.mxu0 0.0
        %1249 = vmatprep.subr.mxu0 0.0
        %1250 = vmatpush2.xpose.msra.mxu0 0.0
        %1251 = vmatprep.subr.mxu0 0.0
        %1252 = vmatpush2.xpose.msra.mxu0 0.0
        %1253 = vmatprep.subr.mxu0 0.0
        %1254 = vmatpush2.xpose.msra.mxu0 0.0
        %1255 = vmatprep.subr.mxu0 0.0
        %1256 = vmatpush2.xpose.msra.mxu0 0.0
        %1257 = vmatprep.subr.mxu0 0.0
        %1258 = vmatpush2.xpose.msra.mxu0 0.0
        %1259 = vmatprep.subr.mxu0 0.0
        %1260 = vmatpush2.xpose.msra.mxu0 0.0
        %1261 = vmatprep.subr.mxu0 0.0
        %1262 = vmatpush2.xpose.msra.mxu0 0.0
        %1263 = vmatprep.subr.mxu0 0.0
        %1264 = vmatpush2.xpose.msra.mxu0 0.0
        %1265 = vmatprep.subr.mxu0 0.0
        %1266 = vmatpush2.xpose.msra.mxu0 0.0
        %1267 = vmatprep.subr.mxu0 0.0
        %1268 = vmatpush2.xpose.msra.mxu0 0.0
        %1269 = vmatprep.subr.mxu0 0.0
        %1270 = vmatpush2.xpose.msra.mxu0 0.0
        %1271 = vmatprep.subr.mxu0 0.0
        %1272 = vmatpush2.xpose.msra.mxu0 0.0
        %1273 = vmatprep.mubr.f32.mxu0 0.0
        %1274 = vmatmul.mubr.f32.gmra.mxu0 %v1204
        %v1275 = vpop.f32.mrf.mxu0
        %v1276 = vadd.f32 0.0, %v1275
        %v1277 = vpop.f32.mrf.mxu0
        %1278 = vdwg.mxu0
        %v1280 = vsel %vm377, %v1125, 0
        %v1283 = vsel %vm377, %v773, 0
        %1285 = vmatprep.subr.mxu0 0.0
        %1286 = vmatpush1.xpose.msra.mxu0 0.0
        %1287 = vmatprep.subr.mxu0 0.0
        %1288 = vmatpush1.xpose.msra.mxu0 0.0
        %1289 = vmatprep.subr.mxu0 0.0
        %1290 = vmatpush1.xpose.msra.mxu0 0.0
        %1291 = vmatprep.subr.mxu0 0.0
        %1292 = vmatpush1.xpose.msra.mxu0 0.0
        %1293 = vmatprep.subr.mxu0 0.0
        %1294 = vmatpush1.xpose.msra.mxu0 0.0
        %1295 = vmatprep.subr.mxu0 0.0
        %1296 = vmatpush1.xpose.msra.mxu0 0.0
        %1297 = vmatprep.subr.mxu0 0.0
        %1298 = vmatpush1.xpose.msra.mxu0 0.0
        %1299 = vmatprep.subr.mxu0 0.0
        %1300 = vmatpush1.xpose.msra.mxu0 0.0
        %1301 = vmatprep.subr.mxu0 0.0
        %1302 = vmatpush1.xpose.msra.mxu0 0.0
        %1303 = vmatprep.subr.mxu0 0.0
        %1304 = vmatpush1.xpose.msra.mxu0 0.0
        %1305 = vmatprep.subr.mxu0 0.0
        %1306 = vmatpush1.xpose.msra.mxu0 0.0
        %1307 = vmatprep.subr.mxu0 0.0
        %1308 = vmatpush1.xpose.msra.mxu0 0.0
        %1309 = vmatprep.subr.mxu0 0.0
        %1310 = vmatpush1.xpose.msra.mxu0 0.0
        %1311 = vmatprep.subr.mxu0 0.0
        %1312 = vmatpush1.xpose.msra.mxu0 0.0
        %1313 = vmatprep.subr.mxu0 0.0
        %1314 = vmatpush1.xpose.msra.mxu0 0.0
        %1315 = vmatprep.subr.mxu0 0.0
        %1316 = vmatpush1.xpose.msra.mxu0 %v1283
        %1317 = vmatprep.subr.mxu0 0.0
        %1318 = vmatpush2.xpose.msra.mxu0 0.0
        %1319 = vmatprep.subr.mxu0 0.0
        %1320 = vmatpush2.xpose.msra.mxu0 0.0
        %1321 = vmatprep.subr.mxu0 0.0
        %1322 = vmatpush2.xpose.msra.mxu0 0.0
        %1323 = vmatprep.subr.mxu0 0.0
        %1324 = vmatpush2.xpose.msra.mxu0 0.0
        %1325 = vmatprep.subr.mxu0 0.0
        %1326 = vmatpush2.xpose.msra.mxu0 0.0
        %1327 = vmatprep.subr.mxu0 0.0
        %1328 = vmatpush2.xpose.msra.mxu0 0.0
        %1329 = vmatprep.subr.mxu0 0.0
        %1330 = vmatpush2.xpose.msra.mxu0 0.0
        %1331 = vmatprep.subr.mxu0 0.0
        %1332 = vmatpush2.xpose.msra.mxu0 0.0
        %1333 = vmatprep.subr.mxu0 0.0
        %1334 = vmatpush2.xpose.msra.mxu0 0.0
        %1335 = vmatprep.subr.mxu0 0.0
        %1336 = vmatpush2.xpose.msra.mxu0 0.0
        %1337 = vmatprep.subr.mxu0 0.0
        %1338 = vmatpush2.xpose.msra.mxu0 0.0
        %1339 = vmatprep.subr.mxu0 0.0
        %1340 = vmatpush2.xpose.msra.mxu0 0.0
        %1341 = vmatprep.subr.mxu0 0.0
        %1342 = vmatpush2.xpose.msra.mxu0 0.0
        %1343 = vmatprep.subr.mxu0 0.0
        %1344 = vmatpush2.xpose.msra.mxu0 0.0
        %1345 = vmatprep.subr.mxu0 0.0
        %1346 = vmatpush2.xpose.msra.mxu0 0.0
        %1347 = vmatprep.subr.mxu0 0.0
        %1348 = vmatpush2.xpose.msra.mxu0 0.0
        %1349 = vmatprep.mubr.f32.mxu0 0.0
        %1350 = vmatmul.mubr.f32.gmra.mxu0 %v1280
        %v1351 = vpop.f32.mrf.mxu0
        %v1352 = vadd.f32 0.0, %v1351
        %v1353 = vpop.f32.mrf.mxu0
        %1354 = vdwg.mxu0
        %v1356 = vsel %vm377, %v1126, 0
        %v1359 = vsel %vm377, %v774, 0
        %1361 = vmatprep.subr.mxu0 0.0
        %1362 = vmatpush1.xpose.msra.mxu0 0.0
        %1363 = vmatprep.subr.mxu0 0.0
        %1364 = vmatpush1.xpose.msra.mxu0 0.0
        %1365 = vmatprep.subr.mxu0 0.0
        %1366 = vmatpush1.xpose.msra.mxu0 0.0
        %1367 = vmatprep.subr.mxu0 0.0
        %1368 = vmatpush1.xpose.msra.mxu0 0.0
        %1369 = vmatprep.subr.mxu0 0.0
        %1370 = vmatpush1.xpose.msra.mxu0 0.0
        %1371 = vmatprep.subr.mxu0 0.0
        %1372 = vmatpush1.xpose.msra.mxu0 0.0
        %1373 = vmatprep.subr.mxu0 0.0
        %1374 = vmatpush1.xpose.msra.mxu0 0.0
        %1375 = vmatprep.subr.mxu0 0.0
        %1376 = vmatpush1.xpose.msra.mxu0 0.0
        %1377 = vmatprep.subr.mxu0 0.0
        %1378 = vmatpush1.xpose.msra.mxu0 0.0
        %1379 = vmatprep.subr.mxu0 0.0
        %1380 = vmatpush1.xpose.msra.mxu0 0.0
        %1381 = vmatprep.subr.mxu0 0.0
        %1382 = vmatpush1.xpose.msra.mxu0 0.0
        %1383 = vmatprep.subr.mxu0 0.0
        %1384 = vmatpush1.xpose.msra.mxu0 0.0
        %1385 = vmatprep.subr.mxu0 0.0
        %1386 = vmatpush1.xpose.msra.mxu0 0.0
        %1387 = vmatprep.subr.mxu0 0.0
        %1388 = vmatpush1.xpose.msra.mxu0 0.0
        %1389 = vmatprep.subr.mxu0 0.0
        %1390 = vmatpush1.xpose.msra.mxu0 0.0
        %1391 = vmatprep.subr.mxu0 0.0
        %1392 = vmatpush1.xpose.msra.mxu0 %v1359
        %1393 = vmatprep.subr.mxu0 0.0
        %1394 = vmatpush2.xpose.msra.mxu0 0.0
        %1395 = vmatprep.subr.mxu0 0.0
        %1396 = vmatpush2.xpose.msra.mxu0 0.0
        %1397 = vmatprep.subr.mxu0 0.0
        %1398 = vmatpush2.xpose.msra.mxu0 0.0
        %1399 = vmatprep.subr.mxu0 0.0
        %1400 = vmatpush2.xpose.msra.mxu0 0.0
        %1401 = vmatprep.subr.mxu0 0.0
        %1402 = vmatpush2.xpose.msra.mxu0 0.0
        %1403 = vmatprep.subr.mxu0 0.0
        %1404 = vmatpush2.xpose.msra.mxu0 0.0
        %1405 = vmatprep.subr.mxu0 0.0
        %1406 = vmatpush2.xpose.msra.mxu0 0.0
        %1407 = vmatprep.subr.mxu0 0.0
        %1408 = vmatpush2.xpose.msra.mxu0 0.0
        %1409 = vmatprep.subr.mxu0 0.0
        %1410 = vmatpush2.xpose.msra.mxu0 0.0
        %1411 = vmatprep.subr.mxu0 0.0
        %1412 = vmatpush2.xpose.msra.mxu0 0.0
        %1413 = vmatprep.subr.mxu0 0.0
        %1414 = vmatpush2.xpose.msra.mxu0 0.0
        %1415 = vmatprep.subr.mxu0 0.0
        %1416 = vmatpush2.xpose.msra.mxu0 0.0
        %1417 = vmatprep.subr.mxu0 0.0
        %1418 = vmatpush2.xpose.msra.mxu0 0.0
        %1419 = vmatprep.subr.mxu0 0.0
        %1420 = vmatpush2.xpose.msra.mxu0 0.0
        %1421 = vmatprep.subr.mxu0 0.0
        %1422 = vmatpush2.xpose.msra.mxu0 0.0
        %1423 = vmatprep.subr.mxu0 0.0
        %1424 = vmatpush2.xpose.msra.mxu0 0.0
        %1425 = vmatprep.mubr.f32.mxu0 0.0
        %1426 = vmatmul.mubr.f32.gmra.mxu0 %v1356
        %v1427 = vpop.f32.mrf.mxu0
        %v1428 = vadd.f32 0.0, %v1427
        %v1429 = vpop.f32.mrf.mxu0
        %1430 = vdwg.mxu0
        %1432 = vrot.lane.b32.xlu0 %v1276, 8
        %v1433 = vpop.permute.xlu0 %1432
        %1436 = vrot.lane.b32.xlu0 %v1352, 16
        %v1437 = vpop.permute.xlu0 %1436
        %1440 = vrot.lane.b32.xlu0 %v1428, 24
        %v1441 = vpop.permute.xlu0 %1440
        %v1443 = vsel %vm377, %v1200, %v1433
        %vm1444 = vcmask 130048
        %v1445 = vsel %vm1444, %v1443, %v1437
        %vm1446 = vcmask 195584
        %v1447 = vsel %vm1446, %v1445, %v1441
        %v1448 = vlaneseq
        %v1449 = vshrl.u32 %v1448, 7
        %v1450 = vsub.s32 0, %v1449
        %v1451 = vrot.slane %v555, %v1450
        %v1453 = vsel %vm477, %v1447, 0
        %1455 = vmatprep.subr.mxu0 0.0
        %1456 = vmatpush1.msra.mxu0 0.0
        %1457 = vmatprep.subr.mxu0 0.0
        %1458 = vmatpush1.msra.mxu0 0.0
        %1459 = vmatprep.subr.mxu0 0.0
        %1460 = vmatpush1.msra.mxu0 0.0
        %1461 = vmatprep.subr.mxu0 0.0
        %1462 = vmatpush1.msra.mxu0 0.0
        %1463 = vmatprep.subr.mxu0 0.0
        %1464 = vmatpush1.msra.mxu0 0.0
        %1465 = vmatprep.subr.mxu0 0.0
        %1466 = vmatpush1.msra.mxu0 0.0
        %1467 = vmatprep.subr.mxu0 0.0
        %1468 = vmatpush1.msra.mxu0 0.0
        %1469 = vmatprep.subr.mxu0 0.0
        %1470 = vmatpush1.msra.mxu0 0.0
        %1471 = vmatprep.subr.mxu0 0.0
        %1472 = vmatpush1.msra.mxu0 0.0
        %1473 = vmatprep.subr.mxu0 0.0
        %1474 = vmatpush1.msra.mxu0 0.0
        %1475 = vmatprep.subr.mxu0 0.0
        %1476 = vmatpush1.msra.mxu0 0.0
        %1477 = vmatprep.subr.mxu0 0.0
        %1478 = vmatpush1.msra.mxu0 0.0
        %1479 = vmatprep.subr.mxu0 0.0
        %1480 = vmatpush1.msra.mxu0 %v554
        %1481 = vmatprep.subr.mxu0 0.0
        %1482 = vmatpush1.msra.mxu0 %v553
        %1483 = vmatprep.subr.mxu0 0.0
        %1484 = vmatpush1.msra.mxu0 %v552
        %1485 = vmatprep.subr.mxu0 0.0
        %1486 = vmatpush1.msra.mxu0 %v551
        %1487 = vmatprep.subr.mxu0 0.0
        %1488 = vmatpush2.msra.mxu0 0.0
        %1489 = vmatprep.subr.mxu0 0.0
        %1490 = vmatpush2.msra.mxu0 0.0
        %1491 = vmatprep.subr.mxu0 0.0
        %1492 = vmatpush2.msra.mxu0 0.0
        %1493 = vmatprep.subr.mxu0 0.0
        %1494 = vmatpush2.msra.mxu0 0.0
        %1495 = vmatprep.subr.mxu0 0.0
        %1496 = vmatpush2.msra.mxu0 0.0
        %1497 = vmatprep.subr.mxu0 0.0
        %1498 = vmatpush2.msra.mxu0 0.0
        %1499 = vmatprep.subr.mxu0 0.0
        %1500 = vmatpush2.msra.mxu0 0.0
        %1501 = vmatprep.subr.mxu0 0.0
        %1502 = vmatpush2.msra.mxu0 0.0
        %1503 = vmatprep.subr.mxu0 0.0
        %1504 = vmatpush2.msra.mxu0 0.0
        %1505 = vmatprep.subr.mxu0 0.0
        %1506 = vmatpush2.msra.mxu0 0.0
        %1507 = vmatprep.subr.mxu0 0.0
        %1508 = vmatpush2.msra.mxu0 0.0
        %1509 = vmatprep.subr.mxu0 0.0
        %1510 = vmatpush2.msra.mxu0 0.0
        %1511 = vmatprep.subr.mxu0 0.0
        %1512 = vmatpush2.msra.mxu0 0.0
        %1513 = vmatprep.subr.mxu0 0.0
        %1514 = vmatpush2.msra.mxu0 0.0
        %1515 = vmatprep.subr.mxu0 0.0
        %1516 = vmatpush2.msra.mxu0 0.0
        %1517 = vmatprep.subr.mxu0 0.0
        %1518 = vmatpush2.msra.mxu0 0.0
        %1519 = vmatprep.mubr.f32.mxu0 0.0
        %1520 = vmatmul.mubr.f32.gmra.mxu0 %v1453
        %v1521 = vpop.f32.mrf.mxu0
        %v1522 = vadd.f32 %v1451, %v1521
        %v1523 = vpop.f32.mrf.mxu0
        %1524 = vdwg.mxu0
        %v1525 = vadd.f32 %v465, %v1522
        %v1526 = vld [vmem:[%s2 + $0xe0] sm:$0x1]
        %v1527 = vld [vmem:[%s2 + $0xe8] sm:$0x1]
        %v1528 = vsel %vm477, %v1525, 0.0
        %1529 = vadd.xlane.f32.xlu0 %v1528
        %v1530 = vpop.xlane.xlu0 %1529
        %v1531 = vrcp.pop 32.0
        %v1532 = vmul.f32 %v1530, %v1531
        %v1533 = vsub.f32 %v1525, %v1532
        %v1534 = vmul.f32 %v1533, %v1533
        %v1535 = vsel %vm477, %v1534, 0.0
        %1536 = vadd.xlane.f32.xlu0 %v1535
        %v1537 = vpop.xlane.xlu0 %1536
        %v1538 = vmul.f32 %v1537, %v1531
        %v1539 = vadd.f32 %v1538, 1e-05
        %v1540 = vrsqrt.pop %v1539
        %v1541 = vmul.f32 %v1533, %v1540
        %v1542 = vlaneseq
        %v1543 = vshrl.u32 %v1542, 7
        %v1544 = vsub.s32 0, %v1543
        %v1545 = vrot.slane %v1526, %v1544
        %v1546 = vmul.f32 %v1541, %v1545
        %v1547 = vlaneseq
        %v1548 = vshrl.u32 %v1547, 7
        %v1549 = vsub.s32 0, %v1548
        %v1550 = vrot.slane %v1527, %v1549
        %v1551 = vadd.f32 %v1546, %v1550
        %v1552 = vld [vmem:[%s2 + $0x70] sm:$0xff]
        %v1553 = vld [vmem:[%s2 + $0x78] sm:$0xff]
        %v1554 = vld [vmem:[%s2 + $0x80] sm:$0xff]
        %v1555 = vld [vmem:[%s2 + $0x88] sm:$0xff]
        %v1556 = vld [vmem:[%s2 + $0x90] sm:$0x1]
        %v1557 = vlaneseq
        %v1558 = vshrl.u32 %v1557, 7
        %v1559 = vsub.s32 0, %v1558
        %v1560 = vrot.slane %v1556, %v1559
        %v1562 = vsel %vm477, %v1551, 0
        %1564 = vmatprep.subr.mxu0 0.0
        %1565 = vmatpush1.msra.mxu0 0.0
        %1566 = vmatprep.subr.mxu0 0.0
        %1567 = vmatpush1.msra.mxu0 0.0
        %1568 = vmatprep.subr.mxu0 0.0
        %1569 = vmatpush1.msra.mxu0 0.0
        %1570 = vmatprep.subr.mxu0 0.0
        %1571 = vmatpush1.msra.mxu0 0.0
        %1572 = vmatprep.subr.mxu0 0.0
        %1573 = vmatpush1.msra.mxu0 0.0
        %1574 = vmatprep.subr.mxu0 0.0
        %1575 = vmatpush1.msra.mxu0 0.0
        %1576 = vmatprep.subr.mxu0 0.0
        %1577 = vmatpush1.msra.mxu0 0.0
        %1578 = vmatprep.subr.mxu0 0.0
        %1579 = vmatpush1.msra.mxu0 0.0
        %1580 = vmatprep.subr.mxu0 0.0
        %1581 = vmatpush1.msra.mxu0 0.0
        %1582 = vmatprep.subr.mxu0 0.0
        %1583 = vmatpush1.msra.mxu0 0.0
        %1584 = vmatprep.subr.mxu0 0.0
        %1585 = vmatpush1.msra.mxu0 0.0
        %1586 = vmatprep.subr.mxu0 0.0
        %1587 = vmatpush1.msra.mxu0 0.0
        %1588 = vmatprep.subr.mxu0 0.0
        %1589 = vmatpush1.msra.mxu0 %v1555
        %1590 = vmatprep.subr.mxu0 0.0
        %1591 = vmatpush1.msra.mxu0 %v1554
        %1592 = vmatprep.subr.mxu0 0.0
        %1593 = vmatpush1.msra.mxu0 %v1553
        %1594 = vmatprep.subr.mxu0 0.0
        %1595 = vmatpush1.msra.mxu0 %v1552
        %1596 = vmatprep.subr.mxu0 0.0
        %1597 = vmatpush2.msra.mxu0 0.0
        %1598 = vmatprep.subr.mxu0 0.0
        %1599 = vmatpush2.msra.mxu0 0.0
        %1600 = vmatprep.subr.mxu0 0.0
        %1601 = vmatpush2.msra.mxu0 0.0
        %1602 = vmatprep.subr.mxu0 0.0
        %1603 = vmatpush2.msra.mxu0 0.0
        %1604 = vmatprep.subr.mxu0 0.0
        %1605 = vmatpush2.msra.mxu0 0.0
        %1606 = vmatprep.subr.mxu0 0.0
        %1607 = vmatpush2.msra.mxu0 0.0
        %1608 = vmatprep.subr.mxu0 0.0
        %1609 = vmatpush2.msra.mxu0 0.0
        %1610 = vmatprep.subr.mxu0 0.0
        %1611 = vmatpush2.msra.mxu0 0.0
        %1612 = vmatprep.subr.mxu0 0.0
        %1613 = vmatpush2.msra.mxu0 0.0
        %1614 = vmatprep.subr.mxu0 0.0
        %1615 = vmatpush2.msra.mxu0 0.0
        %1616 = vmatprep.subr.mxu0 0.0
        %1617 = vmatpush2.msra.mxu0 0.0
        %1618 = vmatprep.subr.mxu0 0.0
        %1619 = vmatpush2.msra.mxu0 0.0
        %1620 = vmatprep.subr.mxu0 0.0
        %1621 = vmatpush2.msra.mxu0 0.0
        %1622 = vmatprep.subr.mxu0 0.0
        %1623 = vmatpush2.msra.mxu0 0.0
        %1624 = vmatprep.subr.mxu0 0.0
        %1625 = vmatpush2.msra.mxu0 0.0
        %1626 = vmatprep.subr.mxu0 0.0
        %1627 = vmatpush2.msra.mxu0 0.0
        %1628 = vmatprep.mubr.f32.mxu0 0.0
        %1629 = vmatmul.mubr.f32.gmra.mxu0 %v1562
        %v1630 = vpop.f32.mrf.mxu0
        %v1631 = vadd.f32 %v1560, %v1630
        %v1632 = vpop.f32.mrf.mxu0
        %1633 = vdwg.mxu0
        %v1634 = vmax.f32 %v1631, 0.0
        %v1635 = vld [vmem:[%s2 + $0x98] sm:$0xff]
        %v1636 = vld [vmem:[%s2 + $0xa0] sm:$0xff]
        %v1637 = vld [vmem:[%s2 + $0xa8] sm:$0xff]
        %v1638 = vld [vmem:[%s2 + $0xb0] sm:$0xff]
        %v1639 = vld [vmem:[%s2 + $0xb8] sm:$0xff]
        %v1640 = vld [vmem:[%s2 + $0xc0] sm:$0xff]
        %v1641 = vld [vmem:[%s2 + $0xc8] sm:$0xff]
        %v1642 = vld [vmem:[%s2 + $0xd0] sm:$0xff]
        %v1643 = vld [vmem:[%s2 + $0xd8] sm:$0x1]
        %v1644 = vlaneseq
        %v1645 = vshrl.u32 %v1644, 7
        %v1646 = vsub.s32 0, %v1645
        %v1647 = vrot.slane %v1643, %v1646
        %vm1648 = vcmask 523264
        %v1650 = vsel %vm1648, %v1634, 0
        %1652 = vmatprep.subr.mxu0 0.0
        %1653 = vmatpush1.msra.mxu0 0.0
        %1654 = vmatprep.subr.mxu0 0.0
        %1655 = vmatpush1.msra.mxu0 0.0
        %1656 = vmatprep.subr.mxu0 0.0
        %1657 = vmatpush1.msra.mxu0 0.0
        %1658 = vmatprep.subr.mxu0 0.0
        %1659 = vmatpush1.msra.mxu0 0.0
        %1660 = vmatprep.subr.mxu0 0.0
        %1661 = vmatpush1.msra.mxu0 0.0
        %1662 = vmatprep.subr.mxu0 0.0
        %1663 = vmatpush1.msra.mxu0 0.0
        %1664 = vmatprep.subr.mxu0 0.0
        %1665 = vmatpush1.msra.mxu0 0.0
        %1666 = vmatprep.subr.mxu0 0.0
        %1667 = vmatpush1.msra.mxu0 0.0
        %1668 = vmatprep.subr.mxu0 0.0
        %1669 = vmatpush1.msra.mxu0 %v1642
        %1670 = vmatprep.subr.mxu0 0.0
        %1671 = vmatpush1.msra.mxu0 %v1641
        %1672 = vmatprep.subr.mxu0 0.0
        %1673 = vmatpush1.msra.mxu0 %v1640
        %1674 = vmatprep.subr.mxu0 0.0
        %1675 = vmatpush1.msra.mxu0 %v1639
        %1676 = vmatprep.subr.mxu0 0.0
        %1677 = vmatpush1.msra.mxu0 %v1638
        %1678 = vmatprep.subr.mxu0 0.0
        %1679 = vmatpush1.msra.mxu0 %v1637
        %1680 = vmatprep.subr.mxu0 0.0
        %1681 = vmatpush1.msra.mxu0 %v1636
        %1682 = vmatprep.subr.mxu0 0.0
        %1683 = vmatpush1.msra.mxu0 %v1635
        %1684 = vmatprep.subr.mxu0 0.0
        %1685 = vmatpush2.msra.mxu0 0.0
        %1686 = vmatprep.subr.mxu0 0.0
        %1687 = vmatpush2.msra.mxu0 0.0
        %1688 = vmatprep.subr.mxu0 0.0
        %1689 = vmatpush2.msra.mxu0 0.0
        %1690 = vmatprep.subr.mxu0 0.0
        %1691 = vmatpush2.msra.mxu0 0.0
        %1692 = vmatprep.subr.mxu0 0.0
        %1693 = vmatpush2.msra.mxu0 0.0
        %1694 = vmatprep.subr.mxu0 0.0
        %1695 = vmatpush2.msra.mxu0 0.0
        %1696 = vmatprep.subr.mxu0 0.0
        %1697 = vmatpush2.msra.mxu0 0.0
        %1698 = vmatprep.subr.mxu0 0.0
        %1699 = vmatpush2.msra.mxu0 0.0
        %1700 = vmatprep.subr.mxu0 0.0
        %1701 = vmatpush2.msra.mxu0 0.0
        %1702 = vmatprep.subr.mxu0 0.0
        %1703 = vmatpush2.msra.mxu0 0.0
        %1704 = vmatprep.subr.mxu0 0.0
        %1705 = vmatpush2.msra.mxu0 0.0
        %1706 = vmatprep.subr.mxu0 0.0
        %1707 = vmatpush2.msra.mxu0 0.0
        %1708 = vmatprep.subr.mxu0 0.0
        %1709 = vmatpush2.msra.mxu0 0.0
        %1710 = vmatprep.subr.mxu0 0.0
        %1711 = vmatpush2.msra.mxu0 0.0
        %1712 = vmatprep.subr.mxu0 0.0
        %1713 = vmatpush2.msra.mxu0 0.0
        %1714 = vmatprep.subr.mxu0 0.0
        %1715 = vmatpush2.msra.mxu0 0.0
        %1716 = vmatprep.mubr.f32.mxu0 0.0
        %1717 = vmatmul.mubr.f32.gmra.mxu0 %v1650
        %v1718 = vpop.f32.mrf.mxu0
        %v1719 = vadd.f32 %v1647, %v1718
        %v1720 = vpop.f32.mrf.mxu0
        %1721 = vdwg.mxu0
        %v1722 = vadd.f32 %v1551, %v1719
        %v1723 = vld [vmem:[%s2 + $0xf0] sm:$0x1]
        %v1724 = vld [vmem:[%s2 + $0xf8] sm:$0x1]
        %v1725 = vsel %vm477, %v1722, 0.0
        %1726 = vadd.xlane.f32.xlu0 %v1725
        %v1727 = vpop.xlane.xlu0 %1726
        %v1728 = vmul.f32 %v1727, %v1531
        %v1729 = vsub.f32 %v1722, %v1728
        %v1730 = vmul.f32 %v1729, %v1729
        %v1731 = vsel %vm477, %v1730, 0.0
        %1732 = vadd.xlane.f32.xlu0 %v1731
        %v1733 = vpop.xlane.xlu0 %1732
        %v1734 = vmul.f32 %v1733, %v1531
        %v1735 = vadd.f32 %v1734, 1e-05
        %v1736 = vrsqrt.pop %v1735
        %v1737 = vmul.f32 %v1729, %v1736
        %v1738 = vlaneseq
        %v1739 = vshrl.u32 %v1738, 7
        %v1740 = vsub.s32 0, %v1739
        %v1741 = vrot.slane %v1723, %v1740
        %v1742 = vmul.f32 %v1737, %v1741
        %v1743 = vlaneseq
        %v1744 = vshrl.u32 %v1743, 7
        %v1745 = vsub.s32 0, %v1744
        %v1746 = vrot.slane %v1724, %v1745
        %v1747 = vadd.f32 %v1742, %v1746
        %v1748 = vld [vmem:[%s2 + $0x100] sm:$0xff]
        %v1749 = vld [vmem:[%s2 + $0x108] sm:$0xff]
        %v1750 = vld [vmem:[%s2 + $0x110] sm:$0xff]
        %v1751 = vld [vmem:[%s2 + $0x118] sm:$0xff]
        %v1752 = vld [vmem:[%s2 + $0x120] sm:$0x1]
        %v1753 = vlaneseq
        %v1754 = vshrl.u32 %v1753, 7
        %v1755 = vsub.s32 0, %v1754
        %v1756 = vrot.slane %v1752, %v1755
        %v1758 = vsel %vm477, %v1747, 0
        %1760 = vmatprep.subr.mxu0 0.0
        %1761 = vmatpush1.msra.mxu0 0.0
        %1762 = vmatprep.subr.mxu0 0.0
        %1763 = vmatpush1.msra.mxu0 0.0
        %1764 = vmatprep.subr.mxu0 0.0
        %1765 = vmatpush1.msra.mxu0 0.0
        %1766 = vmatprep.subr.mxu0 0.0
        %1767 = vmatpush1.msra.mxu0 0.0
        %1768 = vmatprep.subr.mxu0 0.0
        %1769 = vmatpush1.msra.mxu0 0.0
        %1770 = vmatprep.subr.mxu0 0.0
        %1771 = vmatpush1.msra.mxu0 0.0
        %1772 = vmatprep.subr.mxu0 0.0
        %1773 = vmatpush1.msra.mxu0 0.0
        %1774 = vmatprep.subr.mxu0 0.0
        %1775 = vmatpush1.msra.mxu0 0.0
        %1776 = vmatprep.subr.mxu0 0.0
        %1777 = vmatpush1.msra.mxu0 0.0
        %1778 = vmatprep.subr.mxu0 0.0
        %1779 = vmatpush1.msra.mxu0 0.0
        %1780 = vmatprep.subr.mxu0 0.0
        %1781 = vmatpush1.msra.mxu0 0.0
        %1782 = vmatprep.subr.mxu0 0.0
        %1783 = vmatpush1.msra.mxu0 0.0
        %1784 = vmatprep.subr.mxu0 0.0
        %1785 = vmatpush1.msra.mxu0 %v1751
        %1786 = vmatprep.subr.mxu0 0.0
        %1787 = vmatpush1.msra.mxu0 %v1750
        %1788 = vmatprep.subr.mxu0 0.0
        %1789 = vmatpush1.msra.mxu0 %v1749
        %1790 = vmatprep.subr.mxu0 0.0
        %1791 = vmatpush1.msra.mxu0 %v1748
        %1792 = vmatprep.subr.mxu0 0.0
        %1793 = vmatpush2.msra.mxu0 0.0
        %1794 = vmatprep.subr.mxu0 0.0
        %1795 = vmatpush2.msra.mxu0 0.0
        %1796 = vmatprep.subr.mxu0 0.0
        %1797 = vmatpush2.msra.mxu0 0.0
        %1798 = vmatprep.subr.mxu0 0.0
        %1799 = vmatpush2.msra.mxu0 0.0
        %1800 = vmatprep.subr.mxu0 0.0
        %1801 = vmatpush2.msra.mxu0 0.0
        %1802 = vmatprep.subr.mxu0 0.0
        %1803 = vmatpush2.msra.mxu0 0.0
        %1804 = vmatprep.subr.mxu0 0.0
        %1805 = vmatpush2.msra.mxu0 0.0
        %1806 = vmatprep.subr.mxu0 0.0
        %1807 = vmatpush2.msra.mxu0 0.0
        %1808 = vmatprep.subr.mxu0 0.0
        %1809 = vmatpush2.msra.mxu0 0.0
        %1810 = vmatprep.subr.mxu0 0.0
        %1811 = vmatpush2.msra.mxu0 0.0
        %1812 = vmatprep.subr.mxu0 0.0
        %1813 = vmatpush2.msra.mxu0 0.0
        %1814 = vmatprep.subr.mxu0 0.0
        %1815 = vmatpush2.msra.mxu0 0.0
        %1816 = vmatprep.subr.mxu0 0.0
        %1817 = vmatpush2.msra.mxu0 0.0
        %1818 = vmatprep.subr.mxu0 0.0
        %1819 = vmatpush2.msra.mxu0 0.0
        %1820 = vmatprep.subr.mxu0 0.0
        %1821 = vmatpush2.msra.mxu0 0.0
        %1822 = vmatprep.subr.mxu0 0.0
        %1823 = vmatpush2.msra.mxu0 0.0
        %1824 = vmatprep.mubr.f32.mxu0 0.0
        %1825 = vmatmul.mubr.f32.gmra.mxu0 %v1758
        %v1826 = vpop.f32.mrf.mxu0
        %v1827 = vadd.f32 %v1756, %v1826
        %v1828 = vpop.f32.mrf.mxu0
        %1829 = vdwg.mxu0
        %v1830 = vld [vmem:[%s2 + $0x128] sm:$0xff]
        %v1831 = vld [vmem:[%s2 + $0x130] sm:$0xff]
        %v1832 = vld [vmem:[%s2 + $0x138] sm:$0xff]
        %v1833 = vld [vmem:[%s2 + $0x140] sm:$0xff]
        %v1834 = vld [vmem:[%s2 + $0x148] sm:$0x1]
        %1835 = vxpose.xlu0.b32.start [1/16] %v1827, 128
        %1836 = vxpose.xlu0.b32.cont [2/16] 0.0, 128
        %1837 = vxpose.xlu0.b32.cont [3/16] 0.0, 128
        %1838 = vxpose.xlu0.b32.cont [4/16] 0.0, 128
        %1839 = vxpose.xlu0.b32.cont [5/16] 0.0, 128
        %1840 = vxpose.xlu0.b32.cont [6/16] 0.0, 128
        %1841 = vxpose.xlu0.b32.cont [7/16] 0.0, 128
        %1842 = vxpose.xlu0.b32.cont [8/16] 0.0, 128
        %1843 = vxpose.xlu0.b32.cont [9/16] 0.0, 128
        %1844 = vxpose.xlu0.b32.cont [10/16] 0.0, 128
        %1845 = vxpose.xlu0.b32.cont [11/16] 0.0, 128
        %1846 = vxpose.xlu0.b32.cont [12/16] 0.0, 128
        %1847 = vxpose.xlu0.b32.cont [13/16] 0.0, 128
        %1848 = vxpose.xlu0.b32.cont [14/16] 0.0, 128
        %1849 = vxpose.xlu0.b32.cont [15/16] 0.0, 128
        %1850 = vxpose.xlu0.b32.end [16/16] 0.0, 128
        %v1851 = vpop.trf.xlu0
        %v1852 = vpop.trf.xlu0
        %v1853 = vpop.trf.xlu0
        %v1854 = vpop.trf.xlu0
        %v1855 = vpop.trf.xlu0
        %v1856 = vpop.trf.xlu0
        %v1857 = vpop.trf.xlu0
        %v1858 = vpop.trf.xlu0
        %v1859 = vpop.trf.xlu0
        %v1860 = vpop.trf.xlu0
        %v1861 = vpop.trf.xlu0
        %v1862 = vpop.trf.xlu0
        %v1863 = vpop.trf.xlu0
        %v1864 = vpop.trf.xlu0
        %v1865 = vpop.trf.xlu0
        %v1866 = vpop.trf.xlu0
        %1867 = vxpose.xlu0.b32.start [1/16] %v1851, 128
        %1868 = vxpose.xlu0.b32.cont [2/16] 0.0, 128
        %1869 = vxpose.xlu0.b32.cont [3/16] 0.0, 128
        %1870 = vxpose.xlu0.b32.cont [4/16] 0.0, 128
        %1871 = vxpose.xlu0.b32.cont [5/16] 0.0, 128
        %1872 = vxpose.xlu0.b32.cont [6/16] 0.0, 128
        %1873 = vxpose.xlu0.b32.cont [7/16] 0.0, 128
        %1874 = vxpose.xlu0.b32.cont [8/16] 0.0, 128
        %1875 = vxpose.xlu0.b32.cont [9/16] 0.0, 128
        %1876 = vxpose.xlu0.b32.cont [10/16] 0.0, 128
        %1877 = vxpose.xlu0.b32.cont [11/16] 0.0, 128
        %1878 = vxpose.xlu0.b32.cont [12/16] 0.0, 128
        %1879 = vxpose.xlu0.b32.cont [13/16] 0.0, 128
        %1880 = vxpose.xlu0.b32.cont [14/16] 0.0, 128
        %1881 = vxpose.xlu0.b32.cont [15/16] 0.0, 128
        %1882 = vxpose.xlu0.b32.end [16/16] 0.0, 128
        %v1883 = vpop.trf.xlu0
        %v1884 = vpop.trf.xlu0
        %v1885 = vpop.trf.xlu0
        %v1886 = vpop.trf.xlu0
        %v1887 = vpop.trf.xlu0
        %v1888 = vpop.trf.xlu0
        %v1889 = vpop.trf.xlu0
        %v1890 = vpop.trf.xlu0
        %v1891 = vpop.trf.xlu0
        %v1892 = vpop.trf.xlu0
        %v1893 = vpop.trf.xlu0
        %v1894 = vpop.trf.xlu0
        %v1895 = vpop.trf.xlu0
        %v1896 = vpop.trf.xlu0
        %v1897 = vpop.trf.xlu0
        %v1898 = vpop.trf.xlu0
        %1899 = vxpose.xlu0.b32.start [1/16] %v1852, 128
        %1900 = vxpose.xlu0.b32.cont [2/16] 0.0, 128
        %1901 = vxpose.xlu0.b32.cont [3/16] 0.0, 128
        %1902 = vxpose.xlu0.b32.cont [4/16] 0.0, 128
        %1903 = vxpose.xlu0.b32.cont [5/16] 0.0, 128
        %1904 = vxpose.xlu0.b32.cont [6/16] 0.0, 128
        %1905 = vxpose.xlu0.b32.cont [7/16] 0.0, 128
        %1906 = vxpose.xlu0.b32.cont [8/16] 0.0, 128
        %1907 = vxpose.xlu0.b32.cont [9/16] 0.0, 128
        %1908 = vxpose.xlu0.b32.cont [10/16] 0.0, 128
        %1909 = vxpose.xlu0.b32.cont [11/16] 0.0, 128
        %1910 = vxpose.xlu0.b32.cont [12/16] 0.0, 128
        %1911 = vxpose.xlu0.b32.cont [13/16] 0.0, 128
        %1912 = vxpose.xlu0.b32.cont [14/16] 0.0, 128
        %1913 = vxpose.xlu0.b32.cont [15/16] 0.0, 128
        %1914 = vxpose.xlu0.b32.end [16/16] 0.0, 128
        %v1915 = vpop.trf.xlu0
        %v1916 = vpop.trf.xlu0
        %v1917 = vpop.trf.xlu0
        %v1918 = vpop.trf.xlu0
        %v1919 = vpop.trf.xlu0
        %v1920 = vpop.trf.xlu0
        %v1921 = vpop.trf.xlu0
        %v1922 = vpop.trf.xlu0
        %v1923 = vpop.trf.xlu0
        %v1924 = vpop.trf.xlu0
        %v1925 = vpop.trf.xlu0
        %v1926 = vpop.trf.xlu0
        %v1927 = vpop.trf.xlu0
        %v1928 = vpop.trf.xlu0
        %v1929 = vpop.trf.xlu0
        %v1930 = vpop.trf.xlu0
        %1931 = vxpose.xlu0.b32.start [1/16] %v1853, 128
        %1932 = vxpose.xlu0.b32.cont [2/16] 0.0, 128
        %1933 = vxpose.xlu0.b32.cont [3/16] 0.0, 128
        %1934 = vxpose.xlu0.b32.cont [4/16] 0.0, 128
        %1935 = vxpose.xlu0.b32.cont [5/16] 0.0, 128
        %1936 = vxpose.xlu0.b32.cont [6/16] 0.0, 128
        %1937 = vxpose.xlu0.b32.cont [7/16] 0.0, 128
        %1938 = vxpose.xlu0.b32.cont [8/16] 0.0, 128
        %1939 = vxpose.xlu0.b32.cont [9/16] 0.0, 128
        %1940 = vxpose.xlu0.b32.cont [10/16] 0.0, 128
        %1941 = vxpose.xlu0.b32.cont [11/16] 0.0, 128
        %1942 = vxpose.xlu0.b32.cont [12/16] 0.0, 128
        %1943 = vxpose.xlu0.b32.cont [13/16] 0.0, 128
        %1944 = vxpose.xlu0.b32.cont [14/16] 0.0, 128
        %1945 = vxpose.xlu0.b32.cont [15/16] 0.0, 128
        %1946 = vxpose.xlu0.b32.end [16/16] 0.0, 128
        %v1947 = vpop.trf.xlu0
        %v1948 = vpop.trf.xlu0
        %v1949 = vpop.trf.xlu0
        %v1950 = vpop.trf.xlu0
        %v1951 = vpop.trf.xlu0
        %v1952 = vpop.trf.xlu0
        %v1953 = vpop.trf.xlu0
        %v1954 = vpop.trf.xlu0
        %v1955 = vpop.trf.xlu0
        %v1956 = vpop.trf.xlu0
        %v1957 = vpop.trf.xlu0
        %v1958 = vpop.trf.xlu0
        %v1959 = vpop.trf.xlu0
        %v1960 = vpop.trf.xlu0
        %v1961 = vpop.trf.xlu0
        %v1962 = vpop.trf.xlu0
        %1963 = vxpose.xlu0.b32.start [1/16] %v1854, 128
        %1964 = vxpose.xlu0.b32.cont [2/16] 0.0, 128
        %1965 = vxpose.xlu0.b32.cont [3/16] 0.0, 128
        %1966 = vxpose.xlu0.b32.cont [4/16] 0.0, 128
        %1967 = vxpose.xlu0.b32.cont [5/16] 0.0, 128
        %1968 = vxpose.xlu0.b32.cont [6/16] 0.0, 128
        %1969 = vxpose.xlu0.b32.cont [7/16] 0.0, 128
        %1970 = vxpose.xlu0.b32.cont [8/16] 0.0, 128
        %1971 = vxpose.xlu0.b32.cont [9/16] 0.0, 128
        %1972 = vxpose.xlu0.b32.cont [10/16] 0.0, 128
        %1973 = vxpose.xlu0.b32.cont [11/16] 0.0, 128
        %1974 = vxpose.xlu0.b32.cont [12/16] 0.0, 128
        %1975 = vxpose.xlu0.b32.cont [13/16] 0.0, 128
        %1976 = vxpose.xlu0.b32.cont [14/16] 0.0, 128
        %1977 = vxpose.xlu0.b32.cont [15/16] 0.0, 128
        %1978 = vxpose.xlu0.b32.end [16/16] 0.0, 128
        %v1979 = vpop.trf.xlu0
        %v1980 = vpop.trf.xlu0
        %v1981 = vpop.trf.xlu0
        %v1982 = vpop.trf.xlu0
        %v1983 = vpop.trf.xlu0
        %v1984 = vpop.trf.xlu0
        %v1985 = vpop.trf.xlu0
        %v1986 = vpop.trf.xlu0
        %v1987 = vpop.trf.xlu0
        %v1988 = vpop.trf.xlu0
        %v1989 = vpop.trf.xlu0
        %v1990 = vpop.trf.xlu0
        %v1991 = vpop.trf.xlu0
        %v1992 = vpop.trf.xlu0
        %v1993 = vpop.trf.xlu0
        %v1994 = vpop.trf.xlu0
        %1996 = vrot.lane.b32.xlu0 %v1827, 96
        %v1997 = vpop.permute.xlu0 %1996
        %1999 = vxpose.xlu0.b32.start [1/16] %v1997, 128
        %2000 = vxpose.xlu0.b32.cont [2/16] 0.0, 128
        %2001 = vxpose.xlu0.b32.cont [3/16] 0.0, 128
        %2002 = vxpose.xlu0.b32.cont [4/16] 0.0, 128
        %2003 = vxpose.xlu0.b32.cont [5/16] 0.0, 128
        %2004 = vxpose.xlu0.b32.cont [6/16] 0.0, 128
        %2005 = vxpose.xlu0.b32.cont [7/16] 0.0, 128
        %2006 = vxpose.xlu0.b32.cont [8/16] 0.0, 128
        %2007 = vxpose.xlu0.b32.cont [9/16] 0.0, 128
        %2008 = vxpose.xlu0.b32.cont [10/16] 0.0, 128
        %2009 = vxpose.xlu0.b32.cont [11/16] 0.0, 128
        %2010 = vxpose.xlu0.b32.cont [12/16] 0.0, 128
        %2011 = vxpose.xlu0.b32.cont [13/16] 0.0, 128
        %2012 = vxpose.xlu0.b32.cont [14/16] 0.0, 128
        %2013 = vxpose.xlu0.b32.cont [15/16] 0.0, 128
        %2014 = vxpose.xlu0.b32.end [16/16] 0.0, 128
        %v2015 = vpop.trf.xlu0
        %v2016 = vpop.trf.xlu0
        %v2017 = vpop.trf.xlu0
        %v2018 = vpop.trf.xlu0
        %v2019 = vpop.trf.xlu0
        %v2020 = vpop.trf.xlu0
        %v2021 = vpop.trf.xlu0
        %v2022 = vpop.trf.xlu0
        %v2023 = vpop.trf.xlu0
        %v2024 = vpop.trf.xlu0
        %v2025 = vpop.trf.xlu0
        %v2026 = vpop.trf.xlu0
        %v2027 = vpop.trf.xlu0
        %v2028 = vpop.trf.xlu0
        %v2029 = vpop.trf.xlu0
        %v2030 = vpop.trf.xlu0
        %2031 = vrot.lane.b32.xlu0 %v1827, 64
        %v2032 = vpop.permute.xlu0 %2031
        %2034 = vxpose.xlu0.b32.start [1/16] %v2032, 128
        %2035 = vxpose.xlu0.b32.cont [2/16] 0.0, 128
        %2036 = vxpose.xlu0.b32.cont [3/16] 0.0, 128
        %2037 = vxpose.xlu0.b32.cont [4/16] 0.0, 128
        %2038 = vxpose.xlu0.b32.cont [5/16] 0.0, 128
        %2039 = vxpose.xlu0.b32.cont [6/16] 0.0, 128
        %2040 = vxpose.xlu0.b32.cont [7/16] 0.0, 128
        %2041 = vxpose.xlu0.b32.cont [8/16] 0.0, 128
        %2042 = vxpose.xlu0.b32.cont [9/16] 0.0, 128
        %2043 = vxpose.xlu0.b32.cont [10/16] 0.0, 128
        %2044 = vxpose.xlu0.b32.cont [11/16] 0.0, 128
        %2045 = vxpose.xlu0.b32.cont [12/16] 0.0, 128
        %2046 = vxpose.xlu0.b32.cont [13/16] 0.0, 128
        %2047 = vxpose.xlu0.b32.cont [14/16] 0.0, 128
        %2048 = vxpose.xlu0.b32.cont [15/16] 0.0, 128
        %2049 = vxpose.xlu0.b32.end [16/16] 0.0, 128
        %v2050 = vpop.trf.xlu0
        %v2051 = vpop.trf.xlu0
        %v2052 = vpop.trf.xlu0
        %v2053 = vpop.trf.xlu0
        %v2054 = vpop.trf.xlu0
        %v2055 = vpop.trf.xlu0
        %v2056 = vpop.trf.xlu0
        %v2057 = vpop.trf.xlu0
        %v2058 = vpop.trf.xlu0
        %v2059 = vpop.trf.xlu0
        %v2060 = vpop.trf.xlu0
        %v2061 = vpop.trf.xlu0
        %v2062 = vpop.trf.xlu0
        %v2063 = vpop.trf.xlu0
        %v2064 = vpop.trf.xlu0
        %v2065 = vpop.trf.xlu0
        %v2067 = vsel %vm377, %v1883, 0
        %2069 = vmatprep.subr.mxu0 0.0
        %2070 = vmatpush1.msra.mxu0 0.0
        %2071 = vmatprep.subr.mxu0 0.0
        %2072 = vmatpush1.msra.mxu0 0.0
        %2073 = vmatprep.subr.mxu0 0.0
        %2074 = vmatpush1.msra.mxu0 0.0
        %2075 = vmatprep.subr.mxu0 0.0
        %2076 = vmatpush1.msra.mxu0 0.0
        %2077 = vmatprep.subr.mxu0 0.0
        %2078 = vmatpush1.msra.mxu0 0.0
        %2079 = vmatprep.subr.mxu0 0.0
        %2080 = vmatpush1.msra.mxu0 0.0
        %2081 = vmatprep.subr.mxu0 0.0
        %2082 = vmatpush1.msra.mxu0 0.0
        %2083 = vmatprep.subr.mxu0 0.0
        %2084 = vmatpush1.msra.mxu0 0.0
        %2085 = vmatprep.subr.mxu0 0.0
        %2086 = vmatpush1.msra.mxu0 0.0
        %2087 = vmatprep.subr.mxu0 0.0
        %2088 = vmatpush1.msra.mxu0 0.0
        %2089 = vmatprep.subr.mxu0 0.0
        %2090 = vmatpush1.msra.mxu0 0.0
        %2091 = vmatprep.subr.mxu0 0.0
        %2092 = vmatpush1.msra.mxu0 0.0
        %2093 = vmatprep.subr.mxu0 0.0
        %2094 = vmatpush1.msra.mxu0 0.0
        %2095 = vmatprep.subr.mxu0 0.0
        %2096 = vmatpush1.msra.mxu0 0.0
        %2097 = vmatprep.subr.mxu0 0.0
        %2098 = vmatpush1.msra.mxu0 0.0
        %2099 = vmatprep.subr.mxu0 0.0
        %2100 = vmatpush1.msra.mxu0 %v2015
        %2101 = vmatprep.subr.mxu0 0.0
        %2102 = vmatpush2.msra.mxu0 0.0
        %2103 = vmatprep.subr.mxu0 0.0
        %2104 = vmatpush2.msra.mxu0 0.0
        %2105 = vmatprep.subr.mxu0 0.0
        %2106 = vmatpush2.msra.mxu0 0.0
        %2107 = vmatprep.subr.mxu0 0.0
        %2108 = vmatpush2.msra.mxu0 0.0
        %2109 = vmatprep.subr.mxu0 0.0
        %2110 = vmatpush2.msra.mxu0 0.0
        %2111 = vmatprep.subr.mxu0 0.0
        %2112 = vmatpush2.msra.mxu0 0.0
        %2113 = vmatprep.subr.mxu0 0.0
        %2114 = vmatpush2.msra.mxu0 0.0
        %2115 = vmatprep.subr.mxu0 0.0
        %2116 = vmatpush2.msra.mxu0 0.0
        %2117 = vmatprep.subr.mxu0 0.0
        %2118 = vmatpush2.msra.mxu0 0.0
        %2119 = vmatprep.subr.mxu0 0.0
        %2120 = vmatpush2.msra.mxu0 0.0
        %2121 = vmatprep.subr.mxu0 0.0
        %2122 = vmatpush2.msra.mxu0 0.0
        %2123 = vmatprep.subr.mxu0 0.0
        %2124 = vmatpush2.msra.mxu0 0.0
        %2125 = vmatprep.subr.mxu0 0.0
        %2126 = vmatpush2.msra.mxu0 0.0
        %2127 = vmatprep.subr.mxu0 0.0
        %2128 = vmatpush2.msra.mxu0 0.0
        %2129 = vmatprep.subr.mxu0 0.0
        %2130 = vmatpush2.msra.mxu0 0.0
        %2131 = vmatprep.subr.mxu0 0.0
        %2132 = vmatpush2.msra.mxu0 0.0
        %2133 = vmatprep.mubr.f32.mxu0 0.0
        %2134 = vmatmul.mubr.f32.gmra.mxu0 %v2067
        %v2135 = vpop.f32.mrf.mxu0
        %v2136 = vadd.f32 0.0, %v2135
        %v2137 = vpop.f32.mrf.mxu0
        %2138 = vdwg.mxu0
        %v2140 = vsel %vm377, %v1915, 0
        %2142 = vmatprep.subr.mxu0 0.0
        %2143 = vmatpush1.msra.mxu0 0.0
        %2144 = vmatprep.subr.mxu0 0.0
        %2145 = vmatpush1.msra.mxu0 0.0
        %2146 = vmatprep.subr.mxu0 0.0
        %2147 = vmatpush1.msra.mxu0 0.0
        %2148 = vmatprep.subr.mxu0 0.0
        %2149 = vmatpush1.msra.mxu0 0.0
        %2150 = vmatprep.subr.mxu0 0.0
        %2151 = vmatpush1.msra.mxu0 0.0
        %2152 = vmatprep.subr.mxu0 0.0
        %2153 = vmatpush1.msra.mxu0 0.0
        %2154 = vmatprep.subr.mxu0 0.0
        %2155 = vmatpush1.msra.mxu0 0.0
        %2156 = vmatprep.subr.mxu0 0.0
        %2157 = vmatpush1.msra.mxu0 0.0
        %2158 = vmatprep.subr.mxu0 0.0
        %2159 = vmatpush1.msra.mxu0 0.0
        %2160 = vmatprep.subr.mxu0 0.0
        %2161 = vmatpush1.msra.mxu0 0.0
        %2162 = vmatprep.subr.mxu0 0.0
        %2163 = vmatpush1.msra.mxu0 0.0
        %2164 = vmatprep.subr.mxu0 0.0
        %2165 = vmatpush1.msra.mxu0 0.0
        %2166 = vmatprep.subr.mxu0 0.0
        %2167 = vmatpush1.msra.mxu0 0.0
        %2168 = vmatprep.subr.mxu0 0.0
        %2169 = vmatpush1.msra.mxu0 0.0
        %2170 = vmatprep.subr.mxu0 0.0
        %2171 = vmatpush1.msra.mxu0 0.0
        %2172 = vmatprep.subr.mxu0 0.0
        %2173 = vmatpush1.msra.mxu0 %v2016
        %2174 = vmatprep.subr.mxu0 0.0
        %2175 = vmatpush2.msra.mxu0 0.0
        %2176 = vmatprep.subr.mxu0 0.0
        %2177 = vmatpush2.msra.mxu0 0.0
        %2178 = vmatprep.subr.mxu0 0.0
        %2179 = vmatpush2.msra.mxu0 0.0
        %2180 = vmatprep.subr.mxu0 0.0
        %2181 = vmatpush2.msra.mxu0 0.0
        %2182 = vmatprep.subr.mxu0 0.0
        %2183 = vmatpush2.msra.mxu0 0.0
        %2184 = vmatprep.subr.mxu0 0.0
        %2185 = vmatpush2.msra.mxu0 0.0
        %2186 = vmatprep.subr.mxu0 0.0
        %2187 = vmatpush2.msra.mxu0 0.0
        %2188 = vmatprep.subr.mxu0 0.0
        %2189 = vmatpush2.msra.mxu0 0.0
        %2190 = vmatprep.subr.mxu0 0.0
        %2191 = vmatpush2.msra.mxu0 0.0
        %2192 = vmatprep.subr.mxu0 0.0
        %2193 = vmatpush2.msra.mxu0 0.0
        %2194 = vmatprep.subr.mxu0 0.0
        %2195 = vmatpush2.msra.mxu0 0.0
        %2196 = vmatprep.subr.mxu0 0.0
        %2197 = vmatpush2.msra.mxu0 0.0
        %2198 = vmatprep.subr.mxu0 0.0
        %2199 = vmatpush2.msra.mxu0 0.0
        %2200 = vmatprep.subr.mxu0 0.0
        %2201 = vmatpush2.msra.mxu0 0.0
        %2202 = vmatprep.subr.mxu0 0.0
        %2203 = vmatpush2.msra.mxu0 0.0
        %2204 = vmatprep.subr.mxu0 0.0
        %2205 = vmatpush2.msra.mxu0 0.0
        %2206 = vmatprep.mubr.f32.mxu0 0.0
        %2207 = vmatmul.mubr.f32.gmra.mxu0 %v2140
        %v2208 = vpop.f32.mrf.mxu0
        %v2209 = vadd.f32 0.0, %v2208
        %v2210 = vpop.f32.mrf.mxu0
        %2211 = vdwg.mxu0
        %v2213 = vsel %vm377, %v1947, 0
        %2215 = vmatprep.subr.mxu0 0.0
        %2216 = vmatpush1.msra.mxu0 0.0
        %2217 = vmatprep.subr.mxu0 0.0
        %2218 = vmatpush1.msra.mxu0 0.0
        %2219 = vmatprep.subr.mxu0 0.0
        %2220 = vmatpush1.msra.mxu0 0.0
        %2221 = vmatprep.subr.mxu0 0.0
        %2222 = vmatpush1.msra.mxu0 0.0
        %2223 = vmatprep.subr.mxu0 0.0
        %2224 = vmatpush1.msra.mxu0 0.0
        %2225 = vmatprep.subr.mxu0 0.0
        %2226 = vmatpush1.msra.mxu0 0.0
        %2227 = vmatprep.subr.mxu0 0.0
        %2228 = vmatpush1.msra.mxu0 0.0
        %2229 = vmatprep.subr.mxu0 0.0
        %2230 = vmatpush1.msra.mxu0 0.0
        %2231 = vmatprep.subr.mxu0 0.0
        %2232 = vmatpush1.msra.mxu0 0.0
        %2233 = vmatprep.subr.mxu0 0.0
        %2234 = vmatpush1.msra.mxu0 0.0
        %2235 = vmatprep.subr.mxu0 0.0
        %2236 = vmatpush1.msra.mxu0 0.0
        %2237 = vmatprep.subr.mxu0 0.0
        %2238 = vmatpush1.msra.mxu0 0.0
        %2239 = vmatprep.subr.mxu0 0.0
        %2240 = vmatpush1.msra.mxu0 0.0
        %2241 = vmatprep.subr.mxu0 0.0
        %2242 = vmatpush1.msra.mxu0 0.0
        %2243 = vmatprep.subr.mxu0 0.0
        %2244 = vmatpush1.msra.mxu0 0.0
        %2245 = vmatprep.subr.mxu0 0.0
        %2246 = vmatpush1.msra.mxu0 %v2017
        %2247 = vmatprep.subr.mxu0 0.0
        %2248 = vmatpush2.msra.mxu0 0.0
        %2249 = vmatprep.subr.mxu0 0.0
        %2250 = vmatpush2.msra.mxu0 0.0
        %2251 = vmatprep.subr.mxu0 0.0
        %2252 = vmatpush2.msra.mxu0 0.0
        %2253 = vmatprep.subr.mxu0 0.0
        %2254 = vmatpush2.msra.mxu0 0.0
        %2255 = vmatprep.subr.mxu0 0.0
        %2256 = vmatpush2.msra.mxu0 0.0
        %2257 = vmatprep.subr.mxu0 0.0
        %2258 = vmatpush2.msra.mxu0 0.0
        %2259 = vmatprep.subr.mxu0 0.0
        %2260 = vmatpush2.msra.mxu0 0.0
        %2261 = vmatprep.subr.mxu0 0.0
        %2262 = vmatpush2.msra.mxu0 0.0
        %2263 = vmatprep.subr.mxu0 0.0
        %2264 = vmatpush2.msra.mxu0 0.0
        %2265 = vmatprep.subr.mxu0 0.0
        %2266 = vmatpush2.msra.mxu0 0.0
        %2267 = vmatprep.subr.mxu0 0.0
        %2268 = vmatpush2.msra.mxu0 0.0
        %2269 = vmatprep.subr.mxu0 0.0
        %2270 = vmatpush2.msra.mxu0 0.0
        %2271 = vmatprep.subr.mxu0 0.0
        %2272 = vmatpush2.msra.mxu0 0.0
        %2273 = vmatprep.subr.mxu0 0.0
        %2274 = vmatpush2.msra.mxu0 0.0
        %2275 = vmatprep.subr.mxu0 0.0
        %2276 = vmatpush2.msra.mxu0 0.0
        %2277 = vmatprep.subr.mxu0 0.0
        %2278 = vmatpush2.msra.mxu0 0.0
        %2279 = vmatprep.mubr.f32.mxu0 0.0
        %2280 = vmatmul.mubr.f32.gmra.mxu0 %v2213
        %v2281 = vpop.f32.mrf.mxu0
        %v2282 = vadd.f32 0.0, %v2281
        %v2283 = vpop.f32.mrf.mxu0
        %2284 = vdwg.mxu0
        %v2286 = vsel %vm377, %v1979, 0
        %2288 = vmatprep.subr.mxu0 0.0
        %2289 = vmatpush1.msra.mxu0 0.0
        %2290 = vmatprep.subr.mxu0 0.0
        %2291 = vmatpush1.msra.mxu0 0.0
        %2292 = vmatprep.subr.mxu0 0.0
        %2293 = vmatpush1.msra.mxu0 0.0
        %2294 = vmatprep.subr.mxu0 0.0
        %2295 = vmatpush1.msra.mxu0 0.0
        %2296 = vmatprep.subr.mxu0 0.0
        %2297 = vmatpush1.msra.mxu0 0.0
        %2298 = vmatprep.subr.mxu0 0.0
        %2299 = vmatpush1.msra.mxu0 0.0
        %2300 = vmatprep.subr.mxu0 0.0
        %2301 = vmatpush1.msra.mxu0 0.0
        %2302 = vmatprep.subr.mxu0 0.0
        %2303 = vmatpush1.msra.mxu0 0.0
        %2304 = vmatprep.subr.mxu0 0.0
        %2305 = vmatpush1.msra.mxu0 0.0
        %2306 = vmatprep.subr.mxu0 0.0
        %2307 = vmatpush1.msra.mxu0 0.0
        %2308 = vmatprep.subr.mxu0 0.0
        %2309 = vmatpush1.msra.mxu0 0.0
        %2310 = vmatprep.subr.mxu0 0.0
        %2311 = vmatpush1.msra.mxu0 0.0
        %2312 = vmatprep.subr.mxu0 0.0
        %2313 = vmatpush1.msra.mxu0 0.0
        %2314 = vmatprep.subr.mxu0 0.0
        %2315 = vmatpush1.msra.mxu0 0.0
        %2316 = vmatprep.subr.mxu0 0.0
        %2317 = vmatpush1.msra.mxu0 0.0
        %2318 = vmatprep.subr.mxu0 0.0
        %2319 = vmatpush1.msra.mxu0 %v2018
        %2320 = vmatprep.subr.mxu0 0.0
        %2321 = vmatpush2.msra.mxu0 0.0
        %2322 = vmatprep.subr.mxu0 0.0
        %2323 = vmatpush2.msra.mxu0 0.0
        %2324 = vmatprep.subr.mxu0 0.0
        %2325 = vmatpush2.msra.mxu0 0.0
        %2326 = vmatprep.subr.mxu0 0.0
        %2327 = vmatpush2.msra.mxu0 0.0
        %2328 = vmatprep.subr.mxu0 0.0
        %2329 = vmatpush2.msra.mxu0 0.0
        %2330 = vmatprep.subr.mxu0 0.0
        %2331 = vmatpush2.msra.mxu0 0.0
        %2332 = vmatprep.subr.mxu0 0.0
        %2333 = vmatpush2.msra.mxu0 0.0
        %2334 = vmatprep.subr.mxu0 0.0
        %2335 = vmatpush2.msra.mxu0 0.0
        %2336 = vmatprep.subr.mxu0 0.0
        %2337 = vmatpush2.msra.mxu0 0.0
        %2338 = vmatprep.subr.mxu0 0.0
        %2339 = vmatpush2.msra.mxu0 0.0
        %2340 = vmatprep.subr.mxu0 0.0
        %2341 = vmatpush2.msra.mxu0 0.0
        %2342 = vmatprep.subr.mxu0 0.0
        %2343 = vmatpush2.msra.mxu0 0.0
        %2344 = vmatprep.subr.mxu0 0.0
        %2345 = vmatpush2.msra.mxu0 0.0
        %2346 = vmatprep.subr.mxu0 0.0
        %2347 = vmatpush2.msra.mxu0 0.0
        %2348 = vmatprep.subr.mxu0 0.0
        %2349 = vmatpush2.msra.mxu0 0.0
        %2350 = vmatprep.subr.mxu0 0.0
        %2351 = vmatpush2.msra.mxu0 0.0
        %2352 = vmatprep.mubr.f32.mxu0 0.0
        %2353 = vmatmul.mubr.f32.gmra.mxu0 %v2286
        %v2354 = vpop.f32.mrf.mxu0
        %v2355 = vadd.f32 0.0, %v2354
        %v2356 = vpop.f32.mrf.mxu0
        %2357 = vdwg.mxu0
        %v2358 = vmul.f32 %v2136, 0.35355338
        %v2359 = vmul.f32 %v2209, 0.35355338
        %v2360 = vmul.f32 %v2282, 0.35355338
        %v2361 = vmul.f32 %v2355, 0.35355338
        %v2362 = vsel %vm377, %v2358, -inf
        %2363 = vmax.xlane.f32.xlu0 %v2362
        %v2364 = vpop.xlane.xlu0 %2363
        %v2365 = vsel %vm377, %v2359, -inf
        %2366 = vmax.xlane.f32.xlu0 %v2365
        %v2367 = vpop.xlane.xlu0 %2366
        %v2368 = vsel %vm377, %v2360, -inf
        %2369 = vmax.xlane.f32.xlu0 %v2368
        %v2370 = vpop.xlane.xlu0 %2369
        %v2371 = vsel %vm377, %v2361, -inf
        %2372 = vmax.xlane.f32.xlu0 %v2371
        %v2373 = vpop.xlane.xlu0 %2372
        %v2374 = vsub.f32 %v2358, %v2364
        %v2375 = vsub.f32 %v2359, %v2367
        %v2376 = vsub.f32 %v2360, %v2370
        %v2377 = vsub.f32 %v2361, %v2373
        %v2378 = vmul.f32 %v2374, 1.442695
        %v2379 = vpow.pop %v2378
        %v2380 = vmul.f32 %v2375, 1.442695
        %v2381 = vpow.pop %v2380
        %v2382 = vmul.f32 %v2376, 1.442695
        %v2383 = vpow.pop %v2382
        %v2384 = vmul.f32 %v2377, 1.442695
        %v2385 = vpow.pop %v2384
        %v2386 = vsel %vm377, %v2379, 0.0
        %2387 = vadd.xlane.f32.xlu0 %v2386
        %v2388 = vpop.xlane.xlu0 %2387
        %v2389 = vsel %vm377, %v2381, 0.0
        %2390 = vadd.xlane.f32.xlu0 %v2389
        %v2391 = vpop.xlane.xlu0 %2390
        %v2392 = vsel %vm377, %v2383, 0.0
        %2393 = vadd.xlane.f32.xlu0 %v2392
        %v2394 = vpop.xlane.xlu0 %2393
        %v2395 = vsel %vm377, %v2385, 0.0
        %2396 = vadd.xlane.f32.xlu0 %v2395
        %v2397 = vpop.xlane.xlu0 %2396
        %v2398 = vrcp.pop %v2388
        %v2399 = vrcp.pop %v2391
        %v2400 = vrcp.pop %v2394
        %v2401 = vrcp.pop %v2397
        %v2402 = vmul.f32 %v2379, %v2398
        %v2403 = vmul.f32 %v2381, %v2399
        %v2404 = vmul.f32 %v2383, %v2400
        %v2405 = vmul.f32 %v2385, %v2401
        %v2407 = vsel %vm377, %v2402, 0
        %v2410 = vsel %vm377, %v2050, 0
        %2412 = vmatprep.subr.mxu0 0.0
        %2413 = vmatpush1.xpose.msra.mxu0 0.0
        %2414 = vmatprep.subr.mxu0 0.0
        %2415 = vmatpush1.xpose.msra.mxu0 0.0
        %2416 = vmatprep.subr.mxu0 0.0
        %2417 = vmatpush1.xpose.msra.mxu0 0.0
        %2418 = vmatprep.subr.mxu0 0.0
        %2419 = vmatpush1.xpose.msra.mxu0 0.0
        %2420 = vmatprep.subr.mxu0 0.0
        %2421 = vmatpush1.xpose.msra.mxu0 0.0
        %2422 = vmatprep.subr.mxu0 0.0
        %2423 = vmatpush1.xpose.msra.mxu0 0.0
        %2424 = vmatprep.subr.mxu0 0.0
        %2425 = vmatpush1.xpose.msra.mxu0 0.0
        %2426 = vmatprep.subr.mxu0 0.0
        %2427 = vmatpush1.xpose.msra.mxu0 0.0
        %2428 = vmatprep.subr.mxu0 0.0
        %2429 = vmatpush1.xpose.msra.mxu0 0.0
        %2430 = vmatprep.subr.mxu0 0.0
        %2431 = vmatpush1.xpose.msra.mxu0 0.0
        %2432 = vmatprep.subr.mxu0 0.0
        %2433 = vmatpush1.xpose.msra.mxu0 0.0
        %2434 = vmatprep.subr.mxu0 0.0
        %2435 = vmatpush1.xpose.msra.mxu0 0.0
        %2436 = vmatprep.subr.mxu0 0.0
        %2437 = vmatpush1.xpose.msra.mxu0 0.0
        %2438 = vmatprep.subr.mxu0 0.0
        %2439 = vmatpush1.xpose.msra.mxu0 0.0
        %2440 = vmatprep.subr.mxu0 0.0
        %2441 = vmatpush1.xpose.msra.mxu0 0.0
        %2442 = vmatprep.subr.mxu0 0.0
        %2443 = vmatpush1.xpose.msra.mxu0 %v2410
        %2444 = vmatprep.subr.mxu0 0.0
        %2445 = vmatpush2.xpose.msra.mxu0 0.0
        %2446 = vmatprep.subr.mxu0 0.0
        %2447 = vmatpush2.xpose.msra.mxu0 0.0
        %2448 = vmatprep.subr.mxu0 0.0
        %2449 = vmatpush2.xpose.msra.mxu0 0.0
        %2450 = vmatprep.subr.mxu0 0.0
        %2451 = vmatpush2.xpose.msra.mxu0 0.0
        %2452 = vmatprep.subr.mxu0 0.0
        %2453 = vmatpush2.xpose.msra.mxu0 0.0
        %2454 = vmatprep.subr.mxu0 0.0
        %2455 = vmatpush2.xpose.msra.mxu0 0.0
        %2456 = vmatprep.subr.mxu0 0.0
        %2457 = vmatpush2.xpose.msra.mxu0 0.0
        %2458 = vmatprep.subr.mxu0 0.0
        %2459 = vmatpush2.xpose.msra.mxu0 0.0
        %2460 = vmatprep.subr.mxu0 0.0
        %2461 = vmatpush2.xpose.msra.mxu0 0.0
        %2462 = vmatprep.subr.mxu0 0.0
        %2463 = vmatpush2.xpose.msra.mxu0 0.0
        %2464 = vmatprep.subr.mxu0 0.0
        %2465 = vmatpush2.xpose.msra.mxu0 0.0
        %2466 = vmatprep.subr.mxu0 0.0
        %2467 = vmatpush2.xpose.msra.mxu0 0.0
        %2468 = vmatprep.subr.mxu0 0.0
        %2469 = vmatpush2.xpose.msra.mxu0 0.0
        %2470 = vmatprep.subr.mxu0 0.0
        %2471 = vmatpush2.xpose.msra.mxu0 0.0
        %2472 = vmatprep.subr.mxu0 0.0
        %2473 = vmatpush2.xpose.msra.mxu0 0.0
        %2474 = vmatprep.subr.mxu0 0.0
        %2475 = vmatpush2.xpose.msra.mxu0 0.0
        %2476 = vmatprep.mubr.f32.mxu0 0.0
        %2477 = vmatmul.mubr.f32.gmra.mxu0 %v2407
        %v2478 = vpop.f32.mrf.mxu0
        %v2479 = vadd.f32 0.0, %v2478
        %v2480 = vpop.f32.mrf.mxu0
        %2481 = vdwg.mxu0
        %v2483 = vsel %vm377, %v2403, 0
        %v2486 = vsel %vm377, %v2051, 0
        %2488 = vmatprep.subr.mxu0 0.0
        %2489 = vmatpush1.xpose.msra.mxu0 0.0
        %2490 = vmatprep.subr.mxu0 0.0
        %2491 = vmatpush1.xpose.msra.mxu0 0.0
        %2492 = vmatprep.subr.mxu0 0.0
        %2493 = vmatpush1.xpose.msra.mxu0 0.0
        %2494 = vmatprep.subr.mxu0 0.0
        %2495 = vmatpush1.xpose.msra.mxu0 0.0
        %2496 = vmatprep.subr.mxu0 0.0
        %2497 = vmatpush1.xpose.msra.mxu0 0.0
        %2498 = vmatprep.subr.mxu0 0.0
        %2499 = vmatpush1.xpose.msra.mxu0 0.0
        %2500 = vmatprep.subr.mxu0 0.0
        %2501 = vmatpush1.xpose.msra.mxu0 0.0
        %2502 = vmatprep.subr.mxu0 0.0
        %2503 = vmatpush1.xpose.msra.mxu0 0.0
        %2504 = vmatprep.subr.mxu0 0.0
        %2505 = vmatpush1.xpose.msra.mxu0 0.0
        %2506 = vmatprep.subr.mxu0 0.0
        %2507 = vmatpush1.xpose.msra.mxu0 0.0
        %2508 = vmatprep.subr.mxu0 0.0
        %2509 = vmatpush1.xpose.msra.mxu0 0.0
        %2510 = vmatprep.subr.mxu0 0.0
        %2511 = vmatpush1.xpose.msra.mxu0 0.0
        %2512 = vmatprep.subr.mxu0 0.0
        %2513 = vmatpush1.xpose.msra.mxu0 0.0
        %2514 = vmatprep.subr.mxu0 0.0
        %2515 = vmatpush1.xpose.msra.mxu0 0.0
        %2516 = vmatprep.subr.mxu0 0.0
        %2517 = vmatpush1.xpose.msra.mxu0 0.0
        %2518 = vmatprep.subr.mxu0 0.0
        %2519 = vmatpush1.xpose.msra.mxu0 %v2486
        %2520 = vmatprep.subr.mxu0 0.0
        %2521 = vmatpush2.xpose.msra.mxu0 0.0
        %2522 = vmatprep.subr.mxu0 0.0
        %2523 = vmatpush2.xpose.msra.mxu0 0.0
        %2524 = vmatprep.subr.mxu0 0.0
        %2525 = vmatpush2.xpose.msra.mxu0 0.0
        %2526 = vmatprep.subr.mxu0 0.0
        %2527 = vmatpush2.xpose.msra.mxu0 0.0
        %2528 = vmatprep.subr.mxu0 0.0
        %2529 = vmatpush2.xpose.msra.mxu0 0.0
        %2530 = vmatprep.subr.mxu0 0.0
        %2531 = vmatpush2.xpose.msra.mxu0 0.0
        %2532 = vmatprep.subr.mxu0 0.0
        %2533 = vmatpush2.xpose.msra.mxu0 0.0
        %2534 = vmatprep.subr.mxu0 0.0
        %2535 = vmatpush2.xpose.msra.mxu0 0.0
        %2536 = vmatprep.subr.mxu0 0.0
        %2537 = vmatpush2.xpose.msra.mxu0 0.0
        %2538 = vmatprep.subr.mxu0 0.0
        %2539 = vmatpush2.xpose.msra.mxu0 0.0
        %2540 = vmatprep.subr.mxu0 0.0
        %2541 = vmatpush2.xpose.msra.mxu0 0.0
        %2542 = vmatprep.subr.mxu0 0.0
        %2543 = vmatpush2.xpose.msra.mxu0 0.0
        %2544 = vmatprep.subr.mxu0 0.0
        %2545 = vmatpush2.xpose.msra.mxu0 0.0
        %2546 = vmatprep.subr.mxu0 0.0
        %2547 = vmatpush2.xpose.msra.mxu0 0.0
        %2548 = vmatprep.subr.mxu0 0.0
        %2549 = vmatpush2.xpose.msra.mxu0 0.0
        %2550 = vmatprep.subr.mxu0 0.0
        %2551 = vmatpush2.xpose.msra.mxu0 0.0
        %2552 = vmatprep.mubr.f32.mxu0 0.0
        %2553 = vmatmul.mubr.f32.gmra.mxu0 %v2483
        %v2554 = vpop.f32.mrf.mxu0
        %v2555 = vadd.f32 0.0, %v2554
        %v2556 = vpop.f32.mrf.mxu0
        %2557 = vdwg.mxu0
        %v2559 = vsel %vm377, %v2404, 0
        %v2562 = vsel %vm377, %v2052, 0
        %2564 = vmatprep.subr.mxu0 0.0
        %2565 = vmatpush1.xpose.msra.mxu0 0.0
        %2566 = vmatprep.subr.mxu0 0.0
        %2567 = vmatpush1.xpose.msra.mxu0 0.0
        %2568 = vmatprep.subr.mxu0 0.0
        %2569 = vmatpush1.xpose.msra.mxu0 0.0
        %2570 = vmatprep.subr.mxu0 0.0
        %2571 = vmatpush1.xpose.msra.mxu0 0.0
        %2572 = vmatprep.subr.mxu0 0.0
        %2573 = vmatpush1.xpose.msra.mxu0 0.0
        %2574 = vmatprep.subr.mxu0 0.0
        %2575 = vmatpush1.xpose.msra.mxu0 0.0
        %2576 = vmatprep.subr.mxu0 0.0
        %2577 = vmatpush1.xpose.msra.mxu0 0.0
        %2578 = vmatprep.subr.mxu0 0.0
        %2579 = vmatpush1.xpose.msra.mxu0 0.0
        %2580 = vmatprep.subr.mxu0 0.0
        %2581 = vmatpush1.xpose.msra.mxu0 0.0
        %2582 = vmatprep.subr.mxu0 0.0
        %2583 = vmatpush1.xpose.msra.mxu0 0.0
        %2584 = vmatprep.subr.mxu0 0.0
        %2585 = vmatpush1.xpose.msra.mxu0 0.0
        %2586 = vmatprep.subr.mxu0 0.0
        %2587 = vmatpush1.xpose.msra.mxu0 0.0
        %2588 = vmatprep.subr.mxu0 0.0
        %2589 = vmatpush1.xpose.msra.mxu0 0.0
        %2590 = vmatprep.subr.mxu0 0.0
        %2591 = vmatpush1.xpose.msra.mxu0 0.0
        %2592 = vmatprep.subr.mxu0 0.0
        %2593 = vmatpush1.xpose.msra.mxu0 0.0
        %2594 = vmatprep.subr.mxu0 0.0
        %2595 = vmatpush1.xpose.msra.mxu0 %v2562
        %2596 = vmatprep.subr.mxu0 0.0
        %2597 = vmatpush2.xpose.msra.mxu0 0.0
        %2598 = vmatprep.subr.mxu0 0.0
        %2599 = vmatpush2.xpose.msra.mxu0 0.0
        %2600 = vmatprep.subr.mxu0 0.0
        %2601 = vmatpush2.xpose.msra.mxu0 0.0
        %2602 = vmatprep.subr.mxu0 0.0
        %2603 = vmatpush2.xpose.msra.mxu0 0.0
        %2604 = vmatprep.subr.mxu0 0.0
        %2605 = vmatpush2.xpose.msra.mxu0 0.0
        %2606 = vmatprep.subr.mxu0 0.0
        %2607 = vmatpush2.xpose.msra.mxu0 0.0
        %2608 = vmatprep.subr.mxu0 0.0
        %2609 = vmatpush2.xpose.msra.mxu0 0.0
        %2610 = vmatprep.subr.mxu0 0.0
        %2611 = vmatpush2.xpose.msra.mxu0 0.0
        %2612 = vmatprep.subr.mxu0 0.0
        %2613 = vmatpush2.xpose.msra.mxu0 0.0
        %2614 = vmatprep.subr.mxu0 0.0
        %2615 = vmatpush2.xpose.msra.mxu0 0.0
        %2616 = vmatprep.subr.mxu0 0.0
        %2617 = vmatpush2.xpose.msra.mxu0 0.0
        %2618 = vmatprep.subr.mxu0 0.0
        %2619 = vmatpush2.xpose.msra.mxu0 0.0
        %2620 = vmatprep.subr.mxu0 0.0
        %2621 = vmatpush2.xpose.msra.mxu0 0.0
        %2622 = vmatprep.subr.mxu0 0.0
        %2623 = vmatpush2.xpose.msra.mxu0 0.0
        %2624 = vmatprep.subr.mxu0 0.0
        %2625 = vmatpush2.xpose.msra.mxu0 0.0
        %2626 = vmatprep.subr.mxu0 0.0
        %2627 = vmatpush2.xpose.msra.mxu0 0.0
        %2628 = vmatprep.mubr.f32.mxu0 0.0
        %2629 = vmatmul.mubr.f32.gmra.mxu0 %v2559
        %v2630 = vpop.f32.mrf.mxu0
        %v2631 = vadd.f32 0.0, %v2630
        %v2632 = vpop.f32.mrf.mxu0
        %2633 = vdwg.mxu0
        %v2635 = vsel %vm377, %v2405, 0
        %v2638 = vsel %vm377, %v2053, 0
        %2640 = vmatprep.subr.mxu0 0.0
        %2641 = vmatpush1.xpose.msra.mxu0 0.0
        %2642 = vmatprep.subr.mxu0 0.0
        %2643 = vmatpush1.xpose.msra.mxu0 0.0
        %2644 = vmatprep.subr.mxu0 0.0
        %2645 = vmatpush1.xpose.msra.mxu0 0.0
        %2646 = vmatprep.subr.mxu0 0.0
        %2647 = vmatpush1.xpose.msra.mxu0 0.0
        %2648 = vmatprep.subr.mxu0 0.0
        %2649 = vmatpush1.xpose.msra.mxu0 0.0
        %2650 = vmatprep.subr.mxu0 0.0
        %2651 = vmatpush1.xpose.msra.mxu0 0.0
        %2652 = vmatprep.subr.mxu0 0.0
        %2653 = vmatpush1.xpose.msra.mxu0 0.0
        %2654 = vmatprep.subr.mxu0 0.0
        %2655 = vmatpush1.xpose.msra.mxu0 0.0
        %2656 = vmatprep.subr.mxu0 0.0
        %2657 = vmatpush1.xpose.msra.mxu0 0.0
        %2658 = vmatprep.subr.mxu0 0.0
        %2659 = vmatpush1.xpose.msra.mxu0 0.0
        %2660 = vmatprep.subr.mxu0 0.0
        %2661 = vmatpush1.xpose.msra.mxu0 0.0
        %2662 = vmatprep.subr.mxu0 0.0
        %2663 = vmatpush1.xpose.msra.mxu0 0.0
        %2664 = vmatprep.subr.mxu0 0.0
        %2665 = vmatpush1.xpose.msra.mxu0 0.0
        %2666 = vmatprep.subr.mxu0 0.0
        %2667 = vmatpush1.xpose.msra.mxu0 0.0
        %2668 = vmatprep.subr.mxu0 0.0
        %2669 = vmatpush1.xpose.msra.mxu0 0.0
        %2670 = vmatprep.subr.mxu0 0.0
        %2671 = vmatpush1.xpose.msra.mxu0 %v2638
        %2672 = vmatprep.subr.mxu0 0.0
        %2673 = vmatpush2.xpose.msra.mxu0 0.0
        %2674 = vmatprep.subr.mxu0 0.0
        %2675 = vmatpush2.xpose.msra.mxu0 0.0
        %2676 = vmatprep.subr.mxu0 0.0
        %2677 = vmatpush2.xpose.msra.mxu0 0.0
        %2678 = vmatprep.subr.mxu0 0.0
        %2679 = vmatpush2.xpose.msra.mxu0 0.0
        %2680 = vmatprep.subr.mxu0 0.0
        %2681 = vmatpush2.xpose.msra.mxu0 0.0
        %2682 = vmatprep.subr.mxu0 0.0
        %2683 = vmatpush2.xpose.msra.mxu0 0.0
        %2684 = vmatprep.subr.mxu0 0.0
        %2685 = vmatpush2.xpose.msra.mxu0 0.0
        %2686 = vmatprep.subr.mxu0 0.0
        %2687 = vmatpush2.xpose.msra.mxu0 0.0
        %2688 = vmatprep.subr.mxu0 0.0
        %2689 = vmatpush2.xpose.msra.mxu0 0.0
        %2690 = vmatprep.subr.mxu0 0.0
        %2691 = vmatpush2.xpose.msra.mxu0 0.0
        %2692 = vmatprep.subr.mxu0 0.0
        %2693 = vmatpush2.xpose.msra.mxu0 0.0
        %2694 = vmatprep.subr.mxu0 0.0
        %2695 = vmatpush2.xpose.msra.mxu0 0.0
        %2696 = vmatprep.subr.mxu0 0.0
        %2697 = vmatpush2.xpose.msra.mxu0 0.0
        %2698 = vmatprep.subr.mxu0 0.0
        %2699 = vmatpush2.xpose.msra.mxu0 0.0
        %2700 = vmatprep.subr.mxu0 0.0
        %2701 = vmatpush2.xpose.msra.mxu0 0.0
        %2702 = vmatprep.subr.mxu0 0.0
        %2703 = vmatpush2.xpose.msra.mxu0 0.0
        %2704 = vmatprep.mubr.f32.mxu0 0.0
        %2705 = vmatmul.mubr.f32.gmra.mxu0 %v2635
        %v2706 = vpop.f32.mrf.mxu0
        %v2707 = vadd.f32 0.0, %v2706
        %v2708 = vpop.f32.mrf.mxu0
        %2709 = vdwg.mxu0
        %2711 = vrot.lane.b32.xlu0 %v2555, 8
        %v2712 = vpop.permute.xlu0 %2711
        %2715 = vrot.lane.b32.xlu0 %v2631, 16
        %v2716 = vpop.permute.xlu0 %2715
        %2719 = vrot.lane.b32.xlu0 %v2707, 24
        %v2720 = vpop.permute.xlu0 %2719
        %v2722 = vsel %vm377, %v2479, %v2712
        %v2723 = vsel %vm1444, %v2722, %v2716
        %v2724 = vsel %vm1446, %v2723, %v2720
        %v2725 = vlaneseq
        %v2726 = vshrl.u32 %v2725, 7
        %v2727 = vsub.s32 0, %v2726
        %v2728 = vrot.slane %v1834, %v2727
        %v2730 = vsel %vm477, %v2724, 0
        %2732 = vmatprep.subr.mxu0 0.0
        %2733 = vmatpush1.msra.mxu0 0.0
        %2734 = vmatprep.subr.mxu0 0.0
        %2735 = vmatpush1.msra.mxu0 0.0
        %2736 = vmatprep.subr.mxu0 0.0
        %2737 = vmatpush1.msra.mxu0 0.0
        %2738 = vmatprep.subr.mxu0 0.0
        %2739 = vmatpush1.msra.mxu0 0.0
        %2740 = vmatprep.subr.mxu0 0.0
        %2741 = vmatpush1.msra.mxu0 0.0
        %2742 = vmatprep.subr.mxu0 0.0
        %2743 = vmatpush1.msra.mxu0 0.0
        %2744 = vmatprep.subr.mxu0 0.0
        %2745 = vmatpush1.msra.mxu0 0.0
        %2746 = vmatprep.subr.mxu0 0.0
        %2747 = vmatpush1.msra.mxu0 0.0
        %2748 = vmatprep.subr.mxu0 0.0
        %2749 = vmatpush1.msra.mxu0 0.0
        %2750 = vmatprep.subr.mxu0 0.0
        %2751 = vmatpush1.msra.mxu0 0.0
        %2752 = vmatprep.subr.mxu0 0.0
        %2753 = vmatpush1.msra.mxu0 0.0
        %2754 = vmatprep.subr.mxu0 0.0
        %2755 = vmatpush1.msra.mxu0 0.0
        %2756 = vmatprep.subr.mxu0 0.0
        %2757 = vmatpush1.msra.mxu0 %v1833
        %2758 = vmatprep.subr.mxu0 0.0
        %2759 = vmatpush1.msra.mxu0 %v1832
        %2760 = vmatprep.subr.mxu0 0.0
        %2761 = vmatpush1.msra.mxu0 %v1831
        %2762 = vmatprep.subr.mxu0 0.0
        %2763 = vmatpush1.msra.mxu0 %v1830
        %2764 = vmatprep.subr.mxu0 0.0
        %2765 = vmatpush2.msra.mxu0 0.0
        %2766 = vmatprep.subr.mxu0 0.0
        %2767 = vmatpush2.msra.mxu0 0.0
        %2768 = vmatprep.subr.mxu0 0.0
        %2769 = vmatpush2.msra.mxu0 0.0
        %2770 = vmatprep.subr.mxu0 0.0
        %2771 = vmatpush2.msra.mxu0 0.0
        %2772 = vmatprep.subr.mxu0 0.0
        %2773 = vmatpush2.msra.mxu0 0.0
        %2774 = vmatprep.subr.mxu0 0.0
        %2775 = vmatpush2.msra.mxu0 0.0
        %2776 = vmatprep.subr.mxu0 0.0
        %2777 = vmatpush2.msra.mxu0 0.0
        %2778 = vmatprep.subr.mxu0 0.0
        %2779 = vmatpush2.msra.mxu0 0.0
        %2780 = vmatprep.subr.mxu0 0.0
        %2781 = vmatpush2.msra.mxu0 0.0
        %2782 = vmatprep.subr.mxu0 0.0
        %2783 = vmatpush2.msra.mxu0 0.0
        %2784 = vmatprep.subr.mxu0 0.0
        %2785 = vmatpush2.msra.mxu0 0.0
        %2786 = vmatprep.subr.mxu0 0.0
        %2787 = vmatpush2.msra.mxu0 0.0
        %2788 = vmatprep.subr.mxu0 0.0
        %2789 = vmatpush2.msra.mxu0 0.0
        %2790 = vmatprep.subr.mxu0 0.0
        %2791 = vmatpush2.msra.mxu0 0.0
        %2792 = vmatprep.subr.mxu0 0.0
        %2793 = vmatpush2.msra.mxu0 0.0
        %2794 = vmatprep.subr.mxu0 0.0
        %2795 = vmatpush2.msra.mxu0 0.0
        %2796 = vmatprep.mubr.f32.mxu0 0.0
        %2797 = vmatmul.mubr.f32.gmra.mxu0 %v2730
        %v2798 = vpop.f32.mrf.mxu0
        %v2799 = vadd.f32 %v2728, %v2798
        %v2800 = vpop.f32.mrf.mxu0
        %2801 = vdwg.mxu0
        %v2802 = vadd.f32 %v1747, %v2799
        %v2803 = vld [vmem:[%s2 + $0x1c0] sm:$0x1]
        %v2804 = vld [vmem:[%s2 + $0x1c8] sm:$0x1]
        %v2805 = vsel %vm477, %v2802, 0.0
        %2806 = vadd.xlane.f32.xlu0 %v2805
        %v2807 = vpop.xlane.xlu0 %2806
        %v2808 = vmul.f32 %v2807, %v1531
        %v2809 = vsub.f32 %v2802, %v2808
        %v2810 = vmul.f32 %v2809, %v2809
        %v2811 = vsel %vm477, %v2810, 0.0
        %2812 = vadd.xlane.f32.xlu0 %v2811
        %v2813 = vpop.xlane.xlu0 %2812
        %v2814 = vmul.f32 %v2813, %v1531
        %v2815 = vadd.f32 %v2814, 1e-05
        %v2816 = vrsqrt.pop %v2815
        %v2817 = vmul.f32 %v2809, %v2816
        %v2818 = vlaneseq
        %v2819 = vshrl.u32 %v2818, 7
        %v2820 = vsub.s32 0, %v2819
        %v2821 = vrot.slane %v2803, %v2820
        %v2822 = vmul.f32 %v2817, %v2821
        %v2823 = vlaneseq
        %v2824 = vshrl.u32 %v2823, 7
        %v2825 = vsub.s32 0, %v2824
        %v2826 = vrot.slane %v2804, %v2825
        %v2827 = vadd.f32 %v2822, %v2826
        %v2828 = vld [vmem:[%s2 + $0x150] sm:$0xff]
        %v2829 = vld [vmem:[%s2 + $0x158] sm:$0xff]
        %v2830 = vld [vmem:[%s2 + $0x160] sm:$0xff]
        %v2831 = vld [vmem:[%s2 + $0x168] sm:$0xff]
        %v2832 = vld [vmem:[%s2 + $0x170] sm:$0x1]
        %v2833 = vlaneseq
        %v2834 = vshrl.u32 %v2833, 7
        %v2835 = vsub.s32 0, %v2834
        %v2836 = vrot.slane %v2832, %v2835
        %v2838 = vsel %vm477, %v2827, 0
        %2840 = vmatprep.subr.mxu0 0.0
        %2841 = vmatpush1.msra.mxu0 0.0
        %2842 = vmatprep.subr.mxu0 0.0
        %2843 = vmatpush1.msra.mxu0 0.0
        %2844 = vmatprep.subr.mxu0 0.0
        %2845 = vmatpush1.msra.mxu0 0.0
        %2846 = vmatprep.subr.mxu0 0.0
        %2847 = vmatpush1.msra.mxu0 0.0
        %2848 = vmatprep.subr.mxu0 0.0
        %2849 = vmatpush1.msra.mxu0 0.0
        %2850 = vmatprep.subr.mxu0 0.0
        %2851 = vmatpush1.msra.mxu0 0.0
        %2852 = vmatprep.subr.mxu0 0.0
        %2853 = vmatpush1.msra.mxu0 0.0
        %2854 = vmatprep.subr.mxu0 0.0
        %2855 = vmatpush1.msra.mxu0 0.0
        %2856 = vmatprep.subr.mxu0 0.0
        %2857 = vmatpush1.msra.mxu0 0.0
        %2858 = vmatprep.subr.mxu0 0.0
        %2859 = vmatpush1.msra.mxu0 0.0
        %2860 = vmatprep.subr.mxu0 0.0
        %2861 = vmatpush1.msra.mxu0 0.0
        %2862 = vmatprep.subr.mxu0 0.0
        %2863 = vmatpush1.msra.mxu0 0.0
        %2864 = vmatprep.subr.mxu0 0.0
        %2865 = vmatpush1.msra.mxu0 %v2831
        %2866 = vmatprep.subr.mxu0 0.0
        %2867 = vmatpush1.msra.mxu0 %v2830
        %2868 = vmatprep.subr.mxu0 0.0
        %2869 = vmatpush1.msra.mxu0 %v2829
        %2870 = vmatprep.subr.mxu0 0.0
        %2871 = vmatpush1.msra.mxu0 %v2828
        %2872 = vmatprep.subr.mxu0 0.0
        %2873 = vmatpush2.msra.mxu0 0.0
        %2874 = vmatprep.subr.mxu0 0.0
        %2875 = vmatpush2.msra.mxu0 0.0
        %2876 = vmatprep.subr.mxu0 0.0
        %2877 = vmatpush2.msra.mxu0 0.0
        %2878 = vmatprep.subr.mxu0 0.0
        %2879 = vmatpush2.msra.mxu0 0.0
        %2880 = vmatprep.subr.mxu0 0.0
        %2881 = vmatpush2.msra.mxu0 0.0
        %2882 = vmatprep.subr.mxu0 0.0
        %2883 = vmatpush2.msra.mxu0 0.0
        %2884 = vmatprep.subr.mxu0 0.0
        %2885 = vmatpush2.msra.mxu0 0.0
        %2886 = vmatprep.subr.mxu0 0.0
        %2887 = vmatpush2.msra.mxu0 0.0
        %2888 = vmatprep.subr.mxu0 0.0
        %2889 = vmatpush2.msra.mxu0 0.0
        %2890 = vmatprep.subr.mxu0 0.0
        %2891 = vmatpush2.msra.mxu0 0.0
        %2892 = vmatprep.subr.mxu0 0.0
        %2893 = vmatpush2.msra.mxu0 0.0
        %2894 = vmatprep.subr.mxu0 0.0
        %2895 = vmatpush2.msra.mxu0 0.0
        %2896 = vmatprep.subr.mxu0 0.0
        %2897 = vmatpush2.msra.mxu0 0.0
        %2898 = vmatprep.subr.mxu0 0.0
        %2899 = vmatpush2.msra.mxu0 0.0
        %2900 = vmatprep.subr.mxu0 0.0
        %2901 = vmatpush2.msra.mxu0 0.0
        %2902 = vmatprep.subr.mxu0 0.0
        %2903 = vmatpush2.msra.mxu0 0.0
        %2904 = vmatprep.mubr.f32.mxu0 0.0
        %2905 = vmatmul.mubr.f32.gmra.mxu0 %v2838
        %v2906 = vpop.f32.mrf.mxu0
        %v2907 = vadd.f32 %v2836, %v2906
        %v2908 = vpop.f32.mrf.mxu0
        %2909 = vdwg.mxu0
        %v2910 = vmax.f32 %v2907, 0.0
        %v2911 = vld [vmem:[%s2 + $0x178] sm:$0xff]
        %v2912 = vld [vmem:[%s2 + $0x180] sm:$0xff]
        %v2913 = vld [vmem:[%s2 + $0x188] sm:$0xff]
        %v2914 = vld [vmem:[%s2 + $0x190] sm:$0xff]
        %v2915 = vld [vmem:[%s2 + $0x198] sm:$0xff]
        %v2916 = vld [vmem:[%s2 + $0x1a0] sm:$0xff]
        %v2917 = vld [vmem:[%s2 + $0x1a8] sm:$0xff]
        %v2918 = vld [vmem:[%s2 + $0x1b0] sm:$0xff]
        %v2919 = vld [vmem:[%s2 + $0x1b8] sm:$0x1]
        %v2920 = vlaneseq
        %v2921 = vshrl.u32 %v2920, 7
        %v2922 = vsub.s32 0, %v2921
        %v2923 = vrot.slane %v2919, %v2922
        %v2925 = vsel %vm1648, %v2910, 0
        %2927 = vmatprep.subr.mxu0 0.0
        %2928 = vmatpush1.msra.mxu0 0.0
        %2929 = vmatprep.subr.mxu0 0.0
        %2930 = vmatpush1.msra.mxu0 0.0
        %2931 = vmatprep.subr.mxu0 0.0
        %2932 = vmatpush1.msra.mxu0 0.0
        %2933 = vmatprep.subr.mxu0 0.0
        %2934 = vmatpush1.msra.mxu0 0.0
        %2935 = vmatprep.subr.mxu0 0.0
        %2936 = vmatpush1.msra.mxu0 0.0
        %2937 = vmatprep.subr.mxu0 0.0
        %2938 = vmatpush1.msra.mxu0 0.0
        %2939 = vmatprep.subr.mxu0 0.0
        %2940 = vmatpush1.msra.mxu0 0.0
        %2941 = vmatprep.subr.mxu0 0.0
        %2942 = vmatpush1.msra.mxu0 0.0
        %2943 = vmatprep.subr.mxu0 0.0
        %2944 = vmatpush1.msra.mxu0 %v2918
        %2945 = vmatprep.subr.mxu0 0.0
        %2946 = vmatpush1.msra.mxu0 %v2917
        %2947 = vmatprep.subr.mxu0 0.0
        %2948 = vmatpush1.msra.mxu0 %v2916
        %2949 = vmatprep.subr.mxu0 0.0
        %2950 = vmatpush1.msra.mxu0 %v2915
        %2951 = vmatprep.subr.mxu0 0.0
        %2952 = vmatpush1.msra.mxu0 %v2914
        %2953 = vmatprep.subr.mxu0 0.0
        %2954 = vmatpush1.msra.mxu0 %v2913
        %2955 = vmatprep.subr.mxu0 0.0
        %2956 = vmatpush1.msra.mxu0 %v2912
        %2957 = vmatprep.subr.mxu0 0.0
        %2958 = vmatpush1.msra.mxu0 %v2911
        %2959 = vmatprep.subr.mxu0 0.0
        %2960 = vmatpush2.msra.mxu0 0.0
        %2961 = vmatprep.subr.mxu0 0.0
        %2962 = vmatpush2.msra.mxu0 0.0
        %2963 = vmatprep.subr.mxu0 0.0
        %2964 = vmatpush2.msra.mxu0 0.0
        %2965 = vmatprep.subr.mxu0 0.0
        %2966 = vmatpush2.msra.mxu0 0.0
        %2967 = vmatprep.subr.mxu0 0.0
        %2968 = vmatpush2.msra.mxu0 0.0
        %2969 = vmatprep.subr.mxu0 0.0
        %2970 = vmatpush2.msra.mxu0 0.0
        %2971 = vmatprep.subr.mxu0 0.0
        %2972 = vmatpush2.msra.mxu0 0.0
        %2973 = vmatprep.subr.mxu0 0.0
        %2974 = vmatpush2.msra.mxu0 0.0
        %2975 = vmatprep.subr.mxu0 0.0
        %2976 = vmatpush2.msra.mxu0 0.0
        %2977 = vmatprep.subr.mxu0 0.0
        %2978 = vmatpush2.msra.mxu0 0.0
        %2979 = vmatprep.subr.mxu0 0.0
        %2980 = vmatpush2.msra.mxu0 0.0
        %2981 = vmatprep.subr.mxu0 0.0
        %2982 = vmatpush2.msra.mxu0 0.0
        %2983 = vmatprep.subr.mxu0 0.0
        %2984 = vmatpush2.msra.mxu0 0.0
        %2985 = vmatprep.subr.mxu0 0.0
        %2986 = vmatpush2.msra.mxu0 0.0
        %2987 = vmatprep.subr.mxu0 0.0
        %2988 = vmatpush2.msra.mxu0 0.0
        %2989 = vmatprep.subr.mxu0 0.0
        %2990 = vmatpush2.msra.mxu0 0.0
        %2991 = vmatprep.mubr.f32.mxu0 0.0
        %2992 = vmatmul.mubr.f32.gmra.mxu0 %v2925
        %v2993 = vpop.f32.mrf.mxu0
        %v2994 = vadd.f32 %v2923, %v2993
        %v2995 = vpop.f32.mrf.mxu0
        %2996 = vdwg.mxu0
        %v2997 = vadd.f32 %v2827, %v2994
        %v2998 = vld [vmem:[%s2 + $0x1d0] sm:$0x1]
        %v2999 = vld [vmem:[%s2 + $0x1d8] sm:$0x1]
        %v3000 = vsel %vm477, %v2997, 0.0
        %3001 = vadd.xlane.f32.xlu0 %v3000
        %v3002 = vpop.xlane.xlu0 %3001
        %v3003 = vmul.f32 %v3002, %v1531
        %v3004 = vsub.f32 %v2997, %v3003
        %v3005 = vmul.f32 %v3004, %v3004
        %v3006 = vsel %vm477, %v3005, 0.0
        %3007 = vadd.xlane.f32.xlu0 %v3006
        %v3008 = vpop.xlane.xlu0 %3007
        %v3009 = vmul.f32 %v3008, %v1531
        %v3010 = vadd.f32 %v3009, 1e-05
        %v3011 = vrsqrt.pop %v3010
        %v3012 = vmul.f32 %v3004, %v3011
        %v3013 = vlaneseq
        %v3014 = vshrl.u32 %v3013, 7
        %v3015 = vsub.s32 0, %v3014
        %v3016 = vrot.slane %v2998, %v3015
        %v3017 = vmul.f32 %v3012, %v3016
        %v3018 = vlaneseq
        %v3019 = vshrl.u32 %v3018, 7
        %v3020 = vsub.s32 0, %v3019
        %v3021 = vrot.slane %v2999, %v3020
        %v3022 = vadd.f32 %v3017, %v3021
        %v3023 = vld [vmem:[%s2 + $0x1f0] sm:$0x1]
        %v3024 = vlaneseq
        %v3025 = vshrl.u32 %v3024, 7
        %v3026 = vsub.s32 0, %v3025
        %v3027 = vrot.slane %v3023, %v3026
        %v3028 = vsub.f32 %v3022, %v3027
        %v3029 = vld [vmem:[%s2 + $0x1f8] sm:$0x1]
        %v3030 = vadd.f32 %v3029, 1e-05
        %v3031 = vrsqrt.pop %v3030
        %v3032 = vlaneseq
        %v3033 = vshrl.u32 %v3032, 7
        %v3034 = vsub.s32 0, %v3033
        %v3035 = vrot.slane %v3031, %v3034
        %v3036 = vmul.f32 %v3028, %v3035
        %v3037 = vld [vmem:[%s2 + $0x1e0] sm:$0x1]
        %v3038 = vlaneseq
        %v3039 = vshrl.u32 %v3038, 7
        %v3040 = vsub.s32 0, %v3039
        %v3041 = vrot.slane %v3037, %v3040
        %v3042 = vmul.f32 %v3036, %v3041
        %v3043 = vld [vmem:[%s2 + $0x1e8] sm:$0x1]
        %v3044 = vlaneseq
        %v3045 = vshrl.u32 %v3044, 7
        %v3046 = vsub.s32 0, %v3045
        %v3047 = vrot.slane %v3043, %v3046
        %v3048 = vadd.f32 %v3042, %v3047
        %v3049 = vld [vmem:[%s2 + $0x200] sm:$0xff]
        %v3050 = vld [vmem:[%s2 + $0x208] sm:$0xff]
        %v3051 = vld [vmem:[%s2 + $0x210] sm:$0xff]
        %v3052 = vld [vmem:[%s2 + $0x218] sm:$0xff]
        %v3053 = vld [vmem:[%s2 + $0x220] sm:$0x1]
        %v3054 = vlaneseq
        %v3055 = vshrl.u32 %v3054, 7
        %v3056 = vsub.s32 0, %v3055
        %v3057 = vrot.slane %v3053, %v3056
        %3058 = vmatprep.subr.mxu0 0.0
        %3059 = vmatpush1.msra.mxu0 0.0
        %3060 = vmatprep.subr.mxu0 0.0
        %3061 = vmatpush1.msra.mxu0 0.0
        %3062 = vmatprep.subr.mxu0 0.0
        %3063 = vmatpush1.msra.mxu0 0.0
        %3064 = vmatprep.subr.mxu0 0.0
        %3065 = vmatpush1.msra.mxu0 0.0
        %3066 = vmatprep.subr.mxu0 0.0
        %3067 = vmatpush1.msra.mxu0 0.0
        %3068 = vmatprep.subr.mxu0 0.0
        %3069 = vmatpush1.msra.mxu0 0.0
        %3070 = vmatprep.subr.mxu0 0.0
        %3071 = vmatpush1.msra.mxu0 0.0
        %3072 = vmatprep.subr.mxu0 0.0
        %3073 = vmatpush1.msra.mxu0 0.0
        %3074 = vmatprep.subr.mxu0 0.0
        %3075 = vmatpush1.msra.mxu0 0.0
        %3076 = vmatprep.subr.mxu0 0.0
        %3077 = vmatpush1.msra.mxu0 0.0
        %3078 = vmatprep.subr.mxu0 0.0
        %3079 = vmatpush1.msra.mxu0 0.0
        %3080 = vmatprep.subr.mxu0 0.0
        %3081 = vmatpush1.msra.mxu0 0.0
        %3082 = vmatprep.subr.mxu0 0.0
        %3083 = vmatpush1.msra.mxu0 %v3052
        %3084 = vmatprep.subr.mxu0 0.0
        %3085 = vmatpush1.msra.mxu0 %v3051
        %3086 = vmatprep.subr.mxu0 0.0
        %3087 = vmatpush1.msra.mxu0 %v3050
        %3088 = vmatprep.subr.mxu0 0.0
        %3089 = vmatpush1.msra.mxu0 %v3049
        %3090 = vmatprep.subr.mxu0 0.0
        %3091 = vmatpush2.msra.mxu0 0.0
        %3092 = vmatprep.subr.mxu0 0.0
        %3093 = vmatpush2.msra.mxu0 0.0
        %3094 = vmatprep.subr.mxu0 0.0
        %3095 = vmatpush2.msra.mxu0 0.0
        %3096 = vmatprep.subr.mxu0 0.0
        %3097 = vmatpush2.msra.mxu0 0.0
        %3098 = vmatprep.subr.mxu0 0.0
        %3099 = vmatpush2.msra.mxu0 0.0
        %3100 = vmatprep.subr.mxu0 0.0
        %3101 = vmatpush2.msra.mxu0 0.0
        %3102 = vmatprep.subr.mxu0 0.0
        %3103 = vmatpush2.msra.mxu0 0.0
        %3104 = vmatprep.subr.mxu0 0.0
        %3105 = vmatpush2.msra.mxu0 0.0
        %3106 = vmatprep.subr.mxu0 0.0
        %3107 = vmatpush2.msra.mxu0 0.0
        %3108 = vmatprep.subr.mxu0 0.0
        %3109 = vmatpush2.msra.mxu0 0.0
        %3110 = vmatprep.subr.mxu0 0.0
        %3111 = vmatpush2.msra.mxu0 0.0
        %3112 = vmatprep.subr.mxu0 0.0
        %3113 = vmatpush2.msra.mxu0 0.0
        %3114 = vmatprep.subr.mxu0 0.0
        %3115 = vmatpush2.msra.mxu0 0.0
        %3116 = vmatprep.subr.mxu0 0.0
        %3117 = vmatpush2.msra.mxu0 0.0
        %3118 = vmatprep.subr.mxu0 0.0
        %3119 = vmatpush2.msra.mxu0 0.0
        %3120 = vmatprep.subr.mxu0 0.0
        %3121 = vmatpush2.msra.mxu0 0.0
        %3122 = vmatprep.mubr.f32.mxu0 0.0
        %3123 = vmatmul.mubr.f32.gmra.mxu0 %v479
        %v3124 = vpop.f32.mrf.mxu0
        %v3125 = vadd.f32 %v3057, %v3124
        %v3126 = vpop.f32.mrf.mxu0
        %3127 = vdwg.mxu0
        %v3128 = vld [vmem:[%s2 + $0x228] sm:$0xff]
        %v3129 = vld [vmem:[%s2 + $0x230] sm:$0xff]
        %v3130 = vld [vmem:[%s2 + $0x238] sm:$0xff]
        %v3131 = vld [vmem:[%s2 + $0x240] sm:$0xff]
        %v3132 = vld [vmem:[%s2 + $0x248] sm:$0x1]
        %3133 = vxpose.xlu0.b32.start [1/16] %v3125, 128
        %3134 = vxpose.xlu0.b32.cont [2/16] 0.0, 128
        %3135 = vxpose.xlu0.b32.cont [3/16] 0.0, 128
        %3136 = vxpose.xlu0.b32.cont [4/16] 0.0, 128
        %3137 = vxpose.xlu0.b32.cont [5/16] 0.0, 128
        %3138 = vxpose.xlu0.b32.cont [6/16] 0.0, 128
        %3139 = vxpose.xlu0.b32.cont [7/16] 0.0, 128
        %3140 = vxpose.xlu0.b32.cont [8/16] 0.0, 128
        %3141 = vxpose.xlu0.b32.cont [9/16] 0.0, 128
        %3142 = vxpose.xlu0.b32.cont [10/16] 0.0, 128
        %3143 = vxpose.xlu0.b32.cont [11/16] 0.0, 128
        %3144 = vxpose.xlu0.b32.cont [12/16] 0.0, 128
        %3145 = vxpose.xlu0.b32.cont [13/16] 0.0, 128
        %3146 = vxpose.xlu0.b32.cont [14/16] 0.0, 128
        %3147 = vxpose.xlu0.b32.cont [15/16] 0.0, 128
        %3148 = vxpose.xlu0.b32.end [16/16] 0.0, 128
        %v3149 = vpop.trf.xlu0
        %v3150 = vpop.trf.xlu0
        %v3151 = vpop.trf.xlu0
        %v3152 = vpop.trf.xlu0
        %v3153 = vpop.trf.xlu0
        %v3154 = vpop.trf.xlu0
        %v3155 = vpop.trf.xlu0
        %v3156 = vpop.trf.xlu0
        %v3157 = vpop.trf.xlu0
        %v3158 = vpop.trf.xlu0
        %v3159 = vpop.trf.xlu0
        %v3160 = vpop.trf.xlu0
        %v3161 = vpop.trf.xlu0
        %v3162 = vpop.trf.xlu0
        %v3163 = vpop.trf.xlu0
        %v3164 = vpop.trf.xlu0
        %3165 = vxpose.xlu0.b32.start [1/16] %v3149, 128
        %3166 = vxpose.xlu0.b32.cont [2/16] 0.0, 128
        %3167 = vxpose.xlu0.b32.cont [3/16] 0.0, 128
        %3168 = vxpose.xlu0.b32.cont [4/16] 0.0, 128
        %3169 = vxpose.xlu0.b32.cont [5/16] 0.0, 128
        %3170 = vxpose.xlu0.b32.cont [6/16] 0.0, 128
        %3171 = vxpose.xlu0.b32.cont [7/16] 0.0, 128
        %3172 = vxpose.xlu0.b32.cont [8/16] 0.0, 128
        %3173 = vxpose.xlu0.b32.cont [9/16] 0.0, 128
        %3174 = vxpose.xlu0.b32.cont [10/16] 0.0, 128
        %3175 = vxpose.xlu0.b32.cont [11/16] 0.0, 128
        %3176 = vxpose.xlu0.b32.cont [12/16] 0.0, 128
        %3177 = vxpose.xlu0.b32.cont [13/16] 0.0, 128
        %3178 = vxpose.xlu0.b32.cont [14/16] 0.0, 128
        %3179 = vxpose.xlu0.b32.cont [15/16] 0.0, 128
        %3180 = vxpose.xlu0.b32.end [16/16] 0.0, 128
        %v3181 = vpop.trf.xlu0
        %v3182 = vpop.trf.xlu0
        %v3183 = vpop.trf.xlu0
        %v3184 = vpop.trf.xlu0
        %v3185 = vpop.trf.xlu0
        %v3186 = vpop.trf.xlu0
        %v3187 = vpop.trf.xlu0
        %v3188 = vpop.trf.xlu0
        %v3189 = vpop.trf.xlu0
        %v3190 = vpop.trf.xlu0
        %v3191 = vpop.trf.xlu0
        %v3192 = vpop.trf.xlu0
        %v3193 = vpop.trf.xlu0
        %v3194 = vpop.trf.xlu0
        %v3195 = vpop.trf.xlu0
        %v3196 = vpop.trf.xlu0
        %3197 = vxpose.xlu0.b32.start [1/16] %v3150, 128
        %3198 = vxpose.xlu0.b32.cont [2/16] 0.0, 128
        %3199 = vxpose.xlu0.b32.cont [3/16] 0.0, 128
        %3200 = vxpose.xlu0.b32.cont [4/16] 0.0, 128
        %3201 = vxpose.xlu0.b32.cont [5/16] 0.0, 128
        %3202 = vxpose.xlu0.b32.cont [6/16] 0.0, 128
        %3203 = vxpose.xlu0.b32.cont [7/16] 0.0, 128
        %3204 = vxpose.xlu0.b32.cont [8/16] 0.0, 128
        %3205 = vxpose.xlu0.b32.cont [9/16] 0.0, 128
        %3206 = vxpose.xlu0.b32.cont [10/16] 0.0, 128
        %3207 = vxpose.xlu0.b32.cont [11/16] 0.0, 128
        %3208 = vxpose.xlu0.b32.cont [12/16] 0.0, 128
        %3209 = vxpose.xlu0.b32.cont [13/16] 0.0, 128
        %3210 = vxpose.xlu0.b32.cont [14/16] 0.0, 128
        %3211 = vxpose.xlu0.b32.cont [15/16] 0.0, 128
        %3212 = vxpose.xlu0.b32.end [16/16] 0.0, 128
        %v3213 = vpop.trf.xlu0
        %v3214 = vpop.trf.xlu0
        %v3215 = vpop.trf.xlu0
        %v3216 = vpop.trf.xlu0
        %v3217 = vpop.trf.xlu0
        %v3218 = vpop.trf.xlu0
        %v3219 = vpop.trf.xlu0
        %v3220 = vpop.trf.xlu0
        %v3221 = vpop.trf.xlu0
        %v3222 = vpop.trf.xlu0
        %v3223 = vpop.trf.xlu0
        %v3224 = vpop.trf.xlu0
        %v3225 = vpop.trf.xlu0
        %v3226 = vpop.trf.xlu0
        %v3227 = vpop.trf.xlu0
        %v3228 = vpop.trf.xlu0
        %3229 = vxpose.xlu0.b32.start [1/16] %v3151, 128
        %3230 = vxpose.xlu0.b32.cont [2/16] 0.0, 128
        %3231 = vxpose.xlu0.b32.cont [3/16] 0.0, 128
        %3232 = vxpose.xlu0.b32.cont [4/16] 0.0, 128
        %3233 = vxpose.xlu0.b32.cont [5/16] 0.0, 128
        %3234 = vxpose.xlu0.b32.cont [6/16] 0.0, 128
        %3235 = vxpose.xlu0.b32.cont [7/16] 0.0, 128
        %3236 = vxpose.xlu0.b32.cont [8/16] 0.0, 128
        %3237 = vxpose.xlu0.b32.cont [9/16] 0.0, 128
        %3238 = vxpose.xlu0.b32.cont [10/16] 0.0, 128
        %3239 = vxpose.xlu0.b32.cont [11/16] 0.0, 128
        %3240 = vxpose.xlu0.b32.cont [12/16] 0.0, 128
        %3241 = vxpose.xlu0.b32.cont [13/16] 0.0, 128
        %3242 = vxpose.xlu0.b32.cont [14/16] 0.0, 128
        %3243 = vxpose.xlu0.b32.cont [15/16] 0.0, 128
        %3244 = vxpose.xlu0.b32.end [16/16] 0.0, 128
        %v3245 = vpop.trf.xlu0
        %v3246 = vpop.trf.xlu0
        %v3247 = vpop.trf.xlu0
        %v3248 = vpop.trf.xlu0
        %v3249 = vpop.trf.xlu0
        %v3250 = vpop.trf.xlu0
        %v3251 = vpop.trf.xlu0
        %v3252 = vpop.trf.xlu0
        %v3253 = vpop.trf.xlu0
        %v3254 = vpop.trf.xlu0
        %v3255 = vpop.trf.xlu0
        %v3256 = vpop.trf.xlu0
        %v3257 = vpop.trf.xlu0
        %v3258 = vpop.trf.xlu0
        %v3259 = vpop.trf.xlu0
        %v3260 = vpop.trf.xlu0
        %3261 = vxpose.xlu0.b32.start [1/16] %v3152, 128
        %3262 = vxpose.xlu0.b32.cont [2/16] 0.0, 128
        %3263 = vxpose.xlu0.b32.cont [3/16] 0.0, 128
        %3264 = vxpose.xlu0.b32.cont [4/16] 0.0, 128
        %3265 = vxpose.xlu0.b32.cont [5/16] 0.0, 128
        %3266 = vxpose.xlu0.b32.cont [6/16] 0.0, 128
        %3267 = vxpose.xlu0.b32.cont [7/16] 0.0, 128
        %3268 = vxpose.xlu0.b32.cont [8/16] 0.0, 128
        %3269 = vxpose.xlu0.b32.cont [9/16] 0.0, 128
        %3270 = vxpose.xlu0.b32.cont [10/16] 0.0, 128
        %3271 = vxpose.xlu0.b32.cont [11/16] 0.0, 128
        %3272 = vxpose.xlu0.b32.cont [12/16] 0.0, 128
        %3273 = vxpose.xlu0.b32.cont [13/16] 0.0, 128
        %3274 = vxpose.xlu0.b32.cont [14/16] 0.0, 128
        %3275 = vxpose.xlu0.b32.cont [15/16] 0.0, 128
        %3276 = vxpose.xlu0.b32.end [16/16] 0.0, 128
        %v3277 = vpop.trf.xlu0
        %v3278 = vpop.trf.xlu0
        %v3279 = vpop.trf.xlu0
        %v3280 = vpop.trf.xlu0
        %v3281 = vpop.trf.xlu0
        %v3282 = vpop.trf.xlu0
        %v3283 = vpop.trf.xlu0
        %v3284 = vpop.trf.xlu0
        %v3285 = vpop.trf.xlu0
        %v3286 = vpop.trf.xlu0
        %v3287 = vpop.trf.xlu0
        %v3288 = vpop.trf.xlu0
        %v3289 = vpop.trf.xlu0
        %v3290 = vpop.trf.xlu0
        %v3291 = vpop.trf.xlu0
        %v3292 = vpop.trf.xlu0
        %3294 = vrot.lane.b32.xlu0 %v3125, 96
        %v3295 = vpop.permute.xlu0 %3294
        %3297 = vxpose.xlu0.b32.start [1/16] %v3295, 128
        %3298 = vxpose.xlu0.b32.cont [2/16] 0.0, 128
        %3299 = vxpose.xlu0.b32.cont [3/16] 0.0, 128
        %3300 = vxpose.xlu0.b32.cont [4/16] 0.0, 128
        %3301 = vxpose.xlu0.b32.cont [5/16] 0.0, 128
        %3302 = vxpose.xlu0.b32.cont [6/16] 0.0, 128
        %3303 = vxpose.xlu0.b32.cont [7/16] 0.0, 128
        %3304 = vxpose.xlu0.b32.cont [8/16] 0.0, 128
        %3305 = vxpose.xlu0.b32.cont [9/16] 0.0, 128
        %3306 = vxpose.xlu0.b32.cont [10/16] 0.0, 128
        %3307 = vxpose.xlu0.b32.cont [11/16] 0.0, 128
        %3308 = vxpose.xlu0.b32.cont [12/16] 0.0, 128
        %3309 = vxpose.xlu0.b32.cont [13/16] 0.0, 128
        %3310 = vxpose.xlu0.b32.cont [14/16] 0.0, 128
        %3311 = vxpose.xlu0.b32.cont [15/16] 0.0, 128
        %3312 = vxpose.xlu0.b32.end [16/16] 0.0, 128
        %v3313 = vpop.trf.xlu0
        %v3314 = vpop.trf.xlu0
        %v3315 = vpop.trf.xlu0
        %v3316 = vpop.trf.xlu0
        %v3317 = vpop.trf.xlu0
        %v3318 = vpop.trf.xlu0
        %v3319 = vpop.trf.xlu0
        %v3320 = vpop.trf.xlu0
        %v3321 = vpop.trf.xlu0
        %v3322 = vpop.trf.xlu0
        %v3323 = vpop.trf.xlu0
        %v3324 = vpop.trf.xlu0
        %v3325 = vpop.trf.xlu0
        %v3326 = vpop.trf.xlu0
        %v3327 = vpop.trf.xlu0
        %v3328 = vpop.trf.xlu0
        %3329 = vrot.lane.b32.xlu0 %v3125, 64
        %v3330 = vpop.permute.xlu0 %3329
        %3332 = vxpose.xlu0.b32.start [1/16] %v3330, 128
        %3333 = vxpose.xlu0.b32.cont [2/16] 0.0, 128
        %3334 = vxpose.xlu0.b32.cont [3/16] 0.0, 128
        %3335 = vxpose.xlu0.b32.cont [4/16] 0.0, 128
        %3336 = vxpose.xlu0.b32.cont [5/16] 0.0, 128
        %3337 = vxpose.xlu0.b32.cont [6/16] 0.0, 128
        %3338 = vxpose.xlu0.b32.cont [7/16] 0.0, 128
        %3339 = vxpose.xlu0.b32.cont [8/16] 0.0, 128
        %3340 = vxpose.xlu0.b32.cont [9/16] 0.0, 128
        %3341 = vxpose.xlu0.b32.cont [10/16] 0.0, 128
        %3342 = vxpose.xlu0.b32.cont [11/16] 0.0, 128
        %3343 = vxpose.xlu0.b32.cont [12/16] 0.0, 128
        %3344 = vxpose.xlu0.b32.cont [13/16] 0.0, 128
        %3345 = vxpose.xlu0.b32.cont [14/16] 0.0, 128
        %3346 = vxpose.xlu0.b32.cont [15/16] 0.0, 128
        %3347 = vxpose.xlu0.b32.end [16/16] 0.0, 128
        %v3348 = vpop.trf.xlu0
        %v3349 = vpop.trf.xlu0
        %v3350 = vpop.trf.xlu0
        %v3351 = vpop.trf.xlu0
        %v3352 = vpop.trf.xlu0
        %v3353 = vpop.trf.xlu0
        %v3354 = vpop.trf.xlu0
        %v3355 = vpop.trf.xlu0
        %v3356 = vpop.trf.xlu0
        %v3357 = vpop.trf.xlu0
        %v3358 = vpop.trf.xlu0
        %v3359 = vpop.trf.xlu0
        %v3360 = vpop.trf.xlu0
        %v3361 = vpop.trf.xlu0
        %v3362 = vpop.trf.xlu0
        %v3363 = vpop.trf.xlu0
        %v3365 = vsel %vm377, %v3181, 0
        %3367 = vmatprep.subr.mxu0 0.0
        %3368 = vmatpush1.msra.mxu0 0.0
        %3369 = vmatprep.subr.mxu0 0.0
        %3370 = vmatpush1.msra.mxu0 0.0
        %3371 = vmatprep.subr.mxu0 0.0
        %3372 = vmatpush1.msra.mxu0 0.0
        %3373 = vmatprep.subr.mxu0 0.0
        %3374 = vmatpush1.msra.mxu0 0.0
        %3375 = vmatprep.subr.mxu0 0.0
        %3376 = vmatpush1.msra.mxu0 0.0
        %3377 = vmatprep.subr.mxu0 0.0
        %3378 = vmatpush1.msra.mxu0 0.0
        %3379 = vmatprep.subr.mxu0 0.0
        %3380 = vmatpush1.msra.mxu0 0.0
        %3381 = vmatprep.subr.mxu0 0.0
        %3382 = vmatpush1.msra.mxu0 0.0
        %3383 = vmatprep.subr.mxu0 0.0
        %3384 = vmatpush1.msra.mxu0 0.0
        %3385 = vmatprep.subr.mxu0 0.0
        %3386 = vmatpush1.msra.mxu0 0.0
        %3387 = vmatprep.subr.mxu0 0.0
        %3388 = vmatpush1.msra.mxu0 0.0
        %3389 = vmatprep.subr.mxu0 0.0
        %3390 = vmatpush1.msra.mxu0 0.0
        %3391 = vmatprep.subr.mxu0 0.0
        %3392 = vmatpush1.msra.mxu0 0.0
        %3393 = vmatprep.subr.mxu0 0.0
        %3394 = vmatpush1.msra.mxu0 0.0
        %3395 = vmatprep.subr.mxu0 0.0
        %3396 = vmatpush1.msra.mxu0 0.0
        %3397 = vmatprep.subr.mxu0 0.0
        %3398 = vmatpush1.msra.mxu0 %v3313
        %3399 = vmatprep.subr.mxu0 0.0
        %3400 = vmatpush2.msra.mxu0 0.0
        %3401 = vmatprep.subr.mxu0 0.0
        %3402 = vmatpush2.msra.mxu0 0.0
        %3403 = vmatprep.subr.mxu0 0.0
        %3404 = vmatpush2.msra.mxu0 0.0
        %3405 = vmatprep.subr.mxu0 0.0
        %3406 = vmatpush2.msra.mxu0 0.0
        %3407 = vmatprep.subr.mxu0 0.0
        %3408 = vmatpush2.msra.mxu0 0.0
        %3409 = vmatprep.subr.mxu0 0.0
        %3410 = vmatpush2.msra.mxu0 0.0
        %3411 = vmatprep.subr.mxu0 0.0
        %3412 = vmatpush2.msra.mxu0 0.0
        %3413 = vmatprep.subr.mxu0 0.0
        %3414 = vmatpush2.msra.mxu0 0.0
        %3415 = vmatprep.subr.mxu0 0.0
        %3416 = vmatpush2.msra.mxu0 0.0
        %3417 = vmatprep.subr.mxu0 0.0
        %3418 = vmatpush2.msra.mxu0 0.0
        %3419 = vmatprep.subr.mxu0 0.0
        %3420 = vmatpush2.msra.mxu0 0.0
        %3421 = vmatprep.subr.mxu0 0.0
        %3422 = vmatpush2.msra.mxu0 0.0
        %3423 = vmatprep.subr.mxu0 0.0
        %3424 = vmatpush2.msra.mxu0 0.0
        %3425 = vmatprep.subr.mxu0 0.0
        %3426 = vmatpush2.msra.mxu0 0.0
        %3427 = vmatprep.subr.mxu0 0.0
        %3428 = vmatpush2.msra.mxu0 0.0
        %3429 = vmatprep.subr.mxu0 0.0
        %3430 = vmatpush2.msra.mxu0 0.0
        %3431 = vmatprep.mubr.f32.mxu0 0.0
        %3432 = vmatmul.mubr.f32.gmra.mxu0 %v3365
        %v3433 = vpop.f32.mrf.mxu0
        %v3434 = vadd.f32 0.0, %v3433
        %v3435 = vpop.f32.mrf.mxu0
        %3436 = vdwg.mxu0
        %v3438 = vsel %vm377, %v3213, 0
        %3440 = vmatprep.subr.mxu0 0.0
        %3441 = vmatpush1.msra.mxu0 0.0
        %3442 = vmatprep.subr.mxu0 0.0
        %3443 = vmatpush1.msra.mxu0 0.0
        %3444 = vmatprep.subr.mxu0 0.0
        %3445 = vmatpush1.msra.mxu0 0.0
        %3446 = vmatprep.subr.mxu0 0.0
        %3447 = vmatpush1.msra.mxu0 0.0
        %3448 = vmatprep.subr.mxu0 0.0
        %3449 = vmatpush1.msra.mxu0 0.0
        %3450 = vmatprep.subr.mxu0 0.0
        %3451 = vmatpush1.msra.mxu0 0.0
        %3452 = vmatprep.subr.mxu0 0.0
        %3453 = vmatpush1.msra.mxu0 0.0
        %3454 = vmatprep.subr.mxu0 0.0
        %3455 = vmatpush1.msra.mxu0 0.0
        %3456 = vmatprep.subr.mxu0 0.0
        %3457 = vmatpush1.msra.mxu0 0.0
        %3458 = vmatprep.subr.mxu0 0.0
        %3459 = vmatpush1.msra.mxu0 0.0
        %3460 = vmatprep.subr.mxu0 0.0
        %3461 = vmatpush1.msra.mxu0 0.0
        %3462 = vmatprep.subr.mxu0 0.0
        %3463 = vmatpush1.msra.mxu0 0.0
        %3464 = vmatprep.subr.mxu0 0.0
        %3465 = vmatpush1.msra.mxu0 0.0
        %3466 = vmatprep.subr.mxu0 0.0
        %3467 = vmatpush1.msra.mxu0 0.0
        %3468 = vmatprep.subr.mxu0 0.0
        %3469 = vmatpush1.msra.mxu0 0.0
        %3470 = vmatprep.subr.mxu0 0.0
        %3471 = vmatpush1.msra.mxu0 %v3314
        %3472 = vmatprep.subr.mxu0 0.0
        %3473 = vmatpush2.msra.mxu0 0.0
        %3474 = vmatprep.subr.mxu0 0.0
        %3475 = vmatpush2.msra.mxu0 0.0
        %3476 = vmatprep.subr.mxu0 0.0
        %3477 = vmatpush2.msra.mxu0 0.0
        %3478 = vmatprep.subr.mxu0 0.0
        %3479 = vmatpush2.msra.mxu0 0.0
        %3480 = vmatprep.subr.mxu0 0.0
        %3481 = vmatpush2.msra.mxu0 0.0
        %3482 = vmatprep.subr.mxu0 0.0
        %3483 = vmatpush2.msra.mxu0 0.0
        %3484 = vmatprep.subr.mxu0 0.0
        %3485 = vmatpush2.msra.mxu0 0.0
        %3486 = vmatprep.subr.mxu0 0.0
        %3487 = vmatpush2.msra.mxu0 0.0
        %3488 = vmatprep.subr.mxu0 0.0
        %3489 = vmatpush2.msra.mxu0 0.0
        %3490 = vmatprep.subr.mxu0 0.0
        %3491 = vmatpush2.msra.mxu0 0.0
        %3492 = vmatprep.subr.mxu0 0.0
        %3493 = vmatpush2.msra.mxu0 0.0
        %3494 = vmatprep.subr.mxu0 0.0
        %3495 = vmatpush2.msra.mxu0 0.0
        %3496 = vmatprep.subr.mxu0 0.0
        %3497 = vmatpush2.msra.mxu0 0.0
        %3498 = vmatprep.subr.mxu0 0.0
        %3499 = vmatpush2.msra.mxu0 0.0
        %3500 = vmatprep.subr.mxu0 0.0
        %3501 = vmatpush2.msra.mxu0 0.0
        %3502 = vmatprep.subr.mxu0 0.0
        %3503 = vmatpush2.msra.mxu0 0.0
        %3504 = vmatprep.mubr.f32.mxu0 0.0
        %3505 = vmatmul.mubr.f32.gmra.mxu0 %v3438
        %v3506 = vpop.f32.mrf.mxu0
        %v3507 = vadd.f32 0.0, %v3506
        %v3508 = vpop.f32.mrf.mxu0
        %3509 = vdwg.mxu0
        %v3511 = vsel %vm377, %v3245, 0
        %3513 = vmatprep.subr.mxu0 0.0
        %3514 = vmatpush1.msra.mxu0 0.0
        %3515 = vmatprep.subr.mxu0 0.0
        %3516 = vmatpush1.msra.mxu0 0.0
        %3517 = vmatprep.subr.mxu0 0.0
        %3518 = vmatpush1.msra.mxu0 0.0
        %3519 = vmatprep.subr.mxu0 0.0
        %3520 = vmatpush1.msra.mxu0 0.0
        %3521 = vmatprep.subr.mxu0 0.0
        %3522 = vmatpush1.msra.mxu0 0.0
        %3523 = vmatprep.subr.mxu0 0.0
        %3524 = vmatpush1.msra.mxu0 0.0
        %3525 = vmatprep.subr.mxu0 0.0
        %3526 = vmatpush1.msra.mxu0 0.0
        %3527 = vmatprep.subr.mxu0 0.0
        %3528 = vmatpush1.msra.mxu0 0.0
        %3529 = vmatprep.subr.mxu0 0.0
        %3530 = vmatpush1.msra.mxu0 0.0
        %3531 = vmatprep.subr.mxu0 0.0
        %3532 = vmatpush1.msra.mxu0 0.0
        %3533 = vmatprep.subr.mxu0 0.0
        %3534 = vmatpush1.msra.mxu0 0.0
        %3535 = vmatprep.subr.mxu0 0.0
        %3536 = vmatpush1.msra.mxu0 0.0
        %3537 = vmatprep.subr.mxu0 0.0
        %3538 = vmatpush1.msra.mxu0 0.0
        %3539 = vmatprep.subr.mxu0 0.0
        %3540 = vmatpush1.msra.mxu0 0.0
        %3541 = vmatprep.subr.mxu0 0.0
        %3542 = vmatpush1.msra.mxu0 0.0
        %3543 = vmatprep.subr.mxu0 0.0
        %3544 = vmatpush1.msra.mxu0 %v3315
        %3545 = vmatprep.subr.mxu0 0.0
        %3546 = vmatpush2.msra.mxu0 0.0
        %3547 = vmatprep.subr.mxu0 0.0
        %3548 = vmatpush2.msra.mxu0 0.0
        %3549 = vmatprep.subr.mxu0 0.0
        %3550 = vmatpush2.msra.mxu0 0.0
        %3551 = vmatprep.subr.mxu0 0.0
        %3552 = vmatpush2.msra.mxu0 0.0
        %3553 = vmatprep.subr.mxu0 0.0
        %3554 = vmatpush2.msra.mxu0 0.0
        %3555 = vmatprep.subr.mxu0 0.0
        %3556 = vmatpush2.msra.mxu0 0.0
        %3557 = vmatprep.subr.mxu0 0.0
        %3558 = vmatpush2.msra.mxu0 0.0
        %3559 = vmatprep.subr.mxu0 0.0
        %3560 = vmatpush2.msra.mxu0 0.0
        %3561 = vmatprep.subr.mxu0 0.0
        %3562 = vmatpush2.msra.mxu0 0.0
        %3563 = vmatprep.subr.mxu0 0.0
        %3564 = vmatpush2.msra.mxu0 0.0
        %3565 = vmatprep.subr.mxu0 0.0
        %3566 = vmatpush2.msra.mxu0 0.0
        %3567 = vmatprep.subr.mxu0 0.0
        %3568 = vmatpush2.msra.mxu0 0.0
        %3569 = vmatprep.subr.mxu0 0.0
        %3570 = vmatpush2.msra.mxu0 0.0
        %3571 = vmatprep.subr.mxu0 0.0
        %3572 = vmatpush2.msra.mxu0 0.0
        %3573 = vmatprep.subr.mxu0 0.0
        %3574 = vmatpush2.msra.mxu0 0.0
        %3575 = vmatprep.subr.mxu0 0.0
        %3576 = vmatpush2.msra.mxu0 0.0
        %3577 = vmatprep.mubr.f32.mxu0 0.0
        %3578 = vmatmul.mubr.f32.gmra.mxu0 %v3511
        %v3579 = vpop.f32.mrf.mxu0
        %v3580 = vadd.f32 0.0, %v3579
        %v3581 = vpop.f32.mrf.mxu0
        %3582 = vdwg.mxu0
        %v3584 = vsel %vm377, %v3277, 0
        %3586 = vmatprep.subr.mxu0 0.0
        %3587 = vmatpush1.msra.mxu0 0.0
        %3588 = vmatprep.subr.mxu0 0.0
        %3589 = vmatpush1.msra.mxu0 0.0
        %3590 = vmatprep.subr.mxu0 0.0
        %3591 = vmatpush1.msra.mxu0 0.0
        %3592 = vmatprep.subr.mxu0 0.0
        %3593 = vmatpush1.msra.mxu0 0.0
        %3594 = vmatprep.subr.mxu0 0.0
        %3595 = vmatpush1.msra.mxu0 0.0
        %3596 = vmatprep.subr.mxu0 0.0
        %3597 = vmatpush1.msra.mxu0 0.0
        %3598 = vmatprep.subr.mxu0 0.0
        %3599 = vmatpush1.msra.mxu0 0.0
        %3600 = vmatprep.subr.mxu0 0.0
        %3601 = vmatpush1.msra.mxu0 0.0
        %3602 = vmatprep.subr.mxu0 0.0
        %3603 = vmatpush1.msra.mxu0 0.0
        %3604 = vmatprep.subr.mxu0 0.0
        %3605 = vmatpush1.msra.mxu0 0.0
        %3606 = vmatprep.subr.mxu0 0.0
        %3607 = vmatpush1.msra.mxu0 0.0
        %3608 = vmatprep.subr.mxu0 0.0
        %3609 = vmatpush1.msra.mxu0 0.0
        %3610 = vmatprep.subr.mxu0 0.0
        %3611 = vmatpush1.msra.mxu0 0.0
        %3612 = vmatprep.subr.mxu0 0.0
        %3613 = vmatpush1.msra.mxu0 0.0
        %3614 = vmatprep.subr.mxu0 0.0
        %3615 = vmatpush1.msra.mxu0 0.0
        %3616 = vmatprep.subr.mxu0 0.0
        %3617 = vmatpush1.msra.mxu0 %v3316
        %3618 = vmatprep.subr.mxu0 0.0
        %3619 = vmatpush2.msra.mxu0 0.0
        %3620 = vmatprep.subr.mxu0 0.0
        %3621 = vmatpush2.msra.mxu0 0.0
        %3622 = vmatprep.subr.mxu0 0.0
        %3623 = vmatpush2.msra.mxu0 0.0
        %3624 = vmatprep.subr.mxu0 0.0
        %3625 = vmatpush2.msra.mxu0 0.0
        %3626 = vmatprep.subr.mxu0 0.0
        %3627 = vmatpush2.msra.mxu0 0.0
        %3628 = vmatprep.subr.mxu0 0.0
        %3629 = vmatpush2.msra.mxu0 0.0
        %3630 = vmatprep.subr.mxu0 0.0
        %3631 = vmatpush2.msra.mxu0 0.0
        %3632 = vmatprep.subr.mxu0 0.0
        %3633 = vmatpush2.msra.mxu0 0.0
        %3634 = vmatprep.subr.mxu0 0.0
        %3635 = vmatpush2.msra.mxu0 0.0
        %3636 = vmatprep.subr.mxu0 0.0
        %3637 = vmatpush2.msra.mxu0 0.0
        %3638 = vmatprep.subr.mxu0 0.0
        %3639 = vmatpush2.msra.mxu0 0.0
        %3640 = vmatprep.subr.mxu0 0.0
        %3641 = vmatpush2.msra.mxu0 0.0
        %3642 = vmatprep.subr.mxu0 0.0
        %3643 = vmatpush2.msra.mxu0 0.0
        %3644 = vmatprep.subr.mxu0 0.0
        %3645 = vmatpush2.msra.mxu0 0.0
        %3646 = vmatprep.subr.mxu0 0.0
        %3647 = vmatpush2.msra.mxu0 0.0
        %3648 = vmatprep.subr.mxu0 0.0
        %3649 = vmatpush2.msra.mxu0 0.0
        %3650 = vmatprep.mubr.f32.mxu0 0.0
        %3651 = vmatmul.mubr.f32.gmra.mxu0 %v3584
        %v3652 = vpop.f32.mrf.mxu0
        %v3653 = vadd.f32 0.0, %v3652
        %v3654 = vpop.f32.mrf.mxu0
        %3655 = vdwg.mxu0
        %v3656 = vmul.f32 %v3434, 0.35355338
        %v3657 = vmul.f32 %v3507, 0.35355338
        %v3658 = vmul.f32 %v3580, 0.35355338
        %v3659 = vmul.f32 %v3653, 0.35355338
        %v3660 = vlaneseq
        %v3661 = vshrl.u32 %v3660, 7
        %vm3662 = vcmp.gt.s32.totalorder %v270, %v3661
        %v3663 = vsel %vm3662, 1, 0
        %vm3664 = vcmp.eq.s32.totalorder %v3663, 1
        %v3665 = vsel %vm3664, -1e+30, %v3656
        %v3666 = vsel %vm3664, -1e+30, %v3657
        %v3667 = vsel %vm3664, -1e+30, %v3658
        %v3668 = vsel %vm3664, -1e+30, %v3659
        %v3669 = vsel %vm377, %v3665, -inf
        %3670 = vmax.xlane.f32.xlu0 %v3669
        %v3671 = vpop.xlane.xlu0 %3670
        %v3672 = vsel %vm377, %v3666, -inf
        %3673 = vmax.xlane.f32.xlu0 %v3672
        %v3674 = vpop.xlane.xlu0 %3673
        %v3675 = vsel %vm377, %v3667, -inf
        %3676 = vmax.xlane.f32.xlu0 %v3675
        %v3677 = vpop.xlane.xlu0 %3676
        %v3678 = vsel %vm377, %v3668, -inf
        %3679 = vmax.xlane.f32.xlu0 %v3678
        %v3680 = vpop.xlane.xlu0 %3679
        %v3681 = vsub.f32 %v3665, %v3671
        %v3682 = vsub.f32 %v3666, %v3674
        %v3683 = vsub.f32 %v3667, %v3677
        %v3684 = vsub.f32 %v3668, %v3680
        %v3685 = vmul.f32 %v3681, 1.442695
        %v3686 = vpow.pop %v3685
        %v3687 = vmul.f32 %v3682, 1.442695
        %v3688 = vpow.pop %v3687
        %v3689 = vmul.f32 %v3683, 1.442695
        %v3690 = vpow.pop %v3689
        %v3691 = vmul.f32 %v3684, 1.442695
        %v3692 = vpow.pop %v3691
        %v3693 = vsel %vm377, %v3686, 0.0
        %3694 = vadd.xlane.f32.xlu0 %v3693
        %v3695 = vpop.xlane.xlu0 %3694
        %v3696 = vsel %vm377, %v3688, 0.0
        %3697 = vadd.xlane.f32.xlu0 %v3696
        %v3698 = vpop.xlane.xlu0 %3697
        %v3699 = vsel %vm377, %v3690, 0.0
        %3700 = vadd.xlane.f32.xlu0 %v3699
        %v3701 = vpop.xlane.xlu0 %3700
        %v3702 = vsel %vm377, %v3692, 0.0
        %3703 = vadd.xlane.f32.xlu0 %v3702
        %v3704 = vpop.xlane.xlu0 %3703
        %v3705 = vrcp.pop %v3695
        %v3706 = vrcp.pop %v3698
        %v3707 = vrcp.pop %v3701
        %v3708 = vrcp.pop %v3704
        %v3709 = vmul.f32 %v3686, %v3705
        %v3710 = vmul.f32 %v3688, %v3706
        %v3711 = vmul.f32 %v3690, %v3707
        %v3712 = vmul.f32 %v3692, %v3708
        %v3714 = vsel %vm377, %v3709, 0
        %v3717 = vsel %vm377, %v3348, 0
        %3719 = vmatprep.subr.mxu0 0.0
        %3720 = vmatpush1.xpose.msra.mxu0 0.0
        %3721 = vmatprep.subr.mxu0 0.0
        %3722 = vmatpush1.xpose.msra.mxu0 0.0
        %3723 = vmatprep.subr.mxu0 0.0
        %3724 = vmatpush1.xpose.msra.mxu0 0.0
        %3725 = vmatprep.subr.mxu0 0.0
        %3726 = vmatpush1.xpose.msra.mxu0 0.0
        %3727 = vmatprep.subr.mxu0 0.0
        %3728 = vmatpush1.xpose.msra.mxu0 0.0
        %3729 = vmatprep.subr.mxu0 0.0
        %3730 = vmatpush1.xpose.msra.mxu0 0.0
        %3731 = vmatprep.subr.mxu0 0.0
        %3732 = vmatpush1.xpose.msra.mxu0 0.0
        %3733 = vmatprep.subr.mxu0 0.0
        %3734 = vmatpush1.xpose.msra.mxu0 0.0
        %3735 = vmatprep.subr.mxu0 0.0
        %3736 = vmatpush1.xpose.msra.mxu0 0.0
        %3737 = vmatprep.subr.mxu0 0.0
        %3738 = vmatpush1.xpose.msra.mxu0 0.0
        %3739 = vmatprep.subr.mxu0 0.0
        %3740 = vmatpush1.xpose.msra.mxu0 0.0
        %3741 = vmatprep.subr.mxu0 0.0
        %3742 = vmatpush1.xpose.msra.mxu0 0.0
        %3743 = vmatprep.subr.mxu0 0.0
        %3744 = vmatpush1.xpose.msra.mxu0 0.0
        %3745 = vmatprep.subr.mxu0 0.0
        %3746 = vmatpush1.xpose.msra.mxu0 0.0
        %3747 = vmatprep.subr.mxu0 0.0
        %3748 = vmatpush1.xpose.msra.mxu0 0.0
        %3749 = vmatprep.subr.mxu0 0.0
        %3750 = vmatpush1.xpose.msra.mxu0 %v3717
        %3751 = vmatprep.subr.mxu0 0.0
        %3752 = vmatpush2.xpose.msra.mxu0 0.0
        %3753 = vmatprep.subr.mxu0 0.0
        %3754 = vmatpush2.xpose.msra.mxu0 0.0
        %3755 = vmatprep.subr.mxu0 0.0
        %3756 = vmatpush2.xpose.msra.mxu0 0.0
        %3757 = vmatprep.subr.mxu0 0.0
        %3758 = vmatpush2.xpose.msra.mxu0 0.0
        %3759 = vmatprep.subr.mxu0 0.0
        %3760 = vmatpush2.xpose.msra.mxu0 0.0
        %3761 = vmatprep.subr.mxu0 0.0
        %3762 = vmatpush2.xpose.msra.mxu0 0.0
        %3763 = vmatprep.subr.mxu0 0.0
        %3764 = vmatpush2.xpose.msra.mxu0 0.0
        %3765 = vmatprep.subr.mxu0 0.0
        %3766 = vmatpush2.xpose.msra.mxu0 0.0
        %3767 = vmatprep.subr.mxu0 0.0
        %3768 = vmatpush2.xpose.msra.mxu0 0.0
        %3769 = vmatprep.subr.mxu0 0.0
        %3770 = vmatpush2.xpose.msra.mxu0 0.0
        %3771 = vmatprep.subr.mxu0 0.0
        %3772 = vmatpush2.xpose.msra.mxu0 0.0
        %3773 = vmatprep.subr.mxu0 0.0
        %3774 = vmatpush2.xpose.msra.mxu0 0.0
        %3775 = vmatprep.subr.mxu0 0.0
        %3776 = vmatpush2.xpose.msra.mxu0 0.0
        %3777 = vmatprep.subr.mxu0 0.0
        %3778 = vmatpush2.xpose.msra.mxu0 0.0
        %3779 = vmatprep.subr.mxu0 0.0
        %3780 = vmatpush2.xpose.msra.mxu0 0.0
        %3781 = vmatprep.subr.mxu0 0.0
        %3782 = vmatpush2.xpose.msra.mxu0 0.0
        %3783 = vmatprep.mubr.f32.mxu0 0.0
        %3784 = vmatmul.mubr.f32.gmra.mxu0 %v3714
        %v3785 = vpop.f32.mrf.mxu0
        %v3786 = vadd.f32 0.0, %v3785
        %v3787 = vpop.f32.mrf.mxu0
        %3788 = vdwg.mxu0
        %v3790 = vsel %vm377, %v3710, 0
        %v3793 = vsel %vm377, %v3349, 0
        %3795 = vmatprep.subr.mxu0 0.0
        %3796 = vmatpush1.xpose.msra.mxu0 0.0
        %3797 = vmatprep.subr.mxu0 0.0
        %3798 = vmatpush1.xpose.msra.mxu0 0.0
        %3799 = vmatprep.subr.mxu0 0.0
        %3800 = vmatpush1.xpose.msra.mxu0 0.0
        %3801 = vmatprep.subr.mxu0 0.0
        %3802 = vmatpush1.xpose.msra.mxu0 0.0
        %3803 = vmatprep.subr.mxu0 0.0
        %3804 = vmatpush1.xpose.msra.mxu0 0.0
        %3805 = vmatprep.subr.mxu0 0.0
        %3806 = vmatpush1.xpose.msra.mxu0 0.0
        %3807 = vmatprep.subr.mxu0 0.0
        %3808 = vmatpush1.xpose.msra.mxu0 0.0
        %3809 = vmatprep.subr.mxu0 0.0
        %3810 = vmatpush1.xpose.msra.mxu0 0.0
        %3811 = vmatprep.subr.mxu0 0.0
        %3812 = vmatpush1.xpose.msra.mxu0 0.0
        %3813 = vmatprep.subr.mxu0 0.0
        %3814 = vmatpush1.xpose.msra.mxu0 0.0
        %3815 = vmatprep.subr.mxu0 0.0
        %3816 = vmatpush1.xpose.msra.mxu0 0.0
        %3817 = vmatprep.subr.mxu0 0.0
        %3818 = vmatpush1.xpose.msra.mxu0 0.0
        %3819 = vmatprep.subr.mxu0 0.0
        %3820 = vmatpush1.xpose.msra.mxu0 0.0
        %3821 = vmatprep.subr.mxu0 0.0
        %3822 = vmatpush1.xpose.msra.mxu0 0.0
        %3823 = vmatprep.subr.mxu0 0.0
        %3824 = vmatpush1.xpose.msra.mxu0 0.0
        %3825 = vmatprep.subr.mxu0 0.0
        %3826 = vmatpush1.xpose.msra.mxu0 %v3793
        %3827 = vmatprep.subr.mxu0 0.0
        %3828 = vmatpush2.xpose.msra.mxu0 0.0
        %3829 = vmatprep.subr.mxu0 0.0
        %3830 = vmatpush2.xpose.msra.mxu0 0.0
        %3831 = vmatprep.subr.mxu0 0.0
        %3832 = vmatpush2.xpose.msra.mxu0 0.0
        %3833 = vmatprep.subr.mxu0 0.0
        %3834 = vmatpush2.xpose.msra.mxu0 0.0
        %3835 = vmatprep.subr.mxu0 0.0
        %3836 = vmatpush2.xpose.msra.mxu0 0.0
        %3837 = vmatprep.subr.mxu0 0.0
        %3838 = vmatpush2.xpose.msra.mxu0 0.0
        %3839 = vmatprep.subr.mxu0 0.0
        %3840 = vmatpush2.xpose.msra.mxu0 0.0
        %3841 = vmatprep.subr.mxu0 0.0
        %3842 = vmatpush2.xpose.msra.mxu0 0.0
        %3843 = vmatprep.subr.mxu0 0.0
        %3844 = vmatpush2.xpose.msra.mxu0 0.0
        %3845 = vmatprep.subr.mxu0 0.0
        %3846 = vmatpush2.xpose.msra.mxu0 0.0
        %3847 = vmatprep.subr.mxu0 0.0
        %3848 = vmatpush2.xpose.msra.mxu0 0.0
        %3849 = vmatprep.subr.mxu0 0.0
        %3850 = vmatpush2.xpose.msra.mxu0 0.0
        %3851 = vmatprep.subr.mxu0 0.0
        %3852 = vmatpush2.xpose.msra.mxu0 0.0
        %3853 = vmatprep.subr.mxu0 0.0
        %3854 = vmatpush2.xpose.msra.mxu0 0.0
        %3855 = vmatprep.subr.mxu0 0.0
        %3856 = vmatpush2.xpose.msra.mxu0 0.0
        %3857 = vmatprep.subr.mxu0 0.0
        %3858 = vmatpush2.xpose.msra.mxu0 0.0
        %3859 = vmatprep.mubr.f32.mxu0 0.0
        %3860 = vmatmul.mubr.f32.gmra.mxu0 %v3790
        %v3861 = vpop.f32.mrf.mxu0
        %v3862 = vadd.f32 0.0, %v3861
        %v3863 = vpop.f32.mrf.mxu0
        %3864 = vdwg.mxu0
        %v3866 = vsel %vm377, %v3711, 0
        %v3869 = vsel %vm377, %v3350, 0
        %3871 = vmatprep.subr.mxu0 0.0
        %3872 = vmatpush1.xpose.msra.mxu0 0.0
        %3873 = vmatprep.subr.mxu0 0.0
        %3874 = vmatpush1.xpose.msra.mxu0 0.0
        %3875 = vmatprep.subr.mxu0 0.0
        %3876 = vmatpush1.xpose.msra.mxu0 0.0
        %3877 = vmatprep.subr.mxu0 0.0
        %3878 = vmatpush1.xpose.msra.mxu0 0.0
        %3879 = vmatprep.subr.mxu0 0.0
        %3880 = vmatpush1.xpose.msra.mxu0 0.0
        %3881 = vmatprep.subr.mxu0 0.0
        %3882 = vmatpush1.xpose.msra.mxu0 0.0
        %3883 = vmatprep.subr.mxu0 0.0
        %3884 = vmatpush1.xpose.msra.mxu0 0.0
        %3885 = vmatprep.subr.mxu0 0.0
        %3886 = vmatpush1.xpose.msra.mxu0 0.0
        %3887 = vmatprep.subr.mxu0 0.0
        %3888 = vmatpush1.xpose.msra.mxu0 0.0
        %3889 = vmatprep.subr.mxu0 0.0
        %3890 = vmatpush1.xpose.msra.mxu0 0.0
        %3891 = vmatprep.subr.mxu0 0.0
        %3892 = vmatpush1.xpose.msra.mxu0 0.0
        %3893 = vmatprep.subr.mxu0 0.0
        %3894 = vmatpush1.xpose.msra.mxu0 0.0
        %3895 = vmatprep.subr.mxu0 0.0
        %3896 = vmatpush1.xpose.msra.mxu0 0.0
        %3897 = vmatprep.subr.mxu0 0.0
        %3898 = vmatpush1.xpose.msra.mxu0 0.0
        %3899 = vmatprep.subr.mxu0 0.0
        %3900 = vmatpush1.xpose.msra.mxu0 0.0
        %3901 = vmatprep.subr.mxu0 0.0
        %3902 = vmatpush1.xpose.msra.mxu0 %v3869
        %3903 = vmatprep.subr.mxu0 0.0
        %3904 = vmatpush2.xpose.msra.mxu0 0.0
        %3905 = vmatprep.subr.mxu0 0.0
        %3906 = vmatpush2.xpose.msra.mxu0 0.0
        %3907 = vmatprep.subr.mxu0 0.0
        %3908 = vmatpush2.xpose.msra.mxu0 0.0
        %3909 = vmatprep.subr.mxu0 0.0
        %3910 = vmatpush2.xpose.msra.mxu0 0.0
        %3911 = vmatprep.subr.mxu0 0.0
        %3912 = vmatpush2.xpose.msra.mxu0 0.0
        %3913 = vmatprep.subr.mxu0 0.0
        %3914 = vmatpush2.xpose.msra.mxu0 0.0
        %3915 = vmatprep.subr.mxu0 0.0
        %3916 = vmatpush2.xpose.msra.mxu0 0.0
        %3917 = vmatprep.subr.mxu0 0.0
        %3918 = vmatpush2.xpose.msra.mxu0 0.0
        %3919 = vmatprep.subr.mxu0 0.0
        %3920 = vmatpush2.xpose.msra.mxu0 0.0
        %3921 = vmatprep.subr.mxu0 0.0
        %3922 = vmatpush2.xpose.msra.mxu0 0.0
        %3923 = vmatprep.subr.mxu0 0.0
        %3924 = vmatpush2.xpose.msra.mxu0 0.0
        %3925 = vmatprep.subr.mxu0 0.0
        %3926 = vmatpush2.xpose.msra.mxu0 0.0
        %3927 = vmatprep.subr.mxu0 0.0
        %3928 = vmatpush2.xpose.msra.mxu0 0.0
        %3929 = vmatprep.subr.mxu0 0.0
        %3930 = vmatpush2.xpose.msra.mxu0 0.0
        %3931 = vmatprep.subr.mxu0 0.0
        %3932 = vmatpush2.xpose.msra.mxu0 0.0
        %3933 = vmatprep.subr.mxu0 0.0
        %3934 = vmatpush2.xpose.msra.mxu0 0.0
        %3935 = vmatprep.mubr.f32.mxu0 0.0
        %3936 = vmatmul.mubr.f32.gmra.mxu0 %v3866
        %v3937 = vpop.f32.mrf.mxu0
        %v3938 = vadd.f32 0.0, %v3937
        %v3939 = vpop.f32.mrf.mxu0
        %3940 = vdwg.mxu0
        %v3942 = vsel %vm377, %v3712, 0
        %v3945 = vsel %vm377, %v3351, 0
        %3947 = vmatprep.subr.mxu0 0.0
        %3948 = vmatpush1.xpose.msra.mxu0 0.0
        %3949 = vmatprep.subr.mxu0 0.0
        %3950 = vmatpush1.xpose.msra.mxu0 0.0
        %3951 = vmatprep.subr.mxu0 0.0
        %3952 = vmatpush1.xpose.msra.mxu0 0.0
        %3953 = vmatprep.subr.mxu0 0.0
        %3954 = vmatpush1.xpose.msra.mxu0 0.0
        %3955 = vmatprep.subr.mxu0 0.0
        %3956 = vmatpush1.xpose.msra.mxu0 0.0
        %3957 = vmatprep.subr.mxu0 0.0
        %3958 = vmatpush1.xpose.msra.mxu0 0.0
        %3959 = vmatprep.subr.mxu0 0.0
        %3960 = vmatpush1.xpose.msra.mxu0 0.0
        %3961 = vmatprep.subr.mxu0 0.0
        %3962 = vmatpush1.xpose.msra.mxu0 0.0
        %3963 = vmatprep.subr.mxu0 0.0
        %3964 = vmatpush1.xpose.msra.mxu0 0.0
        %3965 = vmatprep.subr.mxu0 0.0
        %3966 = vmatpush1.xpose.msra.mxu0 0.0
        %3967 = vmatprep.subr.mxu0 0.0
        %3968 = vmatpush1.xpose.msra.mxu0 0.0
        %3969 = vmatprep.subr.mxu0 0.0
        %3970 = vmatpush1.xpose.msra.mxu0 0.0
        %3971 = vmatprep.subr.mxu0 0.0
        %3972 = vmatpush1.xpose.msra.mxu0 0.0
        %3973 = vmatprep.subr.mxu0 0.0
        %3974 = vmatpush1.xpose.msra.mxu0 0.0
        %3975 = vmatprep.subr.mxu0 0.0
        %3976 = vmatpush1.xpose.msra.mxu0 0.0
        %3977 = vmatprep.subr.mxu0 0.0
        %3978 = vmatpush1.xpose.msra.mxu0 %v3945
        %3979 = vmatprep.subr.mxu0 0.0
        %3980 = vmatpush2.xpose.msra.mxu0 0.0
        %3981 = vmatprep.subr.mxu0 0.0
        %3982 = vmatpush2.xpose.msra.mxu0 0.0
        %3983 = vmatprep.subr.mxu0 0.0
        %3984 = vmatpush2.xpose.msra.mxu0 0.0
        %3985 = vmatprep.subr.mxu0 0.0
        %3986 = vmatpush2.xpose.msra.mxu0 0.0
        %3987 = vmatprep.subr.mxu0 0.0
        %3988 = vmatpush2.xpose.msra.mxu0 0.0
        %3989 = vmatprep.subr.mxu0 0.0
        %3990 = vmatpush2.xpose.msra.mxu0 0.0
        %3991 = vmatprep.subr.mxu0 0.0
        %3992 = vmatpush2.xpose.msra.mxu0 0.0
        %3993 = vmatprep.subr.mxu0 0.0
        %3994 = vmatpush2.xpose.msra.mxu0 0.0
        %3995 = vmatprep.subr.mxu0 0.0
        %3996 = vmatpush2.xpose.msra.mxu0 0.0
        %3997 = vmatprep.subr.mxu0 0.0
        %3998 = vmatpush2.xpose.msra.mxu0 0.0
        %3999 = vmatprep.subr.mxu0 0.0
        %4000 = vmatpush2.xpose.msra.mxu0 0.0
        %4001 = vmatprep.subr.mxu0 0.0
        %4002 = vmatpush2.xpose.msra.mxu0 0.0
        %4003 = vmatprep.subr.mxu0 0.0
        %4004 = vmatpush2.xpose.msra.mxu0 0.0
        %4005 = vmatprep.subr.mxu0 0.0
        %4006 = vmatpush2.xpose.msra.mxu0 0.0
        %4007 = vmatprep.subr.mxu0 0.0
        %4008 = vmatpush2.xpose.msra.mxu0 0.0
        %4009 = vmatprep.subr.mxu0 0.0
        %4010 = vmatpush2.xpose.msra.mxu0 0.0
        %4011 = vmatprep.mubr.f32.mxu0 0.0
        %4012 = vmatmul.mubr.f32.gmra.mxu0 %v3942
        %v4013 = vpop.f32.mrf.mxu0
        %v4014 = vadd.f32 0.0, %v4013
        %v4015 = vpop.f32.mrf.mxu0
        %4016 = vdwg.mxu0
        %4018 = vrot.lane.b32.xlu0 %v3862, 8
        %v4019 = vpop.permute.xlu0 %4018
        %4022 = vrot.lane.b32.xlu0 %v3938, 16
        %v4023 = vpop.permute.xlu0 %4022
        %4026 = vrot.lane.b32.xlu0 %v4014, 24
        %v4027 = vpop.permute.xlu0 %4026
        %v4029 = vsel %vm377, %v3786, %v4019
        %v4030 = vsel %vm1444, %v4029, %v4023
        %v4031 = vsel %vm1446, %v4030, %v4027
        %v4032 = vlaneseq
        %v4033 = vshrl.u32 %v4032, 7
        %v4034 = vsub.s32 0, %v4033
        %v4035 = vrot.slane %v3132, %v4034
        %v4037 = vsel %vm477, %v4031, 0
        %4039 = vmatprep.subr.mxu0 0.0
        %4040 = vmatpush1.msra.mxu0 0.0
        %4041 = vmatprep.subr.mxu0 0.0
        %4042 = vmatpush1.msra.mxu0 0.0
        %4043 = vmatprep.subr.mxu0 0.0
        %4044 = vmatpush1.msra.mxu0 0.0
        %4045 = vmatprep.subr.mxu0 0.0
        %4046 = vmatpush1.msra.mxu0 0.0
        %4047 = vmatprep.subr.mxu0 0.0
        %4048 = vmatpush1.msra.mxu0 0.0
        %4049 = vmatprep.subr.mxu0 0.0
        %4050 = vmatpush1.msra.mxu0 0.0
        %4051 = vmatprep.subr.mxu0 0.0
        %4052 = vmatpush1.msra.mxu0 0.0
        %4053 = vmatprep.subr.mxu0 0.0
        %4054 = vmatpush1.msra.mxu0 0.0
        %4055 = vmatprep.subr.mxu0 0.0
        %4056 = vmatpush1.msra.mxu0 0.0
        %4057 = vmatprep.subr.mxu0 0.0
        %4058 = vmatpush1.msra.mxu0 0.0
        %4059 = vmatprep.subr.mxu0 0.0
        %4060 = vmatpush1.msra.mxu0 0.0
        %4061 = vmatprep.subr.mxu0 0.0
        %4062 = vmatpush1.msra.mxu0 0.0
        %4063 = vmatprep.subr.mxu0 0.0
        %4064 = vmatpush1.msra.mxu0 %v3131
        %4065 = vmatprep.subr.mxu0 0.0
        %4066 = vmatpush1.msra.mxu0 %v3130
        %4067 = vmatprep.subr.mxu0 0.0
        %4068 = vmatpush1.msra.mxu0 %v3129
        %4069 = vmatprep.subr.mxu0 0.0
        %4070 = vmatpush1.msra.mxu0 %v3128
        %4071 = vmatprep.subr.mxu0 0.0
        %4072 = vmatpush2.msra.mxu0 0.0
        %4073 = vmatprep.subr.mxu0 0.0
        %4074 = vmatpush2.msra.mxu0 0.0
        %4075 = vmatprep.subr.mxu0 0.0
        %4076 = vmatpush2.msra.mxu0 0.0
        %4077 = vmatprep.subr.mxu0 0.0
        %4078 = vmatpush2.msra.mxu0 0.0
        %4079 = vmatprep.subr.mxu0 0.0
        %4080 = vmatpush2.msra.mxu0 0.0
        %4081 = vmatprep.subr.mxu0 0.0
        %4082 = vmatpush2.msra.mxu0 0.0
        %4083 = vmatprep.subr.mxu0 0.0
        %4084 = vmatpush2.msra.mxu0 0.0
        %4085 = vmatprep.subr.mxu0 0.0
        %4086 = vmatpush2.msra.mxu0 0.0
        %4087 = vmatprep.subr.mxu0 0.0
        %4088 = vmatpush2.msra.mxu0 0.0
        %4089 = vmatprep.subr.mxu0 0.0
        %4090 = vmatpush2.msra.mxu0 0.0
        %4091 = vmatprep.subr.mxu0 0.0
        %4092 = vmatpush2.msra.mxu0 0.0
        %4093 = vmatprep.subr.mxu0 0.0
        %4094 = vmatpush2.msra.mxu0 0.0
        %4095 = vmatprep.subr.mxu0 0.0
        %4096 = vmatpush2.msra.mxu0 0.0
        %4097 = vmatprep.subr.mxu0 0.0
        %4098 = vmatpush2.msra.mxu0 0.0
        %4099 = vmatprep.subr.mxu0 0.0
        %4100 = vmatpush2.msra.mxu0 0.0
        %4101 = vmatprep.subr.mxu0 0.0
        %4102 = vmatpush2.msra.mxu0 0.0
        %4103 = vmatprep.mubr.f32.mxu0 0.0
        %4104 = vmatmul.mubr.f32.gmra.mxu0 %v4037
        %v4105 = vpop.f32.mrf.mxu0
        %v4106 = vadd.f32 %v4035, %v4105
        %v4107 = vpop.f32.mrf.mxu0
        %4108 = vdwg.mxu0
        %v4109 = vadd.f32 %v465, %v4106
        %v4110 = vld [vmem:[%s2 + $0x338] sm:$0x1]
        %v4111 = vld [vmem:[%s2 + $0x340] sm:$0x1]
        %v4112 = vsel %vm477, %v4109, 0.0
        %4113 = vadd.xlane.f32.xlu0 %v4112
        %v4114 = vpop.xlane.xlu0 %4113
        %v4115 = vmul.f32 %v4114, %v1531
        %v4116 = vsub.f32 %v4109, %v4115
        %v4117 = vmul.f32 %v4116, %v4116
        %v4118 = vsel %vm477, %v4117, 0.0
        %4119 = vadd.xlane.f32.xlu0 %v4118
        %v4120 = vpop.xlane.xlu0 %4119
        %v4121 = vmul.f32 %v4120, %v1531
        %v4122 = vadd.f32 %v4121, 1e-05
        %v4123 = vrsqrt.pop %v4122
        %v4124 = vmul.f32 %v4116, %v4123
        %v4125 = vlaneseq
        %v4126 = vshrl.u32 %v4125, 7
        %v4127 = vsub.s32 0, %v4126
        %v4128 = vrot.slane %v4110, %v4127
        %v4129 = vmul.f32 %v4124, %v4128
        %v4130 = vlaneseq
        %v4131 = vshrl.u32 %v4130, 7
        %v4132 = vsub.s32 0, %v4131
        %v4133 = vrot.slane %v4111, %v4132
        %v4134 = vadd.f32 %v4129, %v4133
        %v4135 = vld [vmem:[%s2 + $0x250] sm:$0xff]
        %v4136 = vld [vmem:[%s2 + $0x258] sm:$0xff]
        %v4137 = vld [vmem:[%s2 + $0x260] sm:$0xff]
        %v4138 = vld [vmem:[%s2 + $0x268] sm:$0xff]
        %v4139 = vld [vmem:[%s2 + $0x270] sm:$0x1]
        %v4140 = vlaneseq
        %v4141 = vshrl.u32 %v4140, 7
        %v4142 = vsub.s32 0, %v4141
        %v4143 = vrot.slane %v4139, %v4142
        %v4145 = vsel %vm477, %v4134, 0
        %4147 = vmatprep.subr.mxu0 0.0
        %4148 = vmatpush1.msra.mxu0 0.0
        %4149 = vmatprep.subr.mxu0 0.0
        %4150 = vmatpush1.msra.mxu0 0.0
        %4151 = vmatprep.subr.mxu0 0.0
        %4152 = vmatpush1.msra.mxu0 0.0
        %4153 = vmatprep.subr.mxu0 0.0
        %4154 = vmatpush1.msra.mxu0 0.0
        %4155 = vmatprep.subr.mxu0 0.0
        %4156 = vmatpush1.msra.mxu0 0.0
        %4157 = vmatprep.subr.mxu0 0.0
        %4158 = vmatpush1.msra.mxu0 0.0
        %4159 = vmatprep.subr.mxu0 0.0
        %4160 = vmatpush1.msra.mxu0 0.0
        %4161 = vmatprep.subr.mxu0 0.0
        %4162 = vmatpush1.msra.mxu0 0.0
        %4163 = vmatprep.subr.mxu0 0.0
        %4164 = vmatpush1.msra.mxu0 0.0
        %4165 = vmatprep.subr.mxu0 0.0
        %4166 = vmatpush1.msra.mxu0 0.0
        %4167 = vmatprep.subr.mxu0 0.0
        %4168 = vmatpush1.msra.mxu0 0.0
        %4169 = vmatprep.subr.mxu0 0.0
        %4170 = vmatpush1.msra.mxu0 0.0
        %4171 = vmatprep.subr.mxu0 0.0
        %4172 = vmatpush1.msra.mxu0 %v4138
        %4173 = vmatprep.subr.mxu0 0.0
        %4174 = vmatpush1.msra.mxu0 %v4137
        %4175 = vmatprep.subr.mxu0 0.0
        %4176 = vmatpush1.msra.mxu0 %v4136
        %4177 = vmatprep.subr.mxu0 0.0
        %4178 = vmatpush1.msra.mxu0 %v4135
        %4179 = vmatprep.subr.mxu0 0.0
        %4180 = vmatpush2.msra.mxu0 0.0
        %4181 = vmatprep.subr.mxu0 0.0
        %4182 = vmatpush2.msra.mxu0 0.0
        %4183 = vmatprep.subr.mxu0 0.0
        %4184 = vmatpush2.msra.mxu0 0.0
        %4185 = vmatprep.subr.mxu0 0.0
        %4186 = vmatpush2.msra.mxu0 0.0
        %4187 = vmatprep.subr.mxu0 0.0
        %4188 = vmatpush2.msra.mxu0 0.0
        %4189 = vmatprep.subr.mxu0 0.0
        %4190 = vmatpush2.msra.mxu0 0.0
        %4191 = vmatprep.subr.mxu0 0.0
        %4192 = vmatpush2.msra.mxu0 0.0
        %4193 = vmatprep.subr.mxu0 0.0
        %4194 = vmatpush2.msra.mxu0 0.0
        %4195 = vmatprep.subr.mxu0 0.0
        %4196 = vmatpush2.msra.mxu0 0.0
        %4197 = vmatprep.subr.mxu0 0.0
        %4198 = vmatpush2.msra.mxu0 0.0
        %4199 = vmatprep.subr.mxu0 0.0
        %4200 = vmatpush2.msra.mxu0 0.0
        %4201 = vmatprep.subr.mxu0 0.0
        %4202 = vmatpush2.msra.mxu0 0.0
        %4203 = vmatprep.subr.mxu0 0.0
        %4204 = vmatpush2.msra.mxu0 0.0
        %4205 = vmatprep.subr.mxu0 0.0
        %4206 = vmatpush2.msra.mxu0 0.0
        %4207 = vmatprep.subr.mxu0 0.0
        %4208 = vmatpush2.msra.mxu0 0.0
        %4209 = vmatprep.subr.mxu0 0.0
        %4210 = vmatpush2.msra.mxu0 0.0
        %4211 = vmatprep.mubr.f32.mxu0 0.0
        %4212 = vmatmul.mubr.f32.gmra.mxu0 %v4145
        %v4213 = vpop.f32.mrf.mxu0
        %v4214 = vadd.f32 %v4143, %v4213
        %v4215 = vpop.f32.mrf.mxu0
        %4216 = vdwg.mxu0
        %v4217 = vld [vmem:[%s2 + $0x278] sm:$0xff]
        %v4218 = vld [vmem:[%s2 + $0x280] sm:$0xff]
        %v4219 = vld [vmem:[%s2 + $0x288] sm:$0xff]
        %v4220 = vld [vmem:[%s2 + $0x290] sm:$0xff]
        %v4221 = vld [vmem:[%s2 + $0x298] sm:$0x1]
        %v4222 = vlaneseq
        %v4223 = vshrl.u32 %v4222, 7
        %v4224 = vsub.s32 0, %v4223
        %v4225 = vrot.slane %v4221, %v4224
        %v4227 = vsel %vm477, %v3048, 0
        %4229 = vmatprep.subr.mxu0 0.0
        %4230 = vmatpush1.msra.mxu0 0.0
        %4231 = vmatprep.subr.mxu0 0.0
        %4232 = vmatpush1.msra.mxu0 0.0
        %4233 = vmatprep.subr.mxu0 0.0
        %4234 = vmatpush1.msra.mxu0 0.0
        %4235 = vmatprep.subr.mxu0 0.0
        %4236 = vmatpush1.msra.mxu0 0.0
        %4237 = vmatprep.subr.mxu0 0.0
        %4238 = vmatpush1.msra.mxu0 0.0
        %4239 = vmatprep.subr.mxu0 0.0
        %4240 = vmatpush1.msra.mxu0 0.0
        %4241 = vmatprep.subr.mxu0 0.0
        %4242 = vmatpush1.msra.mxu0 0.0
        %4243 = vmatprep.subr.mxu0 0.0
        %4244 = vmatpush1.msra.mxu0 0.0
        %4245 = vmatprep.subr.mxu0 0.0
        %4246 = vmatpush1.msra.mxu0 0.0
        %4247 = vmatprep.subr.mxu0 0.0
        %4248 = vmatpush1.msra.mxu0 0.0
        %4249 = vmatprep.subr.mxu0 0.0
        %4250 = vmatpush1.msra.mxu0 0.0
        %4251 = vmatprep.subr.mxu0 0.0
        %4252 = vmatpush1.msra.mxu0 0.0
        %4253 = vmatprep.subr.mxu0 0.0
        %4254 = vmatpush1.msra.mxu0 %v4220
        %4255 = vmatprep.subr.mxu0 0.0
        %4256 = vmatpush1.msra.mxu0 %v4219
        %4257 = vmatprep.subr.mxu0 0.0
        %4258 = vmatpush1.msra.mxu0 %v4218
        %4259 = vmatprep.subr.mxu0 0.0
        %4260 = vmatpush1.msra.mxu0 %v4217
        %4261 = vmatprep.subr.mxu0 0.0
        %4262 = vmatpush2.msra.mxu0 0.0
        %4263 = vmatprep.subr.mxu0 0.0
        %4264 = vmatpush2.msra.mxu0 0.0
        %4265 = vmatprep.subr.mxu0 0.0
        %4266 = vmatpush2.msra.mxu0 0.0
        %4267 = vmatprep.subr.mxu0 0.0
        %4268 = vmatpush2.msra.mxu0 0.0
        %4269 = vmatprep.subr.mxu0 0.0
        %4270 = vmatpush2.msra.mxu0 0.0
        %4271 = vmatprep.subr.mxu0 0.0
        %4272 = vmatpush2.msra.mxu0 0.0
        %4273 = vmatprep.subr.mxu0 0.0
        %4274 = vmatpush2.msra.mxu0 0.0
        %4275 = vmatprep.subr.mxu0 0.0
        %4276 = vmatpush2.msra.mxu0 0.0
        %4277 = vmatprep.subr.mxu0 0.0
        %4278 = vmatpush2.msra.mxu0 0.0
        %4279 = vmatprep.subr.mxu0 0.0
        %4280 = vmatpush2.msra.mxu0 0.0
        %4281 = vmatprep.subr.mxu0 0.0
        %4282 = vmatpush2.msra.mxu0 0.0
        %4283 = vmatprep.subr.mxu0 0.0
        %4284 = vmatpush2.msra.mxu0 0.0
        %4285 = vmatprep.subr.mxu0 0.0
        %4286 = vmatpush2.msra.mxu0 0.0
        %4287 = vmatprep.subr.mxu0 0.0
        %4288 = vmatpush2.msra.mxu0 0.0
        %4289 = vmatprep.subr.mxu0 0.0
        %4290 = vmatpush2.msra.mxu0 0.0
        %4291 = vmatprep.subr.mxu0 0.0
        %4292 = vmatpush2.msra.mxu0 0.0
        %4293 = vmatprep.mubr.f32.mxu0 0.0
        %4294 = vmatmul.mubr.f32.gmra.mxu0 %v4227
        %v4295 = vpop.f32.mrf.mxu0
        %v4296 = vadd.f32 %v4225, %v4295
        %v4297 = vpop.f32.mrf.mxu0
        %4298 = vdwg.mxu0
        %v4299 = vld [vmem:[%s2 + $0x2a0] sm:$0xff]
        %v4300 = vld [vmem:[%s2 + $0x2a8] sm:$0xff]
        %v4301 = vld [vmem:[%s2 + $0x2b0] sm:$0xff]
        %v4302 = vld [vmem:[%s2 + $0x2b8] sm:$0xff]
        %v4303 = vld [vmem:[%s2 + $0x2c0] sm:$0x1]
        %4304 = vxpose.xlu0.b32.start [1/16] %v4214, 128
        %4305 = vxpose.xlu0.b32.cont [2/16] 0.0, 128
        %4306 = vxpose.xlu0.b32.cont [3/16] 0.0, 128
        %4307 = vxpose.xlu0.b32.cont [4/16] 0.0, 128
        %4308 = vxpose.xlu0.b32.cont [5/16] 0.0, 128
        %4309 = vxpose.xlu0.b32.cont [6/16] 0.0, 128
        %4310 = vxpose.xlu0.b32.cont [7/16] 0.0, 128
        %4311 = vxpose.xlu0.b32.cont [8/16] 0.0, 128
        %4312 = vxpose.xlu0.b32.cont [9/16] 0.0, 128
        %4313 = vxpose.xlu0.b32.cont [10/16] 0.0, 128
        %4314 = vxpose.xlu0.b32.cont [11/16] 0.0, 128
        %4315 = vxpose.xlu0.b32.cont [12/16] 0.0, 128
        %4316 = vxpose.xlu0.b32.cont [13/16] 0.0, 128
        %4317 = vxpose.xlu0.b32.cont [14/16] 0.0, 128
        %4318 = vxpose.xlu0.b32.cont [15/16] 0.0, 128
        %4319 = vxpose.xlu0.b32.end [16/16] 0.0, 128
        %v4320 = vpop.trf.xlu0
        %v4321 = vpop.trf.xlu0
        %v4322 = vpop.trf.xlu0
        %v4323 = vpop.trf.xlu0
        %v4324 = vpop.trf.xlu0
        %v4325 = vpop.trf.xlu0
        %v4326 = vpop.trf.xlu0
        %v4327 = vpop.trf.xlu0
        %v4328 = vpop.trf.xlu0
        %v4329 = vpop.trf.xlu0
        %v4330 = vpop.trf.xlu0
        %v4331 = vpop.trf.xlu0
        %v4332 = vpop.trf.xlu0
        %v4333 = vpop.trf.xlu0
        %v4334 = vpop.trf.xlu0
        %v4335 = vpop.trf.xlu0
        %4336 = vxpose.xlu0.b32.start [1/16] %v4320, 128
        %4337 = vxpose.xlu0.b32.cont [2/16] 0.0, 128
        %4338 = vxpose.xlu0.b32.cont [3/16] 0.0, 128
        %4339 = vxpose.xlu0.b32.cont [4/16] 0.0, 128
        %4340 = vxpose.xlu0.b32.cont [5/16] 0.0, 128
        %4341 = vxpose.xlu0.b32.cont [6/16] 0.0, 128
        %4342 = vxpose.xlu0.b32.cont [7/16] 0.0, 128
        %4343 = vxpose.xlu0.b32.cont [8/16] 0.0, 128
        %4344 = vxpose.xlu0.b32.cont [9/16] 0.0, 128
        %4345 = vxpose.xlu0.b32.cont [10/16] 0.0, 128
        %4346 = vxpose.xlu0.b32.cont [11/16] 0.0, 128
        %4347 = vxpose.xlu0.b32.cont [12/16] 0.0, 128
        %4348 = vxpose.xlu0.b32.cont [13/16] 0.0, 128
        %4349 = vxpose.xlu0.b32.cont [14/16] 0.0, 128
        %4350 = vxpose.xlu0.b32.cont [15/16] 0.0, 128
        %4351 = vxpose.xlu0.b32.end [16/16] 0.0, 128
        %v4352 = vpop.trf.xlu0
        %v4353 = vpop.trf.xlu0
        %v4354 = vpop.trf.xlu0
        %v4355 = vpop.trf.xlu0
        %v4356 = vpop.trf.xlu0
        %v4357 = vpop.trf.xlu0
        %v4358 = vpop.trf.xlu0
        %v4359 = vpop.trf.xlu0
        %v4360 = vpop.trf.xlu0
        %v4361 = vpop.trf.xlu0
        %v4362 = vpop.trf.xlu0
        %v4363 = vpop.trf.xlu0
        %v4364 = vpop.trf.xlu0
        %v4365 = vpop.trf.xlu0
        %v4366 = vpop.trf.xlu0
        %v4367 = vpop.trf.xlu0
        %4368 = vxpose.xlu0.b32.start [1/16] %v4321, 128
        %4369 = vxpose.xlu0.b32.cont [2/16] 0.0, 128
        %4370 = vxpose.xlu0.b32.cont [3/16] 0.0, 128
        %4371 = vxpose.xlu0.b32.cont [4/16] 0.0, 128
        %4372 = vxpose.xlu0.b32.cont [5/16] 0.0, 128
        %4373 = vxpose.xlu0.b32.cont [6/16] 0.0, 128
        %4374 = vxpose.xlu0.b32.cont [7/16] 0.0, 128
        %4375 = vxpose.xlu0.b32.cont [8/16] 0.0, 128
        %4376 = vxpose.xlu0.b32.cont [9/16] 0.0, 128
        %4377 = vxpose.xlu0.b32.cont [10/16] 0.0, 128
        %4378 = vxpose.xlu0.b32.cont [11/16] 0.0, 128
        %4379 = vxpose.xlu0.b32.cont [12/16] 0.0, 128
        %4380 = vxpose.xlu0.b32.cont [13/16] 0.0, 128
        %4381 = vxpose.xlu0.b32.cont [14/16] 0.0, 128
        %4382 = vxpose.xlu0.b32.cont [15/16] 0.0, 128
        %4383 = vxpose.xlu0.b32.end [16/16] 0.0, 128
        %v4384 = vpop.trf.xlu0
        %v4385 = vpop.trf.xlu0
        %v4386 = vpop.trf.xlu0
        %v4387 = vpop.trf.xlu0
        %v4388 = vpop.trf.xlu0
        %v4389 = vpop.trf.xlu0
        %v4390 = vpop.trf.xlu0
        %v4391 = vpop.trf.xlu0
        %v4392 = vpop.trf.xlu0
        %v4393 = vpop.trf.xlu0
        %v4394 = vpop.trf.xlu0
        %v4395 = vpop.trf.xlu0
        %v4396 = vpop.trf.xlu0
        %v4397 = vpop.trf.xlu0
        %v4398 = vpop.trf.xlu0
        %v4399 = vpop.trf.xlu0
        %4400 = vxpose.xlu0.b32.start [1/16] %v4322, 128
        %4401 = vxpose.xlu0.b32.cont [2/16] 0.0, 128
        %4402 = vxpose.xlu0.b32.cont [3/16] 0.0, 128
        %4403 = vxpose.xlu0.b32.cont [4/16] 0.0, 128
        %4404 = vxpose.xlu0.b32.cont [5/16] 0.0, 128
        %4405 = vxpose.xlu0.b32.cont [6/16] 0.0, 128
        %4406 = vxpose.xlu0.b32.cont [7/16] 0.0, 128
        %4407 = vxpose.xlu0.b32.cont [8/16] 0.0, 128
        %4408 = vxpose.xlu0.b32.cont [9/16] 0.0, 128
        %4409 = vxpose.xlu0.b32.cont [10/16] 0.0, 128
        %4410 = vxpose.xlu0.b32.cont [11/16] 0.0, 128
        %4411 = vxpose.xlu0.b32.cont [12/16] 0.0, 128
        %4412 = vxpose.xlu0.b32.cont [13/16] 0.0, 128
        %4413 = vxpose.xlu0.b32.cont [14/16] 0.0, 128
        %4414 = vxpose.xlu0.b32.cont [15/16] 0.0, 128
        %4415 = vxpose.xlu0.b32.end [16/16] 0.0, 128
        %v4416 = vpop.trf.xlu0
        %v4417 = vpop.trf.xlu0
        %v4418 = vpop.trf.xlu0
        %v4419 = vpop.trf.xlu0
        %v4420 = vpop.trf.xlu0
        %v4421 = vpop.trf.xlu0
        %v4422 = vpop.trf.xlu0
        %v4423 = vpop.trf.xlu0
        %v4424 = vpop.trf.xlu0
        %v4425 = vpop.trf.xlu0
        %v4426 = vpop.trf.xlu0
        %v4427 = vpop.trf.xlu0
        %v4428 = vpop.trf.xlu0
        %v4429 = vpop.trf.xlu0
        %v4430 = vpop.trf.xlu0
        %v4431 = vpop.trf.xlu0
        %4432 = vxpose.xlu0.b32.start [1/16] %v4323, 128
        %4433 = vxpose.xlu0.b32.cont [2/16] 0.0, 128
        %4434 = vxpose.xlu0.b32.cont [3/16] 0.0, 128
        %4435 = vxpose.xlu0.b32.cont [4/16] 0.0, 128
        %4436 = vxpose.xlu0.b32.cont [5/16] 0.0, 128
        %4437 = vxpose.xlu0.b32.cont [6/16] 0.0, 128
        %4438 = vxpose.xlu0.b32.cont [7/16] 0.0, 128
        %4439 = vxpose.xlu0.b32.cont [8/16] 0.0, 128
        %4440 = vxpose.xlu0.b32.cont [9/16] 0.0, 128
        %4441 = vxpose.xlu0.b32.cont [10/16] 0.0, 128
        %4442 = vxpose.xlu0.b32.cont [11/16] 0.0, 128
        %4443 = vxpose.xlu0.b32.cont [12/16] 0.0, 128
        %4444 = vxpose.xlu0.b32.cont [13/16] 0.0, 128
        %4445 = vxpose.xlu0.b32.cont [14/16] 0.0, 128
        %4446 = vxpose.xlu0.b32.cont [15/16] 0.0, 128
        %4447 = vxpose.xlu0.b32.end [16/16] 0.0, 128
        %v4448 = vpop.trf.xlu0
        %v4449 = vpop.trf.xlu0
        %v4450 = vpop.trf.xlu0
        %v4451 = vpop.trf.xlu0
        %v4452 = vpop.trf.xlu0
        %v4453 = vpop.trf.xlu0
        %v4454 = vpop.trf.xlu0
        %v4455 = vpop.trf.xlu0
        %v4456 = vpop.trf.xlu0
        %v4457 = vpop.trf.xlu0
        %v4458 = vpop.trf.xlu0
        %v4459 = vpop.trf.xlu0
        %v4460 = vpop.trf.xlu0
        %v4461 = vpop.trf.xlu0
        %v4462 = vpop.trf.xlu0
        %v4463 = vpop.trf.xlu0
        %4464 = vxpose.xlu0.b32.start [1/16] %v4296, 128
        %4465 = vxpose.xlu0.b32.cont [2/16] 0.0, 128
        %4466 = vxpose.xlu0.b32.cont [3/16] 0.0, 128
        %4467 = vxpose.xlu0.b32.cont [4/16] 0.0, 128
        %4468 = vxpose.xlu0.b32.cont [5/16] 0.0, 128
        %4469 = vxpose.xlu0.b32.cont [6/16] 0.0, 128
        %4470 = vxpose.xlu0.b32.cont [7/16] 0.0, 128
        %4471 = vxpose.xlu0.b32.cont [8/16] 0.0, 128
        %4472 = vxpose.xlu0.b32.cont [9/16] 0.0, 128
        %4473 = vxpose.xlu0.b32.cont [10/16] 0.0, 128
        %4474 = vxpose.xlu0.b32.cont [11/16] 0.0, 128
        %4475 = vxpose.xlu0.b32.cont [12/16] 0.0, 128
        %4476 = vxpose.xlu0.b32.cont [13/16] 0.0, 128
        %4477 = vxpose.xlu0.b32.cont [14/16] 0.0, 128
        %4478 = vxpose.xlu0.b32.cont [15/16] 0.0, 128
        %4479 = vxpose.xlu0.b32.end [16/16] 0.0, 128
        %v4480 = vpop.trf.xlu0
        %v4481 = vpop.trf.xlu0
        %v4482 = vpop.trf.xlu0
        %v4483 = vpop.trf.xlu0
        %v4484 = vpop.trf.xlu0
        %v4485 = vpop.trf.xlu0
        %v4486 = vpop.trf.xlu0
        %v4487 = vpop.trf.xlu0
        %v4488 = vpop.trf.xlu0
        %v4489 = vpop.trf.xlu0
        %v4490 = vpop.trf.xlu0
        %v4491 = vpop.trf.xlu0
        %v4492 = vpop.trf.xlu0
        %v4493 = vpop.trf.xlu0
        %v4494 = vpop.trf.xlu0
        %v4495 = vpop.trf.xlu0
        %4497 = vrot.lane.b32.xlu0 %v4296, 96
        %v4498 = vpop.permute.xlu0 %4497
        %4500 = vxpose.xlu0.b32.start [1/16] %v4498, 128
        %4501 = vxpose.xlu0.b32.cont [2/16] 0.0, 128
        %4502 = vxpose.xlu0.b32.cont [3/16] 0.0, 128
        %4503 = vxpose.xlu0.b32.cont [4/16] 0.0, 128
        %4504 = vxpose.xlu0.b32.cont [5/16] 0.0, 128
        %4505 = vxpose.xlu0.b32.cont [6/16] 0.0, 128
        %4506 = vxpose.xlu0.b32.cont [7/16] 0.0, 128
        %4507 = vxpose.xlu0.b32.cont [8/16] 0.0, 128
        %4508 = vxpose.xlu0.b32.cont [9/16] 0.0, 128
        %4509 = vxpose.xlu0.b32.cont [10/16] 0.0, 128
        %4510 = vxpose.xlu0.b32.cont [11/16] 0.0, 128
        %4511 = vxpose.xlu0.b32.cont [12/16] 0.0, 128
        %4512 = vxpose.xlu0.b32.cont [13/16] 0.0, 128
        %4513 = vxpose.xlu0.b32.cont [14/16] 0.0, 128
        %4514 = vxpose.xlu0.b32.cont [15/16] 0.0, 128
        %4515 = vxpose.xlu0.b32.end [16/16] 0.0, 128
        %v4516 = vpop.trf.xlu0
        %v4517 = vpop.trf.xlu0
        %v4518 = vpop.trf.xlu0
        %v4519 = vpop.trf.xlu0
        %v4520 = vpop.trf.xlu0
        %v4521 = vpop.trf.xlu0
        %v4522 = vpop.trf.xlu0
        %v4523 = vpop.trf.xlu0
        %v4524 = vpop.trf.xlu0
        %v4525 = vpop.trf.xlu0
        %v4526 = vpop.trf.xlu0
        %v4527 = vpop.trf.xlu0
        %v4528 = vpop.trf.xlu0
        %v4529 = vpop.trf.xlu0
        %v4530 = vpop.trf.xlu0
        %v4531 = vpop.trf.xlu0
        %v4533 = vsel %vm377, %v4352, 0
        %4535 = vmatprep.subr.mxu0 0.0
        %4536 = vmatpush1.msra.mxu0 0.0
        %4537 = vmatprep.subr.mxu0 0.0
        %4538 = vmatpush1.msra.mxu0 0.0
        %4539 = vmatprep.subr.mxu0 0.0
        %4540 = vmatpush1.msra.mxu0 0.0
        %4541 = vmatprep.subr.mxu0 0.0
        %4542 = vmatpush1.msra.mxu0 0.0
        %4543 = vmatprep.subr.mxu0 0.0
        %4544 = vmatpush1.msra.mxu0 0.0
        %4545 = vmatprep.subr.mxu0 0.0
        %4546 = vmatpush1.msra.mxu0 0.0
        %4547 = vmatprep.subr.mxu0 0.0
        %4548 = vmatpush1.msra.mxu0 0.0
        %4549 = vmatprep.subr.mxu0 0.0
        %4550 = vmatpush1.msra.mxu0 0.0
        %4551 = vmatprep.subr.mxu0 0.0
        %4552 = vmatpush1.msra.mxu0 0.0
        %4553 = vmatprep.subr.mxu0 0.0
        %4554 = vmatpush1.msra.mxu0 0.0
        %4555 = vmatprep.subr.mxu0 0.0
        %4556 = vmatpush1.msra.mxu0 0.0
        %4557 = vmatprep.subr.mxu0 0.0
        %4558 = vmatpush1.msra.mxu0 0.0
        %4559 = vmatprep.subr.mxu0 0.0
        %4560 = vmatpush1.msra.mxu0 0.0
        %4561 = vmatprep.subr.mxu0 0.0
        %4562 = vmatpush1.msra.mxu0 0.0
        %4563 = vmatprep.subr.mxu0 0.0
        %4564 = vmatpush1.msra.mxu0 0.0
        %4565 = vmatprep.subr.mxu0 0.0
        %4566 = vmatpush1.msra.mxu0 %v4480
        %4567 = vmatprep.subr.mxu0 0.0
        %4568 = vmatpush2.msra.mxu0 0.0
        %4569 = vmatprep.subr.mxu0 0.0
        %4570 = vmatpush2.msra.mxu0 0.0
        %4571 = vmatprep.subr.mxu0 0.0
        %4572 = vmatpush2.msra.mxu0 0.0
        %4573 = vmatprep.subr.mxu0 0.0
        %4574 = vmatpush2.msra.mxu0 0.0
        %4575 = vmatprep.subr.mxu0 0.0
        %4576 = vmatpush2.msra.mxu0 0.0
        %4577 = vmatprep.subr.mxu0 0.0
        %4578 = vmatpush2.msra.mxu0 0.0
        %4579 = vmatprep.subr.mxu0 0.0
        %4580 = vmatpush2.msra.mxu0 0.0
        %4581 = vmatprep.subr.mxu0 0.0
        %4582 = vmatpush2.msra.mxu0 0.0
        %4583 = vmatprep.subr.mxu0 0.0
        %4584 = vmatpush2.msra.mxu0 0.0
        %4585 = vmatprep.subr.mxu0 0.0
        %4586 = vmatpush2.msra.mxu0 0.0
        %4587 = vmatprep.subr.mxu0 0.0
        %4588 = vmatpush2.msra.mxu0 0.0
        %4589 = vmatprep.subr.mxu0 0.0
        %4590 = vmatpush2.msra.mxu0 0.0
        %4591 = vmatprep.subr.mxu0 0.0
        %4592 = vmatpush2.msra.mxu0 0.0
        %4593 = vmatprep.subr.mxu0 0.0
        %4594 = vmatpush2.msra.mxu0 0.0
        %4595 = vmatprep.subr.mxu0 0.0
        %4596 = vmatpush2.msra.mxu0 0.0
        %4597 = vmatprep.subr.mxu0 0.0
        %4598 = vmatpush2.msra.mxu0 0.0
        %4599 = vmatprep.mubr.f32.mxu0 0.0
        %4600 = vmatmul.mubr.f32.gmra.mxu0 %v4533
        %v4601 = vpop.f32.mrf.mxu0
        %v4602 = vadd.f32 0.0, %v4601
        %v4603 = vpop.f32.mrf.mxu0
        %4604 = vdwg.mxu0
        %v4606 = vsel %vm377, %v4384, 0
        %4608 = vmatprep.subr.mxu0 0.0
        %4609 = vmatpush1.msra.mxu0 0.0
        %4610 = vmatprep.subr.mxu0 0.0
        %4611 = vmatpush1.msra.mxu0 0.0
        %4612 = vmatprep.subr.mxu0 0.0
        %4613 = vmatpush1.msra.mxu0 0.0
        %4614 = vmatprep.subr.mxu0 0.0
        %4615 = vmatpush1.msra.mxu0 0.0
        %4616 = vmatprep.subr.mxu0 0.0
        %4617 = vmatpush1.msra.mxu0 0.0
        %4618 = vmatprep.subr.mxu0 0.0
        %4619 = vmatpush1.msra.mxu0 0.0
        %4620 = vmatprep.subr.mxu0 0.0
        %4621 = vmatpush1.msra.mxu0 0.0
        %4622 = vmatprep.subr.mxu0 0.0
        %4623 = vmatpush1.msra.mxu0 0.0
        %4624 = vmatprep.subr.mxu0 0.0
        %4625 = vmatpush1.msra.mxu0 0.0
        %4626 = vmatprep.subr.mxu0 0.0
        %4627 = vmatpush1.msra.mxu0 0.0
        %4628 = vmatprep.subr.mxu0 0.0
        %4629 = vmatpush1.msra.mxu0 0.0
        %4630 = vmatprep.subr.mxu0 0.0
        %4631 = vmatpush1.msra.mxu0 0.0
        %4632 = vmatprep.subr.mxu0 0.0
        %4633 = vmatpush1.msra.mxu0 0.0
        %4634 = vmatprep.subr.mxu0 0.0
        %4635 = vmatpush1.msra.mxu0 0.0
        %4636 = vmatprep.subr.mxu0 0.0
        %4637 = vmatpush1.msra.mxu0 0.0
        %4638 = vmatprep.subr.mxu0 0.0
        %4639 = vmatpush1.msra.mxu0 %v4481
        %4640 = vmatprep.subr.mxu0 0.0
        %4641 = vmatpush2.msra.mxu0 0.0
        %4642 = vmatprep.subr.mxu0 0.0
        %4643 = vmatpush2.msra.mxu0 0.0
        %4644 = vmatprep.subr.mxu0 0.0
        %4645 = vmatpush2.msra.mxu0 0.0
        %4646 = vmatprep.subr.mxu0 0.0
        %4647 = vmatpush2.msra.mxu0 0.0
        %4648 = vmatprep.subr.mxu0 0.0
        %4649 = vmatpush2.msra.mxu0 0.0
        %4650 = vmatprep.subr.mxu0 0.0
        %4651 = vmatpush2.msra.mxu0 0.0
        %4652 = vmatprep.subr.mxu0 0.0
        %4653 = vmatpush2.msra.mxu0 0.0
        %4654 = vmatprep.subr.mxu0 0.0
        %4655 = vmatpush2.msra.mxu0 0.0
        %4656 = vmatprep.subr.mxu0 0.0
        %4657 = vmatpush2.msra.mxu0 0.0
        %4658 = vmatprep.subr.mxu0 0.0
        %4659 = vmatpush2.msra.mxu0 0.0
        %4660 = vmatprep.subr.mxu0 0.0
        %4661 = vmatpush2.msra.mxu0 0.0
        %4662 = vmatprep.subr.mxu0 0.0
        %4663 = vmatpush2.msra.mxu0 0.0
        %4664 = vmatprep.subr.mxu0 0.0
        %4665 = vmatpush2.msra.mxu0 0.0
        %4666 = vmatprep.subr.mxu0 0.0
        %4667 = vmatpush2.msra.mxu0 0.0
        %4668 = vmatprep.subr.mxu0 0.0
        %4669 = vmatpush2.msra.mxu0 0.0
        %4670 = vmatprep.subr.mxu0 0.0
        %4671 = vmatpush2.msra.mxu0 0.0
        %4672 = vmatprep.mubr.f32.mxu0 0.0
        %4673 = vmatmul.mubr.f32.gmra.mxu0 %v4606
        %v4674 = vpop.f32.mrf.mxu0
        %v4675 = vadd.f32 0.0, %v4674
        %v4676 = vpop.f32.mrf.mxu0
        %4677 = vdwg.mxu0
        %v4679 = vsel %vm377, %v4416, 0
        %4681 = vmatprep.subr.mxu0 0.0
        %4682 = vmatpush1.msra.mxu0 0.0
        %4683 = vmatprep.subr.mxu0 0.0
        %4684 = vmatpush1.msra.mxu0 0.0
        %4685 = vmatprep.subr.mxu0 0.0
        %4686 = vmatpush1.msra.mxu0 0.0
        %4687 = vmatprep.subr.mxu0 0.0
        %4688 = vmatpush1.msra.mxu0 0.0
        %4689 = vmatprep.subr.mxu0 0.0
        %4690 = vmatpush1.msra.mxu0 0.0
        %4691 = vmatprep.subr.mxu0 0.0
        %4692 = vmatpush1.msra.mxu0 0.0
        %4693 = vmatprep.subr.mxu0 0.0
        %4694 = vmatpush1.msra.mxu0 0.0
        %4695 = vmatprep.subr.mxu0 0.0
        %4696 = vmatpush1.msra.mxu0 0.0
        %4697 = vmatprep.subr.mxu0 0.0
        %4698 = vmatpush1.msra.mxu0 0.0
        %4699 = vmatprep.subr.mxu0 0.0
        %4700 = vmatpush1.msra.mxu0 0.0
        %4701 = vmatprep.subr.mxu0 0.0
        %4702 = vmatpush1.msra.mxu0 0.0
        %4703 = vmatprep.subr.mxu0 0.0
        %4704 = vmatpush1.msra.mxu0 0.0
        %4705 = vmatprep.subr.mxu0 0.0
        %4706 = vmatpush1.msra.mxu0 0.0
        %4707 = vmatprep.subr.mxu0 0.0
        %4708 = vmatpush1.msra.mxu0 0.0
        %4709 = vmatprep.subr.mxu0 0.0
        %4710 = vmatpush1.msra.mxu0 0.0
        %4711 = vmatprep.subr.mxu0 0.0
        %4712 = vmatpush1.msra.mxu0 %v4482
        %4713 = vmatprep.subr.mxu0 0.0
        %4714 = vmatpush2.msra.mxu0 0.0
        %4715 = vmatprep.subr.mxu0 0.0
        %4716 = vmatpush2.msra.mxu0 0.0
        %4717 = vmatprep.subr.mxu0 0.0
        %4718 = vmatpush2.msra.mxu0 0.0
        %4719 = vmatprep.subr.mxu0 0.0
        %4720 = vmatpush2.msra.mxu0 0.0
        %4721 = vmatprep.subr.mxu0 0.0
        %4722 = vmatpush2.msra.mxu0 0.0
        %4723 = vmatprep.subr.mxu0 0.0
        %4724 = vmatpush2.msra.mxu0 0.0
        %4725 = vmatprep.subr.mxu0 0.0
        %4726 = vmatpush2.msra.mxu0 0.0
        %4727 = vmatprep.subr.mxu0 0.0
        %4728 = vmatpush2.msra.mxu0 0.0
        %4729 = vmatprep.subr.mxu0 0.0
        %4730 = vmatpush2.msra.mxu0 0.0
        %4731 = vmatprep.subr.mxu0 0.0
        %4732 = vmatpush2.msra.mxu0 0.0
        %4733 = vmatprep.subr.mxu0 0.0
        %4734 = vmatpush2.msra.mxu0 0.0
        %4735 = vmatprep.subr.mxu0 0.0
        %4736 = vmatpush2.msra.mxu0 0.0
        %4737 = vmatprep.subr.mxu0 0.0
        %4738 = vmatpush2.msra.mxu0 0.0
        %4739 = vmatprep.subr.mxu0 0.0
        %4740 = vmatpush2.msra.mxu0 0.0
        %4741 = vmatprep.subr.mxu0 0.0
        %4742 = vmatpush2.msra.mxu0 0.0
        %4743 = vmatprep.subr.mxu0 0.0
        %4744 = vmatpush2.msra.mxu0 0.0
        %4745 = vmatprep.mubr.f32.mxu0 0.0
        %4746 = vmatmul.mubr.f32.gmra.mxu0 %v4679
        %v4747 = vpop.f32.mrf.mxu0
        %v4748 = vadd.f32 0.0, %v4747
        %v4749 = vpop.f32.mrf.mxu0
        %4750 = vdwg.mxu0
        %v4752 = vsel %vm377, %v4448, 0
        %4754 = vmatprep.subr.mxu0 0.0
        %4755 = vmatpush1.msra.mxu0 0.0
        %4756 = vmatprep.subr.mxu0 0.0
        %4757 = vmatpush1.msra.mxu0 0.0
        %4758 = vmatprep.subr.mxu0 0.0
        %4759 = vmatpush1.msra.mxu0 0.0
        %4760 = vmatprep.subr.mxu0 0.0
        %4761 = vmatpush1.msra.mxu0 0.0
        %4762 = vmatprep.subr.mxu0 0.0
        %4763 = vmatpush1.msra.mxu0 0.0
        %4764 = vmatprep.subr.mxu0 0.0
        %4765 = vmatpush1.msra.mxu0 0.0
        %4766 = vmatprep.subr.mxu0 0.0
        %4767 = vmatpush1.msra.mxu0 0.0
        %4768 = vmatprep.subr.mxu0 0.0
        %4769 = vmatpush1.msra.mxu0 0.0
        %4770 = vmatprep.subr.mxu0 0.0
        %4771 = vmatpush1.msra.mxu0 0.0
        %4772 = vmatprep.subr.mxu0 0.0
        %4773 = vmatpush1.msra.mxu0 0.0
        %4774 = vmatprep.subr.mxu0 0.0
        %4775 = vmatpush1.msra.mxu0 0.0
        %4776 = vmatprep.subr.mxu0 0.0
        %4777 = vmatpush1.msra.mxu0 0.0
        %4778 = vmatprep.subr.mxu0 0.0
        %4779 = vmatpush1.msra.mxu0 0.0
        %4780 = vmatprep.subr.mxu0 0.0
        %4781 = vmatpush1.msra.mxu0 0.0
        %4782 = vmatprep.subr.mxu0 0.0
        %4783 = vmatpush1.msra.mxu0 0.0
        %4784 = vmatprep.subr.mxu0 0.0
        %4785 = vmatpush1.msra.mxu0 %v4483
        %4786 = vmatprep.subr.mxu0 0.0
        %4787 = vmatpush2.msra.mxu0 0.0
        %4788 = vmatprep.subr.mxu0 0.0
        %4789 = vmatpush2.msra.mxu0 0.0
        %4790 = vmatprep.subr.mxu0 0.0
        %4791 = vmatpush2.msra.mxu0 0.0
        %4792 = vmatprep.subr.mxu0 0.0
        %4793 = vmatpush2.msra.mxu0 0.0
        %4794 = vmatprep.subr.mxu0 0.0
        %4795 = vmatpush2.msra.mxu0 0.0
        %4796 = vmatprep.subr.mxu0 0.0
        %4797 = vmatpush2.msra.mxu0 0.0
        %4798 = vmatprep.subr.mxu0 0.0
        %4799 = vmatpush2.msra.mxu0 0.0
        %4800 = vmatprep.subr.mxu0 0.0
        %4801 = vmatpush2.msra.mxu0 0.0
        %4802 = vmatprep.subr.mxu0 0.0
        %4803 = vmatpush2.msra.mxu0 0.0
        %4804 = vmatprep.subr.mxu0 0.0
        %4805 = vmatpush2.msra.mxu0 0.0
        %4806 = vmatprep.subr.mxu0 0.0
        %4807 = vmatpush2.msra.mxu0 0.0
        %4808 = vmatprep.subr.mxu0 0.0
        %4809 = vmatpush2.msra.mxu0 0.0
        %4810 = vmatprep.subr.mxu0 0.0
        %4811 = vmatpush2.msra.mxu0 0.0
        %4812 = vmatprep.subr.mxu0 0.0
        %4813 = vmatpush2.msra.mxu0 0.0
        %4814 = vmatprep.subr.mxu0 0.0
        %4815 = vmatpush2.msra.mxu0 0.0
        %4816 = vmatprep.subr.mxu0 0.0
        %4817 = vmatpush2.msra.mxu0 0.0
        %4818 = vmatprep.mubr.f32.mxu0 0.0
        %4819 = vmatmul.mubr.f32.gmra.mxu0 %v4752
        %v4820 = vpop.f32.mrf.mxu0
        %v4821 = vadd.f32 0.0, %v4820
        %v4822 = vpop.f32.mrf.mxu0
        %4823 = vdwg.mxu0
        %v4824 = vmul.f32 %v4602, 0.35355338
        %v4825 = vmul.f32 %v4675, 0.35355338
        %v4826 = vmul.f32 %v4748, 0.35355338
        %v4827 = vmul.f32 %v4821, 0.35355338
        %v4828 = vsel %vm377, %v4824, -inf
        %4829 = vmax.xlane.f32.xlu0 %v4828
        %v4830 = vpop.xlane.xlu0 %4829
        %v4831 = vsel %vm377, %v4825, -inf
        %4832 = vmax.xlane.f32.xlu0 %v4831
        %v4833 = vpop.xlane.xlu0 %4832
        %v4834 = vsel %vm377, %v4826, -inf
        %4835 = vmax.xlane.f32.xlu0 %v4834
        %v4836 = vpop.xlane.xlu0 %4835
        %v4837 = vsel %vm377, %v4827, -inf
        %4838 = vmax.xlane.f32.xlu0 %v4837
        %v4839 = vpop.xlane.xlu0 %4838
        %v4840 = vsub.f32 %v4824, %v4830
        %v4841 = vsub.f32 %v4825, %v4833
        %v4842 = vsub.f32 %v4826, %v4836
        %v4843 = vsub.f32 %v4827, %v4839
        %v4844 = vmul.f32 %v4840, 1.442695
        %v4845 = vpow.pop %v4844
        %v4846 = vmul.f32 %v4841, 1.442695
        %v4847 = vpow.pop %v4846
        %v4848 = vmul.f32 %v4842, 1.442695
        %v4849 = vpow.pop %v4848
        %v4850 = vmul.f32 %v4843, 1.442695
        %v4851 = vpow.pop %v4850
        %v4852 = vsel %vm377, %v4845, 0.0
        %4853 = vadd.xlane.f32.xlu0 %v4852
        %v4854 = vpop.xlane.xlu0 %4853
        %v4855 = vsel %vm377, %v4847, 0.0
        %4856 = vadd.xlane.f32.xlu0 %v4855
        %v4857 = vpop.xlane.xlu0 %4856
        %v4858 = vsel %vm377, %v4849, 0.0
        %4859 = vadd.xlane.f32.xlu0 %v4858
        %v4860 = vpop.xlane.xlu0 %4859
        %v4861 = vsel %vm377, %v4851, 0.0
        %4862 = vadd.xlane.f32.xlu0 %v4861
        %v4863 = vpop.xlane.xlu0 %4862
        %v4864 = vrcp.pop %v4854
        %v4865 = vrcp.pop %v4857
        %v4866 = vrcp.pop %v4860
        %v4867 = vrcp.pop %v4863
        %v4868 = vmul.f32 %v4845, %v4864
        %v4869 = vmul.f32 %v4847, %v4865
        %v4870 = vmul.f32 %v4849, %v4866
        %v4871 = vmul.f32 %v4851, %v4867
        %v4873 = vsel %vm377, %v4868, 0
        %v4876 = vsel %vm377, %v4516, 0
        %4878 = vmatprep.subr.mxu0 0.0
        %4879 = vmatpush1.xpose.msra.mxu0 0.0
        %4880 = vmatprep.subr.mxu0 0.0
        %4881 = vmatpush1.xpose.msra.mxu0 0.0
        %4882 = vmatprep.subr.mxu0 0.0
        %4883 = vmatpush1.xpose.msra.mxu0 0.0
        %4884 = vmatprep.subr.mxu0 0.0
        %4885 = vmatpush1.xpose.msra.mxu0 0.0
        %4886 = vmatprep.subr.mxu0 0.0
        %4887 = vmatpush1.xpose.msra.mxu0 0.0
        %4888 = vmatprep.subr.mxu0 0.0
        %4889 = vmatpush1.xpose.msra.mxu0 0.0
        %4890 = vmatprep.subr.mxu0 0.0
        %4891 = vmatpush1.xpose.msra.mxu0 0.0
        %4892 = vmatprep.subr.mxu0 0.0
        %4893 = vmatpush1.xpose.msra.mxu0 0.0
        %4894 = vmatprep.subr.mxu0 0.0
        %4895 = vmatpush1.xpose.msra.mxu0 0.0
        %4896 = vmatprep.subr.mxu0 0.0
        %4897 = vmatpush1.xpose.msra.mxu0 0.0
        %4898 = vmatprep.subr.mxu0 0.0
        %4899 = vmatpush1.xpose.msra.mxu0 0.0
        %4900 = vmatprep.subr.mxu0 0.0
        %4901 = vmatpush1.xpose.msra.mxu0 0.0
        %4902 = vmatprep.subr.mxu0 0.0
        %4903 = vmatpush1.xpose.msra.mxu0 0.0
        %4904 = vmatprep.subr.mxu0 0.0
        %4905 = vmatpush1.xpose.msra.mxu0 0.0
        %4906 = vmatprep.subr.mxu0 0.0
        %4907 = vmatpush1.xpose.msra.mxu0 0.0
        %4908 = vmatprep.subr.mxu0 0.0
        %4909 = vmatpush1.xpose.msra.mxu0 %v4876
        %4910 = vmatprep.subr.mxu0 0.0
        %4911 = vmatpush2.xpose.msra.mxu0 0.0
        %4912 = vmatprep.subr.mxu0 0.0
        %4913 = vmatpush2.xpose.msra.mxu0 0.0
        %4914 = vmatprep.subr.mxu0 0.0
        %4915 = vmatpush2.xpose.msra.mxu0 0.0
        %4916 = vmatprep.subr.mxu0 0.0
        %4917 = vmatpush2.xpose.msra.mxu0 0.0
        %4918 = vmatprep.subr.mxu0 0.0
        %4919 = vmatpush2.xpose.msra.mxu0 0.0
        %4920 = vmatprep.subr.mxu0 0.0
        %4921 = vmatpush2.xpose.msra.mxu0 0.0
        %4922 = vmatprep.subr.mxu0 0.0
        %4923 = vmatpush2.xpose.msra.mxu0 0.0
        %4924 = vmatprep.subr.mxu0 0.0
        %4925 = vmatpush2.xpose.msra.mxu0 0.0
        %4926 = vmatprep.subr.mxu0 0.0
        %4927 = vmatpush2.xpose.msra.mxu0 0.0
        %4928 = vmatprep.subr.mxu0 0.0
        %4929 = vmatpush2.xpose.msra.mxu0 0.0
        %4930 = vmatprep.subr.mxu0 0.0
        %4931 = vmatpush2.xpose.msra.mxu0 0.0
        %4932 = vmatprep.subr.mxu0 0.0
        %4933 = vmatpush2.xpose.msra.mxu0 0.0
        %4934 = vmatprep.subr.mxu0 0.0
        %4935 = vmatpush2.xpose.msra.mxu0 0.0
        %4936 = vmatprep.subr.mxu0 0.0
        %4937 = vmatpush2.xpose.msra.mxu0 0.0
        %4938 = vmatprep.subr.mxu0 0.0
        %4939 = vmatpush2.xpose.msra.mxu0 0.0
        %4940 = vmatprep.subr.mxu0 0.0
        %4941 = vmatpush2.xpose.msra.mxu0 0.0
        %4942 = vmatprep.mubr.f32.mxu0 0.0
        %4943 = vmatmul.mubr.f32.gmra.mxu0 %v4873
        %v4944 = vpop.f32.mrf.mxu0
        %v4945 = vadd.f32 0.0, %v4944
        %v4946 = vpop.f32.mrf.mxu0
        %4947 = vdwg.mxu0
        %v4949 = vsel %vm377, %v4869, 0
        %v4952 = vsel %vm377, %v4517, 0
        %4954 = vmatprep.subr.mxu0 0.0
        %4955 = vmatpush1.xpose.msra.mxu0 0.0
        %4956 = vmatprep.subr.mxu0 0.0
        %4957 = vmatpush1.xpose.msra.mxu0 0.0
        %4958 = vmatprep.subr.mxu0 0.0
        %4959 = vmatpush1.xpose.msra.mxu0 0.0
        %4960 = vmatprep.subr.mxu0 0.0
        %4961 = vmatpush1.xpose.msra.mxu0 0.0
        %4962 = vmatprep.subr.mxu0 0.0
        %4963 = vmatpush1.xpose.msra.mxu0 0.0
        %4964 = vmatprep.subr.mxu0 0.0
        %4965 = vmatpush1.xpose.msra.mxu0 0.0
        %4966 = vmatprep.subr.mxu0 0.0
        %4967 = vmatpush1.xpose.msra.mxu0 0.0
        %4968 = vmatprep.subr.mxu0 0.0
        %4969 = vmatpush1.xpose.msra.mxu0 0.0
        %4970 = vmatprep.subr.mxu0 0.0
        %4971 = vmatpush1.xpose.msra.mxu0 0.0
        %4972 = vmatprep.subr.mxu0 0.0
        %4973 = vmatpush1.xpose.msra.mxu0 0.0
        %4974 = vmatprep.subr.mxu0 0.0
        %4975 = vmatpush1.xpose.msra.mxu0 0.0
        %4976 = vmatprep.subr.mxu0 0.0
        %4977 = vmatpush1.xpose.msra.mxu0 0.0
        %4978 = vmatprep.subr.mxu0 0.0
        %4979 = vmatpush1.xpose.msra.mxu0 0.0
        %4980 = vmatprep.subr.mxu0 0.0
        %4981 = vmatpush1.xpose.msra.mxu0 0.0
        %4982 = vmatprep.subr.mxu0 0.0
        %4983 = vmatpush1.xpose.msra.mxu0 0.0
        %4984 = vmatprep.subr.mxu0 0.0
        %4985 = vmatpush1.xpose.msra.mxu0 %v4952
        %4986 = vmatprep.subr.mxu0 0.0
        %4987 = vmatpush2.xpose.msra.mxu0 0.0
        %4988 = vmatprep.subr.mxu0 0.0
        %4989 = vmatpush2.xpose.msra.mxu0 0.0
        %4990 = vmatprep.subr.mxu0 0.0
        %4991 = vmatpush2.xpose.msra.mxu0 0.0
        %4992 = vmatprep.subr.mxu0 0.0
        %4993 = vmatpush2.xpose.msra.mxu0 0.0
        %4994 = vmatprep.subr.mxu0 0.0
        %4995 = vmatpush2.xpose.msra.mxu0 0.0
        %4996 = vmatprep.subr.mxu0 0.0
        %4997 = vmatpush2.xpose.msra.mxu0 0.0
        %4998 = vmatprep.subr.mxu0 0.0
        %4999 = vmatpush2.xpose.msra.mxu0 0.0
        %5000 = vmatprep.subr.mxu0 0.0
        %5001 = vmatpush2.xpose.msra.mxu0 0.0
        %5002 = vmatprep.subr.mxu0 0.0
        %5003 = vmatpush2.xpose.msra.mxu0 0.0
        %5004 = vmatprep.subr.mxu0 0.0
        %5005 = vmatpush2.xpose.msra.mxu0 0.0
        %5006 = vmatprep.subr.mxu0 0.0
        %5007 = vmatpush2.xpose.msra.mxu0 0.0
        %5008 = vmatprep.subr.mxu0 0.0
        %5009 = vmatpush2.xpose.msra.mxu0 0.0
        %5010 = vmatprep.subr.mxu0 0.0
        %5011 = vmatpush2.xpose.msra.mxu0 0.0
        %5012 = vmatprep.subr.mxu0 0.0
        %5013 = vmatpush2.xpose.msra.mxu0 0.0
        %5014 = vmatprep.subr.mxu0 0.0
        %5015 = vmatpush2.xpose.msra.mxu0 0.0
        %5016 = vmatprep.subr.mxu0 0.0
        %5017 = vmatpush2.xpose.msra.mxu0 0.0
        %5018 = vmatprep.mubr.f32.mxu0 0.0
        %5019 = vmatmul.mubr.f32.gmra.mxu0 %v4949
        %v5020 = vpop.f32.mrf.mxu0
        %v5021 = vadd.f32 0.0, %v5020
        %v5022 = vpop.f32.mrf.mxu0
        %5023 = vdwg.mxu0
        %v5025 = vsel %vm377, %v4870, 0
        %v5028 = vsel %vm377, %v4518, 0
        %5030 = vmatprep.subr.mxu0 0.0
        %5031 = vmatpush1.xpose.msra.mxu0 0.0
        %5032 = vmatprep.subr.mxu0 0.0
        %5033 = vmatpush1.xpose.msra.mxu0 0.0
        %5034 = vmatprep.subr.mxu0 0.0
        %5035 = vmatpush1.xpose.msra.mxu0 0.0
        %5036 = vmatprep.subr.mxu0 0.0
        %5037 = vmatpush1.xpose.msra.mxu0 0.0
        %5038 = vmatprep.subr.mxu0 0.0
        %5039 = vmatpush1.xpose.msra.mxu0 0.0
        %5040 = vmatprep.subr.mxu0 0.0
        %5041 = vmatpush1.xpose.msra.mxu0 0.0
        %5042 = vmatprep.subr.mxu0 0.0
        %5043 = vmatpush1.xpose.msra.mxu0 0.0
        %5044 = vmatprep.subr.mxu0 0.0
        %5045 = vmatpush1.xpose.msra.mxu0 0.0
        %5046 = vmatprep.subr.mxu0 0.0
        %5047 = vmatpush1.xpose.msra.mxu0 0.0
        %5048 = vmatprep.subr.mxu0 0.0
        %5049 = vmatpush1.xpose.msra.mxu0 0.0
        %5050 = vmatprep.subr.mxu0 0.0
        %5051 = vmatpush1.xpose.msra.mxu0 0.0
        %5052 = vmatprep.subr.mxu0 0.0
        %5053 = vmatpush1.xpose.msra.mxu0 0.0
        %5054 = vmatprep.subr.mxu0 0.0
        %5055 = vmatpush1.xpose.msra.mxu0 0.0
        %5056 = vmatprep.subr.mxu0 0.0
        %5057 = vmatpush1.xpose.msra.mxu0 0.0
        %5058 = vmatprep.subr.mxu0 0.0
        %5059 = vmatpush1.xpose.msra.mxu0 0.0
        %5060 = vmatprep.subr.mxu0 0.0
        %5061 = vmatpush1.xpose.msra.mxu0 %v5028
        %5062 = vmatprep.subr.mxu0 0.0
        %5063 = vmatpush2.xpose.msra.mxu0 0.0
        %5064 = vmatprep.subr.mxu0 0.0
        %5065 = vmatpush2.xpose.msra.mxu0 0.0
        %5066 = vmatprep.subr.mxu0 0.0
        %5067 = vmatpush2.xpose.msra.mxu0 0.0
        %5068 = vmatprep.subr.mxu0 0.0
        %5069 = vmatpush2.xpose.msra.mxu0 0.0
        %5070 = vmatprep.subr.mxu0 0.0
        %5071 = vmatpush2.xpose.msra.mxu0 0.0
        %5072 = vmatprep.subr.mxu0 0.0
        %5073 = vmatpush2.xpose.msra.mxu0 0.0
        %5074 = vmatprep.subr.mxu0 0.0
        %5075 = vmatpush2.xpose.msra.mxu0 0.0
        %5076 = vmatprep.subr.mxu0 0.0
        %5077 = vmatpush2.xpose.msra.mxu0 0.0
        %5078 = vmatprep.subr.mxu0 0.0
        %5079 = vmatpush2.xpose.msra.mxu0 0.0
        %5080 = vmatprep.subr.mxu0 0.0
        %5081 = vmatpush2.xpose.msra.mxu0 0.0
        %5082 = vmatprep.subr.mxu0 0.0
        %5083 = vmatpush2.xpose.msra.mxu0 0.0
        %5084 = vmatprep.subr.mxu0 0.0
        %5085 = vmatpush2.xpose.msra.mxu0 0.0
        %5086 = vmatprep.subr.mxu0 0.0
        %5087 = vmatpush2.xpose.msra.mxu0 0.0
        %5088 = vmatprep.subr.mxu0 0.0
        %5089 = vmatpush2.xpose.msra.mxu0 0.0
        %5090 = vmatprep.subr.mxu0 0.0
        %5091 = vmatpush2.xpose.msra.mxu0 0.0
        %5092 = vmatprep.subr.mxu0 0.0
        %5093 = vmatpush2.xpose.msra.mxu0 0.0
        %5094 = vmatprep.mubr.f32.mxu0 0.0
        %5095 = vmatmul.mubr.f32.gmra.mxu0 %v5025
        %v5096 = vpop.f32.mrf.mxu0
        %v5097 = vadd.f32 0.0, %v5096
        %v5098 = vpop.f32.mrf.mxu0
        %5099 = vdwg.mxu0
        %v5101 = vsel %vm377, %v4871, 0
        %v5104 = vsel %vm377, %v4519, 0
        %5106 = vmatprep.subr.mxu0 0.0
        %5107 = vmatpush1.xpose.msra.mxu0 0.0
        %5108 = vmatprep.subr.mxu0 0.0
        %5109 = vmatpush1.xpose.msra.mxu0 0.0
        %5110 = vmatprep.subr.mxu0 0.0
        %5111 = vmatpush1.xpose.msra.mxu0 0.0
        %5112 = vmatprep.subr.mxu0 0.0
        %5113 = vmatpush1.xpose.msra.mxu0 0.0
        %5114 = vmatprep.subr.mxu0 0.0
        %5115 = vmatpush1.xpose.msra.mxu0 0.0
        %5116 = vmatprep.subr.mxu0 0.0
        %5117 = vmatpush1.xpose.msra.mxu0 0.0
        %5118 = vmatprep.subr.mxu0 0.0
        %5119 = vmatpush1.xpose.msra.mxu0 0.0
        %5120 = vmatprep.subr.mxu0 0.0
        %5121 = vmatpush1.xpose.msra.mxu0 0.0
        %5122 = vmatprep.subr.mxu0 0.0
        %5123 = vmatpush1.xpose.msra.mxu0 0.0
        %5124 = vmatprep.subr.mxu0 0.0
        %5125 = vmatpush1.xpose.msra.mxu0 0.0
        %5126 = vmatprep.subr.mxu0 0.0
        %5127 = vmatpush1.xpose.msra.mxu0 0.0
        %5128 = vmatprep.subr.mxu0 0.0
        %5129 = vmatpush1.xpose.msra.mxu0 0.0
        %5130 = vmatprep.subr.mxu0 0.0
        %5131 = vmatpush1.xpose.msra.mxu0 0.0
        %5132 = vmatprep.subr.mxu0 0.0
        %5133 = vmatpush1.xpose.msra.mxu0 0.0
        %5134 = vmatprep.subr.mxu0 0.0
        %5135 = vmatpush1.xpose.msra.mxu0 0.0
        %5136 = vmatprep.subr.mxu0 0.0
        %5137 = vmatpush1.xpose.msra.mxu0 %v5104
        %5138 = vmatprep.subr.mxu0 0.0
        %5139 = vmatpush2.xpose.msra.mxu0 0.0
        %5140 = vmatprep.subr.mxu0 0.0
        %5141 = vmatpush2.xpose.msra.mxu0 0.0
        %5142 = vmatprep.subr.mxu0 0.0
        %5143 = vmatpush2.xpose.msra.mxu0 0.0
        %5144 = vmatprep.subr.mxu0 0.0
        %5145 = vmatpush2.xpose.msra.mxu0 0.0
        %5146 = vmatprep.subr.mxu0 0.0
        %5147 = vmatpush2.xpose.msra.mxu0 0.0
        %5148 = vmatprep.subr.mxu0 0.0
        %5149 = vmatpush2.xpose.msra.mxu0 0.0
        %5150 = vmatprep.subr.mxu0 0.0
        %5151 = vmatpush2.xpose.msra.mxu0 0.0
        %5152 = vmatprep.subr.mxu0 0.0
        %5153 = vmatpush2.xpose.msra.mxu0 0.0
        %5154 = vmatprep.subr.mxu0 0.0
        %5155 = vmatpush2.xpose.msra.mxu0 0.0
        %5156 = vmatprep.subr.mxu0 0.0
        %5157 = vmatpush2.xpose.msra.mxu0 0.0
        %5158 = vmatprep.subr.mxu0 0.0
        %5159 = vmatpush2.xpose.msra.mxu0 0.0
        %5160 = vmatprep.subr.mxu0 0.0
        %5161 = vmatpush2.xpose.msra.mxu0 0.0
        %5162 = vmatprep.subr.mxu0 0.0
        %5163 = vmatpush2.xpose.msra.mxu0 0.0
        %5164 = vmatprep.subr.mxu0 0.0
        %5165 = vmatpush2.xpose.msra.mxu0 0.0
        %5166 = vmatprep.subr.mxu0 0.0
        %5167 = vmatpush2.xpose.msra.mxu0 0.0
        %5168 = vmatprep.subr.mxu0 0.0
        %5169 = vmatpush2.xpose.msra.mxu0 0.0
        %5170 = vmatprep.mubr.f32.mxu0 0.0
        %5171 = vmatmul.mubr.f32.gmra.mxu0 %v5101
        %v5172 = vpop.f32.mrf.mxu0
        %v5173 = vadd.f32 0.0, %v5172
        %v5174 = vpop.f32.mrf.mxu0
        %5175 = vdwg.mxu0
        %5177 = vrot.lane.b32.xlu0 %v5021, 8
        %v5178 = vpop.permute.xlu0 %5177
        %5181 = vrot.lane.b32.xlu0 %v5097, 16
        %v5182 = vpop.permute.xlu0 %5181
        %5185 = vrot.lane.b32.xlu0 %v5173, 24
        %v5186 = vpop.permute.xlu0 %5185
        %v5188 = vsel %vm377, %v4945, %v5178
        %v5189 = vsel %vm1444, %v5188, %v5182
        %v5190 = vsel %vm1446, %v5189, %v5186
        %v5191 = vlaneseq
        %v5192 = vshrl.u32 %v5191, 7
        %v5193 = vsub.s32 0, %v5192
        %v5194 = vrot.slane %v4303, %v5193
        %v5196 = vsel %vm477, %v5190, 0
        %5198 = vmatprep.subr.mxu0 0.0
        %5199 = vmatpush1.msra.mxu0 0.0
        %5200 = vmatprep.subr.mxu0 0.0
        %5201 = vmatpush1.msra.mxu0 0.0
        %5202 = vmatprep.subr.mxu0 0.0
        %5203 = vmatpush1.msra.mxu0 0.0
        %5204 = vmatprep.subr.mxu0 0.0
        %5205 = vmatpush1.msra.mxu0 0.0
        %5206 = vmatprep.subr.mxu0 0.0
        %5207 = vmatpush1.msra.mxu0 0.0
        %5208 = vmatprep.subr.mxu0 0.0
        %5209 = vmatpush1.msra.mxu0 0.0
        %5210 = vmatprep.subr.mxu0 0.0
        %5211 = vmatpush1.msra.mxu0 0.0
        %5212 = vmatprep.subr.mxu0 0.0
        %5213 = vmatpush1.msra.mxu0 0.0
        %5214 = vmatprep.subr.mxu0 0.0
        %5215 = vmatpush1.msra.mxu0 0.0
        %5216 = vmatprep.subr.mxu0 0.0
        %5217 = vmatpush1.msra.mxu0 0.0
        %5218 = vmatprep.subr.mxu0 0.0
        %5219 = vmatpush1.msra.mxu0 0.0
        %5220 = vmatprep.subr.mxu0 0.0
        %5221 = vmatpush1.msra.mxu0 0.0
        %5222 = vmatprep.subr.mxu0 0.0
        %5223 = vmatpush1.msra.mxu0 %v4302
        %5224 = vmatprep.subr.mxu0 0.0
        %5225 = vmatpush1.msra.mxu0 %v4301
        %5226 = vmatprep.subr.mxu0 0.0
        %5227 = vmatpush1.msra.mxu0 %v4300
        %5228 = vmatprep.subr.mxu0 0.0
        %5229 = vmatpush1.msra.mxu0 %v4299
        %5230 = vmatprep.subr.mxu0 0.0
        %5231 = vmatpush2.msra.mxu0 0.0
        %5232 = vmatprep.subr.mxu0 0.0
        %5233 = vmatpush2.msra.mxu0 0.0
        %5234 = vmatprep.subr.mxu0 0.0
        %5235 = vmatpush2.msra.mxu0 0.0
        %5236 = vmatprep.subr.mxu0 0.0
        %5237 = vmatpush2.msra.mxu0 0.0
        %5238 = vmatprep.subr.mxu0 0.0
        %5239 = vmatpush2.msra.mxu0 0.0
        %5240 = vmatprep.subr.mxu0 0.0
        %5241 = vmatpush2.msra.mxu0 0.0
        %5242 = vmatprep.subr.mxu0 0.0
        %5243 = vmatpush2.msra.mxu0 0.0
        %5244 = vmatprep.subr.mxu0 0.0
        %5245 = vmatpush2.msra.mxu0 0.0
        %5246 = vmatprep.subr.mxu0 0.0
        %5247 = vmatpush2.msra.mxu0 0.0
        %5248 = vmatprep.subr.mxu0 0.0
        %5249 = vmatpush2.msra.mxu0 0.0
        %5250 = vmatprep.subr.mxu0 0.0
        %5251 = vmatpush2.msra.mxu0 0.0
        %5252 = vmatprep.subr.mxu0 0.0
        %5253 = vmatpush2.msra.mxu0 0.0
        %5254 = vmatprep.subr.mxu0 0.0
        %5255 = vmatpush2.msra.mxu0 0.0
        %5256 = vmatprep.subr.mxu0 0.0
        %5257 = vmatpush2.msra.mxu0 0.0
        %5258 = vmatprep.subr.mxu0 0.0
        %5259 = vmatpush2.msra.mxu0 0.0
        %5260 = vmatprep.subr.mxu0 0.0
        %5261 = vmatpush2.msra.mxu0 0.0
        %5262 = vmatprep.mubr.f32.mxu0 0.0
        %5263 = vmatmul.mubr.f32.gmra.mxu0 %v5196
        %v5264 = vpop.f32.mrf.mxu0
        %v5265 = vadd.f32 %v5194, %v5264
        %v5266 = vpop.f32.mrf.mxu0
        %5267 = vdwg.mxu0
        %v5268 = vadd.f32 %v4134, %v5265
        %v5269 = vld [vmem:[%s2 + $0x348] sm:$0x1]
        %v5270 = vld [vmem:[%s2 + $0x350] sm:$0x1]
        %v5271 = vsel %vm477, %v5268, 0.0
        %5272 = vadd.xlane.f32.xlu0 %v5271
        %v5273 = vpop.xlane.xlu0 %5272
        %v5274 = vmul.f32 %v5273, %v1531
        %v5275 = vsub.f32 %v5268, %v5274
        %v5276 = vmul.f32 %v5275, %v5275
        %v5277 = vsel %vm477, %v5276, 0.0
        %5278 = vadd.xlane.f32.xlu0 %v5277
        %v5279 = vpop.xlane.xlu0 %5278
        %v5280 = vmul.f32 %v5279, %v1531
        %v5281 = vadd.f32 %v5280, 1e-05
        %v5282 = vrsqrt.pop %v5281
        %v5283 = vmul.f32 %v5275, %v5282
        %v5284 = vlaneseq
        %v5285 = vshrl.u32 %v5284, 7
        %v5286 = vsub.s32 0, %v5285
        %v5287 = vrot.slane %v5269, %v5286
        %v5288 = vmul.f32 %v5283, %v5287
        %v5289 = vlaneseq
        %v5290 = vshrl.u32 %v5289, 7
        %v5291 = vsub.s32 0, %v5290
        %v5292 = vrot.slane %v5270, %v5291
        %v5293 = vadd.f32 %v5288, %v5292
        %v5294 = vld [vmem:[%s2 + $0x2c8] sm:$0xff]
        %v5295 = vld [vmem:[%s2 + $0x2d0] sm:$0xff]
        %v5296 = vld [vmem:[%s2 + $0x2d8] sm:$0xff]
        %v5297 = vld [vmem:[%s2 + $0x2e0] sm:$0xff]
        %v5298 = vld [vmem:[%s2 + $0x2e8] sm:$0x1]
        %v5299 = vlaneseq
        %v5300 = vshrl.u32 %v5299, 7
        %v5301 = vsub.s32 0, %v5300
        %v5302 = vrot.slane %v5298, %v5301
        %v5304 = vsel %vm477, %v5293, 0
        %5306 = vmatprep.subr.mxu0 0.0
        %5307 = vmatpush1.msra.mxu0 0.0
        %5308 = vmatprep.subr.mxu0 0.0
        %5309 = vmatpush1.msra.mxu0 0.0
        %5310 = vmatprep.subr.mxu0 0.0
        %5311 = vmatpush1.msra.mxu0 0.0
        %5312 = vmatprep.subr.mxu0 0.0
        %5313 = vmatpush1.msra.mxu0 0.0
        %5314 = vmatprep.subr.mxu0 0.0
        %5315 = vmatpush1.msra.mxu0 0.0
        %5316 = vmatprep.subr.mxu0 0.0
        %5317 = vmatpush1.msra.mxu0 0.0
        %5318 = vmatprep.subr.mxu0 0.0
        %5319 = vmatpush1.msra.mxu0 0.0
        %5320 = vmatprep.subr.mxu0 0.0
        %5321 = vmatpush1.msra.mxu0 0.0
        %5322 = vmatprep.subr.mxu0 0.0
        %5323 = vmatpush1.msra.mxu0 0.0
        %5324 = vmatprep.subr.mxu0 0.0
        %5325 = vmatpush1.msra.mxu0 0.0
        %5326 = vmatprep.subr.mxu0 0.0
        %5327 = vmatpush1.msra.mxu0 0.0
        %5328 = vmatprep.subr.mxu0 0.0
        %5329 = vmatpush1.msra.mxu0 0.0
        %5330 = vmatprep.subr.mxu0 0.0
        %5331 = vmatpush1.msra.mxu0 %v5297
        %5332 = vmatprep.subr.mxu0 0.0
        %5333 = vmatpush1.msra.mxu0 %v5296
        %5334 = vmatprep.subr.mxu0 0.0
        %5335 = vmatpush1.msra.mxu0 %v5295
        %5336 = vmatprep.subr.mxu0 0.0
        %5337 = vmatpush1.msra.mxu0 %v5294
        %5338 = vmatprep.subr.mxu0 0.0
        %5339 = vmatpush2.msra.mxu0 0.0
        %5340 = vmatprep.subr.mxu0 0.0
        %5341 = vmatpush2.msra.mxu0 0.0
        %5342 = vmatprep.subr.mxu0 0.0
        %5343 = vmatpush2.msra.mxu0 0.0
        %5344 = vmatprep.subr.mxu0 0.0
        %5345 = vmatpush2.msra.mxu0 0.0
        %5346 = vmatprep.subr.mxu0 0.0
        %5347 = vmatpush2.msra.mxu0 0.0
        %5348 = vmatprep.subr.mxu0 0.0
        %5349 = vmatpush2.msra.mxu0 0.0
        %5350 = vmatprep.subr.mxu0 0.0
        %5351 = vmatpush2.msra.mxu0 0.0
        %5352 = vmatprep.subr.mxu0 0.0
        %5353 = vmatpush2.msra.mxu0 0.0
        %5354 = vmatprep.subr.mxu0 0.0
        %5355 = vmatpush2.msra.mxu0 0.0
        %5356 = vmatprep.subr.mxu0 0.0
        %5357 = vmatpush2.msra.mxu0 0.0
        %5358 = vmatprep.subr.mxu0 0.0
        %5359 = vmatpush2.msra.mxu0 0.0
        %5360 = vmatprep.subr.mxu0 0.0
        %5361 = vmatpush2.msra.mxu0 0.0
        %5362 = vmatprep.subr.mxu0 0.0
        %5363 = vmatpush2.msra.mxu0 0.0
        %5364 = vmatprep.subr.mxu0 0.0
        %5365 = vmatpush2.msra.mxu0 0.0
        %5366 = vmatprep.subr.mxu0 0.0
        %5367 = vmatpush2.msra.mxu0 0.0
        %5368 = vmatprep.subr.mxu0 0.0
        %5369 = vmatpush2.msra.mxu0 0.0
        %5370 = vmatprep.mubr.f32.mxu0 0.0
        %5371 = vmatmul.mubr.f32.gmra.mxu0 %v5304
        %v5372 = vpop.f32.mrf.mxu0
        %v5373 = vadd.f32 %v5302, %v5372
        %v5374 = vpop.f32.mrf.mxu0
        %5375 = vdwg.mxu0
        %v5376 = vmax.f32 %v5373, 0.0
        %v5377 = vld [vmem:[%s2 + $0x2f0] sm:$0xff]
        %v5378 = vld [vmem:[%s2 + $0x2f8] sm:$0xff]
        %v5379 = vld [vmem:[%s2 + $0x300] sm:$0xff]
        %v5380 = vld [vmem:[%s2 + $0x308] sm:$0xff]
        %v5381 = vld [vmem:[%s2 + $0x310] sm:$0xff]
        %v5382 = vld [vmem:[%s2 + $0x318] sm:$0xff]
        %v5383 = vld [vmem:[%s2 + $0x320] sm:$0xff]
        %v5384 = vld [vmem:[%s2 + $0x328] sm:$0xff]
        %v5385 = vld [vmem:[%s2 + $0x330] sm:$0x1]
        %v5386 = vlaneseq
        %v5387 = vshrl.u32 %v5386, 7
        %v5388 = vsub.s32 0, %v5387
        %v5389 = vrot.slane %v5385, %v5388
        %v5391 = vsel %vm1648, %v5376, 0
        %5393 = vmatprep.subr.mxu0 0.0
        %5394 = vmatpush1.msra.mxu0 0.0
        %5395 = vmatprep.subr.mxu0 0.0
        %5396 = vmatpush1.msra.mxu0 0.0
        %5397 = vmatprep.subr.mxu0 0.0
        %5398 = vmatpush1.msra.mxu0 0.0
        %5399 = vmatprep.subr.mxu0 0.0
        %5400 = vmatpush1.msra.mxu0 0.0
        %5401 = vmatprep.subr.mxu0 0.0
        %5402 = vmatpush1.msra.mxu0 0.0
        %5403 = vmatprep.subr.mxu0 0.0
        %5404 = vmatpush1.msra.mxu0 0.0
        %5405 = vmatprep.subr.mxu0 0.0
        %5406 = vmatpush1.msra.mxu0 0.0
        %5407 = vmatprep.subr.mxu0 0.0
        %5408 = vmatpush1.msra.mxu0 0.0
        %5409 = vmatprep.subr.mxu0 0.0
        %5410 = vmatpush1.msra.mxu0 %v5384
        %5411 = vmatprep.subr.mxu0 0.0
        %5412 = vmatpush1.msra.mxu0 %v5383
        %5413 = vmatprep.subr.mxu0 0.0
        %5414 = vmatpush1.msra.mxu0 %v5382
        %5415 = vmatprep.subr.mxu0 0.0
        %5416 = vmatpush1.msra.mxu0 %v5381
        %5417 = vmatprep.subr.mxu0 0.0
        %5418 = vmatpush1.msra.mxu0 %v5380
        %5419 = vmatprep.subr.mxu0 0.0
        %5420 = vmatpush1.msra.mxu0 %v5379
        %5421 = vmatprep.subr.mxu0 0.0
        %5422 = vmatpush1.msra.mxu0 %v5378
        %5423 = vmatprep.subr.mxu0 0.0
        %5424 = vmatpush1.msra.mxu0 %v5377
        %5425 = vmatprep.subr.mxu0 0.0
        %5426 = vmatpush2.msra.mxu0 0.0
        %5427 = vmatprep.subr.mxu0 0.0
        %5428 = vmatpush2.msra.mxu0 0.0
        %5429 = vmatprep.subr.mxu0 0.0
        %5430 = vmatpush2.msra.mxu0 0.0
        %5431 = vmatprep.subr.mxu0 0.0
        %5432 = vmatpush2.msra.mxu0 0.0
        %5433 = vmatprep.subr.mxu0 0.0
        %5434 = vmatpush2.msra.mxu0 0.0
        %5435 = vmatprep.subr.mxu0 0.0
        %5436 = vmatpush2.msra.mxu0 0.0
        %5437 = vmatprep.subr.mxu0 0.0
        %5438 = vmatpush2.msra.mxu0 0.0
        %5439 = vmatprep.subr.mxu0 0.0
        %5440 = vmatpush2.msra.mxu0 0.0
        %5441 = vmatprep.subr.mxu0 0.0
        %5442 = vmatpush2.msra.mxu0 0.0
        %5443 = vmatprep.subr.mxu0 0.0
        %5444 = vmatpush2.msra.mxu0 0.0
        %5445 = vmatprep.subr.mxu0 0.0
        %5446 = vmatpush2.msra.mxu0 0.0
        %5447 = vmatprep.subr.mxu0 0.0
        %5448 = vmatpush2.msra.mxu0 0.0
        %5449 = vmatprep.subr.mxu0 0.0
        %5450 = vmatpush2.msra.mxu0 0.0
        %5451 = vmatprep.subr.mxu0 0.0
        %5452 = vmatpush2.msra.mxu0 0.0
        %5453 = vmatprep.subr.mxu0 0.0
        %5454 = vmatpush2.msra.mxu0 0.0
        %5455 = vmatprep.subr.mxu0 0.0
        %5456 = vmatpush2.msra.mxu0 0.0
        %5457 = vmatprep.mubr.f32.mxu0 0.0
        %5458 = vmatmul.mubr.f32.gmra.mxu0 %v5391
        %v5459 = vpop.f32.mrf.mxu0
        %v5460 = vadd.f32 %v5389, %v5459
        %v5461 = vpop.f32.mrf.mxu0
        %5462 = vdwg.mxu0
        %v5463 = vadd.f32 %v5293, %v5460
        %v5464 = vld [vmem:[%s2 + $0x358] sm:$0x1]
        %v5465 = vld [vmem:[%s2 + $0x360] sm:$0x1]
        %v5466 = vsel %vm477, %v5463, 0.0
        %5467 = vadd.xlane.f32.xlu0 %v5466
        %v5468 = vpop.xlane.xlu0 %5467
        %v5469 = vmul.f32 %v5468, %v1531
        %v5470 = vsub.f32 %v5463, %v5469
        %v5471 = vmul.f32 %v5470, %v5470
        %v5472 = vsel %vm477, %v5471, 0.0
        %5473 = vadd.xlane.f32.xlu0 %v5472
        %v5474 = vpop.xlane.xlu0 %5473
        %v5475 = vmul.f32 %v5474, %v1531
        %v5476 = vadd.f32 %v5475, 1e-05
        %v5477 = vrsqrt.pop %v5476
        %v5478 = vmul.f32 %v5470, %v5477
        %v5479 = vlaneseq
        %v5480 = vshrl.u32 %v5479, 7
        %v5481 = vsub.s32 0, %v5480
        %v5482 = vrot.slane %v5464, %v5481
        %v5483 = vmul.f32 %v5478, %v5482
        %v5484 = vlaneseq
        %v5485 = vshrl.u32 %v5484, 7
        %v5486 = vsub.s32 0, %v5485
        %v5487 = vrot.slane %v5465, %v5486
        %v5488 = vadd.f32 %v5483, %v5487
        %v5489 = vld [vmem:[%s2 + $0x378] sm:$0x1]
        %v5490 = vlaneseq
        %v5491 = vshrl.u32 %v5490, 7
        %v5492 = vsub.s32 0, %v5491
        %v5493 = vrot.slane %v5489, %v5492
        %v5494 = vsub.f32 %v5488, %v5493
        %v5495 = vld [vmem:[%s2 + $0x380] sm:$0x1]
        %v5496 = vadd.f32 %v5495, 1e-05
        %v5497 = vrsqrt.pop %v5496
        %v5498 = vlaneseq
        %v5499 = vshrl.u32 %v5498, 7
        %v5500 = vsub.s32 0, %v5499
        %v5501 = vrot.slane %v5497, %v5500
        %v5502 = vmul.f32 %v5494, %v5501
        %v5503 = vld [vmem:[%s2 + $0x368] sm:$0x1]
        %v5504 = vlaneseq
        %v5505 = vshrl.u32 %v5504, 7
        %v5506 = vsub.s32 0, %v5505
        %v5507 = vrot.slane %v5503, %v5506
        %v5508 = vmul.f32 %v5502, %v5507
        %v5509 = vld [vmem:[%s2 + $0x370] sm:$0x1]
        %v5510 = vlaneseq
        %v5511 = vshrl.u32 %v5510, 7
        %v5512 = vsub.s32 0, %v5511
        %v5513 = vrot.slane %v5509, %v5512
        %v5514 = vadd.f32 %v5508, %v5513
        %v5515 = vld [vmem:[%s2 + $0x388] sm:$0xff]
        %v5516 = vld [vmem:[%s2 + $0x390] sm:$0xff]
        %v5517 = vld [vmem:[%s2 + $0x398] sm:$0xff]
        %v5518 = vld [vmem:[%s2 + $0x3a0] sm:$0xff]
        %v5519 = vld [vmem:[%s2 + $0x3a8] sm:$0x1]
        %v5520 = vlaneseq
        %v5521 = vshrl.u32 %v5520, 7
        %v5522 = vsub.s32 0, %v5521
        %v5523 = vrot.slane %v5519, %v5522
        %v5525 = vsel %vm477, %v5514, 0
        %5527 = vmatprep.subr.mxu0 0.0
        %5528 = vmatpush1.msra.mxu0 0.0
        %5529 = vmatprep.subr.mxu0 0.0
        %5530 = vmatpush1.msra.mxu0 0.0
        %5531 = vmatprep.subr.mxu0 0.0
        %5532 = vmatpush1.msra.mxu0 0.0
        %5533 = vmatprep.subr.mxu0 0.0
        %5534 = vmatpush1.msra.mxu0 0.0
        %5535 = vmatprep.subr.mxu0 0.0
        %5536 = vmatpush1.msra.mxu0 0.0
        %5537 = vmatprep.subr.mxu0 0.0
        %5538 = vmatpush1.msra.mxu0 0.0
        %5539 = vmatprep.subr.mxu0 0.0
        %5540 = vmatpush1.msra.mxu0 0.0
        %5541 = vmatprep.subr.mxu0 0.0
        %5542 = vmatpush1.msra.mxu0 0.0
        %5543 = vmatprep.subr.mxu0 0.0
        %5544 = vmatpush1.msra.mxu0 0.0
        %5545 = vmatprep.subr.mxu0 0.0
        %5546 = vmatpush1.msra.mxu0 0.0
        %5547 = vmatprep.subr.mxu0 0.0
        %5548 = vmatpush1.msra.mxu0 0.0
        %5549 = vmatprep.subr.mxu0 0.0
        %5550 = vmatpush1.msra.mxu0 0.0
        %5551 = vmatprep.subr.mxu0 0.0
        %5552 = vmatpush1.msra.mxu0 %v5518
        %5553 = vmatprep.subr.mxu0 0.0
        %5554 = vmatpush1.msra.mxu0 %v5517
        %5555 = vmatprep.subr.mxu0 0.0
        %5556 = vmatpush1.msra.mxu0 %v5516
        %5557 = vmatprep.subr.mxu0 0.0
        %5558 = vmatpush1.msra.mxu0 %v5515
        %5559 = vmatprep.subr.mxu0 0.0
        %5560 = vmatpush2.msra.mxu0 0.0
        %5561 = vmatprep.subr.mxu0 0.0
        %5562 = vmatpush2.msra.mxu0 0.0
        %5563 = vmatprep.subr.mxu0 0.0
        %5564 = vmatpush2.msra.mxu0 0.0
        %5565 = vmatprep.subr.mxu0 0.0
        %5566 = vmatpush2.msra.mxu0 0.0
        %5567 = vmatprep.subr.mxu0 0.0
        %5568 = vmatpush2.msra.mxu0 0.0
        %5569 = vmatprep.subr.mxu0 0.0
        %5570 = vmatpush2.msra.mxu0 0.0
        %5571 = vmatprep.subr.mxu0 0.0
        %5572 = vmatpush2.msra.mxu0 0.0
        %5573 = vmatprep.subr.mxu0 0.0
        %5574 = vmatpush2.msra.mxu0 0.0
        %5575 = vmatprep.subr.mxu0 0.0
        %5576 = vmatpush2.msra.mxu0 0.0
        %5577 = vmatprep.subr.mxu0 0.0
        %5578 = vmatpush2.msra.mxu0 0.0
        %5579 = vmatprep.subr.mxu0 0.0
        %5580 = vmatpush2.msra.mxu0 0.0
        %5581 = vmatprep.subr.mxu0 0.0
        %5582 = vmatpush2.msra.mxu0 0.0
        %5583 = vmatprep.subr.mxu0 0.0
        %5584 = vmatpush2.msra.mxu0 0.0
        %5585 = vmatprep.subr.mxu0 0.0
        %5586 = vmatpush2.msra.mxu0 0.0
        %5587 = vmatprep.subr.mxu0 0.0
        %5588 = vmatpush2.msra.mxu0 0.0
        %5589 = vmatprep.subr.mxu0 0.0
        %5590 = vmatpush2.msra.mxu0 0.0
        %5591 = vmatprep.mubr.f32.mxu0 0.0
        %5592 = vmatmul.mubr.f32.gmra.mxu0 %v5525
        %v5593 = vpop.f32.mrf.mxu0
        %v5594 = vadd.f32 %v5523, %v5593
        %v5595 = vpop.f32.mrf.mxu0
        %5596 = vdwg.mxu0
        %v5597 = vld [vmem:[%s2 + $0x3b0] sm:$0xf]
        %v5598 = vld [vmem:[%s2 + $0x3b8] sm:$0xf]
        %5600 = vset.pattern.permute.xlu0 0
        %5601 = vperm.xlu0 %5600, %v5598
        %v5602 = vpop.permute.xlu0 %5601
        %v5605 = vsel %vm377, %v5597, 0
        %5607 = vmatprep.subr.mxu0 0.0
        %5608 = vmatpush1.msra.mxu0 0.0
        %5609 = vmatprep.subr.mxu0 0.0
        %5610 = vmatpush1.msra.mxu0 0.0
        %5611 = vmatprep.subr.mxu0 0.0
        %5612 = vmatpush1.msra.mxu0 0.0
        %5613 = vmatprep.subr.mxu0 0.0
        %5614 = vmatpush1.msra.mxu0 0.0
        %5615 = vmatprep.subr.mxu0 0.0
        %5616 = vmatpush1.msra.mxu0 0.0
        %5617 = vmatprep.subr.mxu0 0.0
        %5618 = vmatpush1.msra.mxu0 0.0
        %5619 = vmatprep.subr.mxu0 0.0
        %5620 = vmatpush1.msra.mxu0 0.0
        %5621 = vmatprep.subr.mxu0 0.0
        %5622 = vmatpush1.msra.mxu0 0.0
        %5623 = vmatprep.subr.mxu0 0.0
        %5624 = vmatpush1.msra.mxu0 0.0
        %5625 = vmatprep.subr.mxu0 0.0
        %5626 = vmatpush1.msra.mxu0 0.0
        %5627 = vmatprep.subr.mxu0 0.0
        %5628 = vmatpush1.msra.mxu0 0.0
        %5629 = vmatprep.subr.mxu0 0.0
        %5630 = vmatpush1.msra.mxu0 0.0
        %5631 = vmatprep.subr.mxu0 0.0
        %5632 = vmatpush1.msra.mxu0 0.0
        %5633 = vmatprep.subr.mxu0 0.0
        %5634 = vmatpush1.msra.mxu0 0.0
        %5635 = vmatprep.subr.mxu0 0.0
        %5636 = vmatpush1.msra.mxu0 0.0
        %5637 = vmatprep.subr.mxu0 0.0
        %5638 = vmatpush1.msra.mxu0 %v5594
        %5639 = vmatprep.subr.mxu0 0.0
        %5640 = vmatpush2.msra.mxu0 0.0
        %5641 = vmatprep.subr.mxu0 0.0
        %5642 = vmatpush2.msra.mxu0 0.0
        %5643 = vmatprep.subr.mxu0 0.0
        %5644 = vmatpush2.msra.mxu0 0.0
        %5645 = vmatprep.subr.mxu0 0.0
        %5646 = vmatpush2.msra.mxu0 0.0
        %5647 = vmatprep.subr.mxu0 0.0
        %5648 = vmatpush2.msra.mxu0 0.0
        %5649 = vmatprep.subr.mxu0 0.0
        %5650 = vmatpush2.msra.mxu0 0.0
        %5651 = vmatprep.subr.mxu0 0.0
        %5652 = vmatpush2.msra.mxu0 0.0
        %5653 = vmatprep.subr.mxu0 0.0
        %5654 = vmatpush2.msra.mxu0 0.0
        %5655 = vmatprep.subr.mxu0 0.0
        %5656 = vmatpush2.msra.mxu0 0.0
        %5657 = vmatprep.subr.mxu0 0.0
        %5658 = vmatpush2.msra.mxu0 0.0
        %5659 = vmatprep.subr.mxu0 0.0
        %5660 = vmatpush2.msra.mxu0 0.0
        %5661 = vmatprep.subr.mxu0 0.0
        %5662 = vmatpush2.msra.mxu0 0.0
        %5663 = vmatprep.subr.mxu0 0.0
        %5664 = vmatpush2.msra.mxu0 0.0
        %5665 = vmatprep.subr.mxu0 0.0
        %5666 = vmatpush2.msra.mxu0 0.0
        %5667 = vmatprep.subr.mxu0 0.0
        %5668 = vmatpush2.msra.mxu0 0.0
        %5669 = vmatprep.subr.mxu0 0.0
        %5670 = vmatpush2.msra.mxu0 0.0
        %5671 = vmatprep.mubr.f32.mxu0 0.0
        %5672 = vmatmul.mubr.f32.gmra.mxu0 %v5605
        %v5673 = vpop.f32.mrf.mxu0
        %v5674 = vadd.f32 %v5602, %v5673
        %v5675 = vpop.f32.mrf.mxu0
        %5676 = vdwg.mxu0
        %vm5677 = vcmask 27648
        %5678 = vst.msk [vmem:[%s174] sm:$0xf] %vm5677, %v5674
        %s5679 = sand.u32 %s98, 1
        %s5680 = scalar_lea.sflag [#allocation3], %s5679
        %s5681 = sand.u32 %s98, 1
        %s5682 = smul.addr %s5681, 4
        %s5683 = scalar_lea.vmem [#allocation2], %s5682
        // Predicated region
        $region33: #{t2v_transformer_forward.1} parent=31 // pred_check
          %p5684 = pneg %p108
        $region34: #{t2v_transformer_forward.1} parent=31 // pred_check_branch
          %5686 = sbr.rel (%p5684) target = $region36
        $region35: #{t2v_transformer_forward.1} parent=31 // pred_region
          %s5688 = ssub.s32 64, 64
          %5689 = vsyncadd %s5680, %s5688
          %s5690 = smul.addr %s17, 64
          %s5691 = scalar_lea.hbm %s3, %s5690
          %s5693 = sshll.u32 %s5683, 4
          %s5694 = int_to_ptr.vmem [resolvable:$true] %s5693
          %5696 = dma.vmem_to_hbm [thread:$0]  %s5694, 64, %s5691, %s5680
        $region36: #{t2v_transformer_forward.1} parent=31 // pred_fallthru
          _
      $region32: #{t2v_transformer_forward.1} parent=5 // pred_fallthru
        _
      %p5697 = scmp.le.s32.totalorder 2, %s12
      // Predicated region
      $region37: #{t2v_transformer_forward.1} parent=5 // pred_check
        %p5698 = pneg %p5697
      $region38: #{t2v_transformer_forward.1} parent=5 // pred_check_branch
        %5700 = sbr.rel (%p5698) target = $region40
      $region39: #{t2v_transformer_forward.1} parent=5 // pred_region
        %s5701 = ssub.s32 %s12, 2
        // Predicated region
        $region41: #{t2v_transformer_forward.1} parent=39 // pred_check
          %p5702 = pneg %p114
        $region42: #{t2v_transformer_forward.1} parent=39 // pred_check_branch
          %5704 = sbr.rel (%p5702) target = $region44
        $region43: #{t2v_transformer_forward.1} parent=39 // pred_region
          %s5705 = sand.u32 %s99, 1
          %s5706 = scalar_lea.sflag [#allocation3], %s5705
          %s5707 = sand.u32 %s99, 1
          %s5708 = smul.addr %s5707, 4
          %s5709 = scalar_lea.vmem [#allocation2], %s5708
          %5710 = dma.done %s5706, 64
        $region44: #{t2v_transformer_forward.1} parent=39 // pred_fallthru
          _
      $region40: #{t2v_transformer_forward.1} parent=5 // pred_fallthru
        _
    $region6: #{t2v_transformer_forward.1} parent=1 // loop_footer
      %s16 = sadd.s32 1, %s12
    $region7: #{t2v_transformer_forward.1} parent=1 // loop_footer_branch
      %11 = sbr.rel target = $region3
    $region8: #{t2v_transformer_forward.1} parent=1 // loop_exit
      _
    %5711 = vsyncpa [#allocation3], 1
    %s5712 = scalar_lea.sflag [#allocation3], 1
    %5713 = vsyncpa %s5712, 1

</llo_original>
